<compile_context>
chip_gen: v5e
topology: v5e:2x2
jax: 0.10.0
libtpu: 0.0.40
codegen_flags: <defaults>
</compile_context>

<pallas_src>
import functools

import jax
import jax.numpy as jnp
from jax.experimental import pallas as pl
from jax.experimental.pallas import tpu as pltpu

_EPS = 1e-5


def _resnet_block_kernel(x_ref, w9a_ref, g1_ref, b1_ref, w9b_ref, g2_ref,
                         b2_ref, o_ref, wb_ref, *, B, H, W, C):
    """Fused ReflPad->Conv->BN->ReLU->ReflPad->Conv->BN + residual.

    x_ref / o_ref : (B*H, W*C) lane-dense view (rows=(b,h), lanes=(w,c))
    w9*_ref       : (9, C, C) raw conv tap weights, w9[3*ky+kx, ci, co], f32
    g*/b*_ref     : (1, W*C) f32 BatchNorm affine params, pre-tiled across W
    wb_ref        : (3, W*C, W*C) bf16 scratch for the banded (block-Toeplitz)
                    conv weights; rebuilt in place for each of the two convs.
    """
    BH = B * H
    WC = W * C
    inv_n = 1.0 / float(B * H * W)
    bf = jnp.bfloat16

    # Row-within-image index masks, computed once and reused by both convs.
    row_id = jax.lax.broadcasted_iota(jnp.int32, (BH, WC), 0)
    row_in_img = row_id % H
    is_top = row_in_img == 0
    is_bot = row_in_img == (H - 1)

    def build_band(w9_ref):
        # Fill the band of wb_ref with conv weights; width reflection is folded
        # into the two edge column-blocks.  Block (src, dst) of wb[ky] holds the
        # (ci, co) weight connecting input column `src` to output column `dst`.
        for ky in range(3):
            w_l = w9_ref[3 * ky + 0]          # kx = 0 tap, (C, C) f32
            w_c = w9_ref[3 * ky + 1]          # kx = 1 tap
            w_r = w9_ref[3 * ky + 2]          # kx = 2 tap
            lr = w_l + w_r                    # reflected edge fold
            # src = 0      -> dst {0: w_c, 1: w_l}
            wb_ref[ky, 0:C, 0:2 * C] = (
                jnp.concatenate([w_c, w_l], axis=1).astype(bf))
            # src = 1      -> dst {0: w_l+w_r, 1: w_c, 2: w_l}
            wb_ref[ky, C:2 * C, 0:3 * C] = (
                jnp.concatenate([lr, w_c, w_l], axis=1).astype(bf))
            # interior src -> dst {src-1: w_r, src: w_c, src+1: w_l}
            mid = jnp.concatenate([w_r, w_c, w_l], axis=1).astype(bf)
            for s in range(2, W - 2):
                wb_ref[ky, s * C:(s + 1) * C, (s - 1) * C:(s + 2) * C] = mid
            # src = W-2    -> dst {W-3: w_r, W-2: w_c, W-1: w_l+w_r}
            wb_ref[ky, (W - 2) * C:(W - 1) * C, (W - 3) * C:W * C] = (
                jnp.concatenate([w_r, w_c, lr], axis=1).astype(bf))
            # src = W-1    -> dst {W-2: w_r, W-1: w_c}
            wb_ref[ky, (W - 1) * C:W * C, (W - 2) * C:W * C] = (
                jnp.concatenate([w_r, w_c], axis=1).astype(bf))

    def conv3x3(x_bf):
        # Three full-slab MXU matmuls (M=B*H, K=N=W*C); width handled inside
        # the banded weights, height reflection via row shifts + boundary fix.
        y0 = jnp.dot(x_bf, wb_ref[0], preferred_element_type=jnp.float32)
        y1 = jnp.dot(x_bf, wb_ref[1], preferred_element_type=jnp.float32)
        y2 = jnp.dot(x_bf, wb_ref[2], preferred_element_type=jnp.float32)
        # ky=0 term: out[h] needs y0[h-1]; at the top row of each image, y0[h+1]
        t0 = jnp.where(is_top, jnp.roll(y0, -1, axis=0),
                       jnp.roll(y0, 1, axis=0))
        # ky=2 term: out[h] needs y2[h+1]; at the bottom row, y2[h-1]
        t2 = jnp.where(is_bot, jnp.roll(y2, 1, axis=0),
                       jnp.roll(y2, -1, axis=0))
        return t0 + y1 + t2

    def lane_allreduce(row):
        # Circular butterfly over the W groups of C lanes (direction-agnostic):
        # after log2(W) roll+add steps every C-lane group holds the full sum,
        # so the per-channel fold and the tile-back are done in one shot.
        shift = WC // 2
        while shift >= C:
            row = row + pltpu.roll(row, shift, axis=1)
            shift //= 2
        return row

    def batch_norm(h, g_ref, bt_ref):
        # Biased batch statistics over (B, H, W) per channel, centred variance.
        s = lane_allreduce(jnp.sum(h, axis=0, keepdims=True))      # (1, WC)
        mean = s * inv_n
        d = h - mean
        ss = lane_allreduce(jnp.sum(d * d, axis=0, keepdims=True))  # (1, WC)
        var = ss * inv_n
        scale = g_ref[...] * jax.lax.rsqrt(var + _EPS)              # (1, WC)
        return d * scale + bt_ref[...]

    # Zero the off-band blocks once; both convs write the same band positions.
    wb_ref[...] = jnp.zeros_like(wb_ref)

    x_bf = x_ref[...].astype(bf)

    # block 1: conv -> BN -> ReLU
    build_band(w9a_ref)
    h = conv3x3(x_bf)
    h = batch_norm(h, g1_ref, b1_ref)
    h = jnp.maximum(h, 0.0)

    # block 2: conv -> BN
    build_band(w9b_ref)
    h = conv3x3(h.astype(bf))
    h = batch_norm(h, g2_ref, b2_ref)

    # residual add (x re-read here to keep it out of the live range above)
    o_ref[...] = (h + x_ref[...].astype(jnp.float32)).astype(o_ref.dtype)


@jax.jit
def resnet_block(x_nchw, w1, g1, b1, w2, g2, b2):
    """x_nchw: (B, C, H, W); w*: (9, C, C) with w[ky*3+kx, ci, co]; g*/b*: (C,)."""
    B, C, H, W = x_nchw.shape
    assert H >= 2 and W >= 4, "reflection pad-1 folding needs H >= 2, W >= 4"
    assert (W & (W - 1)) == 0, "lane-butterfly BN reduce assumes power-of-two W"
    WC = W * C

    # lane-dense 2-D view for the kernel: rows=(b,h), lanes=(w,c)
    x2d = jnp.transpose(x_nchw, (0, 2, 3, 1)).reshape(B * H, WC)
    # pre-tile BN affine params across the W lane-groups (tiny, done in XLA)
    g1r = jnp.tile(g1, W).reshape(1, WC)
    b1r = jnp.tile(b1, W).reshape(1, WC)
    g2r = jnp.tile(g2, W).reshape(1, WC)
    b2r = jnp.tile(b2, W).reshape(1, WC)

    full2 = lambda i: (0, 0)
    full3 = lambda i: (0, 0, 0)

    flops = 2 * 3 * 2 * (B * H) * WC * WC          # 2 convs * 3 ky matmuls
    bytes_accessed = (2 * x2d.size * 4 + 2 * w1.size * 4 + 4 * WC * 4)

    out2d = pl.pallas_call(
        functools.partial(_resnet_block_kernel, B=B, H=H, W=W, C=C),
        out_shape=jax.ShapeDtypeStruct((B * H, WC), x_nchw.dtype),
        grid=(1,),
        in_specs=[
            pl.BlockSpec((B * H, WC), full2),    # x (lane-dense)
            pl.BlockSpec((9, C, C), full3),      # raw conv1 weights (36 KiB)
            pl.BlockSpec((1, WC), full2),        # gamma1 (tiled)
            pl.BlockSpec((1, WC), full2),        # beta1
            pl.BlockSpec((9, C, C), full3),      # raw conv2 weights
            pl.BlockSpec((1, WC), full2),        # gamma2
            pl.BlockSpec((1, WC), full2),        # beta2
        ],
        out_specs=pl.BlockSpec((B * H, WC), full2),
        scratch_shapes=[pltpu.VMEM((3, WC, WC), jnp.bfloat16)],
        compiler_params=pltpu.CompilerParams(
            dimension_semantics=("arbitrary",)),
        cost_estimate=pl.CostEstimate(
            flops=int(flops), transcendentals=2 * C,
            bytes_accessed=int(bytes_accessed)),
    )(x2d, w1, g1r, b1r, w2, g2r, b2r)

    return jnp.transpose(out2d.reshape(B, H, W, C), (0, 3, 1, 2))


def _reference(x_nchw, w1, g1, b1, w2, g2, b2):
    """Pure-JAX f32 reference of the same forward (for correctness checking)."""
    B, C, H, W = x_nchw.shape
    x = jnp.transpose(x_nchw, (0, 2, 3, 1)).astype(jnp.float32)

    def block(h, w, g, bta, relu):
        hp = jnp.pad(h, ((0, 0), (1, 1), (1, 1), (0, 0)), mode="reflect")
        out = jnp.zeros_like(h)
        for ky in range(3):
            for kx in range(3):
                out = out + jnp.einsum("bhwc,cd->bhwd",
                                       hp[:, ky:ky + H, kx:kx + W, :],
                                       w[3 * ky + kx])
        mean = out.mean(axis=(0, 1, 2), keepdims=True)
        var = ((out - mean) ** 2).mean(axis=(0, 1, 2), keepdims=True)
        out = (out - mean) * jax.lax.rsqrt(var + _EPS) * g + bta
        return jnp.maximum(out, 0.0) if relu else out

    h = block(x, w1, g1, b1, True)
    h = block(h, w2, g2, b2, False)
    return jnp.transpose(h + x, (0, 3, 1, 2))


if __name__ == "__main__":
    B, C, H, W = 2, 32, 16, 16  # dim=32 ResnetBlock on a 16x16 feature map

    key = jax.random.PRNGKey(0)
    kx, kw1, kw2, kg1, kb1, kg2, kb2 = jax.random.split(key, 7)

    x = jax.random.normal(kx, (B, C, H, W), jnp.float32)

    fan_in = 9 * C
    w1 = jax.random.normal(kw1, (9, C, C), jnp.float32) / jnp.sqrt(fan_in)
    w2 = jax.random.normal(kw2, (9, C, C), jnp.float32) / jnp.sqrt(fan_in)
    g1 = 1.0 + 0.1 * jax.random.normal(kg1, (C,), jnp.float32)
    b1 = 0.1 * jax.random.normal(kb1, (C,), jnp.float32)
    g2 = 1.0 + 0.1 * jax.random.normal(kg2, (C,), jnp.float32)
    b2 = 0.1 * jax.random.normal(kb2, (C,), jnp.float32)

    out = jax.block_until_ready(resnet_block(x, w1, g1, b1, w2, g2, b2))
    ref = jax.block_until_ready(_reference(x, w1, g1, b1, w2, g2, b2))

    assert out.shape == x.shape and out.dtype == x.dtype
    max_err = float(jnp.max(jnp.abs(out - ref)))
    assert jnp.allclose(out, ref, rtol=2e-2, atol=2e-2), f"max_err={max_err}"

    print("KERNEL_OK")
</pallas_src>

<mosaic_0001>
module attributes {stable_mosaic.version = 11 : i64} {
  func.func @_resnet_block_kernel(%arg0: i32, %arg1: memref<32x512xf32, #tpu.memory_space<vmem>>, %arg2: memref<9x32x32xf32, #tpu.memory_space<vmem>>, %arg3: memref<1x512xf32, #tpu.memory_space<vmem>>, %arg4: memref<1x512xf32, #tpu.memory_space<vmem>>, %arg5: memref<9x32x32xf32, #tpu.memory_space<vmem>>, %arg6: memref<1x512xf32, #tpu.memory_space<vmem>>, %arg7: memref<1x512xf32, #tpu.memory_space<vmem>>, %arg8: memref<32x512xf32, #tpu.memory_space<vmem>>, %arg9: memref<3x512x512xbf16, #tpu.memory_space<vmem>>) attributes {dimension_semantics = [#tpu.dimension_semantics<arbitrary>], iteration_bounds = array<i64: 1>, scalar_prefetch = 0 : i64, scratch_operands = 1 : i64, tpu.core_type = #tpu.core_type<tc>, window_params = [{pipeline_mode = #tpu.pipeline_mode<synchronous>, transform_indices = @transform_0, window_bounds = array<i64: 32, 512>}, {pipeline_mode = #tpu.pipeline_mode<synchronous>, transform_indices = @transform_1, window_bounds = array<i64: 9, 32, 32>}, {pipeline_mode = #tpu.pipeline_mode<synchronous>, transform_indices = @transform_2, window_bounds = array<i64: 1, 512>}, {pipeline_mode = #tpu.pipeline_mode<synchronous>, transform_indices = @transform_3, window_bounds = array<i64: 1, 512>}, {pipeline_mode = #tpu.pipeline_mode<synchronous>, transform_indices = @transform_4, window_bounds = array<i64: 9, 32, 32>}, {pipeline_mode = #tpu.pipeline_mode<synchronous>, transform_indices = @transform_5, window_bounds = array<i64: 1, 512>}, {pipeline_mode = #tpu.pipeline_mode<synchronous>, transform_indices = @transform_6, window_bounds = array<i64: 1, 512>}, {pipeline_mode = #tpu.pipeline_mode<synchronous>, transform_indices = @transform_7, window_bounds = array<i64: 32, 512>}]} {
    %0 = tpu.iota {dimensions = array<i32: 0>} : vector<32x512xi32>
    %c16_i32 = arith.constant 16 : i32
    %c0_i32 = arith.constant 0 : i32
    %1 = arith.cmpi eq, %c16_i32, %c0_i32 : i32
    %c1_i32 = arith.constant 1 : i32
    %2 = arith.select %1, %c1_i32, %c16_i32 : i32
    %3 = vector.broadcast %2 : i32 to vector<32x512xi32>
    %4 = arith.remsi %0, %3 : vector<32x512xi32>
    %c0_i32_0 = arith.constant 0 : i32
    %5 = vector.broadcast %c0_i32_0 : i32 to vector<32x512xi32>
    %6 = arith.cmpi ne, %4, %5 : vector<32x512xi32>
    %c0_i32_1 = arith.constant 0 : i32
    %7 = vector.broadcast %c0_i32_1 : i32 to vector<32x512xi32>
    %8 = arith.cmpi slt, %4, %7 : vector<32x512xi32>
    %c0_i32_2 = arith.constant 0 : i32
    %9 = arith.cmpi slt, %2, %c0_i32_2 : i32
    %10 = vector.broadcast %9 : i1 to vector<32x512xi1>
    %11 = vector.broadcast %10 : vector<32x512xi1> to vector<32x512xi1>
    %12 = arith.xori %8, %11 : vector<32x512xi1>
    %13 = arith.andi %12, %6 : vector<32x512xi1>
    %14 = vector.broadcast %2 : i32 to vector<32x512xi32>
    %15 = arith.addi %4, %14 : vector<32x512xi32>
    %16 = arith.select %13, %15, %4 : vector<32x512xi1>, vector<32x512xi32>
    %c0_i32_3 = arith.constant 0 : i32
    %17 = vector.broadcast %c0_i32_3 : i32 to vector<32x512xi32>
    %18 = arith.cmpi eq, %16, %17 : vector<32x512xi32>
    %c15_i32 = arith.constant 15 : i32
    %19 = vector.broadcast %c15_i32 : i32 to vector<32x512xi32>
    %20 = arith.cmpi eq, %16, %19 : vector<32x512xi32>
    %cst = arith.constant 0.000000e+00 : bf16
    %21 = vector.broadcast %cst : bf16 to vector<3x512x512xbf16>
    %c0 = arith.constant 0 : index
    %c0_4 = arith.constant 0 : index
    %c0_5 = arith.constant 0 : index
    %22 = vector.load %arg9[%c0, %c0_4, %c0_5] : memref<3x512x512xbf16, #tpu.memory_space<vmem>>, vector<3x512x512xbf16>
    tpu.vector_store %arg9[%c0, %c0_4, %c0_5], %21 {strides = array<i32>} : memref<3x512x512xbf16, #tpu.memory_space<vmem>>, vector<3x512x512xbf16>,
    %c0_6 = arith.constant 0 : index
    %c0_7 = arith.constant 0 : index
    %23 = vector.load %arg1[%c0_6, %c0_7] : memref<32x512xf32, #tpu.memory_space<vmem>>, vector<32x512xf32>
    %24 = arith.truncf %23 : vector<32x512xf32> to vector<32x512xbf16>
    %c0_8 = arith.constant 0 : index
    %c0_9 = arith.constant 0 : index
    %c0_10 = arith.constant 0 : index
    %25 = vector.load %arg2[%c0_8, %c0_9, %c0_10] : memref<9x32x32xf32, #tpu.memory_space<vmem>>, vector<1x32x32xf32>
    %26 = vector.shape_cast %25 : vector<1x32x32xf32> to vector<32x32xf32>
    %c1 = arith.constant 1 : index
    %c0_11 = arith.constant 0 : index
    %c0_12 = arith.constant 0 : index
    %27 = vector.load %arg2[%c1, %c0_11, %c0_12] : memref<9x32x32xf32, #tpu.memory_space<vmem>>, vector<1x32x32xf32>
    %28 = vector.shape_cast %27 : vector<1x32x32xf32> to vector<32x32xf32>
    %c2 = arith.constant 2 : index
    %c0_13 = arith.constant 0 : index
    %c0_14 = arith.constant 0 : index
    %29 = vector.load %arg2[%c2, %c0_13, %c0_14] : memref<9x32x32xf32, #tpu.memory_space<vmem>>, vector<1x32x32xf32>
    %30 = vector.shape_cast %29 : vector<1x32x32xf32> to vector<32x32xf32>
    %31 = arith.addf %26, %30 : vector<32x32xf32>
    %32 = tpu.concatenate %28, %26 in 1 : vector<32x32xf32>, vector<32x32xf32> -> vector<32x64xf32>
    %33 = arith.truncf %32 : vector<32x64xf32> to vector<32x64xbf16>
    %c0_15 = arith.constant 0 : index
    %c0_16 = arith.constant 0 : index
    %c0_17 = arith.constant 0 : index
    %34 = vector.load %arg9[%c0_15, %c0_16, %c0_17] : memref<3x512x512xbf16, #tpu.memory_space<vmem>>, vector<1x32x64xbf16>
    %35 = vector.shape_cast %34 : vector<1x32x64xbf16> to vector<32x64xbf16>
    %36 = vector.shape_cast %33 : vector<32x64xbf16> to vector<1x32x64xbf16>
    tpu.vector_store %arg9[%c0_15, %c0_16, %c0_17], %36 {strides = array<i32>} : memref<3x512x512xbf16, #tpu.memory_space<vmem>>, vector<1x32x64xbf16>,
    %37 = tpu.concatenate %31, %28, %26 in 1 : vector<32x32xf32>, vector<32x32xf32>, vector<32x32xf32> -> vector<32x96xf32>
    %38 = arith.truncf %37 : vector<32x96xf32> to vector<32x96xbf16>
    %c0_18 = arith.constant 0 : index
    %c32 = arith.constant 32 : index
    %c0_19 = arith.constant 0 : index
    %39 = vector.load %arg9[%c0_18, %c32, %c0_19] : memref<3x512x512xbf16, #tpu.memory_space<vmem>>, vector<1x32x96xbf16>
    %40 = vector.shape_cast %39 : vector<1x32x96xbf16> to vector<32x96xbf16>
    %41 = vector.shape_cast %38 : vector<32x96xbf16> to vector<1x32x96xbf16>
    tpu.vector_store %arg9[%c0_18, %c32, %c0_19], %41 {strides = array<i32>} : memref<3x512x512xbf16, #tpu.memory_space<vmem>>, vector<1x32x96xbf16>,
    %42 = tpu.concatenate %30, %28, %26 in 1 : vector<32x32xf32>, vector<32x32xf32>, vector<32x32xf32> -> vector<32x96xf32>
    %43 = arith.truncf %42 : vector<32x96xf32> to vector<32x96xbf16>
    %c0_20 = arith.constant 0 : index
    %c64 = arith.constant 64 : index
    %c32_21 = arith.constant 32 : index
    %44 = vector.load %arg9[%c0_20, %c64, %c32_21] : memref<3x512x512xbf16, #tpu.memory_space<vmem>>, vector<1x32x96xbf16>
    %45 = vector.shape_cast %44 : vector<1x32x96xbf16> to vector<32x96xbf16>
    %46 = vector.shape_cast %43 : vector<32x96xbf16> to vector<1x32x96xbf16>
    tpu.vector_store %arg9[%c0_20, %c64, %c32_21], %46 {strides = array<i32>} : memref<3x512x512xbf16, #tpu.memory_space<vmem>>, vector<1x32x96xbf16>,
    %c0_22 = arith.constant 0 : index
    %c96 = arith.constant 96 : index
    %c64_23 = arith.constant 64 : index
    %47 = vector.load %arg9[%c0_22, %c96, %c64_23] : memref<3x512x512xbf16, #tpu.memory_space<vmem>>, vector<1x32x96xbf16>
    %48 = vector.shape_cast %47 : vector<1x32x96xbf16> to vector<32x96xbf16>
    %49 = vector.shape_cast %43 : vector<32x96xbf16> to vector<1x32x96xbf16>
    tpu.vector_store %arg9[%c0_22, %c96, %c64_23], %49 {strides = array<i32>} : memref<3x512x512xbf16, #tpu.memory_space<vmem>>, vector<1x32x96xbf16>,
    %c0_24 = arith.constant 0 : index
    %c128 = arith.constant 128 : index
    %c96_25 = arith.constant 96 : index
    %50 = vector.load %arg9[%c0_24, %c128, %c96_25] : memref<3x512x512xbf16, #tpu.memory_space<vmem>>, vector<1x32x96xbf16>
    %51 = vector.shape_cast %50 : vector<1x32x96xbf16> to vector<32x96xbf16>
    %52 = vector.shape_cast %43 : vector<32x96xbf16> to vector<1x32x96xbf16>
    tpu.vector_store %arg9[%c0_24, %c128, %c96_25], %52 {strides = array<i32>} : memref<3x512x512xbf16, #tpu.memory_space<vmem>>, vector<1x32x96xbf16>,
    %c0_26 = arith.constant 0 : index
    %c160 = arith.constant 160 : index
    %c128_27 = arith.constant 128 : index
    %53 = vector.load %arg9[%c0_26, %c160, %c128_27] : memref<3x512x512xbf16, #tpu.memory_space<vmem>>, vector<1x32x96xbf16>
    %54 = vector.shape_cast %53 : vector<1x32x96xbf16> to vector<32x96xbf16>
    %55 = vector.shape_cast %43 : vector<32x96xbf16> to vector<1x32x96xbf16>
    tpu.vector_store %arg9[%c0_26, %c160, %c128_27], %55 {strides = array<i32>} : memref<3x512x512xbf16, #tpu.memory_space<vmem>>, vector<1x32x96xbf16>,
    %c0_28 = arith.constant 0 : index
    %c192 = arith.constant 192 : index
    %c160_29 = arith.constant 160 : index
    %56 = vector.load %arg9[%c0_28, %c192, %c160_29] : memref<3x512x512xbf16, #tpu.memory_space<vmem>>, vector<1x32x96xbf16>
    %57 = vector.shape_cast %56 : vector<1x32x96xbf16> to vector<32x96xbf16>
    %58 = vector.shape_cast %43 : vector<32x96xbf16> to vector<1x32x96xbf16>
    tpu.vector_store %arg9[%c0_28, %c192, %c160_29], %58 {strides = array<i32>} : memref<3x512x512xbf16, #tpu.memory_space<vmem>>, vector<1x32x96xbf16>,
    %c0_30 = arith.constant 0 : index
    %c224 = arith.constant 224 : index
    %c192_31 = arith.constant 192 : index
    %59 = vector.load %arg9[%c0_30, %c224, %c192_31] : memref<3x512x512xbf16, #tpu.memory_space<vmem>>, vector<1x32x96xbf16>
    %60 = vector.shape_cast %59 : vector<1x32x96xbf16> to vector<32x96xbf16>
    %61 = vector.shape_cast %43 : vector<32x96xbf16> to vector<1x32x96xbf16>
    tpu.vector_store %arg9[%c0_30, %c224, %c192_31], %61 {strides = array<i32>} : memref<3x512x512xbf16, #tpu.memory_space<vmem>>, vector<1x32x96xbf16>,
    %c0_32 = arith.constant 0 : index
    %c256 = arith.constant 256 : index
    %c224_33 = arith.constant 224 : index
    %62 = vector.load %arg9[%c0_32, %c256, %c224_33] : memref<3x512x512xbf16, #tpu.memory_space<vmem>>, vector<1x32x96xbf16>
    %63 = vector.shape_cast %62 : vector<1x32x96xbf16> to vector<32x96xbf16>
    %64 = vector.shape_cast %43 : vector<32x96xbf16> to vector<1x32x96xbf16>
    tpu.vector_store %arg9[%c0_32, %c256, %c224_33], %64 {strides = array<i32>} : memref<3x512x512xbf16, #tpu.memory_space<vmem>>, vector<1x32x96xbf16>,
    %c0_34 = arith.constant 0 : index
    %c288 = arith.constant 288 : index
    %c256_35 = arith.constant 256 : index
    %65 = vector.load %arg9[%c0_34, %c288, %c256_35] : memref<3x512x512xbf16, #tpu.memory_space<vmem>>, vector<1x32x96xbf16>
    %66 = vector.shape_cast %65 : vector<1x32x96xbf16> to vector<32x96xbf16>
    %67 = vector.shape_cast %43 : vector<32x96xbf16> to vector<1x32x96xbf16>
    tpu.vector_store %arg9[%c0_34, %c288, %c256_35], %67 {strides = array<i32>} : memref<3x512x512xbf16, #tpu.memory_space<vmem>>, vector<1x32x96xbf16>,
    %c0_36 = arith.constant 0 : index
    %c320 = arith.constant 320 : index
    %c288_37 = arith.constant 288 : index
    %68 = vector.load %arg9[%c0_36, %c320, %c288_37] : memref<3x512x512xbf16, #tpu.memory_space<vmem>>, vector<1x32x96xbf16>
    %69 = vector.shape_cast %68 : vector<1x32x96xbf16> to vector<32x96xbf16>
    %70 = vector.shape_cast %43 : vector<32x96xbf16> to vector<1x32x96xbf16>
    tpu.vector_store %arg9[%c0_36, %c320, %c288_37], %70 {strides = array<i32>} : memref<3x512x512xbf16, #tpu.memory_space<vmem>>, vector<1x32x96xbf16>,
    %c0_38 = arith.constant 0 : index
    %c352 = arith.constant 352 : index
    %c320_39 = arith.constant 320 : index
    %71 = vector.load %arg9[%c0_38, %c352, %c320_39] : memref<3x512x512xbf16, #tpu.memory_space<vmem>>, vector<1x32x96xbf16>
    %72 = vector.shape_cast %71 : vector<1x32x96xbf16> to vector<32x96xbf16>
    %73 = vector.shape_cast %43 : vector<32x96xbf16> to vector<1x32x96xbf16>
    tpu.vector_store %arg9[%c0_38, %c352, %c320_39], %73 {strides = array<i32>} : memref<3x512x512xbf16, #tpu.memory_space<vmem>>, vector<1x32x96xbf16>,
    %c0_40 = arith.constant 0 : index
    %c384 = arith.constant 384 : index
    %c352_41 = arith.constant 352 : index
    %74 = vector.load %arg9[%c0_40, %c384, %c352_41] : memref<3x512x512xbf16, #tpu.memory_space<vmem>>, vector<1x32x96xbf16>
    %75 = vector.shape_cast %74 : vector<1x32x96xbf16> to vector<32x96xbf16>
    %76 = vector.shape_cast %43 : vector<32x96xbf16> to vector<1x32x96xbf16>
    tpu.vector_store %arg9[%c0_40, %c384, %c352_41], %76 {strides = array<i32>} : memref<3x512x512xbf16, #tpu.memory_space<vmem>>, vector<1x32x96xbf16>,
    %c0_42 = arith.constant 0 : index
    %c416 = arith.constant 416 : index
    %c384_43 = arith.constant 384 : index
    %77 = vector.load %arg9[%c0_42, %c416, %c384_43] : memref<3x512x512xbf16, #tpu.memory_space<vmem>>, vector<1x32x96xbf16>
    %78 = vector.shape_cast %77 : vector<1x32x96xbf16> to vector<32x96xbf16>
    %79 = vector.shape_cast %43 : vector<32x96xbf16> to vector<1x32x96xbf16>
    tpu.vector_store %arg9[%c0_42, %c416, %c384_43], %79 {strides = array<i32>} : memref<3x512x512xbf16, #tpu.memory_space<vmem>>, vector<1x32x96xbf16>,
    %80 = tpu.concatenate %30, %28, %31 in 1 : vector<32x32xf32>, vector<32x32xf32>, vector<32x32xf32> -> vector<32x96xf32>
    %81 = arith.truncf %80 : vector<32x96xf32> to vector<32x96xbf16>
    %c0_44 = arith.constant 0 : index
    %c448 = arith.constant 448 : index
    %c416_45 = arith.constant 416 : index
    %82 = vector.load %arg9[%c0_44, %c448, %c416_45] : memref<3x512x512xbf16, #tpu.memory_space<vmem>>, vector<1x32x96xbf16>
    %83 = vector.shape_cast %82 : vector<1x32x96xbf16> to vector<32x96xbf16>
    %84 = vector.shape_cast %81 : vector<32x96xbf16> to vector<1x32x96xbf16>
    tpu.vector_store %arg9[%c0_44, %c448, %c416_45], %84 {strides = array<i32>} : memref<3x512x512xbf16, #tpu.memory_space<vmem>>, vector<1x32x96xbf16>,
    %85 = tpu.concatenate %30, %28 in 1 : vector<32x32xf32>, vector<32x32xf32> -> vector<32x64xf32>
    %86 = arith.truncf %85 : vector<32x64xf32> to vector<32x64xbf16>
    %c0_46 = arith.constant 0 : index
    %c480 = arith.constant 480 : index
    %c448_47 = arith.constant 448 : index
    %87 = vector.load %arg9[%c0_46, %c480, %c448_47] : memref<3x512x512xbf16, #tpu.memory_space<vmem>>, vector<1x32x64xbf16>
    %88 = vector.shape_cast %87 : vector<1x32x64xbf16> to vector<32x64xbf16>
    %89 = vector.shape_cast %86 : vector<32x64xbf16> to vector<1x32x64xbf16>
    tpu.vector_store %arg9[%c0_46, %c480, %c448_47], %89 {strides = array<i32>} : memref<3x512x512xbf16, #tpu.memory_space<vmem>>, vector<1x32x64xbf16>,
    %c3 = arith.constant 3 : index
    %c0_48 = arith.constant 0 : index
    %c0_49 = arith.constant 0 : index
    %90 = vector.load %arg2[%c3, %c0_48, %c0_49] : memref<9x32x32xf32, #tpu.memory_space<vmem>>, vector<1x32x32xf32>
    %91 = vector.shape_cast %90 : vector<1x32x32xf32> to vector<32x32xf32>
    %c4 = arith.constant 4 : index
    %c0_50 = arith.constant 0 : index
    %c0_51 = arith.constant 0 : index
    %92 = vector.load %arg2[%c4, %c0_50, %c0_51] : memref<9x32x32xf32, #tpu.memory_space<vmem>>, vector<1x32x32xf32>
    %93 = vector.shape_cast %92 : vector<1x32x32xf32> to vector<32x32xf32>
    %c5 = arith.constant 5 : index
    %c0_52 = arith.constant 0 : index
    %c0_53 = arith.constant 0 : index
    %94 = vector.load %arg2[%c5, %c0_52, %c0_53] : memref<9x32x32xf32, #tpu.memory_space<vmem>>, vector<1x32x32xf32>
    %95 = vector.shape_cast %94 : vector<1x32x32xf32> to vector<32x32xf32>
    %96 = arith.addf %91, %95 : vector<32x32xf32>
    %97 = tpu.concatenate %93, %91 in 1 : vector<32x32xf32>, vector<32x32xf32> -> vector<32x64xf32>
    %98 = arith.truncf %97 : vector<32x64xf32> to vector<32x64xbf16>
    %c1_54 = arith.constant 1 : index
    %c0_55 = arith.constant 0 : index
    %c0_56 = arith.constant 0 : index
    %99 = vector.load %arg9[%c1_54, %c0_55, %c0_56] : memref<3x512x512xbf16, #tpu.memory_space<vmem>>, vector<1x32x64xbf16>
    %100 = vector.shape_cast %99 : vector<1x32x64xbf16> to vector<32x64xbf16>
    %101 = vector.shape_cast %98 : vector<32x64xbf16> to vector<1x32x64xbf16>
    tpu.vector_store %arg9[%c1_54, %c0_55, %c0_56], %101 {strides = array<i32>} : memref<3x512x512xbf16, #tpu.memory_space<vmem>>, vector<1x32x64xbf16>,
    %102 = tpu.concatenate %96, %93, %91 in 1 : vector<32x32xf32>, vector<32x32xf32>, vector<32x32xf32> -> vector<32x96xf32>
    %103 = arith.truncf %102 : vector<32x96xf32> to vector<32x96xbf16>
    %c1_57 = arith.constant 1 : index
    %c32_58 = arith.constant 32 : index
    %c0_59 = arith.constant 0 : index
    %104 = vector.load %arg9[%c1_57, %c32_58, %c0_59] : memref<3x512x512xbf16, #tpu.memory_space<vmem>>, vector<1x32x96xbf16>
    %105 = vector.shape_cast %104 : vector<1x32x96xbf16> to vector<32x96xbf16>
    %106 = vector.shape_cast %103 : vector<32x96xbf16> to vector<1x32x96xbf16>
    tpu.vector_store %arg9[%c1_57, %c32_58, %c0_59], %106 {strides = array<i32>} : memref<3x512x512xbf16, #tpu.memory_space<vmem>>, vector<1x32x96xbf16>,
    %107 = tpu.concatenate %95, %93, %91 in 1 : vector<32x32xf32>, vector<32x32xf32>, vector<32x32xf32> -> vector<32x96xf32>
    %108 = arith.truncf %107 : vector<32x96xf32> to vector<32x96xbf16>
    %c1_60 = arith.constant 1 : index
    %c64_61 = arith.constant 64 : index
    %c32_62 = arith.constant 32 : index
    %109 = vector.load %arg9[%c1_60, %c64_61, %c32_62] : memref<3x512x512xbf16, #tpu.memory_space<vmem>>, vector<1x32x96xbf16>
    %110 = vector.shape_cast %109 : vector<1x32x96xbf16> to vector<32x96xbf16>
    %111 = vector.shape_cast %108 : vector<32x96xbf16> to vector<1x32x96xbf16>
    tpu.vector_store %arg9[%c1_60, %c64_61, %c32_62], %111 {strides = array<i32>} : memref<3x512x512xbf16, #tpu.memory_space<vmem>>, vector<1x32x96xbf16>,
    %c1_63 = arith.constant 1 : index
    %c96_64 = arith.constant 96 : index
    %c64_65 = arith.constant 64 : index
    %112 = vector.load %arg9[%c1_63, %c96_64, %c64_65] : memref<3x512x512xbf16, #tpu.memory_space<vmem>>, vector<1x32x96xbf16>
    %113 = vector.shape_cast %112 : vector<1x32x96xbf16> to vector<32x96xbf16>
    %114 = vector.shape_cast %108 : vector<32x96xbf16> to vector<1x32x96xbf16>
    tpu.vector_store %arg9[%c1_63, %c96_64, %c64_65], %114 {strides = array<i32>} : memref<3x512x512xbf16, #tpu.memory_space<vmem>>, vector<1x32x96xbf16>,
    %c1_66 = arith.constant 1 : index
    %c128_67 = arith.constant 128 : index
    %c96_68 = arith.constant 96 : index
    %115 = vector.load %arg9[%c1_66, %c128_67, %c96_68] : memref<3x512x512xbf16, #tpu.memory_space<vmem>>, vector<1x32x96xbf16>
    %116 = vector.shape_cast %115 : vector<1x32x96xbf16> to vector<32x96xbf16>
    %117 = vector.shape_cast %108 : vector<32x96xbf16> to vector<1x32x96xbf16>
    tpu.vector_store %arg9[%c1_66, %c128_67, %c96_68], %117 {strides = array<i32>} : memref<3x512x512xbf16, #tpu.memory_space<vmem>>, vector<1x32x96xbf16>,
    %c1_69 = arith.constant 1 : index
    %c160_70 = arith.constant 160 : index
    %c128_71 = arith.constant 128 : index
    %118 = vector.load %arg9[%c1_69, %c160_70, %c128_71] : memref<3x512x512xbf16, #tpu.memory_space<vmem>>, vector<1x32x96xbf16>
    %119 = vector.shape_cast %118 : vector<1x32x96xbf16> to vector<32x96xbf16>
    %120 = vector.shape_cast %108 : vector<32x96xbf16> to vector<1x32x96xbf16>
    tpu.vector_store %arg9[%c1_69, %c160_70, %c128_71], %120 {strides = array<i32>} : memref<3x512x512xbf16, #tpu.memory_space<vmem>>, vector<1x32x96xbf16>,
    %c1_72 = arith.constant 1 : index
    %c192_73 = arith.constant 192 : index
    %c160_74 = arith.constant 160 : index
    %121 = vector.load %arg9[%c1_72, %c192_73, %c160_74] : memref<3x512x512xbf16, #tpu.memory_space<vmem>>, vector<1x32x96xbf16>
    %122 = vector.shape_cast %121 : vector<1x32x96xbf16> to vector<32x96xbf16>
    %123 = vector.shape_cast %108 : vector<32x96xbf16> to vector<1x32x96xbf16>
    tpu.vector_store %arg9[%c1_72, %c192_73, %c160_74], %123 {strides = array<i32>} : memref<3x512x512xbf16, #tpu.memory_space<vmem>>, vector<1x32x96xbf16>,
    %c1_75 = arith.constant 1 : index
    %c224_76 = arith.constant 224 : index
    %c192_77 = arith.constant 192 : index
    %124 = vector.load %arg9[%c1_75, %c224_76, %c192_77] : memref<3x512x512xbf16, #tpu.memory_space<vmem>>, vector<1x32x96xbf16>
    %125 = vector.shape_cast %124 : vector<1x32x96xbf16> to vector<32x96xbf16>
    %126 = vector.shape_cast %108 : vector<32x96xbf16> to vector<1x32x96xbf16>
    tpu.vector_store %arg9[%c1_75, %c224_76, %c192_77], %126 {strides = array<i32>} : memref<3x512x512xbf16, #tpu.memory_space<vmem>>, vector<1x32x96xbf16>,
    %c1_78 = arith.constant 1 : index
    %c256_79 = arith.constant 256 : index
    %c224_80 = arith.constant 224 : index
    %127 = vector.load %arg9[%c1_78, %c256_79, %c224_80] : memref<3x512x512xbf16, #tpu.memory_space<vmem>>, vector<1x32x96xbf16>
    %128 = vector.shape_cast %127 : vector<1x32x96xbf16> to vector<32x96xbf16>
    %129 = vector.shape_cast %108 : vector<32x96xbf16> to vector<1x32x96xbf16>
    tpu.vector_store %arg9[%c1_78, %c256_79, %c224_80], %129 {strides = array<i32>} : memref<3x512x512xbf16, #tpu.memory_space<vmem>>, vector<1x32x96xbf16>,
    %c1_81 = arith.constant 1 : index
    %c288_82 = arith.constant 288 : index
    %c256_83 = arith.constant 256 : index
    %130 = vector.load %arg9[%c1_81, %c288_82, %c256_83] : memref<3x512x512xbf16, #tpu.memory_space<vmem>>, vector<1x32x96xbf16>
    %131 = vector.shape_cast %130 : vector<1x32x96xbf16> to vector<32x96xbf16>
    %132 = vector.shape_cast %108 : vector<32x96xbf16> to vector<1x32x96xbf16>
    tpu.vector_store %arg9[%c1_81, %c288_82, %c256_83], %132 {strides = array<i32>} : memref<3x512x512xbf16, #tpu.memory_space<vmem>>, vector<1x32x96xbf16>,
    %c1_84 = arith.constant 1 : index
    %c320_85 = arith.constant 320 : index
    %c288_86 = arith.constant 288 : index
    %133 = vector.load %arg9[%c1_84, %c320_85, %c288_86] : memref<3x512x512xbf16, #tpu.memory_space<vmem>>, vector<1x32x96xbf16>
    %134 = vector.shape_cast %133 : vector<1x32x96xbf16> to vector<32x96xbf16>
    %135 = vector.shape_cast %108 : vector<32x96xbf16> to vector<1x32x96xbf16>
    tpu.vector_store %arg9[%c1_84, %c320_85, %c288_86], %135 {strides = array<i32>} : memref<3x512x512xbf16, #tpu.memory_space<vmem>>, vector<1x32x96xbf16>,
    %c1_87 = arith.constant 1 : index
    %c352_88 = arith.constant 352 : index
    %c320_89 = arith.constant 320 : index
    %136 = vector.load %arg9[%c1_87, %c352_88, %c320_89] : memref<3x512x512xbf16, #tpu.memory_space<vmem>>, vector<1x32x96xbf16>
    %137 = vector.shape_cast %136 : vector<1x32x96xbf16> to vector<32x96xbf16>
    %138 = vector.shape_cast %108 : vector<32x96xbf16> to vector<1x32x96xbf16>
    tpu.vector_store %arg9[%c1_87, %c352_88, %c320_89], %138 {strides = array<i32>} : memref<3x512x512xbf16, #tpu.memory_space<vmem>>, vector<1x32x96xbf16>,
    %c1_90 = arith.constant 1 : index
    %c384_91 = arith.constant 384 : index
    %c352_92 = arith.constant 352 : index
    %139 = vector.load %arg9[%c1_90, %c384_91, %c352_92] : memref<3x512x512xbf16, #tpu.memory_space<vmem>>, vector<1x32x96xbf16>
    %140 = vector.shape_cast %139 : vector<1x32x96xbf16> to vector<32x96xbf16>
    %141 = vector.shape_cast %108 : vector<32x96xbf16> to vector<1x32x96xbf16>
    tpu.vector_store %arg9[%c1_90, %c384_91, %c352_92], %141 {strides = array<i32>} : memref<3x512x512xbf16, #tpu.memory_space<vmem>>, vector<1x32x96xbf16>,
    %c1_93 = arith.constant 1 : index
    %c416_94 = arith.constant 416 : index
    %c384_95 = arith.constant 384 : index
    %142 = vector.load %arg9[%c1_93, %c416_94, %c384_95] : memref<3x512x512xbf16, #tpu.memory_space<vmem>>, vector<1x32x96xbf16>
    %143 = vector.shape_cast %142 : vector<1x32x96xbf16> to vector<32x96xbf16>
    %144 = vector.shape_cast %108 : vector<32x96xbf16> to vector<1x32x96xbf16>
    tpu.vector_store %arg9[%c1_93, %c416_94, %c384_95], %144 {strides = array<i32>} : memref<3x512x512xbf16, #tpu.memory_space<vmem>>, vector<1x32x96xbf16>,
    %145 = tpu.concatenate %95, %93, %96 in 1 : vector<32x32xf32>, vector<32x32xf32>, vector<32x32xf32> -> vector<32x96xf32>
    %146 = arith.truncf %145 : vector<32x96xf32> to vector<32x96xbf16>
    %c1_96 = arith.constant 1 : index
    %c448_97 = arith.constant 448 : index
    %c416_98 = arith.constant 416 : index
    %147 = vector.load %arg9[%c1_96, %c448_97, %c416_98] : memref<3x512x512xbf16, #tpu.memory_space<vmem>>, vector<1x32x96xbf16>
    %148 = vector.shape_cast %147 : vector<1x32x96xbf16> to vector<32x96xbf16>
    %149 = vector.shape_cast %146 : vector<32x96xbf16> to vector<1x32x96xbf16>
    tpu.vector_store %arg9[%c1_96, %c448_97, %c416_98], %149 {strides = array<i32>} : memref<3x512x512xbf16, #tpu.memory_space<vmem>>, vector<1x32x96xbf16>,
    %150 = tpu.concatenate %95, %93 in 1 : vector<32x32xf32>, vector<32x32xf32> -> vector<32x64xf32>
    %151 = arith.truncf %150 : vector<32x64xf32> to vector<32x64xbf16>
    %c1_99 = arith.constant 1 : index
    %c480_100 = arith.constant 480 : index
    %c448_101 = arith.constant 448 : index
    %152 = vector.load %arg9[%c1_99, %c480_100, %c448_101] : memref<3x512x512xbf16, #tpu.memory_space<vmem>>, vector<1x32x64xbf16>
    %153 = vector.shape_cast %152 : vector<1x32x64xbf16> to vector<32x64xbf16>
    %154 = vector.shape_cast %151 : vector<32x64xbf16> to vector<1x32x64xbf16>
    tpu.vector_store %arg9[%c1_99, %c480_100, %c448_101], %154 {strides = array<i32>} : memref<3x512x512xbf16, #tpu.memory_space<vmem>>, vector<1x32x64xbf16>,
    %c6 = arith.constant 6 : index
    %c0_102 = arith.constant 0 : index
    %c0_103 = arith.constant 0 : index
    %155 = vector.load %arg2[%c6, %c0_102, %c0_103] : memref<9x32x32xf32, #tpu.memory_space<vmem>>, vector<1x32x32xf32>
    %156 = vector.shape_cast %155 : vector<1x32x32xf32> to vector<32x32xf32>
    %c7 = arith.constant 7 : index
    %c0_104 = arith.constant 0 : index
    %c0_105 = arith.constant 0 : index
    %157 = vector.load %arg2[%c7, %c0_104, %c0_105] : memref<9x32x32xf32, #tpu.memory_space<vmem>>, vector<1x32x32xf32>
    %158 = vector.shape_cast %157 : vector<1x32x32xf32> to vector<32x32xf32>
    %c8 = arith.constant 8 : index
    %c0_106 = arith.constant 0 : index
    %c0_107 = arith.constant 0 : index
    %159 = vector.load %arg2[%c8, %c0_106, %c0_107] : memref<9x32x32xf32, #tpu.memory_space<vmem>>, vector<1x32x32xf32>
    %160 = vector.shape_cast %159 : vector<1x32x32xf32> to vector<32x32xf32>
    %161 = arith.addf %156, %160 : vector<32x32xf32>
    %162 = tpu.concatenate %158, %156 in 1 : vector<32x32xf32>, vector<32x32xf32> -> vector<32x64xf32>
    %163 = arith.truncf %162 : vector<32x64xf32> to vector<32x64xbf16>
    %c2_108 = arith.constant 2 : index
    %c0_109 = arith.constant 0 : index
    %c0_110 = arith.constant 0 : index
    %164 = vector.load %arg9[%c2_108, %c0_109, %c0_110] : memref<3x512x512xbf16, #tpu.memory_space<vmem>>, vector<1x32x64xbf16>
    %165 = vector.shape_cast %164 : vector<1x32x64xbf16> to vector<32x64xbf16>
    %166 = vector.shape_cast %163 : vector<32x64xbf16> to vector<1x32x64xbf16>
    tpu.vector_store %arg9[%c2_108, %c0_109, %c0_110], %166 {strides = array<i32>} : memref<3x512x512xbf16, #tpu.memory_space<vmem>>, vector<1x32x64xbf16>,
    %167 = tpu.concatenate %161, %158, %156 in 1 : vector<32x32xf32>, vector<32x32xf32>, vector<32x32xf32> -> vector<32x96xf32>
    %168 = arith.truncf %167 : vector<32x96xf32> to vector<32x96xbf16>
    %c2_111 = arith.constant 2 : index
    %c32_112 = arith.constant 32 : index
    %c0_113 = arith.constant 0 : index
    %169 = vector.load %arg9[%c2_111, %c32_112, %c0_113] : memref<3x512x512xbf16, #tpu.memory_space<vmem>>, vector<1x32x96xbf16>
    %170 = vector.shape_cast %169 : vector<1x32x96xbf16> to vector<32x96xbf16>
    %171 = vector.shape_cast %168 : vector<32x96xbf16> to vector<1x32x96xbf16>
    tpu.vector_store %arg9[%c2_111, %c32_112, %c0_113], %171 {strides = array<i32>} : memref<3x512x512xbf16, #tpu.memory_space<vmem>>, vector<1x32x96xbf16>,
    %172 = tpu.concatenate %160, %158, %156 in 1 : vector<32x32xf32>, vector<32x32xf32>, vector<32x32xf32> -> vector<32x96xf32>
    %173 = arith.truncf %172 : vector<32x96xf32> to vector<32x96xbf16>
    %c2_114 = arith.constant 2 : index
    %c64_115 = arith.constant 64 : index
    %c32_116 = arith.constant 32 : index
    %174 = vector.load %arg9[%c2_114, %c64_115, %c32_116] : memref<3x512x512xbf16, #tpu.memory_space<vmem>>, vector<1x32x96xbf16>
    %175 = vector.shape_cast %174 : vector<1x32x96xbf16> to vector<32x96xbf16>
    %176 = vector.shape_cast %173 : vector<32x96xbf16> to vector<1x32x96xbf16>
    tpu.vector_store %arg9[%c2_114, %c64_115, %c32_116], %176 {strides = array<i32>} : memref<3x512x512xbf16, #tpu.memory_space<vmem>>, vector<1x32x96xbf16>,
    %c2_117 = arith.constant 2 : index
    %c96_118 = arith.constant 96 : index
    %c64_119 = arith.constant 64 : index
    %177 = vector.load %arg9[%c2_117, %c96_118, %c64_119] : memref<3x512x512xbf16, #tpu.memory_space<vmem>>, vector<1x32x96xbf16>
    %178 = vector.shape_cast %177 : vector<1x32x96xbf16> to vector<32x96xbf16>
    %179 = vector.shape_cast %173 : vector<32x96xbf16> to vector<1x32x96xbf16>
    tpu.vector_store %arg9[%c2_117, %c96_118, %c64_119], %179 {strides = array<i32>} : memref<3x512x512xbf16, #tpu.memory_space<vmem>>, vector<1x32x96xbf16>,
    %c2_120 = arith.constant 2 : index
    %c128_121 = arith.constant 128 : index
    %c96_122 = arith.constant 96 : index
    %180 = vector.load %arg9[%c2_120, %c128_121, %c96_122] : memref<3x512x512xbf16, #tpu.memory_space<vmem>>, vector<1x32x96xbf16>
    %181 = vector.shape_cast %180 : vector<1x32x96xbf16> to vector<32x96xbf16>
    %182 = vector.shape_cast %173 : vector<32x96xbf16> to vector<1x32x96xbf16>
    tpu.vector_store %arg9[%c2_120, %c128_121, %c96_122], %182 {strides = array<i32>} : memref<3x512x512xbf16, #tpu.memory_space<vmem>>, vector<1x32x96xbf16>,
    %c2_123 = arith.constant 2 : index
    %c160_124 = arith.constant 160 : index
    %c128_125 = arith.constant 128 : index
    %183 = vector.load %arg9[%c2_123, %c160_124, %c128_125] : memref<3x512x512xbf16, #tpu.memory_space<vmem>>, vector<1x32x96xbf16>
    %184 = vector.shape_cast %183 : vector<1x32x96xbf16> to vector<32x96xbf16>
    %185 = vector.shape_cast %173 : vector<32x96xbf16> to vector<1x32x96xbf16>
    tpu.vector_store %arg9[%c2_123, %c160_124, %c128_125], %185 {strides = array<i32>} : memref<3x512x512xbf16, #tpu.memory_space<vmem>>, vector<1x32x96xbf16>,
    %c2_126 = arith.constant 2 : index
    %c192_127 = arith.constant 192 : index
    %c160_128 = arith.constant 160 : index
    %186 = vector.load %arg9[%c2_126, %c192_127, %c160_128] : memref<3x512x512xbf16, #tpu.memory_space<vmem>>, vector<1x32x96xbf16>
    %187 = vector.shape_cast %186 : vector<1x32x96xbf16> to vector<32x96xbf16>
    %188 = vector.shape_cast %173 : vector<32x96xbf16> to vector<1x32x96xbf16>
    tpu.vector_store %arg9[%c2_126, %c192_127, %c160_128], %188 {strides = array<i32>} : memref<3x512x512xbf16, #tpu.memory_space<vmem>>, vector<1x32x96xbf16>,
    %c2_129 = arith.constant 2 : index
    %c224_130 = arith.constant 224 : index
    %c192_131 = arith.constant 192 : index
    %189 = vector.load %arg9[%c2_129, %c224_130, %c192_131] : memref<3x512x512xbf16, #tpu.memory_space<vmem>>, vector<1x32x96xbf16>
    %190 = vector.shape_cast %189 : vector<1x32x96xbf16> to vector<32x96xbf16>
    %191 = vector.shape_cast %173 : vector<32x96xbf16> to vector<1x32x96xbf16>
    tpu.vector_store %arg9[%c2_129, %c224_130, %c192_131], %191 {strides = array<i32>} : memref<3x512x512xbf16, #tpu.memory_space<vmem>>, vector<1x32x96xbf16>,
    %c2_132 = arith.constant 2 : index
    %c256_133 = arith.constant 256 : index
    %c224_134 = arith.constant 224 : index
    %192 = vector.load %arg9[%c2_132, %c256_133, %c224_134] : memref<3x512x512xbf16, #tpu.memory_space<vmem>>, vector<1x32x96xbf16>
    %193 = vector.shape_cast %192 : vector<1x32x96xbf16> to vector<32x96xbf16>
    %194 = vector.shape_cast %173 : vector<32x96xbf16> to vector<1x32x96xbf16>
    tpu.vector_store %arg9[%c2_132, %c256_133, %c224_134], %194 {strides = array<i32>} : memref<3x512x512xbf16, #tpu.memory_space<vmem>>, vector<1x32x96xbf16>,
    %c2_135 = arith.constant 2 : index
    %c288_136 = arith.constant 288 : index
    %c256_137 = arith.constant 256 : index
    %195 = vector.load %arg9[%c2_135, %c288_136, %c256_137] : memref<3x512x512xbf16, #tpu.memory_space<vmem>>, vector<1x32x96xbf16>
    %196 = vector.shape_cast %195 : vector<1x32x96xbf16> to vector<32x96xbf16>
    %197 = vector.shape_cast %173 : vector<32x96xbf16> to vector<1x32x96xbf16>
    tpu.vector_store %arg9[%c2_135, %c288_136, %c256_137], %197 {strides = array<i32>} : memref<3x512x512xbf16, #tpu.memory_space<vmem>>, vector<1x32x96xbf16>,
    %c2_138 = arith.constant 2 : index
    %c320_139 = arith.constant 320 : index
    %c288_140 = arith.constant 288 : index
    %198 = vector.load %arg9[%c2_138, %c320_139, %c288_140] : memref<3x512x512xbf16, #tpu.memory_space<vmem>>, vector<1x32x96xbf16>
    %199 = vector.shape_cast %198 : vector<1x32x96xbf16> to vector<32x96xbf16>
    %200 = vector.shape_cast %173 : vector<32x96xbf16> to vector<1x32x96xbf16>
    tpu.vector_store %arg9[%c2_138, %c320_139, %c288_140], %200 {strides = array<i32>} : memref<3x512x512xbf16, #tpu.memory_space<vmem>>, vector<1x32x96xbf16>,
    %c2_141 = arith.constant 2 : index
    %c352_142 = arith.constant 352 : index
    %c320_143 = arith.constant 320 : index
    %201 = vector.load %arg9[%c2_141, %c352_142, %c320_143] : memref<3x512x512xbf16, #tpu.memory_space<vmem>>, vector<1x32x96xbf16>
    %202 = vector.shape_cast %201 : vector<1x32x96xbf16> to vector<32x96xbf16>
    %203 = vector.shape_cast %173 : vector<32x96xbf16> to vector<1x32x96xbf16>
    tpu.vector_store %arg9[%c2_141, %c352_142, %c320_143], %203 {strides = array<i32>} : memref<3x512x512xbf16, #tpu.memory_space<vmem>>, vector<1x32x96xbf16>,
    %c2_144 = arith.constant 2 : index
    %c384_145 = arith.constant 384 : index
    %c352_146 = arith.constant 352 : index
    %204 = vector.load %arg9[%c2_144, %c384_145, %c352_146] : memref<3x512x512xbf16, #tpu.memory_space<vmem>>, vector<1x32x96xbf16>
    %205 = vector.shape_cast %204 : vector<1x32x96xbf16> to vector<32x96xbf16>
    %206 = vector.shape_cast %173 : vector<32x96xbf16> to vector<1x32x96xbf16>
    tpu.vector_store %arg9[%c2_144, %c384_145, %c352_146], %206 {strides = array<i32>} : memref<3x512x512xbf16, #tpu.memory_space<vmem>>, vector<1x32x96xbf16>,
    %c2_147 = arith.constant 2 : index
    %c416_148 = arith.constant 416 : index
    %c384_149 = arith.constant 384 : index
    %207 = vector.load %arg9[%c2_147, %c416_148, %c384_149] : memref<3x512x512xbf16, #tpu.memory_space<vmem>>, vector<1x32x96xbf16>
    %208 = vector.shape_cast %207 : vector<1x32x96xbf16> to vector<32x96xbf16>
    %209 = vector.shape_cast %173 : vector<32x96xbf16> to vector<1x32x96xbf16>
    tpu.vector_store %arg9[%c2_147, %c416_148, %c384_149], %209 {strides = array<i32>} : memref<3x512x512xbf16, #tpu.memory_space<vmem>>, vector<1x32x96xbf16>,
    %210 = tpu.concatenate %160, %158, %161 in 1 : vector<32x32xf32>, vector<32x32xf32>, vector<32x32xf32> -> vector<32x96xf32>
    %211 = arith.truncf %210 : vector<32x96xf32> to vector<32x96xbf16>
    %c2_150 = arith.constant 2 : index
    %c448_151 = arith.constant 448 : index
    %c416_152 = arith.constant 416 : index
    %212 = vector.load %arg9[%c2_150, %c448_151, %c416_152] : memref<3x512x512xbf16, #tpu.memory_space<vmem>>, vector<1x32x96xbf16>
    %213 = vector.shape_cast %212 : vector<1x32x96xbf16> to vector<32x96xbf16>
    %214 = vector.shape_cast %211 : vector<32x96xbf16> to vector<1x32x96xbf16>
    tpu.vector_store %arg9[%c2_150, %c448_151, %c416_152], %214 {strides = array<i32>} : memref<3x512x512xbf16, #tpu.memory_space<vmem>>, vector<1x32x96xbf16>,
    %215 = tpu.concatenate %160, %158 in 1 : vector<32x32xf32>, vector<32x32xf32> -> vector<32x64xf32>
    %216 = arith.truncf %215 : vector<32x64xf32> to vector<32x64xbf16>
    %c2_153 = arith.constant 2 : index
    %c480_154 = arith.constant 480 : index
    %c448_155 = arith.constant 448 : index
    %217 = vector.load %arg9[%c2_153, %c480_154, %c448_155] : memref<3x512x512xbf16, #tpu.memory_space<vmem>>, vector<1x32x64xbf16>
    %218 = vector.shape_cast %217 : vector<1x32x64xbf16> to vector<32x64xbf16>
    %219 = vector.shape_cast %216 : vector<32x64xbf16> to vector<1x32x64xbf16>
    tpu.vector_store %arg9[%c2_153, %c480_154, %c448_155], %219 {strides = array<i32>} : memref<3x512x512xbf16, #tpu.memory_space<vmem>>, vector<1x32x64xbf16>,
    %c0_156 = arith.constant 0 : index
    %c0_157 = arith.constant 0 : index
    %c0_158 = arith.constant 0 : index
    %220 = vector.load %arg9[%c0_156, %c0_157, %c0_158] : memref<3x512x512xbf16, #tpu.memory_space<vmem>>, vector<1x512x512xbf16>
    %221 = vector.shape_cast %220 : vector<1x512x512xbf16> to vector<512x512xbf16>
    %cst_159 = arith.constant dense<0.000000e+00> : vector<32x512xf32>
    %222 = tpu.matmul %24, %221, %cst_159 {dimension_numbers = #tpu.dot_dimension_numbers<[1], [0], [0], [1], [0, 0, 1, 1], [], []>} : vector<32x512xbf16>, vector<512x512xbf16>, vector<32x512xf32> -> vector<32x512xf32>
    %c1_160 = arith.constant 1 : index
    %c0_161 = arith.constant 0 : index
    %c0_162 = arith.constant 0 : index
    %223 = vector.load %arg9[%c1_160, %c0_161, %c0_162] : memref<3x512x512xbf16, #tpu.memory_space<vmem>>, vector<1x512x512xbf16>
    %224 = vector.shape_cast %223 : vector<1x512x512xbf16> to vector<512x512xbf16>
    %cst_163 = arith.constant dense<0.000000e+00> : vector<32x512xf32>
    %225 = tpu.matmul %24, %224, %cst_163 {dimension_numbers = #tpu.dot_dimension_numbers<[1], [0], [0], [1], [0, 0, 1, 1], [], []>} : vector<32x512xbf16>, vector<512x512xbf16>, vector<32x512xf32> -> vector<32x512xf32>
    %c2_164 = arith.constant 2 : index
    %c0_165 = arith.constant 0 : index
    %c0_166 = arith.constant 0 : index
    %226 = vector.load %arg9[%c2_164, %c0_165, %c0_166] : memref<3x512x512xbf16, #tpu.memory_space<vmem>>, vector<1x512x512xbf16>
    %227 = vector.shape_cast %226 : vector<1x512x512xbf16> to vector<512x512xbf16>
    %cst_167 = arith.constant dense<0.000000e+00> : vector<32x512xf32>
    %228 = tpu.matmul %24, %227, %cst_167 {dimension_numbers = #tpu.dot_dimension_numbers<[1], [0], [0], [1], [0, 0, 1, 1], [], []>} : vector<32x512xbf16>, vector<512x512xbf16>, vector<32x512xf32> -> vector<32x512xf32>
    %229 = vector.extract_strided_slice %222 {offsets = [1, 0], sizes = [31, 512], strides = [1, 1]} : vector<32x512xf32> to vector<31x512xf32>
    %230 = vector.extract_strided_slice %222 {offsets = [0, 0], sizes = [1, 512], strides = [1, 1]} : vector<32x512xf32> to vector<1x512xf32>
    %231 = tpu.concatenate %229, %230 in 0 : vector<31x512xf32>, vector<1x512xf32> -> vector<32x512xf32>
    %232 = vector.extract_strided_slice %222 {offsets = [31, 0], sizes = [1, 512], strides = [1, 1]} : vector<32x512xf32> to vector<1x512xf32>
    %233 = vector.extract_strided_slice %222 {offsets = [0, 0], sizes = [31, 512], strides = [1, 1]} : vector<32x512xf32> to vector<31x512xf32>
    %234 = tpu.concatenate %232, %233 in 0 : vector<1x512xf32>, vector<31x512xf32> -> vector<32x512xf32>
    %235 = arith.select %18, %231, %234 : vector<32x512xi1>, vector<32x512xf32>
    %236 = vector.extract_strided_slice %228 {offsets = [31, 0], sizes = [1, 512], strides = [1, 1]} : vector<32x512xf32> to vector<1x512xf32>
    %237 = vector.extract_strided_slice %228 {offsets = [0, 0], sizes = [31, 512], strides = [1, 1]} : vector<32x512xf32> to vector<31x512xf32>
    %238 = tpu.concatenate %236, %237 in 0 : vector<1x512xf32>, vector<31x512xf32> -> vector<32x512xf32>
    %239 = vector.extract_strided_slice %228 {offsets = [1, 0], sizes = [31, 512], strides = [1, 1]} : vector<32x512xf32> to vector<31x512xf32>
    %240 = vector.extract_strided_slice %228 {offsets = [0, 0], sizes = [1, 512], strides = [1, 1]} : vector<32x512xf32> to vector<1x512xf32>
    %241 = tpu.concatenate %239, %240 in 0 : vector<31x512xf32>, vector<1x512xf32> -> vector<32x512xf32>
    %242 = arith.select %20, %238, %241 : vector<32x512xi1>, vector<32x512xf32>
    %243 = arith.addf %235, %225 : vector<32x512xf32>
    %244 = arith.addf %243, %242 : vector<32x512xf32>
    %cst_168 = arith.constant dense<0.000000e+00> : vector<512xf32>
    %245 = vector.multi_reduction <add>, %244, %cst_168 [0] : vector<32x512xf32> to vector<512xf32>
    %246 = vector.shape_cast %245 : vector<512xf32> to vector<1x512xf32>
    %c256_i32 = arith.constant 256 : i32
    %247 = tpu.dynamic_rotate %246 by %c256_i32 dim 1 : vector<1x512xf32>, i32 -> vector<1x512xf32>
    %248 = arith.addf %246, %247 : vector<1x512xf32>
    %c128_i32 = arith.constant 128 : i32
    %249 = tpu.dynamic_rotate %248 by %c128_i32 dim 1 : vector<1x512xf32>, i32 -> vector<1x512xf32>
    %250 = arith.addf %248, %249 : vector<1x512xf32>
    %c64_i32 = arith.constant 64 : i32
    %251 = tpu.dynamic_rotate %250 by %c64_i32 dim 1 : vector<1x512xf32>, i32 -> vector<1x512xf32>
    %252 = arith.addf %250, %251 : vector<1x512xf32>
    %c32_i32 = arith.constant 32 : i32
    %253 = tpu.dynamic_rotate %252 by %c32_i32 dim 1 : vector<1x512xf32>, i32 -> vector<1x512xf32>
    %254 = arith.addf %252, %253 : vector<1x512xf32>
    %cst_169 = arith.constant 0.001953125 : f32
    %255 = vector.broadcast %cst_169 : f32 to vector<1x512xf32>
    %256 = arith.mulf %254, %255 : vector<1x512xf32>
    %257 = vector.broadcast %256 : vector<1x512xf32> to vector<32x512xf32>
    %258 = arith.subf %244, %257 : vector<32x512xf32>
    %259 = arith.mulf %258, %258 : vector<32x512xf32>
    %cst_170 = arith.constant dense<0.000000e+00> : vector<512xf32>
    %260 = vector.multi_reduction <add>, %259, %cst_170 [0] : vector<32x512xf32> to vector<512xf32>
    %261 = vector.shape_cast %260 : vector<512xf32> to vector<1x512xf32>
    %c256_i32_171 = arith.constant 256 : i32
    %262 = tpu.dynamic_rotate %261 by %c256_i32_171 dim 1 : vector<1x512xf32>, i32 -> vector<1x512xf32>
    %263 = arith.addf %261, %262 : vector<1x512xf32>
    %c128_i32_172 = arith.constant 128 : i32
    %264 = tpu.dynamic_rotate %263 by %c128_i32_172 dim 1 : vector<1x512xf32>, i32 -> vector<1x512xf32>
    %265 = arith.addf %263, %264 : vector<1x512xf32>
    %c64_i32_173 = arith.constant 64 : i32
    %266 = tpu.dynamic_rotate %265 by %c64_i32_173 dim 1 : vector<1x512xf32>, i32 -> vector<1x512xf32>
    %267 = arith.addf %265, %266 : vector<1x512xf32>
    %c32_i32_174 = arith.constant 32 : i32
    %268 = tpu.dynamic_rotate %267 by %c32_i32_174 dim 1 : vector<1x512xf32>, i32 -> vector<1x512xf32>
    %269 = arith.addf %267, %268 : vector<1x512xf32>
    %cst_175 = arith.constant 0.001953125 : f32
    %270 = vector.broadcast %cst_175 : f32 to vector<1x512xf32>
    %271 = arith.mulf %269, %270 : vector<1x512xf32>
    %c0_176 = arith.constant 0 : index
    %c0_177 = arith.constant 0 : index
    %272 = vector.load %arg3[%c0_176, %c0_177] : memref<1x512xf32, #tpu.memory_space<vmem>>, vector<1x512xf32>
    %cst_178 = arith.constant 9.99999974E-6 : f32
    %273 = vector.broadcast %cst_178 : f32 to vector<1x512xf32>
    %274 = arith.addf %271, %273 : vector<1x512xf32>
    %275 = math.rsqrt %274 : vector<1x512xf32>
    %276 = arith.mulf %272, %275 : vector<1x512xf32>
    %277 = vector.broadcast %276 : vector<1x512xf32> to vector<32x512xf32>
    %278 = arith.mulf %258, %277 : vector<32x512xf32>
    %c0_179 = arith.constant 0 : index
    %c0_180 = arith.constant 0 : index
    %279 = vector.load %arg4[%c0_179, %c0_180] : memref<1x512xf32, #tpu.memory_space<vmem>>, vector<1x512xf32>
    %280 = vector.broadcast %279 : vector<1x512xf32> to vector<32x512xf32>
    %281 = arith.addf %278, %280 : vector<32x512xf32>
    %cst_181 = arith.constant 0.000000e+00 : f32
    %282 = vector.broadcast %cst_181 : f32 to vector<32x512xf32>
    %283 = arith.maximumf %281, %282 : vector<32x512xf32>
    %c0_182 = arith.constant 0 : index
    %c0_183 = arith.constant 0 : index
    %c0_184 = arith.constant 0 : index
    %284 = vector.load %arg5[%c0_182, %c0_183, %c0_184] : memref<9x32x32xf32, #tpu.memory_space<vmem>>, vector<1x32x32xf32>
    %285 = vector.shape_cast %284 : vector<1x32x32xf32> to vector<32x32xf32>
    %c1_185 = arith.constant 1 : index
    %c0_186 = arith.constant 0 : index
    %c0_187 = arith.constant 0 : index
    %286 = vector.load %arg5[%c1_185, %c0_186, %c0_187] : memref<9x32x32xf32, #tpu.memory_space<vmem>>, vector<1x32x32xf32>
    %287 = vector.shape_cast %286 : vector<1x32x32xf32> to vector<32x32xf32>
    %c2_188 = arith.constant 2 : index
    %c0_189 = arith.constant 0 : index
    %c0_190 = arith.constant 0 : index
    %288 = vector.load %arg5[%c2_188, %c0_189, %c0_190] : memref<9x32x32xf32, #tpu.memory_space<vmem>>, vector<1x32x32xf32>
    %289 = vector.shape_cast %288 : vector<1x32x32xf32> to vector<32x32xf32>
    %290 = arith.addf %285, %289 : vector<32x32xf32>
    %291 = tpu.concatenate %287, %285 in 1 : vector<32x32xf32>, vector<32x32xf32> -> vector<32x64xf32>
    %292 = arith.truncf %291 : vector<32x64xf32> to vector<32x64xbf16>
    %c0_191 = arith.constant 0 : index
    %c0_192 = arith.constant 0 : index
    %c0_193 = arith.constant 0 : index
    %293 = vector.load %arg9[%c0_191, %c0_192, %c0_193] : memref<3x512x512xbf16, #tpu.memory_space<vmem>>, vector<1x32x64xbf16>
    %294 = vector.shape_cast %293 : vector<1x32x64xbf16> to vector<32x64xbf16>
    %295 = vector.shape_cast %292 : vector<32x64xbf16> to vector<1x32x64xbf16>
    tpu.vector_store %arg9[%c0_191, %c0_192, %c0_193], %295 {strides = array<i32>} : memref<3x512x512xbf16, #tpu.memory_space<vmem>>, vector<1x32x64xbf16>,
    %296 = tpu.concatenate %290, %287, %285 in 1 : vector<32x32xf32>, vector<32x32xf32>, vector<32x32xf32> -> vector<32x96xf32>
    %297 = arith.truncf %296 : vector<32x96xf32> to vector<32x96xbf16>
    %c0_194 = arith.constant 0 : index
    %c32_195 = arith.constant 32 : index
    %c0_196 = arith.constant 0 : index
    %298 = vector.load %arg9[%c0_194, %c32_195, %c0_196] : memref<3x512x512xbf16, #tpu.memory_space<vmem>>, vector<1x32x96xbf16>
    %299 = vector.shape_cast %298 : vector<1x32x96xbf16> to vector<32x96xbf16>
    %300 = vector.shape_cast %297 : vector<32x96xbf16> to vector<1x32x96xbf16>
    tpu.vector_store %arg9[%c0_194, %c32_195, %c0_196], %300 {strides = array<i32>} : memref<3x512x512xbf16, #tpu.memory_space<vmem>>, vector<1x32x96xbf16>,
    %301 = tpu.concatenate %289, %287, %285 in 1 : vector<32x32xf32>, vector<32x32xf32>, vector<32x32xf32> -> vector<32x96xf32>
    %302 = arith.truncf %301 : vector<32x96xf32> to vector<32x96xbf16>
    %c0_197 = arith.constant 0 : index
    %c64_198 = arith.constant 64 : index
    %c32_199 = arith.constant 32 : index
    %303 = vector.load %arg9[%c0_197, %c64_198, %c32_199] : memref<3x512x512xbf16, #tpu.memory_space<vmem>>, vector<1x32x96xbf16>
    %304 = vector.shape_cast %303 : vector<1x32x96xbf16> to vector<32x96xbf16>
    %305 = vector.shape_cast %302 : vector<32x96xbf16> to vector<1x32x96xbf16>
    tpu.vector_store %arg9[%c0_197, %c64_198, %c32_199], %305 {strides = array<i32>} : memref<3x512x512xbf16, #tpu.memory_space<vmem>>, vector<1x32x96xbf16>,
    %c0_200 = arith.constant 0 : index
    %c96_201 = arith.constant 96 : index
    %c64_202 = arith.constant 64 : index
    %306 = vector.load %arg9[%c0_200, %c96_201, %c64_202] : memref<3x512x512xbf16, #tpu.memory_space<vmem>>, vector<1x32x96xbf16>
    %307 = vector.shape_cast %306 : vector<1x32x96xbf16> to vector<32x96xbf16>
    %308 = vector.shape_cast %302 : vector<32x96xbf16> to vector<1x32x96xbf16>
    tpu.vector_store %arg9[%c0_200, %c96_201, %c64_202], %308 {strides = array<i32>} : memref<3x512x512xbf16, #tpu.memory_space<vmem>>, vector<1x32x96xbf16>,
    %c0_203 = arith.constant 0 : index
    %c128_204 = arith.constant 128 : index
    %c96_205 = arith.constant 96 : index
    %309 = vector.load %arg9[%c0_203, %c128_204, %c96_205] : memref<3x512x512xbf16, #tpu.memory_space<vmem>>, vector<1x32x96xbf16>
    %310 = vector.shape_cast %309 : vector<1x32x96xbf16> to vector<32x96xbf16>
    %311 = vector.shape_cast %302 : vector<32x96xbf16> to vector<1x32x96xbf16>
    tpu.vector_store %arg9[%c0_203, %c128_204, %c96_205], %311 {strides = array<i32>} : memref<3x512x512xbf16, #tpu.memory_space<vmem>>, vector<1x32x96xbf16>,
    %c0_206 = arith.constant 0 : index
    %c160_207 = arith.constant 160 : index
    %c128_208 = arith.constant 128 : index
    %312 = vector.load %arg9[%c0_206, %c160_207, %c128_208] : memref<3x512x512xbf16, #tpu.memory_space<vmem>>, vector<1x32x96xbf16>
    %313 = vector.shape_cast %312 : vector<1x32x96xbf16> to vector<32x96xbf16>
    %314 = vector.shape_cast %302 : vector<32x96xbf16> to vector<1x32x96xbf16>
    tpu.vector_store %arg9[%c0_206, %c160_207, %c128_208], %314 {strides = array<i32>} : memref<3x512x512xbf16, #tpu.memory_space<vmem>>, vector<1x32x96xbf16>,
    %c0_209 = arith.constant 0 : index
    %c192_210 = arith.constant 192 : index
    %c160_211 = arith.constant 160 : index
    %315 = vector.load %arg9[%c0_209, %c192_210, %c160_211] : memref<3x512x512xbf16, #tpu.memory_space<vmem>>, vector<1x32x96xbf16>
    %316 = vector.shape_cast %315 : vector<1x32x96xbf16> to vector<32x96xbf16>
    %317 = vector.shape_cast %302 : vector<32x96xbf16> to vector<1x32x96xbf16>
    tpu.vector_store %arg9[%c0_209, %c192_210, %c160_211], %317 {strides = array<i32>} : memref<3x512x512xbf16, #tpu.memory_space<vmem>>, vector<1x32x96xbf16>,
    %c0_212 = arith.constant 0 : index
    %c224_213 = arith.constant 224 : index
    %c192_214 = arith.constant 192 : index
    %318 = vector.load %arg9[%c0_212, %c224_213, %c192_214] : memref<3x512x512xbf16, #tpu.memory_space<vmem>>, vector<1x32x96xbf16>
    %319 = vector.shape_cast %318 : vector<1x32x96xbf16> to vector<32x96xbf16>
    %320 = vector.shape_cast %302 : vector<32x96xbf16> to vector<1x32x96xbf16>
    tpu.vector_store %arg9[%c0_212, %c224_213, %c192_214], %320 {strides = array<i32>} : memref<3x512x512xbf16, #tpu.memory_space<vmem>>, vector<1x32x96xbf16>,
    %c0_215 = arith.constant 0 : index
    %c256_216 = arith.constant 256 : index
    %c224_217 = arith.constant 224 : index
    %321 = vector.load %arg9[%c0_215, %c256_216, %c224_217] : memref<3x512x512xbf16, #tpu.memory_space<vmem>>, vector<1x32x96xbf16>
    %322 = vector.shape_cast %321 : vector<1x32x96xbf16> to vector<32x96xbf16>
    %323 = vector.shape_cast %302 : vector<32x96xbf16> to vector<1x32x96xbf16>
    tpu.vector_store %arg9[%c0_215, %c256_216, %c224_217], %323 {strides = array<i32>} : memref<3x512x512xbf16, #tpu.memory_space<vmem>>, vector<1x32x96xbf16>,
    %c0_218 = arith.constant 0 : index
    %c288_219 = arith.constant 288 : index
    %c256_220 = arith.constant 256 : index
    %324 = vector.load %arg9[%c0_218, %c288_219, %c256_220] : memref<3x512x512xbf16, #tpu.memory_space<vmem>>, vector<1x32x96xbf16>
    %325 = vector.shape_cast %324 : vector<1x32x96xbf16> to vector<32x96xbf16>
    %326 = vector.shape_cast %302 : vector<32x96xbf16> to vector<1x32x96xbf16>
    tpu.vector_store %arg9[%c0_218, %c288_219, %c256_220], %326 {strides = array<i32>} : memref<3x512x512xbf16, #tpu.memory_space<vmem>>, vector<1x32x96xbf16>,
    %c0_221 = arith.constant 0 : index
    %c320_222 = arith.constant 320 : index
    %c288_223 = arith.constant 288 : index
    %327 = vector.load %arg9[%c0_221, %c320_222, %c288_223] : memref<3x512x512xbf16, #tpu.memory_space<vmem>>, vector<1x32x96xbf16>
    %328 = vector.shape_cast %327 : vector<1x32x96xbf16> to vector<32x96xbf16>
    %329 = vector.shape_cast %302 : vector<32x96xbf16> to vector<1x32x96xbf16>
    tpu.vector_store %arg9[%c0_221, %c320_222, %c288_223], %329 {strides = array<i32>} : memref<3x512x512xbf16, #tpu.memory_space<vmem>>, vector<1x32x96xbf16>,
    %c0_224 = arith.constant 0 : index
    %c352_225 = arith.constant 352 : index
    %c320_226 = arith.constant 320 : index
    %330 = vector.load %arg9[%c0_224, %c352_225, %c320_226] : memref<3x512x512xbf16, #tpu.memory_space<vmem>>, vector<1x32x96xbf16>
    %331 = vector.shape_cast %330 : vector<1x32x96xbf16> to vector<32x96xbf16>
    %332 = vector.shape_cast %302 : vector<32x96xbf16> to vector<1x32x96xbf16>
    tpu.vector_store %arg9[%c0_224, %c352_225, %c320_226], %332 {strides = array<i32>} : memref<3x512x512xbf16, #tpu.memory_space<vmem>>, vector<1x32x96xbf16>,
    %c0_227 = arith.constant 0 : index
    %c384_228 = arith.constant 384 : index
    %c352_229 = arith.constant 352 : index
    %333 = vector.load %arg9[%c0_227, %c384_228, %c352_229] : memref<3x512x512xbf16, #tpu.memory_space<vmem>>, vector<1x32x96xbf16>
    %334 = vector.shape_cast %333 : vector<1x32x96xbf16> to vector<32x96xbf16>
    %335 = vector.shape_cast %302 : vector<32x96xbf16> to vector<1x32x96xbf16>
    tpu.vector_store %arg9[%c0_227, %c384_228, %c352_229], %335 {strides = array<i32>} : memref<3x512x512xbf16, #tpu.memory_space<vmem>>, vector<1x32x96xbf16>,
    %c0_230 = arith.constant 0 : index
    %c416_231 = arith.constant 416 : index
    %c384_232 = arith.constant 384 : index
    %336 = vector.load %arg9[%c0_230, %c416_231, %c384_232] : memref<3x512x512xbf16, #tpu.memory_space<vmem>>, vector<1x32x96xbf16>
    %337 = vector.shape_cast %336 : vector<1x32x96xbf16> to vector<32x96xbf16>
    %338 = vector.shape_cast %302 : vector<32x96xbf16> to vector<1x32x96xbf16>
    tpu.vector_store %arg9[%c0_230, %c416_231, %c384_232], %338 {strides = array<i32>} : memref<3x512x512xbf16, #tpu.memory_space<vmem>>, vector<1x32x96xbf16>,
    %339 = tpu.concatenate %289, %287, %290 in 1 : vector<32x32xf32>, vector<32x32xf32>, vector<32x32xf32> -> vector<32x96xf32>
    %340 = arith.truncf %339 : vector<32x96xf32> to vector<32x96xbf16>
    %c0_233 = arith.constant 0 : index
    %c448_234 = arith.constant 448 : index
    %c416_235 = arith.constant 416 : index
    %341 = vector.load %arg9[%c0_233, %c448_234, %c416_235] : memref<3x512x512xbf16, #tpu.memory_space<vmem>>, vector<1x32x96xbf16>
    %342 = vector.shape_cast %341 : vector<1x32x96xbf16> to vector<32x96xbf16>
    %343 = vector.shape_cast %340 : vector<32x96xbf16> to vector<1x32x96xbf16>
    tpu.vector_store %arg9[%c0_233, %c448_234, %c416_235], %343 {strides = array<i32>} : memref<3x512x512xbf16, #tpu.memory_space<vmem>>, vector<1x32x96xbf16>,
    %344 = tpu.concatenate %289, %287 in 1 : vector<32x32xf32>, vector<32x32xf32> -> vector<32x64xf32>
    %345 = arith.truncf %344 : vector<32x64xf32> to vector<32x64xbf16>
    %c0_236 = arith.constant 0 : index
    %c480_237 = arith.constant 480 : index
    %c448_238 = arith.constant 448 : index
    %346 = vector.load %arg9[%c0_236, %c480_237, %c448_238] : memref<3x512x512xbf16, #tpu.memory_space<vmem>>, vector<1x32x64xbf16>
    %347 = vector.shape_cast %346 : vector<1x32x64xbf16> to vector<32x64xbf16>
    %348 = vector.shape_cast %345 : vector<32x64xbf16> to vector<1x32x64xbf16>
    tpu.vector_store %arg9[%c0_236, %c480_237, %c448_238], %348 {strides = array<i32>} : memref<3x512x512xbf16, #tpu.memory_space<vmem>>, vector<1x32x64xbf16>,
    %c3_239 = arith.constant 3 : index
    %c0_240 = arith.constant 0 : index
    %c0_241 = arith.constant 0 : index
    %349 = vector.load %arg5[%c3_239, %c0_240, %c0_241] : memref<9x32x32xf32, #tpu.memory_space<vmem>>, vector<1x32x32xf32>
    %350 = vector.shape_cast %349 : vector<1x32x32xf32> to vector<32x32xf32>
    %c4_242 = arith.constant 4 : index
    %c0_243 = arith.constant 0 : index
    %c0_244 = arith.constant 0 : index
    %351 = vector.load %arg5[%c4_242, %c0_243, %c0_244] : memref<9x32x32xf32, #tpu.memory_space<vmem>>, vector<1x32x32xf32>
    %352 = vector.shape_cast %351 : vector<1x32x32xf32> to vector<32x32xf32>
    %c5_245 = arith.constant 5 : index
    %c0_246 = arith.constant 0 : index
    %c0_247 = arith.constant 0 : index
    %353 = vector.load %arg5[%c5_245, %c0_246, %c0_247] : memref<9x32x32xf32, #tpu.memory_space<vmem>>, vector<1x32x32xf32>
    %354 = vector.shape_cast %353 : vector<1x32x32xf32> to vector<32x32xf32>
    %355 = arith.addf %350, %354 : vector<32x32xf32>
    %356 = tpu.concatenate %352, %350 in 1 : vector<32x32xf32>, vector<32x32xf32> -> vector<32x64xf32>
    %357 = arith.truncf %356 : vector<32x64xf32> to vector<32x64xbf16>
    %c1_248 = arith.constant 1 : index
    %c0_249 = arith.constant 0 : index
    %c0_250 = arith.constant 0 : index
    %358 = vector.load %arg9[%c1_248, %c0_249, %c0_250] : memref<3x512x512xbf16, #tpu.memory_space<vmem>>, vector<1x32x64xbf16>
    %359 = vector.shape_cast %358 : vector<1x32x64xbf16> to vector<32x64xbf16>
    %360 = vector.shape_cast %357 : vector<32x64xbf16> to vector<1x32x64xbf16>
    tpu.vector_store %arg9[%c1_248, %c0_249, %c0_250], %360 {strides = array<i32>} : memref<3x512x512xbf16, #tpu.memory_space<vmem>>, vector<1x32x64xbf16>,
    %361 = tpu.concatenate %355, %352, %350 in 1 : vector<32x32xf32>, vector<32x32xf32>, vector<32x32xf32> -> vector<32x96xf32>
    %362 = arith.truncf %361 : vector<32x96xf32> to vector<32x96xbf16>
    %c1_251 = arith.constant 1 : index
    %c32_252 = arith.constant 32 : index
    %c0_253 = arith.constant 0 : index
    %363 = vector.load %arg9[%c1_251, %c32_252, %c0_253] : memref<3x512x512xbf16, #tpu.memory_space<vmem>>, vector<1x32x96xbf16>
    %364 = vector.shape_cast %363 : vector<1x32x96xbf16> to vector<32x96xbf16>
    %365 = vector.shape_cast %362 : vector<32x96xbf16> to vector<1x32x96xbf16>
    tpu.vector_store %arg9[%c1_251, %c32_252, %c0_253], %365 {strides = array<i32>} : memref<3x512x512xbf16, #tpu.memory_space<vmem>>, vector<1x32x96xbf16>,
    %366 = tpu.concatenate %354, %352, %350 in 1 : vector<32x32xf32>, vector<32x32xf32>, vector<32x32xf32> -> vector<32x96xf32>
    %367 = arith.truncf %366 : vector<32x96xf32> to vector<32x96xbf16>
    %c1_254 = arith.constant 1 : index
    %c64_255 = arith.constant 64 : index
    %c32_256 = arith.constant 32 : index
    %368 = vector.load %arg9[%c1_254, %c64_255, %c32_256] : memref<3x512x512xbf16, #tpu.memory_space<vmem>>, vector<1x32x96xbf16>
    %369 = vector.shape_cast %368 : vector<1x32x96xbf16> to vector<32x96xbf16>
    %370 = vector.shape_cast %367 : vector<32x96xbf16> to vector<1x32x96xbf16>
    tpu.vector_store %arg9[%c1_254, %c64_255, %c32_256], %370 {strides = array<i32>} : memref<3x512x512xbf16, #tpu.memory_space<vmem>>, vector<1x32x96xbf16>,
    %c1_257 = arith.constant 1 : index
    %c96_258 = arith.constant 96 : index
    %c64_259 = arith.constant 64 : index
    %371 = vector.load %arg9[%c1_257, %c96_258, %c64_259] : memref<3x512x512xbf16, #tpu.memory_space<vmem>>, vector<1x32x96xbf16>
    %372 = vector.shape_cast %371 : vector<1x32x96xbf16> to vector<32x96xbf16>
    %373 = vector.shape_cast %367 : vector<32x96xbf16> to vector<1x32x96xbf16>
    tpu.vector_store %arg9[%c1_257, %c96_258, %c64_259], %373 {strides = array<i32>} : memref<3x512x512xbf16, #tpu.memory_space<vmem>>, vector<1x32x96xbf16>,
    %c1_260 = arith.constant 1 : index
    %c128_261 = arith.constant 128 : index
    %c96_262 = arith.constant 96 : index
    %374 = vector.load %arg9[%c1_260, %c128_261, %c96_262] : memref<3x512x512xbf16, #tpu.memory_space<vmem>>, vector<1x32x96xbf16>
    %375 = vector.shape_cast %374 : vector<1x32x96xbf16> to vector<32x96xbf16>
    %376 = vector.shape_cast %367 : vector<32x96xbf16> to vector<1x32x96xbf16>
    tpu.vector_store %arg9[%c1_260, %c128_261, %c96_262], %376 {strides = array<i32>} : memref<3x512x512xbf16, #tpu.memory_space<vmem>>, vector<1x32x96xbf16>,
    %c1_263 = arith.constant 1 : index
    %c160_264 = arith.constant 160 : index
    %c128_265 = arith.constant 128 : index
    %377 = vector.load %arg9[%c1_263, %c160_264, %c128_265] : memref<3x512x512xbf16, #tpu.memory_space<vmem>>, vector<1x32x96xbf16>
    %378 = vector.shape_cast %377 : vector<1x32x96xbf16> to vector<32x96xbf16>
    %379 = vector.shape_cast %367 : vector<32x96xbf16> to vector<1x32x96xbf16>
    tpu.vector_store %arg9[%c1_263, %c160_264, %c128_265], %379 {strides = array<i32>} : memref<3x512x512xbf16, #tpu.memory_space<vmem>>, vector<1x32x96xbf16>,
    %c1_266 = arith.constant 1 : index
    %c192_267 = arith.constant 192 : index
    %c160_268 = arith.constant 160 : index
    %380 = vector.load %arg9[%c1_266, %c192_267, %c160_268] : memref<3x512x512xbf16, #tpu.memory_space<vmem>>, vector<1x32x96xbf16>
    %381 = vector.shape_cast %380 : vector<1x32x96xbf16> to vector<32x96xbf16>
    %382 = vector.shape_cast %367 : vector<32x96xbf16> to vector<1x32x96xbf16>
    tpu.vector_store %arg9[%c1_266, %c192_267, %c160_268], %382 {strides = array<i32>} : memref<3x512x512xbf16, #tpu.memory_space<vmem>>, vector<1x32x96xbf16>,
    %c1_269 = arith.constant 1 : index
    %c224_270 = arith.constant 224 : index
    %c192_271 = arith.constant 192 : index
    %383 = vector.load %arg9[%c1_269, %c224_270, %c192_271] : memref<3x512x512xbf16, #tpu.memory_space<vmem>>, vector<1x32x96xbf16>
    %384 = vector.shape_cast %383 : vector<1x32x96xbf16> to vector<32x96xbf16>
    %385 = vector.shape_cast %367 : vector<32x96xbf16> to vector<1x32x96xbf16>
    tpu.vector_store %arg9[%c1_269, %c224_270, %c192_271], %385 {strides = array<i32>} : memref<3x512x512xbf16, #tpu.memory_space<vmem>>, vector<1x32x96xbf16>,
    %c1_272 = arith.constant 1 : index
    %c256_273 = arith.constant 256 : index
    %c224_274 = arith.constant 224 : index
    %386 = vector.load %arg9[%c1_272, %c256_273, %c224_274] : memref<3x512x512xbf16, #tpu.memory_space<vmem>>, vector<1x32x96xbf16>
    %387 = vector.shape_cast %386 : vector<1x32x96xbf16> to vector<32x96xbf16>
    %388 = vector.shape_cast %367 : vector<32x96xbf16> to vector<1x32x96xbf16>
    tpu.vector_store %arg9[%c1_272, %c256_273, %c224_274], %388 {strides = array<i32>} : memref<3x512x512xbf16, #tpu.memory_space<vmem>>, vector<1x32x96xbf16>,
    %c1_275 = arith.constant 1 : index
    %c288_276 = arith.constant 288 : index
    %c256_277 = arith.constant 256 : index
    %389 = vector.load %arg9[%c1_275, %c288_276, %c256_277] : memref<3x512x512xbf16, #tpu.memory_space<vmem>>, vector<1x32x96xbf16>
    %390 = vector.shape_cast %389 : vector<1x32x96xbf16> to vector<32x96xbf16>
    %391 = vector.shape_cast %367 : vector<32x96xbf16> to vector<1x32x96xbf16>
    tpu.vector_store %arg9[%c1_275, %c288_276, %c256_277], %391 {strides = array<i32>} : memref<3x512x512xbf16, #tpu.memory_space<vmem>>, vector<1x32x96xbf16>,
    %c1_278 = arith.constant 1 : index
    %c320_279 = arith.constant 320 : index
    %c288_280 = arith.constant 288 : index
    %392 = vector.load %arg9[%c1_278, %c320_279, %c288_280] : memref<3x512x512xbf16, #tpu.memory_space<vmem>>, vector<1x32x96xbf16>
    %393 = vector.shape_cast %392 : vector<1x32x96xbf16> to vector<32x96xbf16>
    %394 = vector.shape_cast %367 : vector<32x96xbf16> to vector<1x32x96xbf16>
    tpu.vector_store %arg9[%c1_278, %c320_279, %c288_280], %394 {strides = array<i32>} : memref<3x512x512xbf16, #tpu.memory_space<vmem>>, vector<1x32x96xbf16>,
    %c1_281 = arith.constant 1 : index
    %c352_282 = arith.constant 352 : index
    %c320_283 = arith.constant 320 : index
    %395 = vector.load %arg9[%c1_281, %c352_282, %c320_283] : memref<3x512x512xbf16, #tpu.memory_space<vmem>>, vector<1x32x96xbf16>
    %396 = vector.shape_cast %395 : vector<1x32x96xbf16> to vector<32x96xbf16>
    %397 = vector.shape_cast %367 : vector<32x96xbf16> to vector<1x32x96xbf16>
    tpu.vector_store %arg9[%c1_281, %c352_282, %c320_283], %397 {strides = array<i32>} : memref<3x512x512xbf16, #tpu.memory_space<vmem>>, vector<1x32x96xbf16>,
    %c1_284 = arith.constant 1 : index
    %c384_285 = arith.constant 384 : index
    %c352_286 = arith.constant 352 : index
    %398 = vector.load %arg9[%c1_284, %c384_285, %c352_286] : memref<3x512x512xbf16, #tpu.memory_space<vmem>>, vector<1x32x96xbf16>
    %399 = vector.shape_cast %398 : vector<1x32x96xbf16> to vector<32x96xbf16>
    %400 = vector.shape_cast %367 : vector<32x96xbf16> to vector<1x32x96xbf16>
    tpu.vector_store %arg9[%c1_284, %c384_285, %c352_286], %400 {strides = array<i32>} : memref<3x512x512xbf16, #tpu.memory_space<vmem>>, vector<1x32x96xbf16>,
    %c1_287 = arith.constant 1 : index
    %c416_288 = arith.constant 416 : index
    %c384_289 = arith.constant 384 : index
    %401 = vector.load %arg9[%c1_287, %c416_288, %c384_289] : memref<3x512x512xbf16, #tpu.memory_space<vmem>>, vector<1x32x96xbf16>
    %402 = vector.shape_cast %401 : vector<1x32x96xbf16> to vector<32x96xbf16>
    %403 = vector.shape_cast %367 : vector<32x96xbf16> to vector<1x32x96xbf16>
    tpu.vector_store %arg9[%c1_287, %c416_288, %c384_289], %403 {strides = array<i32>} : memref<3x512x512xbf16, #tpu.memory_space<vmem>>, vector<1x32x96xbf16>,
    %404 = tpu.concatenate %354, %352, %355 in 1 : vector<32x32xf32>, vector<32x32xf32>, vector<32x32xf32> -> vector<32x96xf32>
    %405 = arith.truncf %404 : vector<32x96xf32> to vector<32x96xbf16>
    %c1_290 = arith.constant 1 : index
    %c448_291 = arith.constant 448 : index
    %c416_292 = arith.constant 416 : index
    %406 = vector.load %arg9[%c1_290, %c448_291, %c416_292] : memref<3x512x512xbf16, #tpu.memory_space<vmem>>, vector<1x32x96xbf16>
    %407 = vector.shape_cast %406 : vector<1x32x96xbf16> to vector<32x96xbf16>
    %408 = vector.shape_cast %405 : vector<32x96xbf16> to vector<1x32x96xbf16>
    tpu.vector_store %arg9[%c1_290, %c448_291, %c416_292], %408 {strides = array<i32>} : memref<3x512x512xbf16, #tpu.memory_space<vmem>>, vector<1x32x96xbf16>,
    %409 = tpu.concatenate %354, %352 in 1 : vector<32x32xf32>, vector<32x32xf32> -> vector<32x64xf32>
    %410 = arith.truncf %409 : vector<32x64xf32> to vector<32x64xbf16>
    %c1_293 = arith.constant 1 : index
    %c480_294 = arith.constant 480 : index
    %c448_295 = arith.constant 448 : index
    %411 = vector.load %arg9[%c1_293, %c480_294, %c448_295] : memref<3x512x512xbf16, #tpu.memory_space<vmem>>, vector<1x32x64xbf16>
    %412 = vector.shape_cast %411 : vector<1x32x64xbf16> to vector<32x64xbf16>
    %413 = vector.shape_cast %410 : vector<32x64xbf16> to vector<1x32x64xbf16>
    tpu.vector_store %arg9[%c1_293, %c480_294, %c448_295], %413 {strides = array<i32>} : memref<3x512x512xbf16, #tpu.memory_space<vmem>>, vector<1x32x64xbf16>,
    %c6_296 = arith.constant 6 : index
    %c0_297 = arith.constant 0 : index
    %c0_298 = arith.constant 0 : index
    %414 = vector.load %arg5[%c6_296, %c0_297, %c0_298] : memref<9x32x32xf32, #tpu.memory_space<vmem>>, vector<1x32x32xf32>
    %415 = vector.shape_cast %414 : vector<1x32x32xf32> to vector<32x32xf32>
    %c7_299 = arith.constant 7 : index
    %c0_300 = arith.constant 0 : index
    %c0_301 = arith.constant 0 : index
    %416 = vector.load %arg5[%c7_299, %c0_300, %c0_301] : memref<9x32x32xf32, #tpu.memory_space<vmem>>, vector<1x32x32xf32>
    %417 = vector.shape_cast %416 : vector<1x32x32xf32> to vector<32x32xf32>
    %c8_302 = arith.constant 8 : index
    %c0_303 = arith.constant 0 : index
    %c0_304 = arith.constant 0 : index
    %418 = vector.load %arg5[%c8_302, %c0_303, %c0_304] : memref<9x32x32xf32, #tpu.memory_space<vmem>>, vector<1x32x32xf32>
    %419 = vector.shape_cast %418 : vector<1x32x32xf32> to vector<32x32xf32>
    %420 = arith.addf %415, %419 : vector<32x32xf32>
    %421 = tpu.concatenate %417, %415 in 1 : vector<32x32xf32>, vector<32x32xf32> -> vector<32x64xf32>
    %422 = arith.truncf %421 : vector<32x64xf32> to vector<32x64xbf16>
    %c2_305 = arith.constant 2 : index
    %c0_306 = arith.constant 0 : index
    %c0_307 = arith.constant 0 : index
    %423 = vector.load %arg9[%c2_305, %c0_306, %c0_307] : memref<3x512x512xbf16, #tpu.memory_space<vmem>>, vector<1x32x64xbf16>
    %424 = vector.shape_cast %423 : vector<1x32x64xbf16> to vector<32x64xbf16>
    %425 = vector.shape_cast %422 : vector<32x64xbf16> to vector<1x32x64xbf16>
    tpu.vector_store %arg9[%c2_305, %c0_306, %c0_307], %425 {strides = array<i32>} : memref<3x512x512xbf16, #tpu.memory_space<vmem>>, vector<1x32x64xbf16>,
    %426 = tpu.concatenate %420, %417, %415 in 1 : vector<32x32xf32>, vector<32x32xf32>, vector<32x32xf32> -> vector<32x96xf32>
    %427 = arith.truncf %426 : vector<32x96xf32> to vector<32x96xbf16>
    %c2_308 = arith.constant 2 : index
    %c32_309 = arith.constant 32 : index
    %c0_310 = arith.constant 0 : index
    %428 = vector.load %arg9[%c2_308, %c32_309, %c0_310] : memref<3x512x512xbf16, #tpu.memory_space<vmem>>, vector<1x32x96xbf16>
    %429 = vector.shape_cast %428 : vector<1x32x96xbf16> to vector<32x96xbf16>
    %430 = vector.shape_cast %427 : vector<32x96xbf16> to vector<1x32x96xbf16>
    tpu.vector_store %arg9[%c2_308, %c32_309, %c0_310], %430 {strides = array<i32>} : memref<3x512x512xbf16, #tpu.memory_space<vmem>>, vector<1x32x96xbf16>,
    %431 = tpu.concatenate %419, %417, %415 in 1 : vector<32x32xf32>, vector<32x32xf32>, vector<32x32xf32> -> vector<32x96xf32>
    %432 = arith.truncf %431 : vector<32x96xf32> to vector<32x96xbf16>
    %c2_311 = arith.constant 2 : index
    %c64_312 = arith.constant 64 : index
    %c32_313 = arith.constant 32 : index
    %433 = vector.load %arg9[%c2_311, %c64_312, %c32_313] : memref<3x512x512xbf16, #tpu.memory_space<vmem>>, vector<1x32x96xbf16>
    %434 = vector.shape_cast %433 : vector<1x32x96xbf16> to vector<32x96xbf16>
    %435 = vector.shape_cast %432 : vector<32x96xbf16> to vector<1x32x96xbf16>
    tpu.vector_store %arg9[%c2_311, %c64_312, %c32_313], %435 {strides = array<i32>} : memref<3x512x512xbf16, #tpu.memory_space<vmem>>, vector<1x32x96xbf16>,
    %c2_314 = arith.constant 2 : index
    %c96_315 = arith.constant 96 : index
    %c64_316 = arith.constant 64 : index
    %436 = vector.load %arg9[%c2_314, %c96_315, %c64_316] : memref<3x512x512xbf16, #tpu.memory_space<vmem>>, vector<1x32x96xbf16>
    %437 = vector.shape_cast %436 : vector<1x32x96xbf16> to vector<32x96xbf16>
    %438 = vector.shape_cast %432 : vector<32x96xbf16> to vector<1x32x96xbf16>
    tpu.vector_store %arg9[%c2_314, %c96_315, %c64_316], %438 {strides = array<i32>} : memref<3x512x512xbf16, #tpu.memory_space<vmem>>, vector<1x32x96xbf16>,
    %c2_317 = arith.constant 2 : index
    %c128_318 = arith.constant 128 : index
    %c96_319 = arith.constant 96 : index
    %439 = vector.load %arg9[%c2_317, %c128_318, %c96_319] : memref<3x512x512xbf16, #tpu.memory_space<vmem>>, vector<1x32x96xbf16>
    %440 = vector.shape_cast %439 : vector<1x32x96xbf16> to vector<32x96xbf16>
    %441 = vector.shape_cast %432 : vector<32x96xbf16> to vector<1x32x96xbf16>
    tpu.vector_store %arg9[%c2_317, %c128_318, %c96_319], %441 {strides = array<i32>} : memref<3x512x512xbf16, #tpu.memory_space<vmem>>, vector<1x32x96xbf16>,
    %c2_320 = arith.constant 2 : index
    %c160_321 = arith.constant 160 : index
    %c128_322 = arith.constant 128 : index
    %442 = vector.load %arg9[%c2_320, %c160_321, %c128_322] : memref<3x512x512xbf16, #tpu.memory_space<vmem>>, vector<1x32x96xbf16>
    %443 = vector.shape_cast %442 : vector<1x32x96xbf16> to vector<32x96xbf16>
    %444 = vector.shape_cast %432 : vector<32x96xbf16> to vector<1x32x96xbf16>
    tpu.vector_store %arg9[%c2_320, %c160_321, %c128_322], %444 {strides = array<i32>} : memref<3x512x512xbf16, #tpu.memory_space<vmem>>, vector<1x32x96xbf16>,
    %c2_323 = arith.constant 2 : index
    %c192_324 = arith.constant 192 : index
    %c160_325 = arith.constant 160 : index
    %445 = vector.load %arg9[%c2_323, %c192_324, %c160_325] : memref<3x512x512xbf16, #tpu.memory_space<vmem>>, vector<1x32x96xbf16>
    %446 = vector.shape_cast %445 : vector<1x32x96xbf16> to vector<32x96xbf16>
    %447 = vector.shape_cast %432 : vector<32x96xbf16> to vector<1x32x96xbf16>
    tpu.vector_store %arg9[%c2_323, %c192_324, %c160_325], %447 {strides = array<i32>} : memref<3x512x512xbf16, #tpu.memory_space<vmem>>, vector<1x32x96xbf16>,
    %c2_326 = arith.constant 2 : index
    %c224_327 = arith.constant 224 : index
    %c192_328 = arith.constant 192 : index
    %448 = vector.load %arg9[%c2_326, %c224_327, %c192_328] : memref<3x512x512xbf16, #tpu.memory_space<vmem>>, vector<1x32x96xbf16>
    %449 = vector.shape_cast %448 : vector<1x32x96xbf16> to vector<32x96xbf16>
    %450 = vector.shape_cast %432 : vector<32x96xbf16> to vector<1x32x96xbf16>
    tpu.vector_store %arg9[%c2_326, %c224_327, %c192_328], %450 {strides = array<i32>} : memref<3x512x512xbf16, #tpu.memory_space<vmem>>, vector<1x32x96xbf16>,
    %c2_329 = arith.constant 2 : index
    %c256_330 = arith.constant 256 : index
    %c224_331 = arith.constant 224 : index
    %451 = vector.load %arg9[%c2_329, %c256_330, %c224_331] : memref<3x512x512xbf16, #tpu.memory_space<vmem>>, vector<1x32x96xbf16>
    %452 = vector.shape_cast %451 : vector<1x32x96xbf16> to vector<32x96xbf16>
    %453 = vector.shape_cast %432 : vector<32x96xbf16> to vector<1x32x96xbf16>
    tpu.vector_store %arg9[%c2_329, %c256_330, %c224_331], %453 {strides = array<i32>} : memref<3x512x512xbf16, #tpu.memory_space<vmem>>, vector<1x32x96xbf16>,
    %c2_332 = arith.constant 2 : index
    %c288_333 = arith.constant 288 : index
    %c256_334 = arith.constant 256 : index
    %454 = vector.load %arg9[%c2_332, %c288_333, %c256_334] : memref<3x512x512xbf16, #tpu.memory_space<vmem>>, vector<1x32x96xbf16>
    %455 = vector.shape_cast %454 : vector<1x32x96xbf16> to vector<32x96xbf16>
    %456 = vector.shape_cast %432 : vector<32x96xbf16> to vector<1x32x96xbf16>
    tpu.vector_store %arg9[%c2_332, %c288_333, %c256_334], %456 {strides = array<i32>} : memref<3x512x512xbf16, #tpu.memory_space<vmem>>, vector<1x32x96xbf16>,
    %c2_335 = arith.constant 2 : index
    %c320_336 = arith.constant 320 : index
    %c288_337 = arith.constant 288 : index
    %457 = vector.load %arg9[%c2_335, %c320_336, %c288_337] : memref<3x512x512xbf16, #tpu.memory_space<vmem>>, vector<1x32x96xbf16>
    %458 = vector.shape_cast %457 : vector<1x32x96xbf16> to vector<32x96xbf16>
    %459 = vector.shape_cast %432 : vector<32x96xbf16> to vector<1x32x96xbf16>
    tpu.vector_store %arg9[%c2_335, %c320_336, %c288_337], %459 {strides = array<i32>} : memref<3x512x512xbf16, #tpu.memory_space<vmem>>, vector<1x32x96xbf16>,
    %c2_338 = arith.constant 2 : index
    %c352_339 = arith.constant 352 : index
    %c320_340 = arith.constant 320 : index
    %460 = vector.load %arg9[%c2_338, %c352_339, %c320_340] : memref<3x512x512xbf16, #tpu.memory_space<vmem>>, vector<1x32x96xbf16>
    %461 = vector.shape_cast %460 : vector<1x32x96xbf16> to vector<32x96xbf16>
    %462 = vector.shape_cast %432 : vector<32x96xbf16> to vector<1x32x96xbf16>
    tpu.vector_store %arg9[%c2_338, %c352_339, %c320_340], %462 {strides = array<i32>} : memref<3x512x512xbf16, #tpu.memory_space<vmem>>, vector<1x32x96xbf16>,
    %c2_341 = arith.constant 2 : index
    %c384_342 = arith.constant 384 : index
    %c352_343 = arith.constant 352 : index
    %463 = vector.load %arg9[%c2_341, %c384_342, %c352_343] : memref<3x512x512xbf16, #tpu.memory_space<vmem>>, vector<1x32x96xbf16>
    %464 = vector.shape_cast %463 : vector<1x32x96xbf16> to vector<32x96xbf16>
    %465 = vector.shape_cast %432 : vector<32x96xbf16> to vector<1x32x96xbf16>
    tpu.vector_store %arg9[%c2_341, %c384_342, %c352_343], %465 {strides = array<i32>} : memref<3x512x512xbf16, #tpu.memory_space<vmem>>, vector<1x32x96xbf16>,
    %c2_344 = arith.constant 2 : index
    %c416_345 = arith.constant 416 : index
    %c384_346 = arith.constant 384 : index
    %466 = vector.load %arg9[%c2_344, %c416_345, %c384_346] : memref<3x512x512xbf16, #tpu.memory_space<vmem>>, vector<1x32x96xbf16>
    %467 = vector.shape_cast %466 : vector<1x32x96xbf16> to vector<32x96xbf16>
    %468 = vector.shape_cast %432 : vector<32x96xbf16> to vector<1x32x96xbf16>
    tpu.vector_store %arg9[%c2_344, %c416_345, %c384_346], %468 {strides = array<i32>} : memref<3x512x512xbf16, #tpu.memory_space<vmem>>, vector<1x32x96xbf16>,
    %469 = tpu.concatenate %419, %417, %420 in 1 : vector<32x32xf32>, vector<32x32xf32>, vector<32x32xf32> -> vector<32x96xf32>
    %470 = arith.truncf %469 : vector<32x96xf32> to vector<32x96xbf16>
    %c2_347 = arith.constant 2 : index
    %c448_348 = arith.constant 448 : index
    %c416_349 = arith.constant 416 : index
    %471 = vector.load %arg9[%c2_347, %c448_348, %c416_349] : memref<3x512x512xbf16, #tpu.memory_space<vmem>>, vector<1x32x96xbf16>
    %472 = vector.shape_cast %471 : vector<1x32x96xbf16> to vector<32x96xbf16>
    %473 = vector.shape_cast %470 : vector<32x96xbf16> to vector<1x32x96xbf16>
    tpu.vector_store %arg9[%c2_347, %c448_348, %c416_349], %473 {strides = array<i32>} : memref<3x512x512xbf16, #tpu.memory_space<vmem>>, vector<1x32x96xbf16>,
    %474 = tpu.concatenate %419, %417 in 1 : vector<32x32xf32>, vector<32x32xf32> -> vector<32x64xf32>
    %475 = arith.truncf %474 : vector<32x64xf32> to vector<32x64xbf16>
    %c2_350 = arith.constant 2 : index
    %c480_351 = arith.constant 480 : index
    %c448_352 = arith.constant 448 : index
    %476 = vector.load %arg9[%c2_350, %c480_351, %c448_352] : memref<3x512x512xbf16, #tpu.memory_space<vmem>>, vector<1x32x64xbf16>
    %477 = vector.shape_cast %476 : vector<1x32x64xbf16> to vector<32x64xbf16>
    %478 = vector.shape_cast %475 : vector<32x64xbf16> to vector<1x32x64xbf16>
    tpu.vector_store %arg9[%c2_350, %c480_351, %c448_352], %478 {strides = array<i32>} : memref<3x512x512xbf16, #tpu.memory_space<vmem>>, vector<1x32x64xbf16>,
    %479 = arith.truncf %283 : vector<32x512xf32> to vector<32x512xbf16>
    %c0_353 = arith.constant 0 : index
    %c0_354 = arith.constant 0 : index
    %c0_355 = arith.constant 0 : index
    %480 = vector.load %arg9[%c0_353, %c0_354, %c0_355] : memref<3x512x512xbf16, #tpu.memory_space<vmem>>, vector<1x512x512xbf16>
    %481 = vector.shape_cast %480 : vector<1x512x512xbf16> to vector<512x512xbf16>
    %cst_356 = arith.constant dense<0.000000e+00> : vector<32x512xf32>
    %482 = tpu.matmul %479, %481, %cst_356 {dimension_numbers = #tpu.dot_dimension_numbers<[1], [0], [0], [1], [0, 0, 1, 1], [], []>} : vector<32x512xbf16>, vector<512x512xbf16>, vector<32x512xf32> -> vector<32x512xf32>
    %c1_357 = arith.constant 1 : index
    %c0_358 = arith.constant 0 : index
    %c0_359 = arith.constant 0 : index
    %483 = vector.load %arg9[%c1_357, %c0_358, %c0_359] : memref<3x512x512xbf16, #tpu.memory_space<vmem>>, vector<1x512x512xbf16>
    %484 = vector.shape_cast %483 : vector<1x512x512xbf16> to vector<512x512xbf16>
    %cst_360 = arith.constant dense<0.000000e+00> : vector<32x512xf32>
    %485 = tpu.matmul %479, %484, %cst_360 {dimension_numbers = #tpu.dot_dimension_numbers<[1], [0], [0], [1], [0, 0, 1, 1], [], []>} : vector<32x512xbf16>, vector<512x512xbf16>, vector<32x512xf32> -> vector<32x512xf32>
    %c2_361 = arith.constant 2 : index
    %c0_362 = arith.constant 0 : index
    %c0_363 = arith.constant 0 : index
    %486 = vector.load %arg9[%c2_361, %c0_362, %c0_363] : memref<3x512x512xbf16, #tpu.memory_space<vmem>>, vector<1x512x512xbf16>
    %487 = vector.shape_cast %486 : vector<1x512x512xbf16> to vector<512x512xbf16>
    %cst_364 = arith.constant dense<0.000000e+00> : vector<32x512xf32>
    %488 = tpu.matmul %479, %487, %cst_364 {dimension_numbers = #tpu.dot_dimension_numbers<[1], [0], [0], [1], [0, 0, 1, 1], [], []>} : vector<32x512xbf16>, vector<512x512xbf16>, vector<32x512xf32> -> vector<32x512xf32>
    %489 = vector.extract_strided_slice %482 {offsets = [1, 0], sizes = [31, 512], strides = [1, 1]} : vector<32x512xf32> to vector<31x512xf32>
    %490 = vector.extract_strided_slice %482 {offsets = [0, 0], sizes = [1, 512], strides = [1, 1]} : vector<32x512xf32> to vector<1x512xf32>
    %491 = tpu.concatenate %489, %490 in 0 : vector<31x512xf32>, vector<1x512xf32> -> vector<32x512xf32>
    %492 = vector.extract_strided_slice %482 {offsets = [31, 0], sizes = [1, 512], strides = [1, 1]} : vector<32x512xf32> to vector<1x512xf32>
    %493 = vector.extract_strided_slice %482 {offsets = [0, 0], sizes = [31, 512], strides = [1, 1]} : vector<32x512xf32> to vector<31x512xf32>
    %494 = tpu.concatenate %492, %493 in 0 : vector<1x512xf32>, vector<31x512xf32> -> vector<32x512xf32>
    %495 = arith.select %18, %491, %494 : vector<32x512xi1>, vector<32x512xf32>
    %496 = vector.extract_strided_slice %488 {offsets = [31, 0], sizes = [1, 512], strides = [1, 1]} : vector<32x512xf32> to vector<1x512xf32>
    %497 = vector.extract_strided_slice %488 {offsets = [0, 0], sizes = [31, 512], strides = [1, 1]} : vector<32x512xf32> to vector<31x512xf32>
    %498 = tpu.concatenate %496, %497 in 0 : vector<1x512xf32>, vector<31x512xf32> -> vector<32x512xf32>
    %499 = vector.extract_strided_slice %488 {offsets = [1, 0], sizes = [31, 512], strides = [1, 1]} : vector<32x512xf32> to vector<31x512xf32>
    %500 = vector.extract_strided_slice %488 {offsets = [0, 0], sizes = [1, 512], strides = [1, 1]} : vector<32x512xf32> to vector<1x512xf32>
    %501 = tpu.concatenate %499, %500 in 0 : vector<31x512xf32>, vector<1x512xf32> -> vector<32x512xf32>
    %502 = arith.select %20, %498, %501 : vector<32x512xi1>, vector<32x512xf32>
    %503 = arith.addf %495, %485 : vector<32x512xf32>
    %504 = arith.addf %503, %502 : vector<32x512xf32>
    %cst_365 = arith.constant dense<0.000000e+00> : vector<512xf32>
    %505 = vector.multi_reduction <add>, %504, %cst_365 [0] : vector<32x512xf32> to vector<512xf32>
    %506 = vector.shape_cast %505 : vector<512xf32> to vector<1x512xf32>
    %c256_i32_366 = arith.constant 256 : i32
    %507 = tpu.dynamic_rotate %506 by %c256_i32_366 dim 1 : vector<1x512xf32>, i32 -> vector<1x512xf32>
    %508 = arith.addf %506, %507 : vector<1x512xf32>
    %c128_i32_367 = arith.constant 128 : i32
    %509 = tpu.dynamic_rotate %508 by %c128_i32_367 dim 1 : vector<1x512xf32>, i32 -> vector<1x512xf32>
    %510 = arith.addf %508, %509 : vector<1x512xf32>
    %c64_i32_368 = arith.constant 64 : i32
    %511 = tpu.dynamic_rotate %510 by %c64_i32_368 dim 1 : vector<1x512xf32>, i32 -> vector<1x512xf32>
    %512 = arith.addf %510, %511 : vector<1x512xf32>
    %c32_i32_369 = arith.constant 32 : i32
    %513 = tpu.dynamic_rotate %512 by %c32_i32_369 dim 1 : vector<1x512xf32>, i32 -> vector<1x512xf32>
    %514 = arith.addf %512, %513 : vector<1x512xf32>
    %cst_370 = arith.constant 0.001953125 : f32
    %515 = vector.broadcast %cst_370 : f32 to vector<1x512xf32>
    %516 = arith.mulf %514, %515 : vector<1x512xf32>
    %517 = vector.broadcast %516 : vector<1x512xf32> to vector<32x512xf32>
    %518 = arith.subf %504, %517 : vector<32x512xf32>
    %519 = arith.mulf %518, %518 : vector<32x512xf32>
    %cst_371 = arith.constant dense<0.000000e+00> : vector<512xf32>
    %520 = vector.multi_reduction <add>, %519, %cst_371 [0] : vector<32x512xf32> to vector<512xf32>
    %521 = vector.shape_cast %520 : vector<512xf32> to vector<1x512xf32>
    %c256_i32_372 = arith.constant 256 : i32
    %522 = tpu.dynamic_rotate %521 by %c256_i32_372 dim 1 : vector<1x512xf32>, i32 -> vector<1x512xf32>
    %523 = arith.addf %521, %522 : vector<1x512xf32>
    %c128_i32_373 = arith.constant 128 : i32
    %524 = tpu.dynamic_rotate %523 by %c128_i32_373 dim 1 : vector<1x512xf32>, i32 -> vector<1x512xf32>
    %525 = arith.addf %523, %524 : vector<1x512xf32>
    %c64_i32_374 = arith.constant 64 : i32
    %526 = tpu.dynamic_rotate %525 by %c64_i32_374 dim 1 : vector<1x512xf32>, i32 -> vector<1x512xf32>
    %527 = arith.addf %525, %526 : vector<1x512xf32>
    %c32_i32_375 = arith.constant 32 : i32
    %528 = tpu.dynamic_rotate %527 by %c32_i32_375 dim 1 : vector<1x512xf32>, i32 -> vector<1x512xf32>
    %529 = arith.addf %527, %528 : vector<1x512xf32>
    %cst_376 = arith.constant 0.001953125 : f32
    %530 = vector.broadcast %cst_376 : f32 to vector<1x512xf32>
    %531 = arith.mulf %529, %530 : vector<1x512xf32>
    %c0_377 = arith.constant 0 : index
    %c0_378 = arith.constant 0 : index
    %532 = vector.load %arg6[%c0_377, %c0_378] : memref<1x512xf32, #tpu.memory_space<vmem>>, vector<1x512xf32>
    %cst_379 = arith.constant 9.99999974E-6 : f32
    %533 = vector.broadcast %cst_379 : f32 to vector<1x512xf32>
    %534 = arith.addf %531, %533 : vector<1x512xf32>
    %535 = math.rsqrt %534 : vector<1x512xf32>
    %536 = arith.mulf %532, %535 : vector<1x512xf32>
    %537 = vector.broadcast %536 : vector<1x512xf32> to vector<32x512xf32>
    %538 = arith.mulf %518, %537 : vector<32x512xf32>
    %c0_380 = arith.constant 0 : index
    %c0_381 = arith.constant 0 : index
    %539 = vector.load %arg7[%c0_380, %c0_381] : memref<1x512xf32, #tpu.memory_space<vmem>>, vector<1x512xf32>
    %540 = vector.broadcast %539 : vector<1x512xf32> to vector<32x512xf32>
    %541 = arith.addf %538, %540 : vector<32x512xf32>
    %c0_382 = arith.constant 0 : index
    %c0_383 = arith.constant 0 : index
    %542 = vector.load %arg1[%c0_382, %c0_383] : memref<32x512xf32, #tpu.memory_space<vmem>>, vector<32x512xf32>
    %543 = arith.addf %541, %542 : vector<32x512xf32>
    %c0_384 = arith.constant 0 : index
    %c0_385 = arith.constant 0 : index
    %544 = vector.load %arg8[%c0_384, %c0_385] : memref<32x512xf32, #tpu.memory_space<vmem>>, vector<32x512xf32>
    tpu.vector_store %arg8[%c0_384, %c0_385], %543 {strides = array<i32>} : memref<32x512xf32, #tpu.memory_space<vmem>>, vector<32x512xf32>,
    return
  }
  func.func @transform_0(%arg0: i32) -> (i32, i32) {
    %c0_i32 = arith.constant 0 : i32
    %c0_i32_0 = arith.constant 0 : i32
    %c0_i32_1 = arith.constant 0 : i32
    return %c0_i32, %c0_i32_0 : i32, i32
  }
  func.func @transform_1(%arg0: i32) -> (i32, i32, i32) {
    %c0_i32 = arith.constant 0 : i32
    %c0_i32_0 = arith.constant 0 : i32
    %c0_i32_1 = arith.constant 0 : i32
    %c0_i32_2 = arith.constant 0 : i32
    return %c0_i32, %c0_i32_0, %c0_i32_1 : i32, i32, i32
  }
  func.func @transform_2(%arg0: i32) -> (i32, i32) {
    %c0_i32 = arith.constant 0 : i32
    %c0_i32_0 = arith.constant 0 : i32
    %c0_i32_1 = arith.constant 0 : i32
    return %c0_i32, %c0_i32_0 : i32, i32
  }
  func.func @transform_3(%arg0: i32) -> (i32, i32) {
    %c0_i32 = arith.constant 0 : i32
    %c0_i32_0 = arith.constant 0 : i32
    %c0_i32_1 = arith.constant 0 : i32
    return %c0_i32, %c0_i32_0 : i32, i32
  }
  func.func @transform_4(%arg0: i32) -> (i32, i32, i32) {
    %c0_i32 = arith.constant 0 : i32
    %c0_i32_0 = arith.constant 0 : i32
    %c0_i32_1 = arith.constant 0 : i32
    %c0_i32_2 = arith.constant 0 : i32
    return %c0_i32, %c0_i32_0, %c0_i32_1 : i32, i32, i32
  }
  func.func @transform_5(%arg0: i32) -> (i32, i32) {
    %c0_i32 = arith.constant 0 : i32
    %c0_i32_0 = arith.constant 0 : i32
    %c0_i32_1 = arith.constant 0 : i32
    return %c0_i32, %c0_i32_0 : i32, i32
  }
  func.func @transform_6(%arg0: i32) -> (i32, i32) {
    %c0_i32 = arith.constant 0 : i32
    %c0_i32_0 = arith.constant 0 : i32
    %c0_i32_1 = arith.constant 0 : i32
    return %c0_i32, %c0_i32_0 : i32, i32
  }
  func.func @transform_7(%arg0: i32) -> (i32, i32) {
    %c0_i32 = arith.constant 0 : i32
    %c0_i32_0 = arith.constant 0 : i32
    %c0_i32_1 = arith.constant 0 : i32
    return %c0_i32, %c0_i32_0 : i32, i32
  }
}

</mosaic_0001>

<llo_original>
// kernel: tile.24
$region0: #{tile.24}
  %s0 = inlined_call_operand.vmem [shape: f32[16,32], index: 0, kind: input, shape index: {}]
  %s1 = inlined_call_operand.vmem [shape: f32[1,512], index: 1, kind: output, shape index: {}]
  $region1: #{tile.24} parent=0
    #allocation0 [shape = 'u8[16384]{0}', space=vmem, size = 0x4000, scoped, tag = 'scoped mem for output reshape']
    %v2 = vld [vmem:[%s0] ss:$4 sm:$0xf]
    %vm3 = vcmask 261120
    %4 = vst.msk [vmem:[#allocation0] ss:$8 sm:$0xf] %vm3, %v2
    %s5 = scalar_lea.vmem %s0, 3
    %v6 = vld [vmem:[%s5] ss:$4 sm:$0xf]
    %7 = vrot.lane.b32.xlu0 %v6, 96
    %v8 = vpop.permute.xlu0 %7
    %vm9 = vcmask 1048320
    %10 = vst.msk [vmem:[#allocation0] ss:$8 sm:$0xf] %vm9, %v8
    %s11 = scalar_lea.vmem %s0, 2
    %v12 = vld [vmem:[%s11] ss:$4 sm:$0xf]
    %13 = vrot.lane.b32.xlu0 %v12, 64
    %v14 = vpop.permute.xlu0 %13
    %vm15 = vcmask 785920
    %16 = vst.msk [vmem:[#allocation0] ss:$8 sm:$0xf] %vm15, %v14
    %s17 = scalar_lea.vmem %s0, 1
    %v18 = vld [vmem:[%s17] ss:$4 sm:$0xf]
    %19 = vrot.lane.b32.xlu0 %v18, 32
    %v20 = vpop.permute.xlu0 %19
    %vm21 = vcmask 523520
    %22 = vst.msk [vmem:[#allocation0] ss:$8 sm:$0xf] %vm21, %v20
    %s24 = ssub.s32 2, 1
    %v25 = vld [vmem:[#allocation0] sm:%s24]
    %s27 = ssub.s32 2, 1
    %28 = vst [vmem:[%s1] sm:%s27] %v25
    %s29 = scalar_lea.vmem [#allocation0], 8
    %v30 = vld [vmem:[%s29] sm:%s24]
    %s32 = ssub.s32 2, 1
    %s33 = scalar_lea.vmem %s1, 1
    %34 = vst [vmem:[%s33] sm:%s32] %v30
    %s35 = scalar_lea.vmem [#allocation0], 16
    %v36 = vld [vmem:[%s35] sm:%s24]
    %s38 = ssub.s32 2, 1
    %s39 = scalar_lea.vmem %s1, 2
    %40 = vst [vmem:[%s39] sm:%s38] %v36
    %s41 = scalar_lea.vmem [#allocation0], 24
    %v42 = vld [vmem:[%s41] sm:%s24]
    %s44 = ssub.s32 2, 1
    %s45 = scalar_lea.vmem %s1, 3
    %46 = vst [vmem:[%s45] sm:%s44] %v42

// kernel: tile.23
$region0: #{tile.23}
  #allocation0 [shape = 's32[1]{0}', space=sflag, size = 0x4, scoped, tag = 'scoped memory for tile.23']
  %s0 = inlined_call_operand.vmem [shape: f32[32], index: 0, kind: input, shape index: {}]
  %s1 = inlined_call_operand.vmem [shape: f32[16,32], index: 1, kind: output, shape index: {}]
  // Predicated region
  $region2: #{tile.23} parent=0 // pred_check
    _
  $region3: #{tile.23} parent=0 // pred_check_branch
    %3 = sbr.rel (0) target = $region5
  $region4: #{tile.23} parent=0 // pred_region
    _
  $region5: #{tile.23} parent=0 // pred_fallthru
    _
  %v4 = vld [vmem:[%s0] ss:$0 sm:$0xff]
  %5 = vst [vmem:[%s1] sm:$0xff] %v4
  %s6 = scalar_lea.vmem %s1, 8
  %7 = vst [vmem:[%s6] sm:$0xff] %v4

// kernel: resnet_block.1
$region0: #{resnet_block.1}
  #allocation0 [shape = 'u32[]', space=smem, size = 0x4, offset = 0x4, fixed_abs, tag = 'smem constant byte address 0x4 - core index']
  #allocation1 [shape = 'u32[72,128]{1,0:T(1,128)}', space=vmem, size = 0x9000, scoped, tag = 'internal scratch']
  #allocation2 [shape = 'bf16[3,512,512]{2,1,0:T(8,128)(2,1)}', space=vmem, size = 0x180000, scoped, tag = 'scratch operand']
  %s0 = inlined_call_operand.vmem [shape: f32[32,512], index: 0, kind: input, shape index: {}]
  %s1 = inlined_call_operand.vmem [shape: f32[9,32,32], index: 1, kind: input, shape index: {}]
  %s2 = inlined_call_operand.vmem [shape: f32[1,512], index: 2, kind: input, shape index: {}]
  %s3 = inlined_call_operand.vmem [shape: f32[1,512], index: 3, kind: input, shape index: {}]
  %s4 = inlined_call_operand.vmem [shape: f32[9,32,32], index: 4, kind: input, shape index: {}]
  %s5 = inlined_call_operand.vmem [shape: f32[1,512], index: 5, kind: input, shape index: {}]
  %s6 = inlined_call_operand.vmem [shape: f32[1,512], index: 6, kind: input, shape index: {}]
  %s7 = inlined_call_operand.vmem [shape: f32[32,512], index: 7, kind: output, shape index: {}]
  %s8 = sld [smem:[#allocation0]]
  $region38: #{resnet_block.1} parent=0
    _
  %s10 = ssub.s32 1, %s8
  %s11 = scalar_select 0, %s10, %s8
  // Predicated region
  $region2: #{resnet_block.1} parent=0 // pred_check
    _
  $region3: #{resnet_block.1} parent=0 // pred_check_branch
    %13 = sbr.rel (0) target = $region5
  $region4: #{resnet_block.1} parent=0 // pred_region
    _
  $region5: #{resnet_block.1} parent=0 // pred_fallthru
    _
  // Predicated region
  $region6: #{resnet_block.1} parent=0 // pred_check
    _
  $region7: #{resnet_block.1} parent=0 // pred_check_branch
    %15 = sbr.rel (0) target = $region9
  $region8: #{resnet_block.1} parent=0 // pred_region
    _
  $region9: #{resnet_block.1} parent=0 // pred_fallthru
    _
  // Predicated region
  $region10: #{resnet_block.1} parent=0 // pred_check
    _
  $region11: #{resnet_block.1} parent=0 // pred_check_branch
    %17 = sbr.rel (0) target = $region13
  $region12: #{resnet_block.1} parent=0 // pred_region
    _
  $region13: #{resnet_block.1} parent=0 // pred_fallthru
    _
  // Predicated region
  $region14: #{resnet_block.1} parent=0 // pred_check
    _
  $region15: #{resnet_block.1} parent=0 // pred_check_branch
    %19 = sbr.rel (0) target = $region17
  $region16: #{resnet_block.1} parent=0 // pred_region
    _
  $region17: #{resnet_block.1} parent=0 // pred_fallthru
    _
  // Predicated region
  $region18: #{resnet_block.1} parent=0 // pred_check
    _
  $region19: #{resnet_block.1} parent=0 // pred_check_branch
    %21 = sbr.rel (0) target = $region21
  $region20: #{resnet_block.1} parent=0 // pred_region
    _
  $region21: #{resnet_block.1} parent=0 // pred_fallthru
    _
  // Predicated region
  $region22: #{resnet_block.1} parent=0 // pred_check
    _
  $region23: #{resnet_block.1} parent=0 // pred_check_branch
    %23 = sbr.rel (0) target = $region25
  $region24: #{resnet_block.1} parent=0 // pred_region
    _
  $region25: #{resnet_block.1} parent=0 // pred_fallthru
    _
  // Predicated region
  $region26: #{resnet_block.1} parent=0 // pred_check
    _
  $region27: #{resnet_block.1} parent=0 // pred_check_branch
    %25 = sbr.rel (0) target = $region29
  $region28: #{resnet_block.1} parent=0 // pred_region
    _
  $region29: #{resnet_block.1} parent=0 // pred_fallthru
    _
  %v27 = vlaneseq
  %v28 = vshrl.u32 %v27, 7
  %v29 = vadd.s32 %v28, 8
  %v30 = vadd.s32 %v28, 16
  %v31 = vadd.s32 %v28, 24
  %vm32 = vcmp.lt.s32.totalorder %v28, 0
  %v33 = vsub.s32 0, %v28
  %v34 = vsel %vm32, %v33, %v28
  %v35 = vshrl.u32 %v34, 4
  %v36 = vand.u32 %v34, 15
  %v37 = vsub.s32 0, %v36
  %v38 = vsel %vm32, %v37, %v36
  %vm39 = vcmp.lt.s32.totalorder %v29, 0
  %v40 = vsub.s32 0, %v29
  %v41 = vsel %vm39, %v40, %v29
  %v42 = vshrl.u32 %v41, 4
  %v43 = vand.u32 %v41, 15
  %v44 = vsub.s32 0, %v43
  %v45 = vsel %vm39, %v44, %v43
  %vm46 = vcmp.lt.s32.totalorder %v30, 0
  %v47 = vsub.s32 0, %v30
  %v48 = vsel %vm46, %v47, %v30
  %v49 = vshrl.u32 %v48, 4
  %v50 = vand.u32 %v48, 15
  %v51 = vsub.s32 0, %v50
  %v52 = vsel %vm46, %v51, %v50
  %vm53 = vcmp.lt.s32.totalorder %v31, 0
  %v54 = vsub.s32 0, %v31
  %v55 = vsel %vm53, %v54, %v31
  %v56 = vshrl.u32 %v55, 4
  %v57 = vand.u32 %v55, 15
  %v58 = vsub.s32 0, %v57
  %v59 = vsel %vm53, %v58, %v57
  %vm60 = vcmp.ne.s32.totalorder %v38, 0
  %vm61 = vcmp.ne.s32.totalorder %v45, 0
  %vm62 = vcmp.ne.s32.totalorder %v52, 0
  %vm63 = vcmp.ne.s32.totalorder %v59, 0
  %vm64 = vcmp.lt.s32.totalorder %v38, 0
  %vm65 = vcmp.lt.s32.totalorder %v45, 0
  %vm66 = vcmp.lt.s32.totalorder %v52, 0
  %vm67 = vcmp.lt.s32.totalorder %v59, 0
  %vm68 = vmand %vm64, %vm60
  %vm69 = vmand %vm65, %vm61
  %vm70 = vmand %vm66, %vm62
  %vm71 = vmand %vm67, %vm63
  %v72 = vadd.s32 %v38, 16
  %v73 = vadd.s32 %v45, 16
  %v74 = vadd.s32 %v52, 16
  %v75 = vadd.s32 %v59, 16
  %v76 = vsel %vm68, %v72, %v38
  %v77 = vsel %vm69, %v73, %v45
  %v78 = vsel %vm70, %v74, %v52
  %v79 = vsel %vm71, %v75, %v59
  %vm80 = vcmp.eq.s32.totalorder %v76, 0
  %vm81 = vcmp.eq.s32.totalorder %v77, 0
  %vm82 = vcmp.eq.s32.totalorder %v78, 0
  %vm83 = vcmp.eq.s32.totalorder %v79, 0
  %vm84 = vcmp.eq.s32.totalorder %v76, 15
  %vm85 = vcmp.eq.s32.totalorder %v77, 15
  %vm86 = vcmp.eq.s32.totalorder %v78, 15
  %vm87 = vcmp.eq.s32.totalorder %v79, 15
  %88 = vst [vmem:[#allocation2] sm:$0xff] 0
  %89 = vst [vmem:[#allocation2 + $0x8] sm:$0xff] 0
  %90 = vst [vmem:[#allocation2 + $0x10] sm:$0xff] 0
  %91 = vst [vmem:[#allocation2 + $0x18] sm:$0xff] 0
  %92 = vst [vmem:[#allocation2 + $0x20] sm:$0xff] 0
  %93 = vst [vmem:[#allocation2 + $0x28] sm:$0xff] 0
  %94 = vst [vmem:[#allocation2 + $0x30] sm:$0xff] 0
  %95 = vst [vmem:[#allocation2 + $0x38] sm:$0xff] 0
  %96 = vst [vmem:[#allocation2 + $0x40] sm:$0xff] 0
  %97 = vst [vmem:[#allocation2 + $0x48] sm:$0xff] 0
  %98 = vst [vmem:[#allocation2 + $0x50] sm:$0xff] 0
  %99 = vst [vmem:[#allocation2 + $0x58] sm:$0xff] 0
  %100 = vst [vmem:[#allocation2 + $0x60] sm:$0xff] 0
  %101 = vst [vmem:[#allocation2 + $0x68] sm:$0xff] 0
  %102 = vst [vmem:[#allocation2 + $0x70] sm:$0xff] 0
  %103 = vst [vmem:[#allocation2 + $0x78] sm:$0xff] 0
  %104 = vst [vmem:[#allocation2 + $0x80] sm:$0xff] 0
  %105 = vst [vmem:[#allocation2 + $0x88] sm:$0xff] 0
  %106 = vst [vmem:[#allocation2 + $0x90] sm:$0xff] 0
  %107 = vst [vmem:[#allocation2 + $0x98] sm:$0xff] 0
  %108 = vst [vmem:[#allocation2 + $0xa0] sm:$0xff] 0
  %109 = vst [vmem:[#allocation2 + $0xa8] sm:$0xff] 0
  %110 = vst [vmem:[#allocation2 + $0xb0] sm:$0xff] 0
  %111 = vst [vmem:[#allocation2 + $0xb8] sm:$0xff] 0
  %112 = vst [vmem:[#allocation2 + $0xc0] sm:$0xff] 0
  %113 = vst [vmem:[#allocation2 + $0xc8] sm:$0xff] 0
  %114 = vst [vmem:[#allocation2 + $0xd0] sm:$0xff] 0
  %115 = vst [vmem:[#allocation2 + $0xd8] sm:$0xff] 0
  %116 = vst [vmem:[#allocation2 + $0xe0] sm:$0xff] 0
  %117 = vst [vmem:[#allocation2 + $0xe8] sm:$0xff] 0
  %118 = vst [vmem:[#allocation2 + $0xf0] sm:$0xff] 0
  %119 = vst [vmem:[#allocation2 + $0xf8] sm:$0xff] 0
  %120 = vst [vmem:[#allocation2 + $0x100] sm:$0xff] 0
  %121 = vst [vmem:[#allocation2 + $0x108] sm:$0xff] 0
  %122 = vst [vmem:[#allocation2 + $0x110] sm:$0xff] 0
  %123 = vst [vmem:[#allocation2 + $0x118] sm:$0xff] 0
  %124 = vst [vmem:[#allocation2 + $0x120] sm:$0xff] 0
  %125 = vst [vmem:[#allocation2 + $0x128] sm:$0xff] 0
  %126 = vst [vmem:[#allocation2 + $0x130] sm:$0xff] 0
  %127 = vst [vmem:[#allocation2 + $0x138] sm:$0xff] 0
  %128 = vst [vmem:[#allocation2 + $0x140] sm:$0xff] 0
  %129 = vst [vmem:[#allocation2 + $0x148] sm:$0xff] 0
  %130 = vst [vmem:[#allocation2 + $0x150] sm:$0xff] 0
  %131 = vst [vmem:[#allocation2 + $0x158] sm:$0xff] 0
  %132 = vst [vmem:[#allocation2 + $0x160] sm:$0xff] 0
  %133 = vst [vmem:[#allocation2 + $0x168] sm:$0xff] 0
  %134 = vst [vmem:[#allocation2 + $0x170] sm:$0xff] 0
  %135 = vst [vmem:[#allocation2 + $0x178] sm:$0xff] 0
  %136 = vst [vmem:[#allocation2 + $0x180] sm:$0xff] 0
  %137 = vst [vmem:[#allocation2 + $0x188] sm:$0xff] 0
  %138 = vst [vmem:[#allocation2 + $0x190] sm:$0xff] 0
  %139 = vst [vmem:[#allocation2 + $0x198] sm:$0xff] 0
  %140 = vst [vmem:[#allocation2 + $0x1a0] sm:$0xff] 0
  %141 = vst [vmem:[#allocation2 + $0x1a8] sm:$0xff] 0
  %142 = vst [vmem:[#allocation2 + $0x1b0] sm:$0xff] 0
  %143 = vst [vmem:[#allocation2 + $0x1b8] sm:$0xff] 0
  %144 = vst [vmem:[#allocation2 + $0x1c0] sm:$0xff] 0
  %145 = vst [vmem:[#allocation2 + $0x1c8] sm:$0xff] 0
  %146 = vst [vmem:[#allocation2 + $0x1d0] sm:$0xff] 0
  %147 = vst [vmem:[#allocation2 + $0x1d8] sm:$0xff] 0
  %148 = vst [vmem:[#allocation2 + $0x1e0] sm:$0xff] 0
  %149 = vst [vmem:[#allocation2 + $0x1e8] sm:$0xff] 0
  %150 = vst [vmem:[#allocation2 + $0x1f0] sm:$0xff] 0
  %151 = vst [vmem:[#allocation2 + $0x1f8] sm:$0xff] 0
  %152 = vst [vmem:[#allocation2 + $0x200] sm:$0xff] 0
  %153 = vst [vmem:[#allocation2 + $0x208] sm:$0xff] 0
  %154 = vst [vmem:[#allocation2 + $0x210] sm:$0xff] 0
  %155 = vst [vmem:[#allocation2 + $0x218] sm:$0xff] 0
  %156 = vst [vmem:[#allocation2 + $0x220] sm:$0xff] 0
  %157 = vst [vmem:[#allocation2 + $0x228] sm:$0xff] 0
  %158 = vst [vmem:[#allocation2 + $0x230] sm:$0xff] 0
  %159 = vst [vmem:[#allocation2 + $0x238] sm:$0xff] 0
  %160 = vst [vmem:[#allocation2 + $0x240] sm:$0xff] 0
  %161 = vst [vmem:[#allocation2 + $0x248] sm:$0xff] 0
  %162 = vst [vmem:[#allocation2 + $0x250] sm:$0xff] 0
  %163 = vst [vmem:[#allocation2 + $0x258] sm:$0xff] 0
  %164 = vst [vmem:[#allocation2 + $0x260] sm:$0xff] 0
  %165 = vst [vmem:[#allocation2 + $0x268] sm:$0xff] 0
  %166 = vst [vmem:[#allocation2 + $0x270] sm:$0xff] 0
  %167 = vst [vmem:[#allocation2 + $0x278] sm:$0xff] 0
  %168 = vst [vmem:[#allocation2 + $0x280] sm:$0xff] 0
  %169 = vst [vmem:[#allocation2 + $0x288] sm:$0xff] 0
  %170 = vst [vmem:[#allocation2 + $0x290] sm:$0xff] 0
  %171 = vst [vmem:[#allocation2 + $0x298] sm:$0xff] 0
  %172 = vst [vmem:[#allocation2 + $0x2a0] sm:$0xff] 0
  %173 = vst [vmem:[#allocation2 + $0x2a8] sm:$0xff] 0
  %174 = vst [vmem:[#allocation2 + $0x2b0] sm:$0xff] 0
  %175 = vst [vmem:[#allocation2 + $0x2b8] sm:$0xff] 0
  %176 = vst [vmem:[#allocation2 + $0x2c0] sm:$0xff] 0
  %177 = vst [vmem:[#allocation2 + $0x2c8] sm:$0xff] 0
  %178 = vst [vmem:[#allocation2 + $0x2d0] sm:$0xff] 0
  %179 = vst [vmem:[#allocation2 + $0x2d8] sm:$0xff] 0
  %180 = vst [vmem:[#allocation2 + $0x2e0] sm:$0xff] 0
  %181 = vst [vmem:[#allocation2 + $0x2e8] sm:$0xff] 0
  %182 = vst [vmem:[#allocation2 + $0x2f0] sm:$0xff] 0
  %183 = vst [vmem:[#allocation2 + $0x2f8] sm:$0xff] 0
  %184 = vst [vmem:[#allocation2 + $0x300] sm:$0xff] 0
  %185 = vst [vmem:[#allocation2 + $0x308] sm:$0xff] 0
  %186 = vst [vmem:[#allocation2 + $0x310] sm:$0xff] 0
  %187 = vst [vmem:[#allocation2 + $0x318] sm:$0xff] 0
  %188 = vst [vmem:[#allocation2 + $0x320] sm:$0xff] 0
  %189 = vst [vmem:[#allocation2 + $0x328] sm:$0xff] 0
  %190 = vst [vmem:[#allocation2 + $0x330] sm:$0xff] 0
  %191 = vst [vmem:[#allocation2 + $0x338] sm:$0xff] 0
  %192 = vst [vmem:[#allocation2 + $0x340] sm:$0xff] 0
  %193 = vst [vmem:[#allocation2 + $0x348] sm:$0xff] 0
  %194 = vst [vmem:[#allocation2 + $0x350] sm:$0xff] 0
  %195 = vst [vmem:[#allocation2 + $0x358] sm:$0xff] 0
  %196 = vst [vmem:[#allocation2 + $0x360] sm:$0xff] 0
  %197 = vst [vmem:[#allocation2 + $0x368] sm:$0xff] 0
  %198 = vst [vmem:[#allocation2 + $0x370] sm:$0xff] 0
  %199 = vst [vmem:[#allocation2 + $0x378] sm:$0xff] 0
  %200 = vst [vmem:[#allocation2 + $0x380] sm:$0xff] 0
  %201 = vst [vmem:[#allocation2 + $0x388] sm:$0xff] 0
  %202 = vst [vmem:[#allocation2 + $0x390] sm:$0xff] 0
  %203 = vst [vmem:[#allocation2 + $0x398] sm:$0xff] 0
  %204 = vst [vmem:[#allocation2 + $0x3a0] sm:$0xff] 0
  %205 = vst [vmem:[#allocation2 + $0x3a8] sm:$0xff] 0
  %206 = vst [vmem:[#allocation2 + $0x3b0] sm:$0xff] 0
  %207 = vst [vmem:[#allocation2 + $0x3b8] sm:$0xff] 0
  %208 = vst [vmem:[#allocation2 + $0x3c0] sm:$0xff] 0
  %209 = vst [vmem:[#allocation2 + $0x3c8] sm:$0xff] 0
  %210 = vst [vmem:[#allocation2 + $0x3d0] sm:$0xff] 0
  %211 = vst [vmem:[#allocation2 + $0x3d8] sm:$0xff] 0
  %212 = vst [vmem:[#allocation2 + $0x3e0] sm:$0xff] 0
  %213 = vst [vmem:[#allocation2 + $0x3e8] sm:$0xff] 0
  %214 = vst [vmem:[#allocation2 + $0x3f0] sm:$0xff] 0
  %215 = vst [vmem:[#allocation2 + $0x3f8] sm:$0xff] 0
  %216 = vst [vmem:[#allocation2 + $0x400] sm:$0xff] 0
  %217 = vst [vmem:[#allocation2 + $0x408] sm:$0xff] 0
  %218 = vst [vmem:[#allocation2 + $0x410] sm:$0xff] 0
  %219 = vst [vmem:[#allocation2 + $0x418] sm:$0xff] 0
  %220 = vst [vmem:[#allocation2 + $0x420] sm:$0xff] 0
  %221 = vst [vmem:[#allocation2 + $0x428] sm:$0xff] 0
  %222 = vst [vmem:[#allocation2 + $0x430] sm:$0xff] 0
  %223 = vst [vmem:[#allocation2 + $0x438] sm:$0xff] 0
  %224 = vst [vmem:[#allocation2 + $0x440] sm:$0xff] 0
  %225 = vst [vmem:[#allocation2 + $0x448] sm:$0xff] 0
  %226 = vst [vmem:[#allocation2 + $0x450] sm:$0xff] 0
  %227 = vst [vmem:[#allocation2 + $0x458] sm:$0xff] 0
  %228 = vst [vmem:[#allocation2 + $0x460] sm:$0xff] 0
  %229 = vst [vmem:[#allocation2 + $0x468] sm:$0xff] 0
  %230 = vst [vmem:[#allocation2 + $0x470] sm:$0xff] 0
  %231 = vst [vmem:[#allocation2 + $0x478] sm:$0xff] 0
  %232 = vst [vmem:[#allocation2 + $0x480] sm:$0xff] 0
  %233 = vst [vmem:[#allocation2 + $0x488] sm:$0xff] 0
  %234 = vst [vmem:[#allocation2 + $0x490] sm:$0xff] 0
  %235 = vst [vmem:[#allocation2 + $0x498] sm:$0xff] 0
  %236 = vst [vmem:[#allocation2 + $0x4a0] sm:$0xff] 0
  %237 = vst [vmem:[#allocation2 + $0x4a8] sm:$0xff] 0
  %238 = vst [vmem:[#allocation2 + $0x4b0] sm:$0xff] 0
  %239 = vst [vmem:[#allocation2 + $0x4b8] sm:$0xff] 0
  %240 = vst [vmem:[#allocation2 + $0x4c0] sm:$0xff] 0
  %241 = vst [vmem:[#allocation2 + $0x4c8] sm:$0xff] 0
  %242 = vst [vmem:[#allocation2 + $0x4d0] sm:$0xff] 0
  %243 = vst [vmem:[#allocation2 + $0x4d8] sm:$0xff] 0
  %244 = vst [vmem:[#allocation2 + $0x4e0] sm:$0xff] 0
  %245 = vst [vmem:[#allocation2 + $0x4e8] sm:$0xff] 0
  %246 = vst [vmem:[#allocation2 + $0x4f0] sm:$0xff] 0
  %247 = vst [vmem:[#allocation2 + $0x4f8] sm:$0xff] 0
  %248 = vst [vmem:[#allocation2 + $0x500] sm:$0xff] 0
  %249 = vst [vmem:[#allocation2 + $0x508] sm:$0xff] 0
  %250 = vst [vmem:[#allocation2 + $0x510] sm:$0xff] 0
  %251 = vst [vmem:[#allocation2 + $0x518] sm:$0xff] 0
  %252 = vst [vmem:[#allocation2 + $0x520] sm:$0xff] 0
  %253 = vst [vmem:[#allocation2 + $0x528] sm:$0xff] 0
  %254 = vst [vmem:[#allocation2 + $0x530] sm:$0xff] 0
  %255 = vst [vmem:[#allocation2 + $0x538] sm:$0xff] 0
  %256 = vst [vmem:[#allocation2 + $0x540] sm:$0xff] 0
  %257 = vst [vmem:[#allocation2 + $0x548] sm:$0xff] 0
  %258 = vst [vmem:[#allocation2 + $0x550] sm:$0xff] 0
  %259 = vst [vmem:[#allocation2 + $0x558] sm:$0xff] 0
  %260 = vst [vmem:[#allocation2 + $0x560] sm:$0xff] 0
  %261 = vst [vmem:[#allocation2 + $0x568] sm:$0xff] 0
  %262 = vst [vmem:[#allocation2 + $0x570] sm:$0xff] 0
  %263 = vst [vmem:[#allocation2 + $0x578] sm:$0xff] 0
  %264 = vst [vmem:[#allocation2 + $0x580] sm:$0xff] 0
  %265 = vst [vmem:[#allocation2 + $0x588] sm:$0xff] 0
  %266 = vst [vmem:[#allocation2 + $0x590] sm:$0xff] 0
  %267 = vst [vmem:[#allocation2 + $0x598] sm:$0xff] 0
  %268 = vst [vmem:[#allocation2 + $0x5a0] sm:$0xff] 0
  %269 = vst [vmem:[#allocation2 + $0x5a8] sm:$0xff] 0
  %270 = vst [vmem:[#allocation2 + $0x5b0] sm:$0xff] 0
  %271 = vst [vmem:[#allocation2 + $0x5b8] sm:$0xff] 0
  %272 = vst [vmem:[#allocation2 + $0x5c0] sm:$0xff] 0
  %273 = vst [vmem:[#allocation2 + $0x5c8] sm:$0xff] 0
  %274 = vst [vmem:[#allocation2 + $0x5d0] sm:$0xff] 0
  %275 = vst [vmem:[#allocation2 + $0x5d8] sm:$0xff] 0
  %276 = vst [vmem:[#allocation2 + $0x5e0] sm:$0xff] 0
  %277 = vst [vmem:[#allocation2 + $0x5e8] sm:$0xff] 0
  %278 = vst [vmem:[#allocation2 + $0x5f0] sm:$0xff] 0
  %279 = vst [vmem:[#allocation2 + $0x5f8] sm:$0xff] 0
  %280 = vst [vmem:[#allocation2 + $0x600] sm:$0xff] 0
  %281 = vst [vmem:[#allocation2 + $0x608] sm:$0xff] 0
  %282 = vst [vmem:[#allocation2 + $0x610] sm:$0xff] 0
  %283 = vst [vmem:[#allocation2 + $0x618] sm:$0xff] 0
  %284 = vst [vmem:[#allocation2 + $0x620] sm:$0xff] 0
  %285 = vst [vmem:[#allocation2 + $0x628] sm:$0xff] 0
  %286 = vst [vmem:[#allocation2 + $0x630] sm:$0xff] 0
  %287 = vst [vmem:[#allocation2 + $0x638] sm:$0xff] 0
  %288 = vst [vmem:[#allocation2 + $0x640] sm:$0xff] 0
  %289 = vst [vmem:[#allocation2 + $0x648] sm:$0xff] 0
  %290 = vst [vmem:[#allocation2 + $0x650] sm:$0xff] 0
  %291 = vst [vmem:[#allocation2 + $0x658] sm:$0xff] 0
  %292 = vst [vmem:[#allocation2 + $0x660] sm:$0xff] 0
  %293 = vst [vmem:[#allocation2 + $0x668] sm:$0xff] 0
  %294 = vst [vmem:[#allocation2 + $0x670] sm:$0xff] 0
  %295 = vst [vmem:[#allocation2 + $0x678] sm:$0xff] 0
  %296 = vst [vmem:[#allocation2 + $0x680] sm:$0xff] 0
  %297 = vst [vmem:[#allocation2 + $0x688] sm:$0xff] 0
  %298 = vst [vmem:[#allocation2 + $0x690] sm:$0xff] 0
  %299 = vst [vmem:[#allocation2 + $0x698] sm:$0xff] 0
  %300 = vst [vmem:[#allocation2 + $0x6a0] sm:$0xff] 0
  %301 = vst [vmem:[#allocation2 + $0x6a8] sm:$0xff] 0
  %302 = vst [vmem:[#allocation2 + $0x6b0] sm:$0xff] 0
  %303 = vst [vmem:[#allocation2 + $0x6b8] sm:$0xff] 0
  %304 = vst [vmem:[#allocation2 + $0x6c0] sm:$0xff] 0
  %305 = vst [vmem:[#allocation2 + $0x6c8] sm:$0xff] 0
  %306 = vst [vmem:[#allocation2 + $0x6d0] sm:$0xff] 0
  %307 = vst [vmem:[#allocation2 + $0x6d8] sm:$0xff] 0
  %308 = vst [vmem:[#allocation2 + $0x6e0] sm:$0xff] 0
  %309 = vst [vmem:[#allocation2 + $0x6e8] sm:$0xff] 0
  %310 = vst [vmem:[#allocation2 + $0x6f0] sm:$0xff] 0
  %311 = vst [vmem:[#allocation2 + $0x6f8] sm:$0xff] 0
  %312 = vst [vmem:[#allocation2 + $0x700] sm:$0xff] 0
  %313 = vst [vmem:[#allocation2 + $0x708] sm:$0xff] 0
  %314 = vst [vmem:[#allocation2 + $0x710] sm:$0xff] 0
  %315 = vst [vmem:[#allocation2 + $0x718] sm:$0xff] 0
  %316 = vst [vmem:[#allocation2 + $0x720] sm:$0xff] 0
  %317 = vst [vmem:[#allocation2 + $0x728] sm:$0xff] 0
  %318 = vst [vmem:[#allocation2 + $0x730] sm:$0xff] 0
  %319 = vst [vmem:[#allocation2 + $0x738] sm:$0xff] 0
  %320 = vst [vmem:[#allocation2 + $0x740] sm:$0xff] 0
  %321 = vst [vmem:[#allocation2 + $0x748] sm:$0xff] 0
  %322 = vst [vmem:[#allocation2 + $0x750] sm:$0xff] 0
  %323 = vst [vmem:[#allocation2 + $0x758] sm:$0xff] 0
  %324 = vst [vmem:[#allocation2 + $0x760] sm:$0xff] 0
  %325 = vst [vmem:[#allocation2 + $0x768] sm:$0xff] 0
  %326 = vst [vmem:[#allocation2 + $0x770] sm:$0xff] 0
  %327 = vst [vmem:[#allocation2 + $0x778] sm:$0xff] 0
  %328 = vst [vmem:[#allocation2 + $0x780] sm:$0xff] 0
  %329 = vst [vmem:[#allocation2 + $0x788] sm:$0xff] 0
  %330 = vst [vmem:[#allocation2 + $0x790] sm:$0xff] 0
  %331 = vst [vmem:[#allocation2 + $0x798] sm:$0xff] 0
  %332 = vst [vmem:[#allocation2 + $0x7a0] sm:$0xff] 0
  %333 = vst [vmem:[#allocation2 + $0x7a8] sm:$0xff] 0
  %334 = vst [vmem:[#allocation2 + $0x7b0] sm:$0xff] 0
  %335 = vst [vmem:[#allocation2 + $0x7b8] sm:$0xff] 0
  %336 = vst [vmem:[#allocation2 + $0x7c0] sm:$0xff] 0
  %337 = vst [vmem:[#allocation2 + $0x7c8] sm:$0xff] 0
  %338 = vst [vmem:[#allocation2 + $0x7d0] sm:$0xff] 0
  %339 = vst [vmem:[#allocation2 + $0x7d8] sm:$0xff] 0
  %340 = vst [vmem:[#allocation2 + $0x7e0] sm:$0xff] 0
  %341 = vst [vmem:[#allocation2 + $0x7e8] sm:$0xff] 0
  %342 = vst [vmem:[#allocation2 + $0x7f0] sm:$0xff] 0
  %343 = vst [vmem:[#allocation2 + $0x7f8] sm:$0xff] 0
  %344 = vst [vmem:[#allocation2 + $0x800] sm:$0xff] 0
  %345 = vst [vmem:[#allocation2 + $0x808] sm:$0xff] 0
  %346 = vst [vmem:[#allocation2 + $0x810] sm:$0xff] 0
  %347 = vst [vmem:[#allocation2 + $0x818] sm:$0xff] 0
  %348 = vst [vmem:[#allocation2 + $0x820] sm:$0xff] 0
  %349 = vst [vmem:[#allocation2 + $0x828] sm:$0xff] 0
  %350 = vst [vmem:[#allocation2 + $0x830] sm:$0xff] 0
  %351 = vst [vmem:[#allocation2 + $0x838] sm:$0xff] 0
  %352 = vst [vmem:[#allocation2 + $0x840] sm:$0xff] 0
  %353 = vst [vmem:[#allocation2 + $0x848] sm:$0xff] 0
  %354 = vst [vmem:[#allocation2 + $0x850] sm:$0xff] 0
  %355 = vst [vmem:[#allocation2 + $0x858] sm:$0xff] 0
  %356 = vst [vmem:[#allocation2 + $0x860] sm:$0xff] 0
  %357 = vst [vmem:[#allocation2 + $0x868] sm:$0xff] 0
  %358 = vst [vmem:[#allocation2 + $0x870] sm:$0xff] 0
  %359 = vst [vmem:[#allocation2 + $0x878] sm:$0xff] 0
  %360 = vst [vmem:[#allocation2 + $0x880] sm:$0xff] 0
  %361 = vst [vmem:[#allocation2 + $0x888] sm:$0xff] 0
  %362 = vst [vmem:[#allocation2 + $0x890] sm:$0xff] 0
  %363 = vst [vmem:[#allocation2 + $0x898] sm:$0xff] 0
  %364 = vst [vmem:[#allocation2 + $0x8a0] sm:$0xff] 0
  %365 = vst [vmem:[#allocation2 + $0x8a8] sm:$0xff] 0
  %366 = vst [vmem:[#allocation2 + $0x8b0] sm:$0xff] 0
  %367 = vst [vmem:[#allocation2 + $0x8b8] sm:$0xff] 0
  %368 = vst [vmem:[#allocation2 + $0x8c0] sm:$0xff] 0
  %369 = vst [vmem:[#allocation2 + $0x8c8] sm:$0xff] 0
  %370 = vst [vmem:[#allocation2 + $0x8d0] sm:$0xff] 0
  %371 = vst [vmem:[#allocation2 + $0x8d8] sm:$0xff] 0
  %372 = vst [vmem:[#allocation2 + $0x8e0] sm:$0xff] 0
  %373 = vst [vmem:[#allocation2 + $0x8e8] sm:$0xff] 0
  %374 = vst [vmem:[#allocation2 + $0x8f0] sm:$0xff] 0
  %375 = vst [vmem:[#allocation2 + $0x8f8] sm:$0xff] 0
  %376 = vst [vmem:[#allocation2 + $0x900] sm:$0xff] 0
  %377 = vst [vmem:[#allocation2 + $0x908] sm:$0xff] 0
  %378 = vst [vmem:[#allocation2 + $0x910] sm:$0xff] 0
  %379 = vst [vmem:[#allocation2 + $0x918] sm:$0xff] 0
  %380 = vst [vmem:[#allocation2 + $0x920] sm:$0xff] 0
  %381 = vst [vmem:[#allocation2 + $0x928] sm:$0xff] 0
  %382 = vst [vmem:[#allocation2 + $0x930] sm:$0xff] 0
  %383 = vst [vmem:[#allocation2 + $0x938] sm:$0xff] 0
  %384 = vst [vmem:[#allocation2 + $0x940] sm:$0xff] 0
  %385 = vst [vmem:[#allocation2 + $0x948] sm:$0xff] 0
  %386 = vst [vmem:[#allocation2 + $0x950] sm:$0xff] 0
  %387 = vst [vmem:[#allocation2 + $0x958] sm:$0xff] 0
  %388 = vst [vmem:[#allocation2 + $0x960] sm:$0xff] 0
  %389 = vst [vmem:[#allocation2 + $0x968] sm:$0xff] 0
  %390 = vst [vmem:[#allocation2 + $0x970] sm:$0xff] 0
  %391 = vst [vmem:[#allocation2 + $0x978] sm:$0xff] 0
  %392 = vst [vmem:[#allocation2 + $0x980] sm:$0xff] 0
  %393 = vst [vmem:[#allocation2 + $0x988] sm:$0xff] 0
  %394 = vst [vmem:[#allocation2 + $0x990] sm:$0xff] 0
  %395 = vst [vmem:[#allocation2 + $0x998] sm:$0xff] 0
  %396 = vst [vmem:[#allocation2 + $0x9a0] sm:$0xff] 0
  %397 = vst [vmem:[#allocation2 + $0x9a8] sm:$0xff] 0
  %398 = vst [vmem:[#allocation2 + $0x9b0] sm:$0xff] 0
  %399 = vst [vmem:[#allocation2 + $0x9b8] sm:$0xff] 0
  %400 = vst [vmem:[#allocation2 + $0x9c0] sm:$0xff] 0
  %401 = vst [vmem:[#allocation2 + $0x9c8] sm:$0xff] 0
  %402 = vst [vmem:[#allocation2 + $0x9d0] sm:$0xff] 0
  %403 = vst [vmem:[#allocation2 + $0x9d8] sm:$0xff] 0
  %404 = vst [vmem:[#allocation2 + $0x9e0] sm:$0xff] 0
  %405 = vst [vmem:[#allocation2 + $0x9e8] sm:$0xff] 0
  %406 = vst [vmem:[#allocation2 + $0x9f0] sm:$0xff] 0
  %407 = vst [vmem:[#allocation2 + $0x9f8] sm:$0xff] 0
  %408 = vst [vmem:[#allocation2 + $0xa00] sm:$0xff] 0
  %409 = vst [vmem:[#allocation2 + $0xa08] sm:$0xff] 0
  %410 = vst [vmem:[#allocation2 + $0xa10] sm:$0xff] 0
  %411 = vst [vmem:[#allocation2 + $0xa18] sm:$0xff] 0
  %412 = vst [vmem:[#allocation2 + $0xa20] sm:$0xff] 0
  %413 = vst [vmem:[#allocation2 + $0xa28] sm:$0xff] 0
  %414 = vst [vmem:[#allocation2 + $0xa30] sm:$0xff] 0
  %415 = vst [vmem:[#allocation2 + $0xa38] sm:$0xff] 0
  %416 = vst [vmem:[#allocation2 + $0xa40] sm:$0xff] 0
  %417 = vst [vmem:[#allocation2 + $0xa48] sm:$0xff] 0
  %418 = vst [vmem:[#allocation2 + $0xa50] sm:$0xff] 0
  %419 = vst [vmem:[#allocation2 + $0xa58] sm:$0xff] 0
  %420 = vst [vmem:[#allocation2 + $0xa60] sm:$0xff] 0
  %421 = vst [vmem:[#allocation2 + $0xa68] sm:$0xff] 0
  %422 = vst [vmem:[#allocation2 + $0xa70] sm:$0xff] 0
  %423 = vst [vmem:[#allocation2 + $0xa78] sm:$0xff] 0
  %424 = vst [vmem:[#allocation2 + $0xa80] sm:$0xff] 0
  %425 = vst [vmem:[#allocation2 + $0xa88] sm:$0xff] 0
  %426 = vst [vmem:[#allocation2 + $0xa90] sm:$0xff] 0
  %427 = vst [vmem:[#allocation2 + $0xa98] sm:$0xff] 0
  %428 = vst [vmem:[#allocation2 + $0xaa0] sm:$0xff] 0
  %429 = vst [vmem:[#allocation2 + $0xaa8] sm:$0xff] 0
  %430 = vst [vmem:[#allocation2 + $0xab0] sm:$0xff] 0
  %431 = vst [vmem:[#allocation2 + $0xab8] sm:$0xff] 0
  %432 = vst [vmem:[#allocation2 + $0xac0] sm:$0xff] 0
  %433 = vst [vmem:[#allocation2 + $0xac8] sm:$0xff] 0
  %434 = vst [vmem:[#allocation2 + $0xad0] sm:$0xff] 0
  %435 = vst [vmem:[#allocation2 + $0xad8] sm:$0xff] 0
  %436 = vst [vmem:[#allocation2 + $0xae0] sm:$0xff] 0
  %437 = vst [vmem:[#allocation2 + $0xae8] sm:$0xff] 0
  %438 = vst [vmem:[#allocation2 + $0xaf0] sm:$0xff] 0
  %439 = vst [vmem:[#allocation2 + $0xaf8] sm:$0xff] 0
  %440 = vst [vmem:[#allocation2 + $0xb00] sm:$0xff] 0
  %441 = vst [vmem:[#allocation2 + $0xb08] sm:$0xff] 0
  %442 = vst [vmem:[#allocation2 + $0xb10] sm:$0xff] 0
  %443 = vst [vmem:[#allocation2 + $0xb18] sm:$0xff] 0
  %444 = vst [vmem:[#allocation2 + $0xb20] sm:$0xff] 0
  %445 = vst [vmem:[#allocation2 + $0xb28] sm:$0xff] 0
  %446 = vst [vmem:[#allocation2 + $0xb30] sm:$0xff] 0
  %447 = vst [vmem:[#allocation2 + $0xb38] sm:$0xff] 0
  %448 = vst [vmem:[#allocation2 + $0xb40] sm:$0xff] 0
  %449 = vst [vmem:[#allocation2 + $0xb48] sm:$0xff] 0
  %450 = vst [vmem:[#allocation2 + $0xb50] sm:$0xff] 0
  %451 = vst [vmem:[#allocation2 + $0xb58] sm:$0xff] 0
  %452 = vst [vmem:[#allocation2 + $0xb60] sm:$0xff] 0
  %453 = vst [vmem:[#allocation2 + $0xb68] sm:$0xff] 0
  %454 = vst [vmem:[#allocation2 + $0xb70] sm:$0xff] 0
  %455 = vst [vmem:[#allocation2 + $0xb78] sm:$0xff] 0
  %456 = vst [vmem:[#allocation2 + $0xb80] sm:$0xff] 0
  %457 = vst [vmem:[#allocation2 + $0xb88] sm:$0xff] 0
  %458 = vst [vmem:[#allocation2 + $0xb90] sm:$0xff] 0
  %459 = vst [vmem:[#allocation2 + $0xb98] sm:$0xff] 0
  %460 = vst [vmem:[#allocation2 + $0xba0] sm:$0xff] 0
  %461 = vst [vmem:[#allocation2 + $0xba8] sm:$0xff] 0
  %462 = vst [vmem:[#allocation2 + $0xbb0] sm:$0xff] 0
  %463 = vst [vmem:[#allocation2 + $0xbb8] sm:$0xff] 0
  %464 = vst [vmem:[#allocation2 + $0xbc0] sm:$0xff] 0
  %465 = vst [vmem:[#allocation2 + $0xbc8] sm:$0xff] 0
  %466 = vst [vmem:[#allocation2 + $0xbd0] sm:$0xff] 0
  %467 = vst [vmem:[#allocation2 + $0xbd8] sm:$0xff] 0
  %468 = vst [vmem:[#allocation2 + $0xbe0] sm:$0xff] 0
  %469 = vst [vmem:[#allocation2 + $0xbe8] sm:$0xff] 0
  %470 = vst [vmem:[#allocation2 + $0xbf0] sm:$0xff] 0
  %471 = vst [vmem:[#allocation2 + $0xbf8] sm:$0xff] 0
  %v472 = vld [vmem:[%s0] sm:$0xff]
  %v473 = vld [vmem:[%s0 + $0x8] sm:$0xff]
  %v474 = vld [vmem:[%s0 + $0x10] sm:$0xff]
  %v475 = vld [vmem:[%s0 + $0x18] sm:$0xff]
  %v476 = vld [vmem:[%s0 + $0x20] sm:$0xff]
  %v477 = vld [vmem:[%s0 + $0x28] sm:$0xff]
  %v478 = vld [vmem:[%s0 + $0x30] sm:$0xff]
  %v479 = vld [vmem:[%s0 + $0x38] sm:$0xff]
  %v480 = vld [vmem:[%s0 + $0x40] sm:$0xff]
  %v481 = vld [vmem:[%s0 + $0x48] sm:$0xff]
  %v482 = vld [vmem:[%s0 + $0x50] sm:$0xff]
  %v483 = vld [vmem:[%s0 + $0x58] sm:$0xff]
  %v484 = vld [vmem:[%s0 + $0x60] sm:$0xff]
  %v485 = vld [vmem:[%s0 + $0x68] sm:$0xff]
  %v486 = vld [vmem:[%s0 + $0x70] sm:$0xff]
  %v487 = vld [vmem:[%s0 + $0x78] sm:$0xff]
  %v488 = vpack.c.bf16 %v476, %v472
  %v489 = vpack.c.bf16 %v477, %v473
  %v490 = vpack.c.bf16 %v478, %v474
  %v491 = vpack.c.bf16 %v479, %v475
  %v492 = vpack.c.bf16 %v484, %v480
  %v493 = vpack.c.bf16 %v485, %v481
  %v494 = vpack.c.bf16 %v486, %v482
  %v495 = vpack.c.bf16 %v487, %v483
  %v496 = vld [vmem:[%s1] sm:$0xff]
  %v497 = vld [vmem:[%s1 + $0x8] sm:$0xff]
  %v498 = vld [vmem:[%s1 + $0x10] sm:$0xff]
  %v499 = vld [vmem:[%s1 + $0x18] sm:$0xff]
  %s500 = scalar_lea.vmem %s1, 32
  %v501 = vld [vmem:[%s500] sm:$0xff]
  %v502 = vld [vmem:[%s500 + $0x8] sm:$0xff]
  %v503 = vld [vmem:[%s500 + $0x10] sm:$0xff]
  %v504 = vld [vmem:[%s500 + $0x18] sm:$0xff]
  %s505 = scalar_lea.vmem %s1, 64
  %v506 = vld [vmem:[%s505] sm:$0xff]
  %v507 = vld [vmem:[%s505 + $0x8] sm:$0xff]
  %v508 = vld [vmem:[%s505 + $0x10] sm:$0xff]
  %v509 = vld [vmem:[%s505 + $0x18] sm:$0xff]
  %v510 = vadd.f32 %v496, %v506
  %v511 = vadd.f32 %v497, %v507
  %v512 = vadd.f32 %v498, %v508
  %v513 = vadd.f32 %v499, %v509
  %518 = vrot.lane.b32.xlu0 %v496, 32
  %v519 = vpop.permute.xlu0 %518
  %520 = vrot.lane.b32.xlu0 %v497, 32
  %v521 = vpop.permute.xlu0 %520
  %522 = vrot.lane.b32.xlu0 %v498, 32
  %v523 = vpop.permute.xlu0 %522
  %524 = vrot.lane.b32.xlu0 %v499, 32
  %v525 = vpop.permute.xlu0 %524
  %vm530 = vcmask 261120
  %v531 = vsel %vm530, %v501, %v519
  %v532 = vsel %vm530, %v502, %v521
  %v533 = vsel %vm530, %v503, %v523
  %v534 = vsel %vm530, %v504, %v525
  %v535 = vpack.c.bf16 %v531, %v531
  %v536 = vpack.c.bf16 %v532, %v532
  %v537 = vpack.c.bf16 %v533, %v533
  %v538 = vpack.c.bf16 %v534, %v534
  %vm539 = vcmask 519168
  %540 = vst.msk [vmem:[#allocation2] sm:$0xf] %vm539, %v535
  %541 = vst.msk [vmem:[#allocation2 + $0x10] sm:$0xf] %vm539, %v536
  %542 = vst.msk [vmem:[#allocation2 + $0x20] sm:$0xf] %vm539, %v537
  %543 = vst.msk [vmem:[#allocation2 + $0x30] sm:$0xf] %vm539, %v538
  %548 = vrot.lane.b32.xlu0 %v501, 32
  %v549 = vpop.permute.xlu0 %548
  %550 = vrot.lane.b32.xlu0 %v502, 32
  %v551 = vpop.permute.xlu0 %550
  %552 = vrot.lane.b32.xlu0 %v503, 32
  %v553 = vpop.permute.xlu0 %552
  %554 = vrot.lane.b32.xlu0 %v504, 32
  %v555 = vpop.permute.xlu0 %554
  %560 = vrot.lane.b32.xlu0 %v496, 64
  %v561 = vpop.permute.xlu0 %560
  %562 = vrot.lane.b32.xlu0 %v497, 64
  %v563 = vpop.permute.xlu0 %562
  %564 = vrot.lane.b32.xlu0 %v498, 64
  %v565 = vpop.permute.xlu0 %564
  %566 = vrot.lane.b32.xlu0 %v499, 64
  %v567 = vpop.permute.xlu0 %566
  %v572 = vsel %vm530, %v510, %v549
  %v573 = vsel %vm530, %v511, %v551
  %v574 = vsel %vm530, %v512, %v553
  %v575 = vsel %vm530, %v513, %v555
  %vm576 = vcmask 523264
  %v577 = vsel %vm576, %v572, %v561
  %v578 = vsel %vm576, %v573, %v563
  %v579 = vsel %vm576, %v574, %v565
  %v580 = vsel %vm576, %v575, %v567
  %v581 = vpack.c.bf16 %v577, %v577
  %v582 = vpack.c.bf16 %v578, %v578
  %v583 = vpack.c.bf16 %v579, %v579
  %v584 = vpack.c.bf16 %v580, %v580
  %vm585 = vcmask 781312
  %586 = vst.msk [vmem:[#allocation2 + $0x40] sm:$0xf] %vm585, %v581
  %587 = vst.msk [vmem:[#allocation2 + $0x50] sm:$0xf] %vm585, %v582
  %588 = vst.msk [vmem:[#allocation2 + $0x60] sm:$0xf] %vm585, %v583
  %589 = vst.msk [vmem:[#allocation2 + $0x70] sm:$0xf] %vm585, %v584
  %v590 = vsel %vm530, %v506, %v549
  %v591 = vsel %vm530, %v507, %v551
  %v592 = vsel %vm530, %v508, %v553
  %v593 = vsel %vm530, %v509, %v555
  %v594 = vsel %vm576, %v590, %v561
  %v595 = vsel %vm576, %v591, %v563
  %v596 = vsel %vm576, %v592, %v565
  %v597 = vsel %vm576, %v593, %v567
  %v598 = vpack.c.bf16 %v594, %v594
  %v599 = vpack.c.bf16 %v595, %v595
  %v600 = vpack.c.bf16 %v596, %v596
  %v601 = vpack.c.bf16 %v597, %v597
  %606 = vrot.lane.b32.xlu0 %v598, 32
  %v607 = vpop.permute.xlu0 %606
  %608 = vrot.lane.b32.xlu0 %v599, 32
  %v609 = vpop.permute.xlu0 %608
  %610 = vrot.lane.b32.xlu0 %v600, 32
  %v611 = vpop.permute.xlu0 %610
  %612 = vrot.lane.b32.xlu0 %v601, 32
  %v613 = vpop.permute.xlu0 %612
  %vm618 = vcmask 1043712
  %619 = vst.msk [vmem:[#allocation2 + $0x80] sm:$0xf] %vm618, %v607
  %620 = vst.msk [vmem:[#allocation2 + $0x90] sm:$0xf] %vm618, %v609
  %621 = vst.msk [vmem:[#allocation2 + $0xa0] sm:$0xf] %vm618, %v611
  %622 = vst.msk [vmem:[#allocation2 + $0xb0] sm:$0xf] %vm618, %v613
  %623 = vrot.lane.b32.xlu0 %v598, 64
  %v624 = vpop.permute.xlu0 %623
  %625 = vrot.lane.b32.xlu0 %v599, 64
  %v626 = vpop.permute.xlu0 %625
  %627 = vrot.lane.b32.xlu0 %v600, 64
  %v628 = vpop.permute.xlu0 %627
  %629 = vrot.lane.b32.xlu0 %v601, 64
  %v630 = vpop.permute.xlu0 %629
  %v631 = vrot.slane %v624, 4
  %v632 = vrot.slane %v626, 4
  %v633 = vrot.slane %v628, 4
  %v634 = vrot.slane %v630, 4
  %vm635 = vcmask 523264
  %v636 = vsel %vm635, %v631, %v624
  %v637 = vsel %vm635, %v632, %v626
  %v638 = vsel %vm635, %v633, %v628
  %v639 = vsel %vm635, %v634, %v630
  %vm644 = vcmask 1043968
  %vm645 = vcmask 261124
  %vm646 = vmor %vm645, %vm644
  %647 = vst.msk [vmem:[#allocation2 + $0xc0] sm:$0xff] %vm646, %v636
  %648 = vst.msk [vmem:[#allocation2 + $0xd0] sm:$0xff] %vm646, %v637
  %649 = vst.msk [vmem:[#allocation2 + $0xe0] sm:$0xff] %vm646, %v638
  %650 = vst.msk [vmem:[#allocation2 + $0xf0] sm:$0xff] %vm646, %v639
  %651 = vrot.lane.b32.xlu0 %v598, 96
  %v652 = vpop.permute.xlu0 %651
  %653 = vrot.lane.b32.xlu0 %v599, 96
  %v654 = vpop.permute.xlu0 %653
  %655 = vrot.lane.b32.xlu0 %v600, 96
  %v656 = vpop.permute.xlu0 %655
  %657 = vrot.lane.b32.xlu0 %v601, 96
  %v658 = vpop.permute.xlu0 %657
  %v659 = vrot.slane %v652, 4
  %v660 = vrot.slane %v654, 4
  %v661 = vrot.slane %v656, 4
  %v662 = vrot.slane %v658, 4
  %vm663 = vcmask 785408
  %v664 = vsel %vm663, %v659, %v652
  %v665 = vsel %vm663, %v660, %v654
  %v666 = vsel %vm663, %v661, %v656
  %v667 = vsel %vm663, %v662, %v658
  %vm672 = vcmask 1044224
  %vm673 = vcmask 523268
  %vm674 = vmor %vm673, %vm672
  %675 = vst.msk [vmem:[#allocation2 + $0x100] sm:$0xff] %vm674, %v664
  %676 = vst.msk [vmem:[#allocation2 + $0x110] sm:$0xff] %vm674, %v665
  %677 = vst.msk [vmem:[#allocation2 + $0x120] sm:$0xff] %vm674, %v666
  %678 = vst.msk [vmem:[#allocation2 + $0x130] sm:$0xff] %vm674, %v667
  %679 = vst.msk [vmem:[#allocation2 + $0x144] sm:$0xf] %vm585, %v598
  %680 = vst.msk [vmem:[#allocation2 + $0x154] sm:$0xf] %vm585, %v599
  %681 = vst.msk [vmem:[#allocation2 + $0x164] sm:$0xf] %vm585, %v600
  %682 = vst.msk [vmem:[#allocation2 + $0x174] sm:$0xf] %vm585, %v601
  %683 = vst.msk [vmem:[#allocation2 + $0x184] sm:$0xf] %vm618, %v607
  %684 = vst.msk [vmem:[#allocation2 + $0x194] sm:$0xf] %vm618, %v609
  %685 = vst.msk [vmem:[#allocation2 + $0x1a4] sm:$0xf] %vm618, %v611
  %686 = vst.msk [vmem:[#allocation2 + $0x1b4] sm:$0xf] %vm618, %v613
  %687 = vst.msk [vmem:[#allocation2 + $0x1c4] sm:$0xff] %vm646, %v636
  %688 = vst.msk [vmem:[#allocation2 + $0x1d4] sm:$0xff] %vm646, %v637
  %689 = vst.msk [vmem:[#allocation2 + $0x1e4] sm:$0xff] %vm646, %v638
  %690 = vst.msk [vmem:[#allocation2 + $0x1f4] sm:$0xff] %vm646, %v639
  %691 = vst.msk [vmem:[#allocation2 + $0x204] sm:$0xff] %vm674, %v664
  %692 = vst.msk [vmem:[#allocation2 + $0x214] sm:$0xff] %vm674, %v665
  %693 = vst.msk [vmem:[#allocation2 + $0x224] sm:$0xff] %vm674, %v666
  %694 = vst.msk [vmem:[#allocation2 + $0x234] sm:$0xff] %vm674, %v667
  %695 = vst.msk [vmem:[#allocation2 + $0x248] sm:$0xf] %vm585, %v598
  %696 = vst.msk [vmem:[#allocation2 + $0x258] sm:$0xf] %vm585, %v599
  %697 = vst.msk [vmem:[#allocation2 + $0x268] sm:$0xf] %vm585, %v600
  %698 = vst.msk [vmem:[#allocation2 + $0x278] sm:$0xf] %vm585, %v601
  %699 = vst.msk [vmem:[#allocation2 + $0x288] sm:$0xf] %vm618, %v607
  %700 = vst.msk [vmem:[#allocation2 + $0x298] sm:$0xf] %vm618, %v609
  %701 = vst.msk [vmem:[#allocation2 + $0x2a8] sm:$0xf] %vm618, %v611
  %702 = vst.msk [vmem:[#allocation2 + $0x2b8] sm:$0xf] %vm618, %v613
  %703 = vst.msk [vmem:[#allocation2 + $0x2c8] sm:$0xff] %vm646, %v636
  %704 = vst.msk [vmem:[#allocation2 + $0x2d8] sm:$0xff] %vm646, %v637
  %705 = vst.msk [vmem:[#allocation2 + $0x2e8] sm:$0xff] %vm646, %v638
  %706 = vst.msk [vmem:[#allocation2 + $0x2f8] sm:$0xff] %vm646, %v639
  %707 = vst.msk [vmem:[#allocation2 + $0x308] sm:$0xff] %vm674, %v664
  %708 = vst.msk [vmem:[#allocation2 + $0x318] sm:$0xff] %vm674, %v665
  %709 = vst.msk [vmem:[#allocation2 + $0x328] sm:$0xff] %vm674, %v666
  %710 = vst.msk [vmem:[#allocation2 + $0x338] sm:$0xff] %vm674, %v667
  %711 = vst.msk [vmem:[#allocation2 + $0x34c] sm:$0xf] %vm585, %v598
  %712 = vst.msk [vmem:[#allocation2 + $0x35c] sm:$0xf] %vm585, %v599
  %713 = vst.msk [vmem:[#allocation2 + $0x36c] sm:$0xf] %vm585, %v600
  %714 = vst.msk [vmem:[#allocation2 + $0x37c] sm:$0xf] %vm585, %v601
  %719 = vrot.lane.b32.xlu0 %v510, 64
  %v720 = vpop.permute.xlu0 %719
  %721 = vrot.lane.b32.xlu0 %v511, 64
  %v722 = vpop.permute.xlu0 %721
  %723 = vrot.lane.b32.xlu0 %v512, 64
  %v724 = vpop.permute.xlu0 %723
  %725 = vrot.lane.b32.xlu0 %v513, 64
  %v726 = vpop.permute.xlu0 %725
  %v731 = vsel %vm576, %v590, %v720
  %v732 = vsel %vm576, %v591, %v722
  %v733 = vsel %vm576, %v592, %v724
  %v734 = vsel %vm576, %v593, %v726
  %v735 = vpack.c.bf16 %v731, %v731
  %v736 = vpack.c.bf16 %v732, %v732
  %v737 = vpack.c.bf16 %v733, %v733
  %v738 = vpack.c.bf16 %v734, %v734
  %743 = vrot.lane.b32.xlu0 %v735, 32
  %v744 = vpop.permute.xlu0 %743
  %745 = vrot.lane.b32.xlu0 %v736, 32
  %v746 = vpop.permute.xlu0 %745
  %747 = vrot.lane.b32.xlu0 %v737, 32
  %v748 = vpop.permute.xlu0 %747
  %749 = vrot.lane.b32.xlu0 %v738, 32
  %v750 = vpop.permute.xlu0 %749
  %755 = vst.msk [vmem:[#allocation2 + $0x38c] sm:$0xf] %vm618, %v744
  %756 = vst.msk [vmem:[#allocation2 + $0x39c] sm:$0xf] %vm618, %v746
  %757 = vst.msk [vmem:[#allocation2 + $0x3ac] sm:$0xf] %vm618, %v748
  %758 = vst.msk [vmem:[#allocation2 + $0x3bc] sm:$0xf] %vm618, %v750
  %v759 = vpack.c.bf16 %v590, %v590
  %v760 = vpack.c.bf16 %v591, %v591
  %v761 = vpack.c.bf16 %v592, %v592
  %v762 = vpack.c.bf16 %v593, %v593
  %767 = vrot.lane.b32.xlu0 %v759, 64
  %v768 = vpop.permute.xlu0 %767
  %769 = vrot.lane.b32.xlu0 %v760, 64
  %v770 = vpop.permute.xlu0 %769
  %771 = vrot.lane.b32.xlu0 %v761, 64
  %v772 = vpop.permute.xlu0 %771
  %773 = vrot.lane.b32.xlu0 %v762, 64
  %v774 = vpop.permute.xlu0 %773
  %779 = vst.msk [vmem:[#allocation2 + $0x3cc] sm:$0xf] %vm644, %v768
  %780 = vst.msk [vmem:[#allocation2 + $0x3dc] sm:$0xf] %vm644, %v770
  %781 = vst.msk [vmem:[#allocation2 + $0x3ec] sm:$0xf] %vm644, %v772
  %782 = vst.msk [vmem:[#allocation2 + $0x3fc] sm:$0xf] %vm644, %v774
  %s783 = scalar_lea.vmem %s1, 96
  %v784 = vld [vmem:[%s783] sm:$0xff]
  %v785 = vld [vmem:[%s783 + $0x8] sm:$0xff]
  %v786 = vld [vmem:[%s783 + $0x10] sm:$0xff]
  %v787 = vld [vmem:[%s783 + $0x18] sm:$0xff]
  %s788 = scalar_lea.vmem %s1, 128
  %v789 = vld [vmem:[%s788] sm:$0xff]
  %v790 = vld [vmem:[%s788 + $0x8] sm:$0xff]
  %v791 = vld [vmem:[%s788 + $0x10] sm:$0xff]
  %v792 = vld [vmem:[%s788 + $0x18] sm:$0xff]
  %s793 = scalar_lea.vmem %s1, 160
  %v794 = vld [vmem:[%s793] sm:$0xff]
  %v795 = vld [vmem:[%s793 + $0x8] sm:$0xff]
  %v796 = vld [vmem:[%s793 + $0x10] sm:$0xff]
  %v797 = vld [vmem:[%s793 + $0x18] sm:$0xff]
  %v798 = vadd.f32 %v784, %v794
  %v799 = vadd.f32 %v785, %v795
  %v800 = vadd.f32 %v786, %v796
  %v801 = vadd.f32 %v787, %v797
  %806 = vrot.lane.b32.xlu0 %v784, 32
  %v807 = vpop.permute.xlu0 %806
  %808 = vrot.lane.b32.xlu0 %v785, 32
  %v809 = vpop.permute.xlu0 %808
  %810 = vrot.lane.b32.xlu0 %v786, 32
  %v811 = vpop.permute.xlu0 %810
  %812 = vrot.lane.b32.xlu0 %v787, 32
  %v813 = vpop.permute.xlu0 %812
  %v818 = vsel %vm530, %v789, %v807
  %v819 = vsel %vm530, %v790, %v809
  %v820 = vsel %vm530, %v791, %v811
  %v821 = vsel %vm530, %v792, %v813
  %v822 = vpack.c.bf16 %v818, %v818
  %v823 = vpack.c.bf16 %v819, %v819
  %v824 = vpack.c.bf16 %v820, %v820
  %v825 = vpack.c.bf16 %v821, %v821
  %s826 = scalar_lea.vmem [#allocation2], 1024
  %827 = vst.msk [vmem:[%s826] sm:$0xf] %vm539, %v822
  %828 = vst.msk [vmem:[%s826 + $0x10] sm:$0xf] %vm539, %v823
  %829 = vst.msk [vmem:[%s826 + $0x20] sm:$0xf] %vm539, %v824
  %830 = vst.msk [vmem:[%s826 + $0x30] sm:$0xf] %vm539, %v825
  %835 = vrot.lane.b32.xlu0 %v789, 32
  %v836 = vpop.permute.xlu0 %835
  %837 = vrot.lane.b32.xlu0 %v790, 32
  %v838 = vpop.permute.xlu0 %837
  %839 = vrot.lane.b32.xlu0 %v791, 32
  %v840 = vpop.permute.xlu0 %839
  %841 = vrot.lane.b32.xlu0 %v792, 32
  %v842 = vpop.permute.xlu0 %841
  %847 = vrot.lane.b32.xlu0 %v784, 64
  %v848 = vpop.permute.xlu0 %847
  %849 = vrot.lane.b32.xlu0 %v785, 64
  %v850 = vpop.permute.xlu0 %849
  %851 = vrot.lane.b32.xlu0 %v786, 64
  %v852 = vpop.permute.xlu0 %851
  %853 = vrot.lane.b32.xlu0 %v787, 64
  %v854 = vpop.permute.xlu0 %853
  %v859 = vsel %vm530, %v798, %v836
  %v860 = vsel %vm530, %v799, %v838
  %v861 = vsel %vm530, %v800, %v840
  %v862 = vsel %vm530, %v801, %v842
  %v863 = vsel %vm576, %v859, %v848
  %v864 = vsel %vm576, %v860, %v850
  %v865 = vsel %vm576, %v861, %v852
  %v866 = vsel %vm576, %v862, %v854
  %v867 = vpack.c.bf16 %v863, %v863
  %v868 = vpack.c.bf16 %v864, %v864
  %v869 = vpack.c.bf16 %v865, %v865
  %v870 = vpack.c.bf16 %v866, %v866
  %871 = vst.msk [vmem:[%s826 + $0x40] sm:$0xf] %vm585, %v867
  %872 = vst.msk [vmem:[%s826 + $0x50] sm:$0xf] %vm585, %v868
  %873 = vst.msk [vmem:[%s826 + $0x60] sm:$0xf] %vm585, %v869
  %874 = vst.msk [vmem:[%s826 + $0x70] sm:$0xf] %vm585, %v870
  %v875 = vsel %vm530, %v794, %v836
  %v876 = vsel %vm530, %v795, %v838
  %v877 = vsel %vm530, %v796, %v840
  %v878 = vsel %vm530, %v797, %v842
  %v879 = vsel %vm576, %v875, %v848
  %v880 = vsel %vm576, %v876, %v850
  %v881 = vsel %vm576, %v877, %v852
  %v882 = vsel %vm576, %v878, %v854
  %v883 = vpack.c.bf16 %v879, %v879
  %v884 = vpack.c.bf16 %v880, %v880
  %v885 = vpack.c.bf16 %v881, %v881
  %v886 = vpack.c.bf16 %v882, %v882
  %891 = vrot.lane.b32.xlu0 %v883, 32
  %v892 = vpop.permute.xlu0 %891
  %893 = vrot.lane.b32.xlu0 %v884, 32
  %v894 = vpop.permute.xlu0 %893
  %895 = vrot.lane.b32.xlu0 %v885, 32
  %v896 = vpop.permute.xlu0 %895
  %897 = vrot.lane.b32.xlu0 %v886, 32
  %v898 = vpop.permute.xlu0 %897
  %903 = vst.msk [vmem:[%s826 + $0x80] sm:$0xf] %vm618, %v892
  %904 = vst.msk [vmem:[%s826 + $0x90] sm:$0xf] %vm618, %v894
  %905 = vst.msk [vmem:[%s826 + $0xa0] sm:$0xf] %vm618, %v896
  %906 = vst.msk [vmem:[%s826 + $0xb0] sm:$0xf] %vm618, %v898
  %907 = vrot.lane.b32.xlu0 %v883, 64
  %v908 = vpop.permute.xlu0 %907
  %909 = vrot.lane.b32.xlu0 %v884, 64
  %v910 = vpop.permute.xlu0 %909
  %911 = vrot.lane.b32.xlu0 %v885, 64
  %v912 = vpop.permute.xlu0 %911
  %913 = vrot.lane.b32.xlu0 %v886, 64
  %v914 = vpop.permute.xlu0 %913
  %v915 = vrot.slane %v908, 4
  %v916 = vrot.slane %v910, 4
  %v917 = vrot.slane %v912, 4
  %v918 = vrot.slane %v914, 4
  %v919 = vsel %vm635, %v915, %v908
  %v920 = vsel %vm635, %v916, %v910
  %v921 = vsel %vm635, %v917, %v912
  %v922 = vsel %vm635, %v918, %v914
  %927 = vst.msk [vmem:[%s826 + $0xc0] sm:$0xff] %vm646, %v919
  %928 = vst.msk [vmem:[%s826 + $0xd0] sm:$0xff] %vm646, %v920
  %929 = vst.msk [vmem:[%s826 + $0xe0] sm:$0xff] %vm646, %v921
  %930 = vst.msk [vmem:[%s826 + $0xf0] sm:$0xff] %vm646, %v922
  %931 = vrot.lane.b32.xlu0 %v883, 96
  %v932 = vpop.permute.xlu0 %931
  %933 = vrot.lane.b32.xlu0 %v884, 96
  %v934 = vpop.permute.xlu0 %933
  %935 = vrot.lane.b32.xlu0 %v885, 96
  %v936 = vpop.permute.xlu0 %935
  %937 = vrot.lane.b32.xlu0 %v886, 96
  %v938 = vpop.permute.xlu0 %937
  %v939 = vrot.slane %v932, 4
  %v940 = vrot.slane %v934, 4
  %v941 = vrot.slane %v936, 4
  %v942 = vrot.slane %v938, 4
  %v943 = vsel %vm663, %v939, %v932
  %v944 = vsel %vm663, %v940, %v934
  %v945 = vsel %vm663, %v941, %v936
  %v946 = vsel %vm663, %v942, %v938
  %951 = vst.msk [vmem:[%s826 + $0x100] sm:$0xff] %vm674, %v943
  %952 = vst.msk [vmem:[%s826 + $0x110] sm:$0xff] %vm674, %v944
  %953 = vst.msk [vmem:[%s826 + $0x120] sm:$0xff] %vm674, %v945
  %954 = vst.msk [vmem:[%s826 + $0x130] sm:$0xff] %vm674, %v946
  %955 = vst.msk [vmem:[%s826 + $0x144] sm:$0xf] %vm585, %v883
  %956 = vst.msk [vmem:[%s826 + $0x154] sm:$0xf] %vm585, %v884
  %957 = vst.msk [vmem:[%s826 + $0x164] sm:$0xf] %vm585, %v885
  %958 = vst.msk [vmem:[%s826 + $0x174] sm:$0xf] %vm585, %v886
  %959 = vst.msk [vmem:[%s826 + $0x184] sm:$0xf] %vm618, %v892
  %960 = vst.msk [vmem:[%s826 + $0x194] sm:$0xf] %vm618, %v894
  %961 = vst.msk [vmem:[%s826 + $0x1a4] sm:$0xf] %vm618, %v896
  %962 = vst.msk [vmem:[%s826 + $0x1b4] sm:$0xf] %vm618, %v898
  %963 = vst.msk [vmem:[%s826 + $0x1c4] sm:$0xff] %vm646, %v919
  %964 = vst.msk [vmem:[%s826 + $0x1d4] sm:$0xff] %vm646, %v920
  %965 = vst.msk [vmem:[%s826 + $0x1e4] sm:$0xff] %vm646, %v921
  %966 = vst.msk [vmem:[%s826 + $0x1f4] sm:$0xff] %vm646, %v922
  %967 = vst.msk [vmem:[%s826 + $0x204] sm:$0xff] %vm674, %v943
  %968 = vst.msk [vmem:[%s826 + $0x214] sm:$0xff] %vm674, %v944
  %969 = vst.msk [vmem:[%s826 + $0x224] sm:$0xff] %vm674, %v945
  %970 = vst.msk [vmem:[%s826 + $0x234] sm:$0xff] %vm674, %v946
  %971 = vst.msk [vmem:[%s826 + $0x248] sm:$0xf] %vm585, %v883
  %972 = vst.msk [vmem:[%s826 + $0x258] sm:$0xf] %vm585, %v884
  %973 = vst.msk [vmem:[%s826 + $0x268] sm:$0xf] %vm585, %v885
  %974 = vst.msk [vmem:[%s826 + $0x278] sm:$0xf] %vm585, %v886
  %975 = vst.msk [vmem:[%s826 + $0x288] sm:$0xf] %vm618, %v892
  %976 = vst.msk [vmem:[%s826 + $0x298] sm:$0xf] %vm618, %v894
  %977 = vst.msk [vmem:[%s826 + $0x2a8] sm:$0xf] %vm618, %v896
  %978 = vst.msk [vmem:[%s826 + $0x2b8] sm:$0xf] %vm618, %v898
  %979 = vst.msk [vmem:[%s826 + $0x2c8] sm:$0xff] %vm646, %v919
  %980 = vst.msk [vmem:[%s826 + $0x2d8] sm:$0xff] %vm646, %v920
  %981 = vst.msk [vmem:[%s826 + $0x2e8] sm:$0xff] %vm646, %v921
  %982 = vst.msk [vmem:[%s826 + $0x2f8] sm:$0xff] %vm646, %v922
  %983 = vst.msk [vmem:[%s826 + $0x308] sm:$0xff] %vm674, %v943
  %984 = vst.msk [vmem:[%s826 + $0x318] sm:$0xff] %vm674, %v944
  %985 = vst.msk [vmem:[%s826 + $0x328] sm:$0xff] %vm674, %v945
  %986 = vst.msk [vmem:[%s826 + $0x338] sm:$0xff] %vm674, %v946
  %987 = vst.msk [vmem:[%s826 + $0x34c] sm:$0xf] %vm585, %v883
  %988 = vst.msk [vmem:[%s826 + $0x35c] sm:$0xf] %vm585, %v884
  %989 = vst.msk [vmem:[%s826 + $0x36c] sm:$0xf] %vm585, %v885
  %990 = vst.msk [vmem:[%s826 + $0x37c] sm:$0xf] %vm585, %v886
  %995 = vrot.lane.b32.xlu0 %v798, 64
  %v996 = vpop.permute.xlu0 %995
  %997 = vrot.lane.b32.xlu0 %v799, 64
  %v998 = vpop.permute.xlu0 %997
  %999 = vrot.lane.b32.xlu0 %v800, 64
  %v1000 = vpop.permute.xlu0 %999
  %1001 = vrot.lane.b32.xlu0 %v801, 64
  %v1002 = vpop.permute.xlu0 %1001
  %v1007 = vsel %vm576, %v875, %v996
  %v1008 = vsel %vm576, %v876, %v998
  %v1009 = vsel %vm576, %v877, %v1000
  %v1010 = vsel %vm576, %v878, %v1002
  %v1011 = vpack.c.bf16 %v1007, %v1007
  %v1012 = vpack.c.bf16 %v1008, %v1008
  %v1013 = vpack.c.bf16 %v1009, %v1009
  %v1014 = vpack.c.bf16 %v1010, %v1010
  %1019 = vrot.lane.b32.xlu0 %v1011, 32
  %v1020 = vpop.permute.xlu0 %1019
  %1021 = vrot.lane.b32.xlu0 %v1012, 32
  %v1022 = vpop.permute.xlu0 %1021
  %1023 = vrot.lane.b32.xlu0 %v1013, 32
  %v1024 = vpop.permute.xlu0 %1023
  %1025 = vrot.lane.b32.xlu0 %v1014, 32
  %v1026 = vpop.permute.xlu0 %1025
  %1031 = vst.msk [vmem:[%s826 + $0x38c] sm:$0xf] %vm618, %v1020
  %1032 = vst.msk [vmem:[%s826 + $0x39c] sm:$0xf] %vm618, %v1022
  %1033 = vst.msk [vmem:[%s826 + $0x3ac] sm:$0xf] %vm618, %v1024
  %1034 = vst.msk [vmem:[%s826 + $0x3bc] sm:$0xf] %vm618, %v1026
  %v1035 = vpack.c.bf16 %v875, %v875
  %v1036 = vpack.c.bf16 %v876, %v876
  %v1037 = vpack.c.bf16 %v877, %v877
  %v1038 = vpack.c.bf16 %v878, %v878
  %1043 = vrot.lane.b32.xlu0 %v1035, 64
  %v1044 = vpop.permute.xlu0 %1043
  %1045 = vrot.lane.b32.xlu0 %v1036, 64
  %v1046 = vpop.permute.xlu0 %1045
  %1047 = vrot.lane.b32.xlu0 %v1037, 64
  %v1048 = vpop.permute.xlu0 %1047
  %1049 = vrot.lane.b32.xlu0 %v1038, 64
  %v1050 = vpop.permute.xlu0 %1049
  %1055 = vst.msk [vmem:[%s826 + $0x3cc] sm:$0xf] %vm644, %v1044
  %1056 = vst.msk [vmem:[%s826 + $0x3dc] sm:$0xf] %vm644, %v1046
  %1057 = vst.msk [vmem:[%s826 + $0x3ec] sm:$0xf] %vm644, %v1048
  %1058 = vst.msk [vmem:[%s826 + $0x3fc] sm:$0xf] %vm644, %v1050
  %s1059 = scalar_lea.vmem %s1, 192
  %v1060 = vld [vmem:[%s1059] sm:$0xff]
  %v1061 = vld [vmem:[%s1059 + $0x8] sm:$0xff]
  %v1062 = vld [vmem:[%s1059 + $0x10] sm:$0xff]
  %v1063 = vld [vmem:[%s1059 + $0x18] sm:$0xff]
  %s1064 = scalar_lea.vmem %s1, 224
  %v1065 = vld [vmem:[%s1064] sm:$0xff]
  %v1066 = vld [vmem:[%s1064 + $0x8] sm:$0xff]
  %v1067 = vld [vmem:[%s1064 + $0x10] sm:$0xff]
  %v1068 = vld [vmem:[%s1064 + $0x18] sm:$0xff]
  %s1069 = scalar_lea.vmem %s1, 256
  %v1070 = vld [vmem:[%s1069] sm:$0xff]
  %v1071 = vld [vmem:[%s1069 + $0x8] sm:$0xff]
  %v1072 = vld [vmem:[%s1069 + $0x10] sm:$0xff]
  %v1073 = vld [vmem:[%s1069 + $0x18] sm:$0xff]
  %v1074 = vadd.f32 %v1060, %v1070
  %v1075 = vadd.f32 %v1061, %v1071
  %v1076 = vadd.f32 %v1062, %v1072
  %v1077 = vadd.f32 %v1063, %v1073
  %1082 = vrot.lane.b32.xlu0 %v1060, 32
  %v1083 = vpop.permute.xlu0 %1082
  %1084 = vrot.lane.b32.xlu0 %v1061, 32
  %v1085 = vpop.permute.xlu0 %1084
  %1086 = vrot.lane.b32.xlu0 %v1062, 32
  %v1087 = vpop.permute.xlu0 %1086
  %1088 = vrot.lane.b32.xlu0 %v1063, 32
  %v1089 = vpop.permute.xlu0 %1088
  %v1094 = vsel %vm530, %v1065, %v1083
  %v1095 = vsel %vm530, %v1066, %v1085
  %v1096 = vsel %vm530, %v1067, %v1087
  %v1097 = vsel %vm530, %v1068, %v1089
  %v1098 = vpack.c.bf16 %v1094, %v1094
  %v1099 = vpack.c.bf16 %v1095, %v1095
  %v1100 = vpack.c.bf16 %v1096, %v1096
  %v1101 = vpack.c.bf16 %v1097, %v1097
  %s1102 = scalar_lea.vmem [#allocation2], 2048
  %1103 = vst.msk [vmem:[%s1102] sm:$0xf] %vm539, %v1098
  %1104 = vst.msk [vmem:[%s1102 + $0x10] sm:$0xf] %vm539, %v1099
  %1105 = vst.msk [vmem:[%s1102 + $0x20] sm:$0xf] %vm539, %v1100
  %1106 = vst.msk [vmem:[%s1102 + $0x30] sm:$0xf] %vm539, %v1101
  %1111 = vrot.lane.b32.xlu0 %v1065, 32
  %v1112 = vpop.permute.xlu0 %1111
  %1113 = vrot.lane.b32.xlu0 %v1066, 32
  %v1114 = vpop.permute.xlu0 %1113
  %1115 = vrot.lane.b32.xlu0 %v1067, 32
  %v1116 = vpop.permute.xlu0 %1115
  %1117 = vrot.lane.b32.xlu0 %v1068, 32
  %v1118 = vpop.permute.xlu0 %1117
  %1123 = vrot.lane.b32.xlu0 %v1060, 64
  %v1124 = vpop.permute.xlu0 %1123
  %1125 = vrot.lane.b32.xlu0 %v1061, 64
  %v1126 = vpop.permute.xlu0 %1125
  %1127 = vrot.lane.b32.xlu0 %v1062, 64
  %v1128 = vpop.permute.xlu0 %1127
  %1129 = vrot.lane.b32.xlu0 %v1063, 64
  %v1130 = vpop.permute.xlu0 %1129
  %v1135 = vsel %vm530, %v1074, %v1112
  %v1136 = vsel %vm530, %v1075, %v1114
  %v1137 = vsel %vm530, %v1076, %v1116
  %v1138 = vsel %vm530, %v1077, %v1118
  %v1139 = vsel %vm576, %v1135, %v1124
  %v1140 = vsel %vm576, %v1136, %v1126
  %v1141 = vsel %vm576, %v1137, %v1128
  %v1142 = vsel %vm576, %v1138, %v1130
  %v1143 = vpack.c.bf16 %v1139, %v1139
  %v1144 = vpack.c.bf16 %v1140, %v1140
  %v1145 = vpack.c.bf16 %v1141, %v1141
  %v1146 = vpack.c.bf16 %v1142, %v1142
  %1147 = vst.msk [vmem:[%s1102 + $0x40] sm:$0xf] %vm585, %v1143
  %1148 = vst.msk [vmem:[%s1102 + $0x50] sm:$0xf] %vm585, %v1144
  %1149 = vst.msk [vmem:[%s1102 + $0x60] sm:$0xf] %vm585, %v1145
  %1150 = vst.msk [vmem:[%s1102 + $0x70] sm:$0xf] %vm585, %v1146
  %v1151 = vsel %vm530, %v1070, %v1112
  %v1152 = vsel %vm530, %v1071, %v1114
  %v1153 = vsel %vm530, %v1072, %v1116
  %v1154 = vsel %vm530, %v1073, %v1118
  %v1155 = vsel %vm576, %v1151, %v1124
  %v1156 = vsel %vm576, %v1152, %v1126
  %v1157 = vsel %vm576, %v1153, %v1128
  %v1158 = vsel %vm576, %v1154, %v1130
  %v1159 = vpack.c.bf16 %v1155, %v1155
  %v1160 = vpack.c.bf16 %v1156, %v1156
  %v1161 = vpack.c.bf16 %v1157, %v1157
  %v1162 = vpack.c.bf16 %v1158, %v1158
  %1167 = vrot.lane.b32.xlu0 %v1159, 32
  %v1168 = vpop.permute.xlu0 %1167
  %1169 = vrot.lane.b32.xlu0 %v1160, 32
  %v1170 = vpop.permute.xlu0 %1169
  %1171 = vrot.lane.b32.xlu0 %v1161, 32
  %v1172 = vpop.permute.xlu0 %1171
  %1173 = vrot.lane.b32.xlu0 %v1162, 32
  %v1174 = vpop.permute.xlu0 %1173
  %1179 = vst.msk [vmem:[%s1102 + $0x80] sm:$0xf] %vm618, %v1168
  %1180 = vst.msk [vmem:[%s1102 + $0x90] sm:$0xf] %vm618, %v1170
  %1181 = vst.msk [vmem:[%s1102 + $0xa0] sm:$0xf] %vm618, %v1172
  %1182 = vst.msk [vmem:[%s1102 + $0xb0] sm:$0xf] %vm618, %v1174
  %1183 = vrot.lane.b32.xlu0 %v1159, 64
  %v1184 = vpop.permute.xlu0 %1183
  %1185 = vrot.lane.b32.xlu0 %v1160, 64
  %v1186 = vpop.permute.xlu0 %1185
  %1187 = vrot.lane.b32.xlu0 %v1161, 64
  %v1188 = vpop.permute.xlu0 %1187
  %1189 = vrot.lane.b32.xlu0 %v1162, 64
  %v1190 = vpop.permute.xlu0 %1189
  %v1191 = vrot.slane %v1184, 4
  %v1192 = vrot.slane %v1186, 4
  %v1193 = vrot.slane %v1188, 4
  %v1194 = vrot.slane %v1190, 4
  %v1195 = vsel %vm635, %v1191, %v1184
  %v1196 = vsel %vm635, %v1192, %v1186
  %v1197 = vsel %vm635, %v1193, %v1188
  %v1198 = vsel %vm635, %v1194, %v1190
  %1203 = vst.msk [vmem:[%s1102 + $0xc0] sm:$0xff] %vm646, %v1195
  %1204 = vst.msk [vmem:[%s1102 + $0xd0] sm:$0xff] %vm646, %v1196
  %1205 = vst.msk [vmem:[%s1102 + $0xe0] sm:$0xff] %vm646, %v1197
  %1206 = vst.msk [vmem:[%s1102 + $0xf0] sm:$0xff] %vm646, %v1198
  %1207 = vrot.lane.b32.xlu0 %v1159, 96
  %v1208 = vpop.permute.xlu0 %1207
  %1209 = vrot.lane.b32.xlu0 %v1160, 96
  %v1210 = vpop.permute.xlu0 %1209
  %1211 = vrot.lane.b32.xlu0 %v1161, 96
  %v1212 = vpop.permute.xlu0 %1211
  %1213 = vrot.lane.b32.xlu0 %v1162, 96
  %v1214 = vpop.permute.xlu0 %1213
  %v1215 = vrot.slane %v1208, 4
  %v1216 = vrot.slane %v1210, 4
  %v1217 = vrot.slane %v1212, 4
  %v1218 = vrot.slane %v1214, 4
  %v1219 = vsel %vm663, %v1215, %v1208
  %v1220 = vsel %vm663, %v1216, %v1210
  %v1221 = vsel %vm663, %v1217, %v1212
  %v1222 = vsel %vm663, %v1218, %v1214
  %1227 = vst.msk [vmem:[%s1102 + $0x100] sm:$0xff] %vm674, %v1219
  %1228 = vst.msk [vmem:[%s1102 + $0x110] sm:$0xff] %vm674, %v1220
  %1229 = vst.msk [vmem:[%s1102 + $0x120] sm:$0xff] %vm674, %v1221
  %1230 = vst.msk [vmem:[%s1102 + $0x130] sm:$0xff] %vm674, %v1222
  %1231 = vst.msk [vmem:[%s1102 + $0x144] sm:$0xf] %vm585, %v1159
  %1232 = vst.msk [vmem:[%s1102 + $0x154] sm:$0xf] %vm585, %v1160
  %1233 = vst.msk [vmem:[%s1102 + $0x164] sm:$0xf] %vm585, %v1161
  %1234 = vst.msk [vmem:[%s1102 + $0x174] sm:$0xf] %vm585, %v1162
  %1235 = vst.msk [vmem:[%s1102 + $0x184] sm:$0xf] %vm618, %v1168
  %1236 = vst.msk [vmem:[%s1102 + $0x194] sm:$0xf] %vm618, %v1170
  %1237 = vst.msk [vmem:[%s1102 + $0x1a4] sm:$0xf] %vm618, %v1172
  %1238 = vst.msk [vmem:[%s1102 + $0x1b4] sm:$0xf] %vm618, %v1174
  %1239 = vst.msk [vmem:[%s1102 + $0x1c4] sm:$0xff] %vm646, %v1195
  %1240 = vst.msk [vmem:[%s1102 + $0x1d4] sm:$0xff] %vm646, %v1196
  %1241 = vst.msk [vmem:[%s1102 + $0x1e4] sm:$0xff] %vm646, %v1197
  %1242 = vst.msk [vmem:[%s1102 + $0x1f4] sm:$0xff] %vm646, %v1198
  %1243 = vst.msk [vmem:[%s1102 + $0x204] sm:$0xff] %vm674, %v1219
  %1244 = vst.msk [vmem:[%s1102 + $0x214] sm:$0xff] %vm674, %v1220
  %1245 = vst.msk [vmem:[%s1102 + $0x224] sm:$0xff] %vm674, %v1221
  %1246 = vst.msk [vmem:[%s1102 + $0x234] sm:$0xff] %vm674, %v1222
  %1247 = vst.msk [vmem:[%s1102 + $0x248] sm:$0xf] %vm585, %v1159
  %1248 = vst.msk [vmem:[%s1102 + $0x258] sm:$0xf] %vm585, %v1160
  %1249 = vst.msk [vmem:[%s1102 + $0x268] sm:$0xf] %vm585, %v1161
  %1250 = vst.msk [vmem:[%s1102 + $0x278] sm:$0xf] %vm585, %v1162
  %1251 = vst.msk [vmem:[%s1102 + $0x288] sm:$0xf] %vm618, %v1168
  %1252 = vst.msk [vmem:[%s1102 + $0x298] sm:$0xf] %vm618, %v1170
  %1253 = vst.msk [vmem:[%s1102 + $0x2a8] sm:$0xf] %vm618, %v1172
  %1254 = vst.msk [vmem:[%s1102 + $0x2b8] sm:$0xf] %vm618, %v1174
  %1255 = vst.msk [vmem:[%s1102 + $0x2c8] sm:$0xff] %vm646, %v1195
  %1256 = vst.msk [vmem:[%s1102 + $0x2d8] sm:$0xff] %vm646, %v1196
  %1257 = vst.msk [vmem:[%s1102 + $0x2e8] sm:$0xff] %vm646, %v1197
  %1258 = vst.msk [vmem:[%s1102 + $0x2f8] sm:$0xff] %vm646, %v1198
  %1259 = vst.msk [vmem:[%s1102 + $0x308] sm:$0xff] %vm674, %v1219
  %1260 = vst.msk [vmem:[%s1102 + $0x318] sm:$0xff] %vm674, %v1220
  %1261 = vst.msk [vmem:[%s1102 + $0x328] sm:$0xff] %vm674, %v1221
  %1262 = vst.msk [vmem:[%s1102 + $0x338] sm:$0xff] %vm674, %v1222
  %1263 = vst.msk [vmem:[%s1102 + $0x34c] sm:$0xf] %vm585, %v1159
  %1264 = vst.msk [vmem:[%s1102 + $0x35c] sm:$0xf] %vm585, %v1160
  %1265 = vst.msk [vmem:[%s1102 + $0x36c] sm:$0xf] %vm585, %v1161
  %1266 = vst.msk [vmem:[%s1102 + $0x37c] sm:$0xf] %vm585, %v1162
  %1271 = vrot.lane.b32.xlu0 %v1074, 64
  %v1272 = vpop.permute.xlu0 %1271
  %1273 = vrot.lane.b32.xlu0 %v1075, 64
  %v1274 = vpop.permute.xlu0 %1273
  %1275 = vrot.lane.b32.xlu0 %v1076, 64
  %v1276 = vpop.permute.xlu0 %1275
  %1277 = vrot.lane.b32.xlu0 %v1077, 64
  %v1278 = vpop.permute.xlu0 %1277
  %v1283 = vsel %vm576, %v1151, %v1272
  %v1284 = vsel %vm576, %v1152, %v1274
  %v1285 = vsel %vm576, %v1153, %v1276
  %v1286 = vsel %vm576, %v1154, %v1278
  %v1287 = vpack.c.bf16 %v1283, %v1283
  %v1288 = vpack.c.bf16 %v1284, %v1284
  %v1289 = vpack.c.bf16 %v1285, %v1285
  %v1290 = vpack.c.bf16 %v1286, %v1286
  %1295 = vrot.lane.b32.xlu0 %v1287, 32
  %v1296 = vpop.permute.xlu0 %1295
  %1297 = vrot.lane.b32.xlu0 %v1288, 32
  %v1298 = vpop.permute.xlu0 %1297
  %1299 = vrot.lane.b32.xlu0 %v1289, 32
  %v1300 = vpop.permute.xlu0 %1299
  %1301 = vrot.lane.b32.xlu0 %v1290, 32
  %v1302 = vpop.permute.xlu0 %1301
  %1307 = vst.msk [vmem:[%s1102 + $0x38c] sm:$0xf] %vm618, %v1296
  %1308 = vst.msk [vmem:[%s1102 + $0x39c] sm:$0xf] %vm618, %v1298
  %1309 = vst.msk [vmem:[%s1102 + $0x3ac] sm:$0xf] %vm618, %v1300
  %1310 = vst.msk [vmem:[%s1102 + $0x3bc] sm:$0xf] %vm618, %v1302
  %v1311 = vpack.c.bf16 %v1151, %v1151
  %v1312 = vpack.c.bf16 %v1152, %v1152
  %v1313 = vpack.c.bf16 %v1153, %v1153
  %v1314 = vpack.c.bf16 %v1154, %v1154
  %1319 = vrot.lane.b32.xlu0 %v1311, 64
  %v1320 = vpop.permute.xlu0 %1319
  %1321 = vrot.lane.b32.xlu0 %v1312, 64
  %v1322 = vpop.permute.xlu0 %1321
  %1323 = vrot.lane.b32.xlu0 %v1313, 64
  %v1324 = vpop.permute.xlu0 %1323
  %1325 = vrot.lane.b32.xlu0 %v1314, 64
  %v1326 = vpop.permute.xlu0 %1325
  %1331 = vst.msk [vmem:[%s1102 + $0x3cc] sm:$0xf] %vm644, %v1320
  %1332 = vst.msk [vmem:[%s1102 + $0x3dc] sm:$0xf] %vm644, %v1322
  %1333 = vst.msk [vmem:[%s1102 + $0x3ec] sm:$0xf] %vm644, %v1324
  %1334 = vst.msk [vmem:[%s1102 + $0x3fc] sm:$0xf] %vm644, %v1326
  %v1335 = vld [vmem:[#allocation2] sm:$0xff]
  %v1336 = vld [vmem:[#allocation2 + $0x8] sm:$0xff]
  %v1337 = vld [vmem:[#allocation2 + $0x10] sm:$0xff]
  %v1338 = vld [vmem:[#allocation2 + $0x18] sm:$0xff]
  %v1339 = vld [vmem:[#allocation2 + $0x20] sm:$0xff]
  %v1340 = vld [vmem:[#allocation2 + $0x28] sm:$0xff]
  %v1341 = vld [vmem:[#allocation2 + $0x30] sm:$0xff]
  %v1342 = vld [vmem:[#allocation2 + $0x38] sm:$0xff]
  %v1343 = vld [vmem:[#allocation2 + $0x40] sm:$0xff]
  %v1344 = vld [vmem:[#allocation2 + $0x48] sm:$0xff]
  %v1345 = vld [vmem:[#allocation2 + $0x50] sm:$0xff]
  %v1346 = vld [vmem:[#allocation2 + $0x58] sm:$0xff]
  %v1347 = vld [vmem:[#allocation2 + $0x60] sm:$0xff]
  %v1348 = vld [vmem:[#allocation2 + $0x68] sm:$0xff]
  %v1349 = vld [vmem:[#allocation2 + $0x70] sm:$0xff]
  %v1350 = vld [vmem:[#allocation2 + $0x78] sm:$0xff]
  %v1351 = vld [vmem:[#allocation2 + $0x80] sm:$0xff]
  %v1352 = vld [vmem:[#allocation2 + $0x88] sm:$0xff]
  %v1353 = vld [vmem:[#allocation2 + $0x90] sm:$0xff]
  %v1354 = vld [vmem:[#allocation2 + $0x98] sm:$0xff]
  %v1355 = vld [vmem:[#allocation2 + $0xa0] sm:$0xff]
  %v1356 = vld [vmem:[#allocation2 + $0xa8] sm:$0xff]
  %v1357 = vld [vmem:[#allocation2 + $0xb0] sm:$0xff]
  %v1358 = vld [vmem:[#allocation2 + $0xb8] sm:$0xff]
  %v1359 = vld [vmem:[#allocation2 + $0xc0] sm:$0xff]
  %v1360 = vld [vmem:[#allocation2 + $0xc8] sm:$0xff]
  %v1361 = vld [vmem:[#allocation2 + $0xd0] sm:$0xff]
  %v1362 = vld [vmem:[#allocation2 + $0xd8] sm:$0xff]
  %v1363 = vld [vmem:[#allocation2 + $0xe0] sm:$0xff]
  %v1364 = vld [vmem:[#allocation2 + $0xe8] sm:$0xff]
  %v1365 = vld [vmem:[#allocation2 + $0xf0] sm:$0xff]
  %v1366 = vld [vmem:[#allocation2 + $0xf8] sm:$0xff]
  %v1367 = vld [vmem:[#allocation2 + $0x100] sm:$0xff]
  %v1368 = vld [vmem:[#allocation2 + $0x108] sm:$0xff]
  %v1369 = vld [vmem:[#allocation2 + $0x110] sm:$0xff]
  %v1370 = vld [vmem:[#allocation2 + $0x118] sm:$0xff]
  %v1371 = vld [vmem:[#allocation2 + $0x120] sm:$0xff]
  %v1372 = vld [vmem:[#allocation2 + $0x128] sm:$0xff]
  %v1373 = vld [vmem:[#allocation2 + $0x130] sm:$0xff]
  %v1374 = vld [vmem:[#allocation2 + $0x138] sm:$0xff]
  %v1375 = vld [vmem:[#allocation2 + $0x140] sm:$0xff]
  %v1376 = vld [vmem:[#allocation2 + $0x148] sm:$0xff]
  %v1377 = vld [vmem:[#allocation2 + $0x150] sm:$0xff]
  %v1378 = vld [vmem:[#allocation2 + $0x158] sm:$0xff]
  %v1379 = vld [vmem:[#allocation2 + $0x160] sm:$0xff]
  %v1380 = vld [vmem:[#allocation2 + $0x168] sm:$0xff]
  %v1381 = vld [vmem:[#allocation2 + $0x170] sm:$0xff]
  %v1382 = vld [vmem:[#allocation2 + $0x178] sm:$0xff]
  %v1383 = vld [vmem:[#allocation2 + $0x180] sm:$0xff]
  %v1384 = vld [vmem:[#allocation2 + $0x188] sm:$0xff]
  %v1385 = vld [vmem:[#allocation2 + $0x190] sm:$0xff]
  %v1386 = vld [vmem:[#allocation2 + $0x198] sm:$0xff]
  %v1387 = vld [vmem:[#allocation2 + $0x1a0] sm:$0xff]
  %v1388 = vld [vmem:[#allocation2 + $0x1a8] sm:$0xff]
  %v1389 = vld [vmem:[#allocation2 + $0x1b0] sm:$0xff]
  %v1390 = vld [vmem:[#allocation2 + $0x1b8] sm:$0xff]
  %v1391 = vld [vmem:[#allocation2 + $0x1c0] sm:$0xff]
  %v1392 = vld [vmem:[#allocation2 + $0x1c8] sm:$0xff]
  %v1393 = vld [vmem:[#allocation2 + $0x1d0] sm:$0xff]
  %v1394 = vld [vmem:[#allocation2 + $0x1d8] sm:$0xff]
  %v1395 = vld [vmem:[#allocation2 + $0x1e0] sm:$0xff]
  %v1396 = vld [vmem:[#allocation2 + $0x1e8] sm:$0xff]
  %v1397 = vld [vmem:[#allocation2 + $0x1f0] sm:$0xff]
  %v1398 = vld [vmem:[#allocation2 + $0x1f8] sm:$0xff]
  %v1399 = vld [vmem:[#allocation2 + $0x200] sm:$0xff]
  %v1400 = vld [vmem:[#allocation2 + $0x208] sm:$0xff]
  %v1401 = vld [vmem:[#allocation2 + $0x210] sm:$0xff]
  %v1402 = vld [vmem:[#allocation2 + $0x218] sm:$0xff]
  %v1403 = vld [vmem:[#allocation2 + $0x220] sm:$0xff]
  %v1404 = vld [vmem:[#allocation2 + $0x228] sm:$0xff]
  %v1405 = vld [vmem:[#allocation2 + $0x230] sm:$0xff]
  %v1406 = vld [vmem:[#allocation2 + $0x238] sm:$0xff]
  %v1407 = vld [vmem:[#allocation2 + $0x240] sm:$0xff]
  %v1408 = vld [vmem:[#allocation2 + $0x248] sm:$0xff]
  %v1409 = vld [vmem:[#allocation2 + $0x250] sm:$0xff]
  %v1410 = vld [vmem:[#allocation2 + $0x258] sm:$0xff]
  %v1411 = vld [vmem:[#allocation2 + $0x260] sm:$0xff]
  %v1412 = vld [vmem:[#allocation2 + $0x268] sm:$0xff]
  %v1413 = vld [vmem:[#allocation2 + $0x270] sm:$0xff]
  %v1414 = vld [vmem:[#allocation2 + $0x278] sm:$0xff]
  %v1415 = vld [vmem:[#allocation2 + $0x280] sm:$0xff]
  %v1416 = vld [vmem:[#allocation2 + $0x288] sm:$0xff]
  %v1417 = vld [vmem:[#allocation2 + $0x290] sm:$0xff]
  %v1418 = vld [vmem:[#allocation2 + $0x298] sm:$0xff]
  %v1419 = vld [vmem:[#allocation2 + $0x2a0] sm:$0xff]
  %v1420 = vld [vmem:[#allocation2 + $0x2a8] sm:$0xff]
  %v1421 = vld [vmem:[#allocation2 + $0x2b0] sm:$0xff]
  %v1422 = vld [vmem:[#allocation2 + $0x2b8] sm:$0xff]
  %v1423 = vld [vmem:[#allocation2 + $0x2c0] sm:$0xff]
  %v1424 = vld [vmem:[#allocation2 + $0x2c8] sm:$0xff]
  %v1425 = vld [vmem:[#allocation2 + $0x2d0] sm:$0xff]
  %v1426 = vld [vmem:[#allocation2 + $0x2d8] sm:$0xff]
  %v1427 = vld [vmem:[#allocation2 + $0x2e0] sm:$0xff]
  %v1428 = vld [vmem:[#allocation2 + $0x2e8] sm:$0xff]
  %v1429 = vld [vmem:[#allocation2 + $0x2f0] sm:$0xff]
  %v1430 = vld [vmem:[#allocation2 + $0x2f8] sm:$0xff]
  %v1431 = vld [vmem:[#allocation2 + $0x300] sm:$0xff]
  %v1432 = vld [vmem:[#allocation2 + $0x308] sm:$0xff]
  %v1433 = vld [vmem:[#allocation2 + $0x310] sm:$0xff]
  %v1434 = vld [vmem:[#allocation2 + $0x318] sm:$0xff]
  %v1435 = vld [vmem:[#allocation2 + $0x320] sm:$0xff]
  %v1436 = vld [vmem:[#allocation2 + $0x328] sm:$0xff]
  %v1437 = vld [vmem:[#allocation2 + $0x330] sm:$0xff]
  %v1438 = vld [vmem:[#allocation2 + $0x338] sm:$0xff]
  %v1439 = vld [vmem:[#allocation2 + $0x340] sm:$0xff]
  %v1440 = vld [vmem:[#allocation2 + $0x348] sm:$0xff]
  %v1441 = vld [vmem:[#allocation2 + $0x350] sm:$0xff]
  %v1442 = vld [vmem:[#allocation2 + $0x358] sm:$0xff]
  %v1443 = vld [vmem:[#allocation2 + $0x360] sm:$0xff]
  %v1444 = vld [vmem:[#allocation2 + $0x368] sm:$0xff]
  %v1445 = vld [vmem:[#allocation2 + $0x370] sm:$0xff]
  %v1446 = vld [vmem:[#allocation2 + $0x378] sm:$0xff]
  %v1447 = vld [vmem:[#allocation2 + $0x380] sm:$0xff]
  %v1448 = vld [vmem:[#allocation2 + $0x388] sm:$0xff]
  %v1449 = vld [vmem:[#allocation2 + $0x390] sm:$0xff]
  %v1450 = vld [vmem:[#allocation2 + $0x398] sm:$0xff]
  %v1451 = vld [vmem:[#allocation2 + $0x3a0] sm:$0xff]
  %v1452 = vld [vmem:[#allocation2 + $0x3a8] sm:$0xff]
  %v1453 = vld [vmem:[#allocation2 + $0x3b0] sm:$0xff]
  %v1454 = vld [vmem:[#allocation2 + $0x3b8] sm:$0xff]
  %v1455 = vld [vmem:[#allocation2 + $0x3c0] sm:$0xff]
  %v1456 = vld [vmem:[#allocation2 + $0x3c8] sm:$0xff]
  %v1457 = vld [vmem:[#allocation2 + $0x3d0] sm:$0xff]
  %v1458 = vld [vmem:[#allocation2 + $0x3d8] sm:$0xff]
  %v1459 = vld [vmem:[#allocation2 + $0x3e0] sm:$0xff]
  %v1460 = vld [vmem:[#allocation2 + $0x3e8] sm:$0xff]
  %v1461 = vld [vmem:[#allocation2 + $0x3f0] sm:$0xff]
  %v1462 = vld [vmem:[#allocation2 + $0x3f8] sm:$0xff]
  %v1591 = vunpack.c.l.b16 %v1335
  %v1592 = vunpack.c.h.b16 %v1335
  %v1593 = vunpack.c.l.b16 %v1336
  %v1594 = vunpack.c.h.b16 %v1336
  %v1595 = vunpack.c.l.b16 %v1337
  %v1596 = vunpack.c.h.b16 %v1337
  %v1597 = vunpack.c.l.b16 %v1338
  %v1598 = vunpack.c.h.b16 %v1338
  %v1599 = vunpack.c.l.b16 %v1339
  %v1600 = vunpack.c.h.b16 %v1339
  %v1601 = vunpack.c.l.b16 %v1340
  %v1602 = vunpack.c.h.b16 %v1340
  %v1603 = vunpack.c.l.b16 %v1341
  %v1604 = vunpack.c.h.b16 %v1341
  %v1605 = vunpack.c.l.b16 %v1342
  %v1606 = vunpack.c.h.b16 %v1342
  %v1607 = vunpack.c.l.b16 %v1343
  %v1608 = vunpack.c.h.b16 %v1343
  %v1609 = vunpack.c.l.b16 %v1344
  %v1610 = vunpack.c.h.b16 %v1344
  %v1611 = vunpack.c.l.b16 %v1345
  %v1612 = vunpack.c.h.b16 %v1345
  %v1613 = vunpack.c.l.b16 %v1346
  %v1614 = vunpack.c.h.b16 %v1346
  %v1615 = vunpack.c.l.b16 %v1347
  %v1616 = vunpack.c.h.b16 %v1347
  %v1617 = vunpack.c.l.b16 %v1348
  %v1618 = vunpack.c.h.b16 %v1348
  %v1619 = vunpack.c.l.b16 %v1349
  %v1620 = vunpack.c.h.b16 %v1349
  %v1621 = vunpack.c.l.b16 %v1350
  %v1622 = vunpack.c.h.b16 %v1350
  %v1623 = vunpack.c.l.b16 %v1351
  %v1624 = vunpack.c.h.b16 %v1351
  %v1625 = vunpack.c.l.b16 %v1352
  %v1626 = vunpack.c.h.b16 %v1352
  %v1627 = vunpack.c.l.b16 %v1353
  %v1628 = vunpack.c.h.b16 %v1353
  %v1629 = vunpack.c.l.b16 %v1354
  %v1630 = vunpack.c.h.b16 %v1354
  %v1631 = vunpack.c.l.b16 %v1355
  %v1632 = vunpack.c.h.b16 %v1355
  %v1633 = vunpack.c.l.b16 %v1356
  %v1634 = vunpack.c.h.b16 %v1356
  %v1635 = vunpack.c.l.b16 %v1357
  %v1636 = vunpack.c.h.b16 %v1357
  %v1637 = vunpack.c.l.b16 %v1358
  %v1638 = vunpack.c.h.b16 %v1358
  %v1639 = vunpack.c.l.b16 %v1359
  %v1640 = vunpack.c.h.b16 %v1359
  %v1641 = vunpack.c.l.b16 %v1360
  %v1642 = vunpack.c.h.b16 %v1360
  %v1643 = vunpack.c.l.b16 %v1361
  %v1644 = vunpack.c.h.b16 %v1361
  %v1645 = vunpack.c.l.b16 %v1362
  %v1646 = vunpack.c.h.b16 %v1362
  %v1647 = vunpack.c.l.b16 %v1363
  %v1648 = vunpack.c.h.b16 %v1363
  %v1649 = vunpack.c.l.b16 %v1364
  %v1650 = vunpack.c.h.b16 %v1364
  %v1651 = vunpack.c.l.b16 %v1365
  %v1652 = vunpack.c.h.b16 %v1365
  %v1653 = vunpack.c.l.b16 %v1366
  %v1654 = vunpack.c.h.b16 %v1366
  %v1655 = vunpack.c.l.b16 %v1367
  %v1656 = vunpack.c.h.b16 %v1367
  %v1657 = vunpack.c.l.b16 %v1368
  %v1658 = vunpack.c.h.b16 %v1368
  %v1659 = vunpack.c.l.b16 %v1369
  %v1660 = vunpack.c.h.b16 %v1369
  %v1661 = vunpack.c.l.b16 %v1370
  %v1662 = vunpack.c.h.b16 %v1370
  %v1663 = vunpack.c.l.b16 %v1371
  %v1664 = vunpack.c.h.b16 %v1371
  %v1665 = vunpack.c.l.b16 %v1372
  %v1666 = vunpack.c.h.b16 %v1372
  %v1667 = vunpack.c.l.b16 %v1373
  %v1668 = vunpack.c.h.b16 %v1373
  %v1669 = vunpack.c.l.b16 %v1374
  %v1670 = vunpack.c.h.b16 %v1374
  %v1671 = vunpack.c.l.b16 %v1375
  %v1672 = vunpack.c.h.b16 %v1375
  %v1673 = vunpack.c.l.b16 %v1376
  %v1674 = vunpack.c.h.b16 %v1376
  %v1675 = vunpack.c.l.b16 %v1377
  %v1676 = vunpack.c.h.b16 %v1377
  %v1677 = vunpack.c.l.b16 %v1378
  %v1678 = vunpack.c.h.b16 %v1378
  %v1679 = vunpack.c.l.b16 %v1379
  %v1680 = vunpack.c.h.b16 %v1379
  %v1681 = vunpack.c.l.b16 %v1380
  %v1682 = vunpack.c.h.b16 %v1380
  %v1683 = vunpack.c.l.b16 %v1381
  %v1684 = vunpack.c.h.b16 %v1381
  %v1685 = vunpack.c.l.b16 %v1382
  %v1686 = vunpack.c.h.b16 %v1382
  %v1687 = vunpack.c.l.b16 %v1383
  %v1688 = vunpack.c.h.b16 %v1383
  %v1689 = vunpack.c.l.b16 %v1384
  %v1690 = vunpack.c.h.b16 %v1384
  %v1691 = vunpack.c.l.b16 %v1385
  %v1692 = vunpack.c.h.b16 %v1385
  %v1693 = vunpack.c.l.b16 %v1386
  %v1694 = vunpack.c.h.b16 %v1386
  %v1695 = vunpack.c.l.b16 %v1387
  %v1696 = vunpack.c.h.b16 %v1387
  %v1697 = vunpack.c.l.b16 %v1388
  %v1698 = vunpack.c.h.b16 %v1388
  %v1699 = vunpack.c.l.b16 %v1389
  %v1700 = vunpack.c.h.b16 %v1389
  %v1701 = vunpack.c.l.b16 %v1390
  %v1702 = vunpack.c.h.b16 %v1390
  %v1703 = vunpack.c.l.b16 %v1391
  %v1704 = vunpack.c.h.b16 %v1391
  %v1705 = vunpack.c.l.b16 %v1392
  %v1706 = vunpack.c.h.b16 %v1392
  %v1707 = vunpack.c.l.b16 %v1393
  %v1708 = vunpack.c.h.b16 %v1393
  %v1709 = vunpack.c.l.b16 %v1394
  %v1710 = vunpack.c.h.b16 %v1394
  %v1711 = vunpack.c.l.b16 %v1395
  %v1712 = vunpack.c.h.b16 %v1395
  %v1713 = vunpack.c.l.b16 %v1396
  %v1714 = vunpack.c.h.b16 %v1396
  %v1715 = vunpack.c.l.b16 %v1397
  %v1716 = vunpack.c.h.b16 %v1397
  %v1717 = vunpack.c.l.b16 %v1398
  %v1718 = vunpack.c.h.b16 %v1398
  %v1719 = vunpack.c.l.b16 %v1399
  %v1720 = vunpack.c.h.b16 %v1399
  %v1721 = vunpack.c.l.b16 %v1400
  %v1722 = vunpack.c.h.b16 %v1400
  %v1723 = vunpack.c.l.b16 %v1401
  %v1724 = vunpack.c.h.b16 %v1401
  %v1725 = vunpack.c.l.b16 %v1402
  %v1726 = vunpack.c.h.b16 %v1402
  %v1727 = vunpack.c.l.b16 %v1403
  %v1728 = vunpack.c.h.b16 %v1403
  %v1729 = vunpack.c.l.b16 %v1404
  %v1730 = vunpack.c.h.b16 %v1404
  %v1731 = vunpack.c.l.b16 %v1405
  %v1732 = vunpack.c.h.b16 %v1405
  %v1733 = vunpack.c.l.b16 %v1406
  %v1734 = vunpack.c.h.b16 %v1406
  %v1735 = vunpack.c.l.b16 %v1407
  %v1736 = vunpack.c.h.b16 %v1407
  %v1737 = vunpack.c.l.b16 %v1408
  %v1738 = vunpack.c.h.b16 %v1408
  %v1739 = vunpack.c.l.b16 %v1409
  %v1740 = vunpack.c.h.b16 %v1409
  %v1741 = vunpack.c.l.b16 %v1410
  %v1742 = vunpack.c.h.b16 %v1410
  %v1743 = vunpack.c.l.b16 %v1411
  %v1744 = vunpack.c.h.b16 %v1411
  %v1745 = vunpack.c.l.b16 %v1412
  %v1746 = vunpack.c.h.b16 %v1412
  %v1747 = vunpack.c.l.b16 %v1413
  %v1748 = vunpack.c.h.b16 %v1413
  %v1749 = vunpack.c.l.b16 %v1414
  %v1750 = vunpack.c.h.b16 %v1414
  %v1751 = vunpack.c.l.b16 %v1415
  %v1752 = vunpack.c.h.b16 %v1415
  %v1753 = vunpack.c.l.b16 %v1416
  %v1754 = vunpack.c.h.b16 %v1416
  %v1755 = vunpack.c.l.b16 %v1417
  %v1756 = vunpack.c.h.b16 %v1417
  %v1757 = vunpack.c.l.b16 %v1418
  %v1758 = vunpack.c.h.b16 %v1418
  %v1759 = vunpack.c.l.b16 %v1419
  %v1760 = vunpack.c.h.b16 %v1419
  %v1761 = vunpack.c.l.b16 %v1420
  %v1762 = vunpack.c.h.b16 %v1420
  %v1763 = vunpack.c.l.b16 %v1421
  %v1764 = vunpack.c.h.b16 %v1421
  %v1765 = vunpack.c.l.b16 %v1422
  %v1766 = vunpack.c.h.b16 %v1422
  %v1767 = vunpack.c.l.b16 %v1423
  %v1768 = vunpack.c.h.b16 %v1423
  %v1769 = vunpack.c.l.b16 %v1424
  %v1770 = vunpack.c.h.b16 %v1424
  %v1771 = vunpack.c.l.b16 %v1425
  %v1772 = vunpack.c.h.b16 %v1425
  %v1773 = vunpack.c.l.b16 %v1426
  %v1774 = vunpack.c.h.b16 %v1426
  %v1775 = vunpack.c.l.b16 %v1427
  %v1776 = vunpack.c.h.b16 %v1427
  %v1777 = vunpack.c.l.b16 %v1428
  %v1778 = vunpack.c.h.b16 %v1428
  %v1779 = vunpack.c.l.b16 %v1429
  %v1780 = vunpack.c.h.b16 %v1429
  %v1781 = vunpack.c.l.b16 %v1430
  %v1782 = vunpack.c.h.b16 %v1430
  %v1783 = vunpack.c.l.b16 %v1431
  %v1784 = vunpack.c.h.b16 %v1431
  %v1785 = vunpack.c.l.b16 %v1432
  %v1786 = vunpack.c.h.b16 %v1432
  %v1787 = vunpack.c.l.b16 %v1433
  %v1788 = vunpack.c.h.b16 %v1433
  %v1789 = vunpack.c.l.b16 %v1434
  %v1790 = vunpack.c.h.b16 %v1434
  %v1791 = vunpack.c.l.b16 %v1435
  %v1792 = vunpack.c.h.b16 %v1435
  %v1793 = vunpack.c.l.b16 %v1436
  %v1794 = vunpack.c.h.b16 %v1436
  %v1795 = vunpack.c.l.b16 %v1437
  %v1796 = vunpack.c.h.b16 %v1437
  %v1797 = vunpack.c.l.b16 %v1438
  %v1798 = vunpack.c.h.b16 %v1438
  %v1799 = vunpack.c.l.b16 %v1439
  %v1800 = vunpack.c.h.b16 %v1439
  %v1801 = vunpack.c.l.b16 %v1440
  %v1802 = vunpack.c.h.b16 %v1440
  %v1803 = vunpack.c.l.b16 %v1441
  %v1804 = vunpack.c.h.b16 %v1441
  %v1805 = vunpack.c.l.b16 %v1442
  %v1806 = vunpack.c.h.b16 %v1442
  %v1807 = vunpack.c.l.b16 %v1443
  %v1808 = vunpack.c.h.b16 %v1443
  %v1809 = vunpack.c.l.b16 %v1444
  %v1810 = vunpack.c.h.b16 %v1444
  %v1811 = vunpack.c.l.b16 %v1445
  %v1812 = vunpack.c.h.b16 %v1445
  %v1813 = vunpack.c.l.b16 %v1446
  %v1814 = vunpack.c.h.b16 %v1446
  %v1815 = vunpack.c.l.b16 %v1447
  %v1816 = vunpack.c.h.b16 %v1447
  %v1817 = vunpack.c.l.b16 %v1448
  %v1818 = vunpack.c.h.b16 %v1448
  %v1819 = vunpack.c.l.b16 %v1449
  %v1820 = vunpack.c.h.b16 %v1449
  %v1821 = vunpack.c.l.b16 %v1450
  %v1822 = vunpack.c.h.b16 %v1450
  %v1823 = vunpack.c.l.b16 %v1451
  %v1824 = vunpack.c.h.b16 %v1451
  %v1825 = vunpack.c.l.b16 %v1452
  %v1826 = vunpack.c.h.b16 %v1452
  %v1827 = vunpack.c.l.b16 %v1453
  %v1828 = vunpack.c.h.b16 %v1453
  %v1829 = vunpack.c.l.b16 %v1454
  %v1830 = vunpack.c.h.b16 %v1454
  %v1831 = vunpack.c.l.b16 %v1455
  %v1832 = vunpack.c.h.b16 %v1455
  %v1833 = vunpack.c.l.b16 %v1456
  %v1834 = vunpack.c.h.b16 %v1456
  %v1835 = vunpack.c.l.b16 %v1457
  %v1836 = vunpack.c.h.b16 %v1457
  %v1837 = vunpack.c.l.b16 %v1458
  %v1838 = vunpack.c.h.b16 %v1458
  %v1839 = vunpack.c.l.b16 %v1459
  %v1840 = vunpack.c.h.b16 %v1459
  %v1841 = vunpack.c.l.b16 %v1460
  %v1842 = vunpack.c.h.b16 %v1460
  %v1843 = vunpack.c.l.b16 %v1461
  %v1844 = vunpack.c.h.b16 %v1461
  %v1845 = vunpack.c.l.b16 %v1462
  %v1846 = vunpack.c.h.b16 %v1462
  %v1847 = vpack.c.b16 %v1595, %v1591
  %v1848 = vpack.c.b16 %v1596, %v1592
  %v1849 = vpack.c.b16 %v1597, %v1593
  %v1850 = vpack.c.b16 %v1598, %v1594
  %v1851 = vpack.c.b16 %v1603, %v1599
  %v1852 = vpack.c.b16 %v1604, %v1600
  %v1853 = vpack.c.b16 %v1605, %v1601
  %v1854 = vpack.c.b16 %v1606, %v1602
  %v1855 = vpack.c.b16 %v1611, %v1607
  %v1856 = vpack.c.b16 %v1612, %v1608
  %v1857 = vpack.c.b16 %v1613, %v1609
  %v1858 = vpack.c.b16 %v1614, %v1610
  %v1859 = vpack.c.b16 %v1619, %v1615
  %v1860 = vpack.c.b16 %v1620, %v1616
  %v1861 = vpack.c.b16 %v1621, %v1617
  %v1862 = vpack.c.b16 %v1622, %v1618
  %v1863 = vpack.c.b16 %v1627, %v1623
  %v1864 = vpack.c.b16 %v1628, %v1624
  %v1865 = vpack.c.b16 %v1629, %v1625
  %v1866 = vpack.c.b16 %v1630, %v1626
  %v1867 = vpack.c.b16 %v1635, %v1631
  %v1868 = vpack.c.b16 %v1636, %v1632
  %v1869 = vpack.c.b16 %v1637, %v1633
  %v1870 = vpack.c.b16 %v1638, %v1634
  %v1871 = vpack.c.b16 %v1643, %v1639
  %v1872 = vpack.c.b16 %v1644, %v1640
  %v1873 = vpack.c.b16 %v1645, %v1641
  %v1874 = vpack.c.b16 %v1646, %v1642
  %v1875 = vpack.c.b16 %v1651, %v1647
  %v1876 = vpack.c.b16 %v1652, %v1648
  %v1877 = vpack.c.b16 %v1653, %v1649
  %v1878 = vpack.c.b16 %v1654, %v1650
  %v1879 = vpack.c.b16 %v1659, %v1655
  %v1880 = vpack.c.b16 %v1660, %v1656
  %v1881 = vpack.c.b16 %v1661, %v1657
  %v1882 = vpack.c.b16 %v1662, %v1658
  %v1883 = vpack.c.b16 %v1667, %v1663
  %v1884 = vpack.c.b16 %v1668, %v1664
  %v1885 = vpack.c.b16 %v1669, %v1665
  %v1886 = vpack.c.b16 %v1670, %v1666
  %v1887 = vpack.c.b16 %v1675, %v1671
  %v1888 = vpack.c.b16 %v1676, %v1672
  %v1889 = vpack.c.b16 %v1677, %v1673
  %v1890 = vpack.c.b16 %v1678, %v1674
  %v1891 = vpack.c.b16 %v1683, %v1679
  %v1892 = vpack.c.b16 %v1684, %v1680
  %v1893 = vpack.c.b16 %v1685, %v1681
  %v1894 = vpack.c.b16 %v1686, %v1682
  %v1895 = vpack.c.b16 %v1691, %v1687
  %v1896 = vpack.c.b16 %v1692, %v1688
  %v1897 = vpack.c.b16 %v1693, %v1689
  %v1898 = vpack.c.b16 %v1694, %v1690
  %v1899 = vpack.c.b16 %v1699, %v1695
  %v1900 = vpack.c.b16 %v1700, %v1696
  %v1901 = vpack.c.b16 %v1701, %v1697
  %v1902 = vpack.c.b16 %v1702, %v1698
  %v1903 = vpack.c.b16 %v1707, %v1703
  %v1904 = vpack.c.b16 %v1708, %v1704
  %v1905 = vpack.c.b16 %v1709, %v1705
  %v1906 = vpack.c.b16 %v1710, %v1706
  %v1907 = vpack.c.b16 %v1715, %v1711
  %v1908 = vpack.c.b16 %v1716, %v1712
  %v1909 = vpack.c.b16 %v1717, %v1713
  %v1910 = vpack.c.b16 %v1718, %v1714
  %v1911 = vpack.c.b16 %v1723, %v1719
  %v1912 = vpack.c.b16 %v1724, %v1720
  %v1913 = vpack.c.b16 %v1725, %v1721
  %v1914 = vpack.c.b16 %v1726, %v1722
  %v1915 = vpack.c.b16 %v1731, %v1727
  %v1916 = vpack.c.b16 %v1732, %v1728
  %v1917 = vpack.c.b16 %v1733, %v1729
  %v1918 = vpack.c.b16 %v1734, %v1730
  %v1919 = vpack.c.b16 %v1739, %v1735
  %v1920 = vpack.c.b16 %v1740, %v1736
  %v1921 = vpack.c.b16 %v1741, %v1737
  %v1922 = vpack.c.b16 %v1742, %v1738
  %v1923 = vpack.c.b16 %v1747, %v1743
  %v1924 = vpack.c.b16 %v1748, %v1744
  %v1925 = vpack.c.b16 %v1749, %v1745
  %v1926 = vpack.c.b16 %v1750, %v1746
  %v1927 = vpack.c.b16 %v1755, %v1751
  %v1928 = vpack.c.b16 %v1756, %v1752
  %v1929 = vpack.c.b16 %v1757, %v1753
  %v1930 = vpack.c.b16 %v1758, %v1754
  %v1931 = vpack.c.b16 %v1763, %v1759
  %v1932 = vpack.c.b16 %v1764, %v1760
  %v1933 = vpack.c.b16 %v1765, %v1761
  %v1934 = vpack.c.b16 %v1766, %v1762
  %v1935 = vpack.c.b16 %v1771, %v1767
  %v1936 = vpack.c.b16 %v1772, %v1768
  %v1937 = vpack.c.b16 %v1773, %v1769
  %v1938 = vpack.c.b16 %v1774, %v1770
  %v1939 = vpack.c.b16 %v1779, %v1775
  %v1940 = vpack.c.b16 %v1780, %v1776
  %v1941 = vpack.c.b16 %v1781, %v1777
  %v1942 = vpack.c.b16 %v1782, %v1778
  %v1943 = vpack.c.b16 %v1787, %v1783
  %v1944 = vpack.c.b16 %v1788, %v1784
  %v1945 = vpack.c.b16 %v1789, %v1785
  %v1946 = vpack.c.b16 %v1790, %v1786
  %v1947 = vpack.c.b16 %v1795, %v1791
  %v1948 = vpack.c.b16 %v1796, %v1792
  %v1949 = vpack.c.b16 %v1797, %v1793
  %v1950 = vpack.c.b16 %v1798, %v1794
  %v1951 = vpack.c.b16 %v1803, %v1799
  %v1952 = vpack.c.b16 %v1804, %v1800
  %v1953 = vpack.c.b16 %v1805, %v1801
  %v1954 = vpack.c.b16 %v1806, %v1802
  %v1955 = vpack.c.b16 %v1811, %v1807
  %v1956 = vpack.c.b16 %v1812, %v1808
  %v1957 = vpack.c.b16 %v1813, %v1809
  %v1958 = vpack.c.b16 %v1814, %v1810
  %v1959 = vpack.c.b16 %v1819, %v1815
  %v1960 = vpack.c.b16 %v1820, %v1816
  %v1961 = vpack.c.b16 %v1821, %v1817
  %v1962 = vpack.c.b16 %v1822, %v1818
  %v1963 = vpack.c.b16 %v1827, %v1823
  %v1964 = vpack.c.b16 %v1828, %v1824
  %v1965 = vpack.c.b16 %v1829, %v1825
  %v1966 = vpack.c.b16 %v1830, %v1826
  %v1967 = vpack.c.b16 %v1835, %v1831
  %v1968 = vpack.c.b16 %v1836, %v1832
  %v1969 = vpack.c.b16 %v1837, %v1833
  %v1970 = vpack.c.b16 %v1838, %v1834
  %v1971 = vpack.c.b16 %v1843, %v1839
  %v1972 = vpack.c.b16 %v1844, %v1840
  %v1973 = vpack.c.b16 %v1845, %v1841
  %v1974 = vpack.c.b16 %v1846, %v1842
  %2103 = vmatpush.bf16.msra.mxu0 %v1875
  %2104 = vmatpush.bf16.msra.mxu0 %v1871
  %2105 = vmatpush.bf16.msra.mxu0 %v1867
  %2106 = vmatpush.bf16.msra.mxu0 %v1863
  %2107 = vmatpush.bf16.msra.mxu0 %v1859
  %2108 = vmatpush.bf16.msra.mxu0 %v1855
  %2109 = vmatpush.bf16.msra.mxu0 %v1851
  %2110 = vmatpush.bf16.msra.mxu0 %v1847
  %2111 = vmatmul.bf16.gmra.mxu0 %v488
  %v2112 = vpop.f32.mrf.mxu0
  %v2113 = vadd.f32 0.0, %v2112
  %v2114 = vpop.f32.mrf.mxu0
  %v2115 = vadd.f32 0.0, %v2114
  %2116 = vmatmul.bf16.gmra.mxu0 %v492
  %v2117 = vpop.f32.mrf.mxu0
  %v2118 = vadd.f32 0.0, %v2117
  %v2119 = vpop.f32.mrf.mxu0
  %v2120 = vadd.f32 0.0, %v2119
  %2121 = vdwg.mxu0
  %2122 = vmatpush.bf16.msra.mxu0 %v1907
  %2123 = vmatpush.bf16.msra.mxu0 %v1903
  %2124 = vmatpush.bf16.msra.mxu0 %v1899
  %2125 = vmatpush.bf16.msra.mxu0 %v1895
  %2126 = vmatpush.bf16.msra.mxu0 %v1891
  %2127 = vmatpush.bf16.msra.mxu0 %v1887
  %2128 = vmatpush.bf16.msra.mxu0 %v1883
  %2129 = vmatpush.bf16.msra.mxu0 %v1879
  %2130 = vmatmul.bf16.gmra.mxu0 %v489
  %v2131 = vpop.f32.mrf.mxu0
  %v2132 = vadd.f32 %v2113, %v2131
  %v2133 = vpop.f32.mrf.mxu0
  %v2134 = vadd.f32 %v2115, %v2133
  %2135 = vmatmul.bf16.gmra.mxu0 %v493
  %v2136 = vpop.f32.mrf.mxu0
  %v2137 = vadd.f32 %v2118, %v2136
  %v2138 = vpop.f32.mrf.mxu0
  %v2139 = vadd.f32 %v2120, %v2138
  %2140 = vdwg.mxu0
  %2141 = vmatpush.bf16.msra.mxu0 %v1939
  %2142 = vmatpush.bf16.msra.mxu0 %v1935
  %2143 = vmatpush.bf16.msra.mxu0 %v1931
  %2144 = vmatpush.bf16.msra.mxu0 %v1927
  %2145 = vmatpush.bf16.msra.mxu0 %v1923
  %2146 = vmatpush.bf16.msra.mxu0 %v1919
  %2147 = vmatpush.bf16.msra.mxu0 %v1915
  %2148 = vmatpush.bf16.msra.mxu0 %v1911
  %2149 = vmatmul.bf16.gmra.mxu0 %v490
  %v2150 = vpop.f32.mrf.mxu0
  %v2151 = vadd.f32 %v2132, %v2150
  %v2152 = vpop.f32.mrf.mxu0
  %v2153 = vadd.f32 %v2134, %v2152
  %2154 = vmatmul.bf16.gmra.mxu0 %v494
  %v2155 = vpop.f32.mrf.mxu0
  %v2156 = vadd.f32 %v2137, %v2155
  %v2157 = vpop.f32.mrf.mxu0
  %v2158 = vadd.f32 %v2139, %v2157
  %2159 = vdwg.mxu0
  %2160 = vmatpush.bf16.msra.mxu0 %v1971
  %2161 = vmatpush.bf16.msra.mxu0 %v1967
  %2162 = vmatpush.bf16.msra.mxu0 %v1963
  %2163 = vmatpush.bf16.msra.mxu0 %v1959
  %2164 = vmatpush.bf16.msra.mxu0 %v1955
  %2165 = vmatpush.bf16.msra.mxu0 %v1951
  %2166 = vmatpush.bf16.msra.mxu0 %v1947
  %2167 = vmatpush.bf16.msra.mxu0 %v1943
  %2168 = vmatmul.bf16.gmra.mxu0 %v491
  %v2169 = vpop.f32.mrf.mxu0
  %v2170 = vadd.f32 %v2151, %v2169
  %v2171 = vpop.f32.mrf.mxu0
  %v2172 = vadd.f32 %v2153, %v2171
  %2173 = vmatmul.bf16.gmra.mxu0 %v495
  %v2174 = vpop.f32.mrf.mxu0
  %v2175 = vadd.f32 %v2156, %v2174
  %v2176 = vpop.f32.mrf.mxu0
  %v2177 = vadd.f32 %v2158, %v2176
  %2178 = vdwg.mxu0
  %2179 = vmatpush.bf16.msra.mxu0 %v1876
  %2180 = vmatpush.bf16.msra.mxu0 %v1872
  %2181 = vmatpush.bf16.msra.mxu0 %v1868
  %2182 = vmatpush.bf16.msra.mxu0 %v1864
  %2183 = vmatpush.bf16.msra.mxu0 %v1860
  %2184 = vmatpush.bf16.msra.mxu0 %v1856
  %2185 = vmatpush.bf16.msra.mxu0 %v1852
  %2186 = vmatpush.bf16.msra.mxu0 %v1848
  %2187 = vmatmul.bf16.gmra.mxu0 %v488
  %v2188 = vpop.f32.mrf.mxu0
  %v2189 = vadd.f32 0.0, %v2188
  %v2190 = vpop.f32.mrf.mxu0
  %v2191 = vadd.f32 0.0, %v2190
  %2192 = vmatmul.bf16.gmra.mxu0 %v492
  %v2193 = vpop.f32.mrf.mxu0
  %v2194 = vadd.f32 0.0, %v2193
  %v2195 = vpop.f32.mrf.mxu0
  %v2196 = vadd.f32 0.0, %v2195
  %2197 = vdwg.mxu0
  %2198 = vmatpush.bf16.msra.mxu0 %v1908
  %2199 = vmatpush.bf16.msra.mxu0 %v1904
  %2200 = vmatpush.bf16.msra.mxu0 %v1900
  %2201 = vmatpush.bf16.msra.mxu0 %v1896
  %2202 = vmatpush.bf16.msra.mxu0 %v1892
  %2203 = vmatpush.bf16.msra.mxu0 %v1888
  %2204 = vmatpush.bf16.msra.mxu0 %v1884
  %2205 = vmatpush.bf16.msra.mxu0 %v1880
  %2206 = vmatmul.bf16.gmra.mxu0 %v489
  %v2207 = vpop.f32.mrf.mxu0
  %v2208 = vadd.f32 %v2189, %v2207
  %v2209 = vpop.f32.mrf.mxu0
  %v2210 = vadd.f32 %v2191, %v2209
  %2211 = vmatmul.bf16.gmra.mxu0 %v493
  %v2212 = vpop.f32.mrf.mxu0
  %v2213 = vadd.f32 %v2194, %v2212
  %v2214 = vpop.f32.mrf.mxu0
  %v2215 = vadd.f32 %v2196, %v2214
  %2216 = vdwg.mxu0
  %2217 = vmatpush.bf16.msra.mxu0 %v1940
  %2218 = vmatpush.bf16.msra.mxu0 %v1936
  %2219 = vmatpush.bf16.msra.mxu0 %v1932
  %2220 = vmatpush.bf16.msra.mxu0 %v1928
  %2221 = vmatpush.bf16.msra.mxu0 %v1924
  %2222 = vmatpush.bf16.msra.mxu0 %v1920
  %2223 = vmatpush.bf16.msra.mxu0 %v1916
  %2224 = vmatpush.bf16.msra.mxu0 %v1912
  %2225 = vmatmul.bf16.gmra.mxu0 %v490
  %v2226 = vpop.f32.mrf.mxu0
  %v2227 = vadd.f32 %v2208, %v2226
  %v2228 = vpop.f32.mrf.mxu0
  %v2229 = vadd.f32 %v2210, %v2228
  %2230 = vmatmul.bf16.gmra.mxu0 %v494
  %v2231 = vpop.f32.mrf.mxu0
  %v2232 = vadd.f32 %v2213, %v2231
  %v2233 = vpop.f32.mrf.mxu0
  %v2234 = vadd.f32 %v2215, %v2233
  %2235 = vdwg.mxu0
  %2236 = vmatpush.bf16.msra.mxu0 %v1972
  %2237 = vmatpush.bf16.msra.mxu0 %v1968
  %2238 = vmatpush.bf16.msra.mxu0 %v1964
  %2239 = vmatpush.bf16.msra.mxu0 %v1960
  %2240 = vmatpush.bf16.msra.mxu0 %v1956
  %2241 = vmatpush.bf16.msra.mxu0 %v1952
  %2242 = vmatpush.bf16.msra.mxu0 %v1948
  %2243 = vmatpush.bf16.msra.mxu0 %v1944
  %2244 = vmatmul.bf16.gmra.mxu0 %v491
  %v2245 = vpop.f32.mrf.mxu0
  %v2246 = vadd.f32 %v2227, %v2245
  %v2247 = vpop.f32.mrf.mxu0
  %v2248 = vadd.f32 %v2229, %v2247
  %2249 = vmatmul.bf16.gmra.mxu0 %v495
  %v2250 = vpop.f32.mrf.mxu0
  %v2251 = vadd.f32 %v2232, %v2250
  %v2252 = vpop.f32.mrf.mxu0
  %v2253 = vadd.f32 %v2234, %v2252
  %2254 = vdwg.mxu0
  %2255 = vmatpush.bf16.msra.mxu0 %v1877
  %2256 = vmatpush.bf16.msra.mxu0 %v1873
  %2257 = vmatpush.bf16.msra.mxu0 %v1869
  %2258 = vmatpush.bf16.msra.mxu0 %v1865
  %2259 = vmatpush.bf16.msra.mxu0 %v1861
  %2260 = vmatpush.bf16.msra.mxu0 %v1857
  %2261 = vmatpush.bf16.msra.mxu0 %v1853
  %2262 = vmatpush.bf16.msra.mxu0 %v1849
  %2263 = vmatmul.bf16.gmra.mxu0 %v488
  %v2264 = vpop.f32.mrf.mxu0
  %v2265 = vadd.f32 0.0, %v2264
  %v2266 = vpop.f32.mrf.mxu0
  %v2267 = vadd.f32 0.0, %v2266
  %2268 = vmatmul.bf16.gmra.mxu0 %v492
  %v2269 = vpop.f32.mrf.mxu0
  %v2270 = vadd.f32 0.0, %v2269
  %v2271 = vpop.f32.mrf.mxu0
  %v2272 = vadd.f32 0.0, %v2271
  %2273 = vdwg.mxu0
  %2274 = vmatpush.bf16.msra.mxu0 %v1909
  %2275 = vmatpush.bf16.msra.mxu0 %v1905
  %2276 = vmatpush.bf16.msra.mxu0 %v1901
  %2277 = vmatpush.bf16.msra.mxu0 %v1897
  %2278 = vmatpush.bf16.msra.mxu0 %v1893
  %2279 = vmatpush.bf16.msra.mxu0 %v1889
  %2280 = vmatpush.bf16.msra.mxu0 %v1885
  %2281 = vmatpush.bf16.msra.mxu0 %v1881
  %2282 = vmatmul.bf16.gmra.mxu0 %v489
  %v2283 = vpop.f32.mrf.mxu0
  %v2284 = vadd.f32 %v2265, %v2283
  %v2285 = vpop.f32.mrf.mxu0
  %v2286 = vadd.f32 %v2267, %v2285
  %2287 = vmatmul.bf16.gmra.mxu0 %v493
  %v2288 = vpop.f32.mrf.mxu0
  %v2289 = vadd.f32 %v2270, %v2288
  %v2290 = vpop.f32.mrf.mxu0
  %v2291 = vadd.f32 %v2272, %v2290
  %2292 = vdwg.mxu0
  %2293 = vmatpush.bf16.msra.mxu0 %v1941
  %2294 = vmatpush.bf16.msra.mxu0 %v1937
  %2295 = vmatpush.bf16.msra.mxu0 %v1933
  %2296 = vmatpush.bf16.msra.mxu0 %v1929
  %2297 = vmatpush.bf16.msra.mxu0 %v1925
  %2298 = vmatpush.bf16.msra.mxu0 %v1921
  %2299 = vmatpush.bf16.msra.mxu0 %v1917
  %2300 = vmatpush.bf16.msra.mxu0 %v1913
  %2301 = vmatmul.bf16.gmra.mxu0 %v490
  %v2302 = vpop.f32.mrf.mxu0
  %v2303 = vadd.f32 %v2284, %v2302
  %v2304 = vpop.f32.mrf.mxu0
  %v2305 = vadd.f32 %v2286, %v2304
  %2306 = vmatmul.bf16.gmra.mxu0 %v494
  %v2307 = vpop.f32.mrf.mxu0
  %v2308 = vadd.f32 %v2289, %v2307
  %v2309 = vpop.f32.mrf.mxu0
  %v2310 = vadd.f32 %v2291, %v2309
  %2311 = vdwg.mxu0
  %2312 = vmatpush.bf16.msra.mxu0 %v1973
  %2313 = vmatpush.bf16.msra.mxu0 %v1969
  %2314 = vmatpush.bf16.msra.mxu0 %v1965
  %2315 = vmatpush.bf16.msra.mxu0 %v1961
  %2316 = vmatpush.bf16.msra.mxu0 %v1957
  %2317 = vmatpush.bf16.msra.mxu0 %v1953
  %2318 = vmatpush.bf16.msra.mxu0 %v1949
  %2319 = vmatpush.bf16.msra.mxu0 %v1945
  %2320 = vmatmul.bf16.gmra.mxu0 %v491
  %v2321 = vpop.f32.mrf.mxu0
  %v2322 = vadd.f32 %v2303, %v2321
  %v2323 = vpop.f32.mrf.mxu0
  %v2324 = vadd.f32 %v2305, %v2323
  %2325 = vmatmul.bf16.gmra.mxu0 %v495
  %v2326 = vpop.f32.mrf.mxu0
  %v2327 = vadd.f32 %v2308, %v2326
  %v2328 = vpop.f32.mrf.mxu0
  %v2329 = vadd.f32 %v2310, %v2328
  %2330 = vdwg.mxu0
  %2331 = vmatpush.bf16.msra.mxu0 %v1878
  %2332 = vmatpush.bf16.msra.mxu0 %v1874
  %2333 = vmatpush.bf16.msra.mxu0 %v1870
  %2334 = vmatpush.bf16.msra.mxu0 %v1866
  %2335 = vmatpush.bf16.msra.mxu0 %v1862
  %2336 = vmatpush.bf16.msra.mxu0 %v1858
  %2337 = vmatpush.bf16.msra.mxu0 %v1854
  %2338 = vmatpush.bf16.msra.mxu0 %v1850
  %2339 = vmatmul.bf16.gmra.mxu0 %v488
  %v2340 = vpop.f32.mrf.mxu0
  %v2341 = vadd.f32 0.0, %v2340
  %v2342 = vpop.f32.mrf.mxu0
  %v2343 = vadd.f32 0.0, %v2342
  %2344 = vmatmul.bf16.gmra.mxu0 %v492
  %v2345 = vpop.f32.mrf.mxu0
  %v2346 = vadd.f32 0.0, %v2345
  %v2347 = vpop.f32.mrf.mxu0
  %v2348 = vadd.f32 0.0, %v2347
  %2349 = vdwg.mxu0
  %2350 = vmatpush.bf16.msra.mxu0 %v1910
  %2351 = vmatpush.bf16.msra.mxu0 %v1906
  %2352 = vmatpush.bf16.msra.mxu0 %v1902
  %2353 = vmatpush.bf16.msra.mxu0 %v1898
  %2354 = vmatpush.bf16.msra.mxu0 %v1894
  %2355 = vmatpush.bf16.msra.mxu0 %v1890
  %2356 = vmatpush.bf16.msra.mxu0 %v1886
  %2357 = vmatpush.bf16.msra.mxu0 %v1882
  %2358 = vmatmul.bf16.gmra.mxu0 %v489
  %v2359 = vpop.f32.mrf.mxu0
  %v2360 = vadd.f32 %v2341, %v2359
  %v2361 = vpop.f32.mrf.mxu0
  %v2362 = vadd.f32 %v2343, %v2361
  %2363 = vmatmul.bf16.gmra.mxu0 %v493
  %v2364 = vpop.f32.mrf.mxu0
  %v2365 = vadd.f32 %v2346, %v2364
  %v2366 = vpop.f32.mrf.mxu0
  %v2367 = vadd.f32 %v2348, %v2366
  %2368 = vdwg.mxu0
  %2369 = vmatpush.bf16.msra.mxu0 %v1942
  %2370 = vmatpush.bf16.msra.mxu0 %v1938
  %2371 = vmatpush.bf16.msra.mxu0 %v1934
  %2372 = vmatpush.bf16.msra.mxu0 %v1930
  %2373 = vmatpush.bf16.msra.mxu0 %v1926
  %2374 = vmatpush.bf16.msra.mxu0 %v1922
  %2375 = vmatpush.bf16.msra.mxu0 %v1918
  %2376 = vmatpush.bf16.msra.mxu0 %v1914
  %2377 = vmatmul.bf16.gmra.mxu0 %v490
  %v2378 = vpop.f32.mrf.mxu0
  %v2379 = vadd.f32 %v2360, %v2378
  %v2380 = vpop.f32.mrf.mxu0
  %v2381 = vadd.f32 %v2362, %v2380
  %2382 = vmatmul.bf16.gmra.mxu0 %v494
  %v2383 = vpop.f32.mrf.mxu0
  %v2384 = vadd.f32 %v2365, %v2383
  %v2385 = vpop.f32.mrf.mxu0
  %v2386 = vadd.f32 %v2367, %v2385
  %2387 = vdwg.mxu0
  %2388 = vmatpush.bf16.msra.mxu0 %v1974
  %2389 = vmatpush.bf16.msra.mxu0 %v1970
  %2390 = vmatpush.bf16.msra.mxu0 %v1966
  %2391 = vmatpush.bf16.msra.mxu0 %v1962
  %2392 = vmatpush.bf16.msra.mxu0 %v1958
  %2393 = vmatpush.bf16.msra.mxu0 %v1954
  %2394 = vmatpush.bf16.msra.mxu0 %v1950
  %2395 = vmatpush.bf16.msra.mxu0 %v1946
  %2396 = vmatmul.bf16.gmra.mxu0 %v491
  %v2397 = vpop.f32.mrf.mxu0
  %v2398 = vadd.f32 %v2379, %v2397
  %v2399 = vpop.f32.mrf.mxu0
  %v2400 = vadd.f32 %v2381, %v2399
  %2401 = vmatmul.bf16.gmra.mxu0 %v495
  %v2402 = vpop.f32.mrf.mxu0
  %v2403 = vadd.f32 %v2384, %v2402
  %v2404 = vpop.f32.mrf.mxu0
  %v2405 = vadd.f32 %v2386, %v2404
  %2406 = vdwg.mxu0
  %v2407 = vld [vmem:[%s826] sm:$0xff]
  %v2408 = vld [vmem:[%s826 + $0x8] sm:$0xff]
  %v2409 = vld [vmem:[%s826 + $0x10] sm:$0xff]
  %v2410 = vld [vmem:[%s826 + $0x18] sm:$0xff]
  %v2411 = vld [vmem:[%s826 + $0x20] sm:$0xff]
  %v2412 = vld [vmem:[%s826 + $0x28] sm:$0xff]
  %v2413 = vld [vmem:[%s826 + $0x30] sm:$0xff]
  %v2414 = vld [vmem:[%s826 + $0x38] sm:$0xff]
  %v2415 = vld [vmem:[%s826 + $0x40] sm:$0xff]
  %v2416 = vld [vmem:[%s826 + $0x48] sm:$0xff]
  %v2417 = vld [vmem:[%s826 + $0x50] sm:$0xff]
  %v2418 = vld [vmem:[%s826 + $0x58] sm:$0xff]
  %v2419 = vld [vmem:[%s826 + $0x60] sm:$0xff]
  %v2420 = vld [vmem:[%s826 + $0x68] sm:$0xff]
  %v2421 = vld [vmem:[%s826 + $0x70] sm:$0xff]
  %v2422 = vld [vmem:[%s826 + $0x78] sm:$0xff]
  %v2423 = vld [vmem:[%s826 + $0x80] sm:$0xff]
  %v2424 = vld [vmem:[%s826 + $0x88] sm:$0xff]
  %v2425 = vld [vmem:[%s826 + $0x90] sm:$0xff]
  %v2426 = vld [vmem:[%s826 + $0x98] sm:$0xff]
  %v2427 = vld [vmem:[%s826 + $0xa0] sm:$0xff]
  %v2428 = vld [vmem:[%s826 + $0xa8] sm:$0xff]
  %v2429 = vld [vmem:[%s826 + $0xb0] sm:$0xff]
  %v2430 = vld [vmem:[%s826 + $0xb8] sm:$0xff]
  %v2431 = vld [vmem:[%s826 + $0xc0] sm:$0xff]
  %v2432 = vld [vmem:[%s826 + $0xc8] sm:$0xff]
  %v2433 = vld [vmem:[%s826 + $0xd0] sm:$0xff]
  %v2434 = vld [vmem:[%s826 + $0xd8] sm:$0xff]
  %v2435 = vld [vmem:[%s826 + $0xe0] sm:$0xff]
  %v2436 = vld [vmem:[%s826 + $0xe8] sm:$0xff]
  %v2437 = vld [vmem:[%s826 + $0xf0] sm:$0xff]
  %v2438 = vld [vmem:[%s826 + $0xf8] sm:$0xff]
  %v2439 = vld [vmem:[%s826 + $0x100] sm:$0xff]
  %v2440 = vld [vmem:[%s826 + $0x108] sm:$0xff]
  %v2441 = vld [vmem:[%s826 + $0x110] sm:$0xff]
  %v2442 = vld [vmem:[%s826 + $0x118] sm:$0xff]
  %v2443 = vld [vmem:[%s826 + $0x120] sm:$0xff]
  %v2444 = vld [vmem:[%s826 + $0x128] sm:$0xff]
  %v2445 = vld [vmem:[%s826 + $0x130] sm:$0xff]
  %v2446 = vld [vmem:[%s826 + $0x138] sm:$0xff]
  %v2447 = vld [vmem:[%s826 + $0x140] sm:$0xff]
  %v2448 = vld [vmem:[%s826 + $0x148] sm:$0xff]
  %v2449 = vld [vmem:[%s826 + $0x150] sm:$0xff]
  %v2450 = vld [vmem:[%s826 + $0x158] sm:$0xff]
  %v2451 = vld [vmem:[%s826 + $0x160] sm:$0xff]
  %v2452 = vld [vmem:[%s826 + $0x168] sm:$0xff]
  %v2453 = vld [vmem:[%s826 + $0x170] sm:$0xff]
  %v2454 = vld [vmem:[%s826 + $0x178] sm:$0xff]
  %v2455 = vld [vmem:[%s826 + $0x180] sm:$0xff]
  %v2456 = vld [vmem:[%s826 + $0x188] sm:$0xff]
  %v2457 = vld [vmem:[%s826 + $0x190] sm:$0xff]
  %v2458 = vld [vmem:[%s826 + $0x198] sm:$0xff]
  %v2459 = vld [vmem:[%s826 + $0x1a0] sm:$0xff]
  %v2460 = vld [vmem:[%s826 + $0x1a8] sm:$0xff]
  %v2461 = vld [vmem:[%s826 + $0x1b0] sm:$0xff]
  %v2462 = vld [vmem:[%s826 + $0x1b8] sm:$0xff]
  %v2463 = vld [vmem:[%s826 + $0x1c0] sm:$0xff]
  %v2464 = vld [vmem:[%s826 + $0x1c8] sm:$0xff]
  %v2465 = vld [vmem:[%s826 + $0x1d0] sm:$0xff]
  %v2466 = vld [vmem:[%s826 + $0x1d8] sm:$0xff]
  %v2467 = vld [vmem:[%s826 + $0x1e0] sm:$0xff]
  %v2468 = vld [vmem:[%s826 + $0x1e8] sm:$0xff]
  %v2469 = vld [vmem:[%s826 + $0x1f0] sm:$0xff]
  %v2470 = vld [vmem:[%s826 + $0x1f8] sm:$0xff]
  %v2471 = vld [vmem:[%s826 + $0x200] sm:$0xff]
  %v2472 = vld [vmem:[%s826 + $0x208] sm:$0xff]
  %v2473 = vld [vmem:[%s826 + $0x210] sm:$0xff]
  %v2474 = vld [vmem:[%s826 + $0x218] sm:$0xff]
  %v2475 = vld [vmem:[%s826 + $0x220] sm:$0xff]
  %v2476 = vld [vmem:[%s826 + $0x228] sm:$0xff]
  %v2477 = vld [vmem:[%s826 + $0x230] sm:$0xff]
  %v2478 = vld [vmem:[%s826 + $0x238] sm:$0xff]
  %v2479 = vld [vmem:[%s826 + $0x240] sm:$0xff]
  %v2480 = vld [vmem:[%s826 + $0x248] sm:$0xff]
  %v2481 = vld [vmem:[%s826 + $0x250] sm:$0xff]
  %v2482 = vld [vmem:[%s826 + $0x258] sm:$0xff]
  %v2483 = vld [vmem:[%s826 + $0x260] sm:$0xff]
  %v2484 = vld [vmem:[%s826 + $0x268] sm:$0xff]
  %v2485 = vld [vmem:[%s826 + $0x270] sm:$0xff]
  %v2486 = vld [vmem:[%s826 + $0x278] sm:$0xff]
  %v2487 = vld [vmem:[%s826 + $0x280] sm:$0xff]
  %v2488 = vld [vmem:[%s826 + $0x288] sm:$0xff]
  %v2489 = vld [vmem:[%s826 + $0x290] sm:$0xff]
  %v2490 = vld [vmem:[%s826 + $0x298] sm:$0xff]
  %v2491 = vld [vmem:[%s826 + $0x2a0] sm:$0xff]
  %v2492 = vld [vmem:[%s826 + $0x2a8] sm:$0xff]
  %v2493 = vld [vmem:[%s826 + $0x2b0] sm:$0xff]
  %v2494 = vld [vmem:[%s826 + $0x2b8] sm:$0xff]
  %v2495 = vld [vmem:[%s826 + $0x2c0] sm:$0xff]
  %v2496 = vld [vmem:[%s826 + $0x2c8] sm:$0xff]
  %v2497 = vld [vmem:[%s826 + $0x2d0] sm:$0xff]
  %v2498 = vld [vmem:[%s826 + $0x2d8] sm:$0xff]
  %v2499 = vld [vmem:[%s826 + $0x2e0] sm:$0xff]
  %v2500 = vld [vmem:[%s826 + $0x2e8] sm:$0xff]
  %v2501 = vld [vmem:[%s826 + $0x2f0] sm:$0xff]
  %v2502 = vld [vmem:[%s826 + $0x2f8] sm:$0xff]
  %v2503 = vld [vmem:[%s826 + $0x300] sm:$0xff]
  %v2504 = vld [vmem:[%s826 + $0x308] sm:$0xff]
  %v2505 = vld [vmem:[%s826 + $0x310] sm:$0xff]
  %v2506 = vld [vmem:[%s826 + $0x318] sm:$0xff]
  %v2507 = vld [vmem:[%s826 + $0x320] sm:$0xff]
  %v2508 = vld [vmem:[%s826 + $0x328] sm:$0xff]
  %v2509 = vld [vmem:[%s826 + $0x330] sm:$0xff]
  %v2510 = vld [vmem:[%s826 + $0x338] sm:$0xff]
  %v2511 = vld [vmem:[%s826 + $0x340] sm:$0xff]
  %v2512 = vld [vmem:[%s826 + $0x348] sm:$0xff]
  %v2513 = vld [vmem:[%s826 + $0x350] sm:$0xff]
  %v2514 = vld [vmem:[%s826 + $0x358] sm:$0xff]
  %v2515 = vld [vmem:[%s826 + $0x360] sm:$0xff]
  %v2516 = vld [vmem:[%s826 + $0x368] sm:$0xff]
  %v2517 = vld [vmem:[%s826 + $0x370] sm:$0xff]
  %v2518 = vld [vmem:[%s826 + $0x378] sm:$0xff]
  %v2519 = vld [vmem:[%s826 + $0x380] sm:$0xff]
  %v2520 = vld [vmem:[%s826 + $0x388] sm:$0xff]
  %v2521 = vld [vmem:[%s826 + $0x390] sm:$0xff]
  %v2522 = vld [vmem:[%s826 + $0x398] sm:$0xff]
  %v2523 = vld [vmem:[%s826 + $0x3a0] sm:$0xff]
  %v2524 = vld [vmem:[%s826 + $0x3a8] sm:$0xff]
  %v2525 = vld [vmem:[%s826 + $0x3b0] sm:$0xff]
  %v2526 = vld [vmem:[%s826 + $0x3b8] sm:$0xff]
  %v2527 = vld [vmem:[%s826 + $0x3c0] sm:$0xff]
  %v2528 = vld [vmem:[%s826 + $0x3c8] sm:$0xff]
  %v2529 = vld [vmem:[%s826 + $0x3d0] sm:$0xff]
  %v2530 = vld [vmem:[%s826 + $0x3d8] sm:$0xff]
  %v2531 = vld [vmem:[%s826 + $0x3e0] sm:$0xff]
  %v2532 = vld [vmem:[%s826 + $0x3e8] sm:$0xff]
  %v2533 = vld [vmem:[%s826 + $0x3f0] sm:$0xff]
  %v2534 = vld [vmem:[%s826 + $0x3f8] sm:$0xff]
  %v2663 = vunpack.c.l.b16 %v2407
  %v2664 = vunpack.c.h.b16 %v2407
  %v2665 = vunpack.c.l.b16 %v2408
  %v2666 = vunpack.c.h.b16 %v2408
  %v2667 = vunpack.c.l.b16 %v2409
  %v2668 = vunpack.c.h.b16 %v2409
  %v2669 = vunpack.c.l.b16 %v2410
  %v2670 = vunpack.c.h.b16 %v2410
  %v2671 = vunpack.c.l.b16 %v2411
  %v2672 = vunpack.c.h.b16 %v2411
  %v2673 = vunpack.c.l.b16 %v2412
  %v2674 = vunpack.c.h.b16 %v2412
  %v2675 = vunpack.c.l.b16 %v2413
  %v2676 = vunpack.c.h.b16 %v2413
  %v2677 = vunpack.c.l.b16 %v2414
  %v2678 = vunpack.c.h.b16 %v2414
  %v2679 = vunpack.c.l.b16 %v2415
  %v2680 = vunpack.c.h.b16 %v2415
  %v2681 = vunpack.c.l.b16 %v2416
  %v2682 = vunpack.c.h.b16 %v2416
  %v2683 = vunpack.c.l.b16 %v2417
  %v2684 = vunpack.c.h.b16 %v2417
  %v2685 = vunpack.c.l.b16 %v2418
  %v2686 = vunpack.c.h.b16 %v2418
  %v2687 = vunpack.c.l.b16 %v2419
  %v2688 = vunpack.c.h.b16 %v2419
  %v2689 = vunpack.c.l.b16 %v2420
  %v2690 = vunpack.c.h.b16 %v2420
  %v2691 = vunpack.c.l.b16 %v2421
  %v2692 = vunpack.c.h.b16 %v2421
  %v2693 = vunpack.c.l.b16 %v2422
  %v2694 = vunpack.c.h.b16 %v2422
  %v2695 = vunpack.c.l.b16 %v2423
  %v2696 = vunpack.c.h.b16 %v2423
  %v2697 = vunpack.c.l.b16 %v2424
  %v2698 = vunpack.c.h.b16 %v2424
  %v2699 = vunpack.c.l.b16 %v2425
  %v2700 = vunpack.c.h.b16 %v2425
  %v2701 = vunpack.c.l.b16 %v2426
  %v2702 = vunpack.c.h.b16 %v2426
  %v2703 = vunpack.c.l.b16 %v2427
  %v2704 = vunpack.c.h.b16 %v2427
  %v2705 = vunpack.c.l.b16 %v2428
  %v2706 = vunpack.c.h.b16 %v2428
  %v2707 = vunpack.c.l.b16 %v2429
  %v2708 = vunpack.c.h.b16 %v2429
  %v2709 = vunpack.c.l.b16 %v2430
  %v2710 = vunpack.c.h.b16 %v2430
  %v2711 = vunpack.c.l.b16 %v2431
  %v2712 = vunpack.c.h.b16 %v2431
  %v2713 = vunpack.c.l.b16 %v2432
  %v2714 = vunpack.c.h.b16 %v2432
  %v2715 = vunpack.c.l.b16 %v2433
  %v2716 = vunpack.c.h.b16 %v2433
  %v2717 = vunpack.c.l.b16 %v2434
  %v2718 = vunpack.c.h.b16 %v2434
  %v2719 = vunpack.c.l.b16 %v2435
  %v2720 = vunpack.c.h.b16 %v2435
  %v2721 = vunpack.c.l.b16 %v2436
  %v2722 = vunpack.c.h.b16 %v2436
  %v2723 = vunpack.c.l.b16 %v2437
  %v2724 = vunpack.c.h.b16 %v2437
  %v2725 = vunpack.c.l.b16 %v2438
  %v2726 = vunpack.c.h.b16 %v2438
  %v2727 = vunpack.c.l.b16 %v2439
  %v2728 = vunpack.c.h.b16 %v2439
  %v2729 = vunpack.c.l.b16 %v2440
  %v2730 = vunpack.c.h.b16 %v2440
  %v2731 = vunpack.c.l.b16 %v2441
  %v2732 = vunpack.c.h.b16 %v2441
  %v2733 = vunpack.c.l.b16 %v2442
  %v2734 = vunpack.c.h.b16 %v2442
  %v2735 = vunpack.c.l.b16 %v2443
  %v2736 = vunpack.c.h.b16 %v2443
  %v2737 = vunpack.c.l.b16 %v2444
  %v2738 = vunpack.c.h.b16 %v2444
  %v2739 = vunpack.c.l.b16 %v2445
  %v2740 = vunpack.c.h.b16 %v2445
  %v2741 = vunpack.c.l.b16 %v2446
  %v2742 = vunpack.c.h.b16 %v2446
  %v2743 = vunpack.c.l.b16 %v2447
  %v2744 = vunpack.c.h.b16 %v2447
  %v2745 = vunpack.c.l.b16 %v2448
  %v2746 = vunpack.c.h.b16 %v2448
  %v2747 = vunpack.c.l.b16 %v2449
  %v2748 = vunpack.c.h.b16 %v2449
  %v2749 = vunpack.c.l.b16 %v2450
  %v2750 = vunpack.c.h.b16 %v2450
  %v2751 = vunpack.c.l.b16 %v2451
  %v2752 = vunpack.c.h.b16 %v2451
  %v2753 = vunpack.c.l.b16 %v2452
  %v2754 = vunpack.c.h.b16 %v2452
  %v2755 = vunpack.c.l.b16 %v2453
  %v2756 = vunpack.c.h.b16 %v2453
  %v2757 = vunpack.c.l.b16 %v2454
  %v2758 = vunpack.c.h.b16 %v2454
  %v2759 = vunpack.c.l.b16 %v2455
  %v2760 = vunpack.c.h.b16 %v2455
  %v2761 = vunpack.c.l.b16 %v2456
  %v2762 = vunpack.c.h.b16 %v2456
  %v2763 = vunpack.c.l.b16 %v2457
  %v2764 = vunpack.c.h.b16 %v2457
  %v2765 = vunpack.c.l.b16 %v2458
  %v2766 = vunpack.c.h.b16 %v2458
  %v2767 = vunpack.c.l.b16 %v2459
  %v2768 = vunpack.c.h.b16 %v2459
  %v2769 = vunpack.c.l.b16 %v2460
  %v2770 = vunpack.c.h.b16 %v2460
  %v2771 = vunpack.c.l.b16 %v2461
  %v2772 = vunpack.c.h.b16 %v2461
  %v2773 = vunpack.c.l.b16 %v2462
  %v2774 = vunpack.c.h.b16 %v2462
  %v2775 = vunpack.c.l.b16 %v2463
  %v2776 = vunpack.c.h.b16 %v2463
  %v2777 = vunpack.c.l.b16 %v2464
  %v2778 = vunpack.c.h.b16 %v2464
  %v2779 = vunpack.c.l.b16 %v2465
  %v2780 = vunpack.c.h.b16 %v2465
  %v2781 = vunpack.c.l.b16 %v2466
  %v2782 = vunpack.c.h.b16 %v2466
  %v2783 = vunpack.c.l.b16 %v2467
  %v2784 = vunpack.c.h.b16 %v2467
  %v2785 = vunpack.c.l.b16 %v2468
  %v2786 = vunpack.c.h.b16 %v2468
  %v2787 = vunpack.c.l.b16 %v2469
  %v2788 = vunpack.c.h.b16 %v2469
  %v2789 = vunpack.c.l.b16 %v2470
  %v2790 = vunpack.c.h.b16 %v2470
  %v2791 = vunpack.c.l.b16 %v2471
  %v2792 = vunpack.c.h.b16 %v2471
  %v2793 = vunpack.c.l.b16 %v2472
  %v2794 = vunpack.c.h.b16 %v2472
  %v2795 = vunpack.c.l.b16 %v2473
  %v2796 = vunpack.c.h.b16 %v2473
  %v2797 = vunpack.c.l.b16 %v2474
  %v2798 = vunpack.c.h.b16 %v2474
  %v2799 = vunpack.c.l.b16 %v2475
  %v2800 = vunpack.c.h.b16 %v2475
  %v2801 = vunpack.c.l.b16 %v2476
  %v2802 = vunpack.c.h.b16 %v2476
  %v2803 = vunpack.c.l.b16 %v2477
  %v2804 = vunpack.c.h.b16 %v2477
  %v2805 = vunpack.c.l.b16 %v2478
  %v2806 = vunpack.c.h.b16 %v2478
  %v2807 = vunpack.c.l.b16 %v2479
  %v2808 = vunpack.c.h.b16 %v2479
  %v2809 = vunpack.c.l.b16 %v2480
  %v2810 = vunpack.c.h.b16 %v2480
  %v2811 = vunpack.c.l.b16 %v2481
  %v2812 = vunpack.c.h.b16 %v2481
  %v2813 = vunpack.c.l.b16 %v2482
  %v2814 = vunpack.c.h.b16 %v2482
  %v2815 = vunpack.c.l.b16 %v2483
  %v2816 = vunpack.c.h.b16 %v2483
  %v2817 = vunpack.c.l.b16 %v2484
  %v2818 = vunpack.c.h.b16 %v2484
  %v2819 = vunpack.c.l.b16 %v2485
  %v2820 = vunpack.c.h.b16 %v2485
  %v2821 = vunpack.c.l.b16 %v2486
  %v2822 = vunpack.c.h.b16 %v2486
  %v2823 = vunpack.c.l.b16 %v2487
  %v2824 = vunpack.c.h.b16 %v2487
  %v2825 = vunpack.c.l.b16 %v2488
  %v2826 = vunpack.c.h.b16 %v2488
  %v2827 = vunpack.c.l.b16 %v2489
  %v2828 = vunpack.c.h.b16 %v2489
  %v2829 = vunpack.c.l.b16 %v2490
  %v2830 = vunpack.c.h.b16 %v2490
  %v2831 = vunpack.c.l.b16 %v2491
  %v2832 = vunpack.c.h.b16 %v2491
  %v2833 = vunpack.c.l.b16 %v2492
  %v2834 = vunpack.c.h.b16 %v2492
  %v2835 = vunpack.c.l.b16 %v2493
  %v2836 = vunpack.c.h.b16 %v2493
  %v2837 = vunpack.c.l.b16 %v2494
  %v2838 = vunpack.c.h.b16 %v2494
  %v2839 = vunpack.c.l.b16 %v2495
  %v2840 = vunpack.c.h.b16 %v2495
  %v2841 = vunpack.c.l.b16 %v2496
  %v2842 = vunpack.c.h.b16 %v2496
  %v2843 = vunpack.c.l.b16 %v2497
  %v2844 = vunpack.c.h.b16 %v2497
  %v2845 = vunpack.c.l.b16 %v2498
  %v2846 = vunpack.c.h.b16 %v2498
  %v2847 = vunpack.c.l.b16 %v2499
  %v2848 = vunpack.c.h.b16 %v2499
  %v2849 = vunpack.c.l.b16 %v2500
  %v2850 = vunpack.c.h.b16 %v2500
  %v2851 = vunpack.c.l.b16 %v2501
  %v2852 = vunpack.c.h.b16 %v2501
  %v2853 = vunpack.c.l.b16 %v2502
  %v2854 = vunpack.c.h.b16 %v2502
  %v2855 = vunpack.c.l.b16 %v2503
  %v2856 = vunpack.c.h.b16 %v2503
  %v2857 = vunpack.c.l.b16 %v2504
  %v2858 = vunpack.c.h.b16 %v2504
  %v2859 = vunpack.c.l.b16 %v2505
  %v2860 = vunpack.c.h.b16 %v2505
  %v2861 = vunpack.c.l.b16 %v2506
  %v2862 = vunpack.c.h.b16 %v2506
  %v2863 = vunpack.c.l.b16 %v2507
  %v2864 = vunpack.c.h.b16 %v2507
  %v2865 = vunpack.c.l.b16 %v2508
  %v2866 = vunpack.c.h.b16 %v2508
  %v2867 = vunpack.c.l.b16 %v2509
  %v2868 = vunpack.c.h.b16 %v2509
  %v2869 = vunpack.c.l.b16 %v2510
  %v2870 = vunpack.c.h.b16 %v2510
  %v2871 = vunpack.c.l.b16 %v2511
  %v2872 = vunpack.c.h.b16 %v2511
  %v2873 = vunpack.c.l.b16 %v2512
  %v2874 = vunpack.c.h.b16 %v2512
  %v2875 = vunpack.c.l.b16 %v2513
  %v2876 = vunpack.c.h.b16 %v2513
  %v2877 = vunpack.c.l.b16 %v2514
  %v2878 = vunpack.c.h.b16 %v2514
  %v2879 = vunpack.c.l.b16 %v2515
  %v2880 = vunpack.c.h.b16 %v2515
  %v2881 = vunpack.c.l.b16 %v2516
  %v2882 = vunpack.c.h.b16 %v2516
  %v2883 = vunpack.c.l.b16 %v2517
  %v2884 = vunpack.c.h.b16 %v2517
  %v2885 = vunpack.c.l.b16 %v2518
  %v2886 = vunpack.c.h.b16 %v2518
  %v2887 = vunpack.c.l.b16 %v2519
  %v2888 = vunpack.c.h.b16 %v2519
  %v2889 = vunpack.c.l.b16 %v2520
  %v2890 = vunpack.c.h.b16 %v2520
  %v2891 = vunpack.c.l.b16 %v2521
  %v2892 = vunpack.c.h.b16 %v2521
  %v2893 = vunpack.c.l.b16 %v2522
  %v2894 = vunpack.c.h.b16 %v2522
  %v2895 = vunpack.c.l.b16 %v2523
  %v2896 = vunpack.c.h.b16 %v2523
  %v2897 = vunpack.c.l.b16 %v2524
  %v2898 = vunpack.c.h.b16 %v2524
  %v2899 = vunpack.c.l.b16 %v2525
  %v2900 = vunpack.c.h.b16 %v2525
  %v2901 = vunpack.c.l.b16 %v2526
  %v2902 = vunpack.c.h.b16 %v2526
  %v2903 = vunpack.c.l.b16 %v2527
  %v2904 = vunpack.c.h.b16 %v2527
  %v2905 = vunpack.c.l.b16 %v2528
  %v2906 = vunpack.c.h.b16 %v2528
  %v2907 = vunpack.c.l.b16 %v2529
  %v2908 = vunpack.c.h.b16 %v2529
  %v2909 = vunpack.c.l.b16 %v2530
  %v2910 = vunpack.c.h.b16 %v2530
  %v2911 = vunpack.c.l.b16 %v2531
  %v2912 = vunpack.c.h.b16 %v2531
  %v2913 = vunpack.c.l.b16 %v2532
  %v2914 = vunpack.c.h.b16 %v2532
  %v2915 = vunpack.c.l.b16 %v2533
  %v2916 = vunpack.c.h.b16 %v2533
  %v2917 = vunpack.c.l.b16 %v2534
  %v2918 = vunpack.c.h.b16 %v2534
  %v2919 = vpack.c.b16 %v2667, %v2663
  %v2920 = vpack.c.b16 %v2668, %v2664
  %v2921 = vpack.c.b16 %v2669, %v2665
  %v2922 = vpack.c.b16 %v2670, %v2666
  %v2923 = vpack.c.b16 %v2675, %v2671
  %v2924 = vpack.c.b16 %v2676, %v2672
  %v2925 = vpack.c.b16 %v2677, %v2673
  %v2926 = vpack.c.b16 %v2678, %v2674
  %v2927 = vpack.c.b16 %v2683, %v2679
  %v2928 = vpack.c.b16 %v2684, %v2680
  %v2929 = vpack.c.b16 %v2685, %v2681
  %v2930 = vpack.c.b16 %v2686, %v2682
  %v2931 = vpack.c.b16 %v2691, %v2687
  %v2932 = vpack.c.b16 %v2692, %v2688
  %v2933 = vpack.c.b16 %v2693, %v2689
  %v2934 = vpack.c.b16 %v2694, %v2690
  %v2935 = vpack.c.b16 %v2699, %v2695
  %v2936 = vpack.c.b16 %v2700, %v2696
  %v2937 = vpack.c.b16 %v2701, %v2697
  %v2938 = vpack.c.b16 %v2702, %v2698
  %v2939 = vpack.c.b16 %v2707, %v2703
  %v2940 = vpack.c.b16 %v2708, %v2704
  %v2941 = vpack.c.b16 %v2709, %v2705
  %v2942 = vpack.c.b16 %v2710, %v2706
  %v2943 = vpack.c.b16 %v2715, %v2711
  %v2944 = vpack.c.b16 %v2716, %v2712
  %v2945 = vpack.c.b16 %v2717, %v2713
  %v2946 = vpack.c.b16 %v2718, %v2714
  %v2947 = vpack.c.b16 %v2723, %v2719
  %v2948 = vpack.c.b16 %v2724, %v2720
  %v2949 = vpack.c.b16 %v2725, %v2721
  %v2950 = vpack.c.b16 %v2726, %v2722
  %v2951 = vpack.c.b16 %v2731, %v2727
  %v2952 = vpack.c.b16 %v2732, %v2728
  %v2953 = vpack.c.b16 %v2733, %v2729
  %v2954 = vpack.c.b16 %v2734, %v2730
  %v2955 = vpack.c.b16 %v2739, %v2735
  %v2956 = vpack.c.b16 %v2740, %v2736
  %v2957 = vpack.c.b16 %v2741, %v2737
  %v2958 = vpack.c.b16 %v2742, %v2738
  %v2959 = vpack.c.b16 %v2747, %v2743
  %v2960 = vpack.c.b16 %v2748, %v2744
  %v2961 = vpack.c.b16 %v2749, %v2745
  %v2962 = vpack.c.b16 %v2750, %v2746
  %v2963 = vpack.c.b16 %v2755, %v2751
  %v2964 = vpack.c.b16 %v2756, %v2752
  %v2965 = vpack.c.b16 %v2757, %v2753
  %v2966 = vpack.c.b16 %v2758, %v2754
  %v2967 = vpack.c.b16 %v2763, %v2759
  %v2968 = vpack.c.b16 %v2764, %v2760
  %v2969 = vpack.c.b16 %v2765, %v2761
  %v2970 = vpack.c.b16 %v2766, %v2762
  %v2971 = vpack.c.b16 %v2771, %v2767
  %v2972 = vpack.c.b16 %v2772, %v2768
  %v2973 = vpack.c.b16 %v2773, %v2769
  %v2974 = vpack.c.b16 %v2774, %v2770
  %v2975 = vpack.c.b16 %v2779, %v2775
  %v2976 = vpack.c.b16 %v2780, %v2776
  %v2977 = vpack.c.b16 %v2781, %v2777
  %v2978 = vpack.c.b16 %v2782, %v2778
  %v2979 = vpack.c.b16 %v2787, %v2783
  %v2980 = vpack.c.b16 %v2788, %v2784
  %v2981 = vpack.c.b16 %v2789, %v2785
  %v2982 = vpack.c.b16 %v2790, %v2786
  %v2983 = vpack.c.b16 %v2795, %v2791
  %v2984 = vpack.c.b16 %v2796, %v2792
  %v2985 = vpack.c.b16 %v2797, %v2793
  %v2986 = vpack.c.b16 %v2798, %v2794
  %v2987 = vpack.c.b16 %v2803, %v2799
  %v2988 = vpack.c.b16 %v2804, %v2800
  %v2989 = vpack.c.b16 %v2805, %v2801
  %v2990 = vpack.c.b16 %v2806, %v2802
  %v2991 = vpack.c.b16 %v2811, %v2807
  %v2992 = vpack.c.b16 %v2812, %v2808
  %v2993 = vpack.c.b16 %v2813, %v2809
  %v2994 = vpack.c.b16 %v2814, %v2810
  %v2995 = vpack.c.b16 %v2819, %v2815
  %v2996 = vpack.c.b16 %v2820, %v2816
  %v2997 = vpack.c.b16 %v2821, %v2817
  %v2998 = vpack.c.b16 %v2822, %v2818
  %v2999 = vpack.c.b16 %v2827, %v2823
  %v3000 = vpack.c.b16 %v2828, %v2824
  %v3001 = vpack.c.b16 %v2829, %v2825
  %v3002 = vpack.c.b16 %v2830, %v2826
  %v3003 = vpack.c.b16 %v2835, %v2831
  %v3004 = vpack.c.b16 %v2836, %v2832
  %v3005 = vpack.c.b16 %v2837, %v2833
  %v3006 = vpack.c.b16 %v2838, %v2834
  %v3007 = vpack.c.b16 %v2843, %v2839
  %v3008 = vpack.c.b16 %v2844, %v2840
  %v3009 = vpack.c.b16 %v2845, %v2841
  %v3010 = vpack.c.b16 %v2846, %v2842
  %v3011 = vpack.c.b16 %v2851, %v2847
  %v3012 = vpack.c.b16 %v2852, %v2848
  %v3013 = vpack.c.b16 %v2853, %v2849
  %v3014 = vpack.c.b16 %v2854, %v2850
  %v3015 = vpack.c.b16 %v2859, %v2855
  %v3016 = vpack.c.b16 %v2860, %v2856
  %v3017 = vpack.c.b16 %v2861, %v2857
  %v3018 = vpack.c.b16 %v2862, %v2858
  %v3019 = vpack.c.b16 %v2867, %v2863
  %v3020 = vpack.c.b16 %v2868, %v2864
  %v3021 = vpack.c.b16 %v2869, %v2865
  %v3022 = vpack.c.b16 %v2870, %v2866
  %v3023 = vpack.c.b16 %v2875, %v2871
  %v3024 = vpack.c.b16 %v2876, %v2872
  %v3025 = vpack.c.b16 %v2877, %v2873
  %v3026 = vpack.c.b16 %v2878, %v2874
  %v3027 = vpack.c.b16 %v2883, %v2879
  %v3028 = vpack.c.b16 %v2884, %v2880
  %v3029 = vpack.c.b16 %v2885, %v2881
  %v3030 = vpack.c.b16 %v2886, %v2882
  %v3031 = vpack.c.b16 %v2891, %v2887
  %v3032 = vpack.c.b16 %v2892, %v2888
  %v3033 = vpack.c.b16 %v2893, %v2889
  %v3034 = vpack.c.b16 %v2894, %v2890
  %v3035 = vpack.c.b16 %v2899, %v2895
  %v3036 = vpack.c.b16 %v2900, %v2896
  %v3037 = vpack.c.b16 %v2901, %v2897
  %v3038 = vpack.c.b16 %v2902, %v2898
  %v3039 = vpack.c.b16 %v2907, %v2903
  %v3040 = vpack.c.b16 %v2908, %v2904
  %v3041 = vpack.c.b16 %v2909, %v2905
  %v3042 = vpack.c.b16 %v2910, %v2906
  %v3043 = vpack.c.b16 %v2915, %v2911
  %v3044 = vpack.c.b16 %v2916, %v2912
  %v3045 = vpack.c.b16 %v2917, %v2913
  %v3046 = vpack.c.b16 %v2918, %v2914
  %3175 = vmatpush.bf16.msra.mxu0 %v2947
  %3176 = vmatpush.bf16.msra.mxu0 %v2943
  %3177 = vmatpush.bf16.msra.mxu0 %v2939
  %3178 = vmatpush.bf16.msra.mxu0 %v2935
  %3179 = vmatpush.bf16.msra.mxu0 %v2931
  %3180 = vmatpush.bf16.msra.mxu0 %v2927
  %3181 = vmatpush.bf16.msra.mxu0 %v2923
  %3182 = vmatpush.bf16.msra.mxu0 %v2919
  %3183 = vmatmul.bf16.gmra.mxu0 %v488
  %v3184 = vpop.f32.mrf.mxu0
  %v3185 = vadd.f32 0.0, %v3184
  %v3186 = vpop.f32.mrf.mxu0
  %v3187 = vadd.f32 0.0, %v3186
  %3188 = vmatmul.bf16.gmra.mxu0 %v492
  %v3189 = vpop.f32.mrf.mxu0
  %v3190 = vadd.f32 0.0, %v3189
  %v3191 = vpop.f32.mrf.mxu0
  %v3192 = vadd.f32 0.0, %v3191
  %3193 = vdwg.mxu0
  %3194 = vmatpush.bf16.msra.mxu0 %v2979
  %3195 = vmatpush.bf16.msra.mxu0 %v2975
  %3196 = vmatpush.bf16.msra.mxu0 %v2971
  %3197 = vmatpush.bf16.msra.mxu0 %v2967
  %3198 = vmatpush.bf16.msra.mxu0 %v2963
  %3199 = vmatpush.bf16.msra.mxu0 %v2959
  %3200 = vmatpush.bf16.msra.mxu0 %v2955
  %3201 = vmatpush.bf16.msra.mxu0 %v2951
  %3202 = vmatmul.bf16.gmra.mxu0 %v489
  %v3203 = vpop.f32.mrf.mxu0
  %v3204 = vadd.f32 %v3185, %v3203
  %v3205 = vpop.f32.mrf.mxu0
  %v3206 = vadd.f32 %v3187, %v3205
  %3207 = vmatmul.bf16.gmra.mxu0 %v493
  %v3208 = vpop.f32.mrf.mxu0
  %v3209 = vadd.f32 %v3190, %v3208
  %v3210 = vpop.f32.mrf.mxu0
  %v3211 = vadd.f32 %v3192, %v3210
  %3212 = vdwg.mxu0
  %3213 = vmatpush.bf16.msra.mxu0 %v3011
  %3214 = vmatpush.bf16.msra.mxu0 %v3007
  %3215 = vmatpush.bf16.msra.mxu0 %v3003
  %3216 = vmatpush.bf16.msra.mxu0 %v2999
  %3217 = vmatpush.bf16.msra.mxu0 %v2995
  %3218 = vmatpush.bf16.msra.mxu0 %v2991
  %3219 = vmatpush.bf16.msra.mxu0 %v2987
  %3220 = vmatpush.bf16.msra.mxu0 %v2983
  %3221 = vmatmul.bf16.gmra.mxu0 %v490
  %v3222 = vpop.f32.mrf.mxu0
  %v3223 = vadd.f32 %v3204, %v3222
  %v3224 = vpop.f32.mrf.mxu0
  %v3225 = vadd.f32 %v3206, %v3224
  %3226 = vmatmul.bf16.gmra.mxu0 %v494
  %v3227 = vpop.f32.mrf.mxu0
  %v3228 = vadd.f32 %v3209, %v3227
  %v3229 = vpop.f32.mrf.mxu0
  %v3230 = vadd.f32 %v3211, %v3229
  %3231 = vdwg.mxu0
  %3232 = vmatpush.bf16.msra.mxu0 %v3043
  %3233 = vmatpush.bf16.msra.mxu0 %v3039
  %3234 = vmatpush.bf16.msra.mxu0 %v3035
  %3235 = vmatpush.bf16.msra.mxu0 %v3031
  %3236 = vmatpush.bf16.msra.mxu0 %v3027
  %3237 = vmatpush.bf16.msra.mxu0 %v3023
  %3238 = vmatpush.bf16.msra.mxu0 %v3019
  %3239 = vmatpush.bf16.msra.mxu0 %v3015
  %3240 = vmatmul.bf16.gmra.mxu0 %v491
  %v3241 = vpop.f32.mrf.mxu0
  %v3242 = vadd.f32 %v3223, %v3241
  %v3243 = vpop.f32.mrf.mxu0
  %v3244 = vadd.f32 %v3225, %v3243
  %3245 = vmatmul.bf16.gmra.mxu0 %v495
  %v3246 = vpop.f32.mrf.mxu0
  %v3247 = vadd.f32 %v3228, %v3246
  %v3248 = vpop.f32.mrf.mxu0
  %v3249 = vadd.f32 %v3230, %v3248
  %3250 = vdwg.mxu0
  %3251 = vmatpush.bf16.msra.mxu0 %v2948
  %3252 = vmatpush.bf16.msra.mxu0 %v2944
  %3253 = vmatpush.bf16.msra.mxu0 %v2940
  %3254 = vmatpush.bf16.msra.mxu0 %v2936
  %3255 = vmatpush.bf16.msra.mxu0 %v2932
  %3256 = vmatpush.bf16.msra.mxu0 %v2928
  %3257 = vmatpush.bf16.msra.mxu0 %v2924
  %3258 = vmatpush.bf16.msra.mxu0 %v2920
  %3259 = vmatmul.bf16.gmra.mxu0 %v488
  %v3260 = vpop.f32.mrf.mxu0
  %v3261 = vadd.f32 0.0, %v3260
  %v3262 = vpop.f32.mrf.mxu0
  %v3263 = vadd.f32 0.0, %v3262
  %3264 = vmatmul.bf16.gmra.mxu0 %v492
  %v3265 = vpop.f32.mrf.mxu0
  %v3266 = vadd.f32 0.0, %v3265
  %v3267 = vpop.f32.mrf.mxu0
  %v3268 = vadd.f32 0.0, %v3267
  %3269 = vdwg.mxu0
  %3270 = vmatpush.bf16.msra.mxu0 %v2980
  %3271 = vmatpush.bf16.msra.mxu0 %v2976
  %3272 = vmatpush.bf16.msra.mxu0 %v2972
  %3273 = vmatpush.bf16.msra.mxu0 %v2968
  %3274 = vmatpush.bf16.msra.mxu0 %v2964
  %3275 = vmatpush.bf16.msra.mxu0 %v2960
  %3276 = vmatpush.bf16.msra.mxu0 %v2956
  %3277 = vmatpush.bf16.msra.mxu0 %v2952
  %3278 = vmatmul.bf16.gmra.mxu0 %v489
  %v3279 = vpop.f32.mrf.mxu0
  %v3280 = vadd.f32 %v3261, %v3279
  %v3281 = vpop.f32.mrf.mxu0
  %v3282 = vadd.f32 %v3263, %v3281
  %3283 = vmatmul.bf16.gmra.mxu0 %v493
  %v3284 = vpop.f32.mrf.mxu0
  %v3285 = vadd.f32 %v3266, %v3284
  %v3286 = vpop.f32.mrf.mxu0
  %v3287 = vadd.f32 %v3268, %v3286
  %3288 = vdwg.mxu0
  %3289 = vmatpush.bf16.msra.mxu0 %v3012
  %3290 = vmatpush.bf16.msra.mxu0 %v3008
  %3291 = vmatpush.bf16.msra.mxu0 %v3004
  %3292 = vmatpush.bf16.msra.mxu0 %v3000
  %3293 = vmatpush.bf16.msra.mxu0 %v2996
  %3294 = vmatpush.bf16.msra.mxu0 %v2992
  %3295 = vmatpush.bf16.msra.mxu0 %v2988
  %3296 = vmatpush.bf16.msra.mxu0 %v2984
  %3297 = vmatmul.bf16.gmra.mxu0 %v490
  %v3298 = vpop.f32.mrf.mxu0
  %v3299 = vadd.f32 %v3280, %v3298
  %v3300 = vpop.f32.mrf.mxu0
  %v3301 = vadd.f32 %v3282, %v3300
  %3302 = vmatmul.bf16.gmra.mxu0 %v494
  %v3303 = vpop.f32.mrf.mxu0
  %v3304 = vadd.f32 %v3285, %v3303
  %v3305 = vpop.f32.mrf.mxu0
  %v3306 = vadd.f32 %v3287, %v3305
  %3307 = vdwg.mxu0
  %3308 = vmatpush.bf16.msra.mxu0 %v3044
  %3309 = vmatpush.bf16.msra.mxu0 %v3040
  %3310 = vmatpush.bf16.msra.mxu0 %v3036
  %3311 = vmatpush.bf16.msra.mxu0 %v3032
  %3312 = vmatpush.bf16.msra.mxu0 %v3028
  %3313 = vmatpush.bf16.msra.mxu0 %v3024
  %3314 = vmatpush.bf16.msra.mxu0 %v3020
  %3315 = vmatpush.bf16.msra.mxu0 %v3016
  %3316 = vmatmul.bf16.gmra.mxu0 %v491
  %v3317 = vpop.f32.mrf.mxu0
  %v3318 = vadd.f32 %v3299, %v3317
  %v3319 = vpop.f32.mrf.mxu0
  %v3320 = vadd.f32 %v3301, %v3319
  %3321 = vmatmul.bf16.gmra.mxu0 %v495
  %v3322 = vpop.f32.mrf.mxu0
  %v3323 = vadd.f32 %v3304, %v3322
  %v3324 = vpop.f32.mrf.mxu0
  %v3325 = vadd.f32 %v3306, %v3324
  %3326 = vdwg.mxu0
  %3327 = vmatpush.bf16.msra.mxu0 %v2949
  %3328 = vmatpush.bf16.msra.mxu0 %v2945
  %3329 = vmatpush.bf16.msra.mxu0 %v2941
  %3330 = vmatpush.bf16.msra.mxu0 %v2937
  %3331 = vmatpush.bf16.msra.mxu0 %v2933
  %3332 = vmatpush.bf16.msra.mxu0 %v2929
  %3333 = vmatpush.bf16.msra.mxu0 %v2925
  %3334 = vmatpush.bf16.msra.mxu0 %v2921
  %3335 = vmatmul.bf16.gmra.mxu0 %v488
  %v3336 = vpop.f32.mrf.mxu0
  %v3337 = vadd.f32 0.0, %v3336
  %v3338 = vpop.f32.mrf.mxu0
  %v3339 = vadd.f32 0.0, %v3338
  %3340 = vmatmul.bf16.gmra.mxu0 %v492
  %v3341 = vpop.f32.mrf.mxu0
  %v3342 = vadd.f32 0.0, %v3341
  %v3343 = vpop.f32.mrf.mxu0
  %v3344 = vadd.f32 0.0, %v3343
  %3345 = vdwg.mxu0
  %3346 = vmatpush.bf16.msra.mxu0 %v2981
  %3347 = vmatpush.bf16.msra.mxu0 %v2977
  %3348 = vmatpush.bf16.msra.mxu0 %v2973
  %3349 = vmatpush.bf16.msra.mxu0 %v2969
  %3350 = vmatpush.bf16.msra.mxu0 %v2965
  %3351 = vmatpush.bf16.msra.mxu0 %v2961
  %3352 = vmatpush.bf16.msra.mxu0 %v2957
  %3353 = vmatpush.bf16.msra.mxu0 %v2953
  %3354 = vmatmul.bf16.gmra.mxu0 %v489
  %v3355 = vpop.f32.mrf.mxu0
  %v3356 = vadd.f32 %v3337, %v3355
  %v3357 = vpop.f32.mrf.mxu0
  %v3358 = vadd.f32 %v3339, %v3357
  %3359 = vmatmul.bf16.gmra.mxu0 %v493
  %v3360 = vpop.f32.mrf.mxu0
  %v3361 = vadd.f32 %v3342, %v3360
  %v3362 = vpop.f32.mrf.mxu0
  %v3363 = vadd.f32 %v3344, %v3362
  %3364 = vdwg.mxu0
  %3365 = vmatpush.bf16.msra.mxu0 %v3013
  %3366 = vmatpush.bf16.msra.mxu0 %v3009
  %3367 = vmatpush.bf16.msra.mxu0 %v3005
  %3368 = vmatpush.bf16.msra.mxu0 %v3001
  %3369 = vmatpush.bf16.msra.mxu0 %v2997
  %3370 = vmatpush.bf16.msra.mxu0 %v2993
  %3371 = vmatpush.bf16.msra.mxu0 %v2989
  %3372 = vmatpush.bf16.msra.mxu0 %v2985
  %3373 = vmatmul.bf16.gmra.mxu0 %v490
  %v3374 = vpop.f32.mrf.mxu0
  %v3375 = vadd.f32 %v3356, %v3374
  %v3376 = vpop.f32.mrf.mxu0
  %v3377 = vadd.f32 %v3358, %v3376
  %3378 = vmatmul.bf16.gmra.mxu0 %v494
  %v3379 = vpop.f32.mrf.mxu0
  %v3380 = vadd.f32 %v3361, %v3379
  %v3381 = vpop.f32.mrf.mxu0
  %v3382 = vadd.f32 %v3363, %v3381
  %3383 = vdwg.mxu0
  %3384 = vmatpush.bf16.msra.mxu0 %v3045
  %3385 = vmatpush.bf16.msra.mxu0 %v3041
  %3386 = vmatpush.bf16.msra.mxu0 %v3037
  %3387 = vmatpush.bf16.msra.mxu0 %v3033
  %3388 = vmatpush.bf16.msra.mxu0 %v3029
  %3389 = vmatpush.bf16.msra.mxu0 %v3025
  %3390 = vmatpush.bf16.msra.mxu0 %v3021
  %3391 = vmatpush.bf16.msra.mxu0 %v3017
  %3392 = vmatmul.bf16.gmra.mxu0 %v491
  %v3393 = vpop.f32.mrf.mxu0
  %v3394 = vadd.f32 %v3375, %v3393
  %v3395 = vpop.f32.mrf.mxu0
  %v3396 = vadd.f32 %v3377, %v3395
  %3397 = vmatmul.bf16.gmra.mxu0 %v495
  %v3398 = vpop.f32.mrf.mxu0
  %v3399 = vadd.f32 %v3380, %v3398
  %v3400 = vpop.f32.mrf.mxu0
  %v3401 = vadd.f32 %v3382, %v3400
  %3402 = vdwg.mxu0
  %3403 = vmatpush.bf16.msra.mxu0 %v2950
  %3404 = vmatpush.bf16.msra.mxu0 %v2946
  %3405 = vmatpush.bf16.msra.mxu0 %v2942
  %3406 = vmatpush.bf16.msra.mxu0 %v2938
  %3407 = vmatpush.bf16.msra.mxu0 %v2934
  %3408 = vmatpush.bf16.msra.mxu0 %v2930
  %3409 = vmatpush.bf16.msra.mxu0 %v2926
  %3410 = vmatpush.bf16.msra.mxu0 %v2922
  %3411 = vmatmul.bf16.gmra.mxu0 %v488
  %v3412 = vpop.f32.mrf.mxu0
  %v3413 = vadd.f32 0.0, %v3412
  %v3414 = vpop.f32.mrf.mxu0
  %v3415 = vadd.f32 0.0, %v3414
  %3416 = vmatmul.bf16.gmra.mxu0 %v492
  %v3417 = vpop.f32.mrf.mxu0
  %v3418 = vadd.f32 0.0, %v3417
  %v3419 = vpop.f32.mrf.mxu0
  %v3420 = vadd.f32 0.0, %v3419
  %3421 = vdwg.mxu0
  %3422 = vmatpush.bf16.msra.mxu0 %v2982
  %3423 = vmatpush.bf16.msra.mxu0 %v2978
  %3424 = vmatpush.bf16.msra.mxu0 %v2974
  %3425 = vmatpush.bf16.msra.mxu0 %v2970
  %3426 = vmatpush.bf16.msra.mxu0 %v2966
  %3427 = vmatpush.bf16.msra.mxu0 %v2962
  %3428 = vmatpush.bf16.msra.mxu0 %v2958
  %3429 = vmatpush.bf16.msra.mxu0 %v2954
  %3430 = vmatmul.bf16.gmra.mxu0 %v489
  %v3431 = vpop.f32.mrf.mxu0
  %v3432 = vadd.f32 %v3413, %v3431
  %v3433 = vpop.f32.mrf.mxu0
  %v3434 = vadd.f32 %v3415, %v3433
  %3435 = vmatmul.bf16.gmra.mxu0 %v493
  %v3436 = vpop.f32.mrf.mxu0
  %v3437 = vadd.f32 %v3418, %v3436
  %v3438 = vpop.f32.mrf.mxu0
  %v3439 = vadd.f32 %v3420, %v3438
  %3440 = vdwg.mxu0
  %3441 = vmatpush.bf16.msra.mxu0 %v3014
  %3442 = vmatpush.bf16.msra.mxu0 %v3010
  %3443 = vmatpush.bf16.msra.mxu0 %v3006
  %3444 = vmatpush.bf16.msra.mxu0 %v3002
  %3445 = vmatpush.bf16.msra.mxu0 %v2998
  %3446 = vmatpush.bf16.msra.mxu0 %v2994
  %3447 = vmatpush.bf16.msra.mxu0 %v2990
  %3448 = vmatpush.bf16.msra.mxu0 %v2986
  %3449 = vmatmul.bf16.gmra.mxu0 %v490
  %v3450 = vpop.f32.mrf.mxu0
  %v3451 = vadd.f32 %v3432, %v3450
  %v3452 = vpop.f32.mrf.mxu0
  %v3453 = vadd.f32 %v3434, %v3452
  %3454 = vmatmul.bf16.gmra.mxu0 %v494
  %v3455 = vpop.f32.mrf.mxu0
  %v3456 = vadd.f32 %v3437, %v3455
  %v3457 = vpop.f32.mrf.mxu0
  %v3458 = vadd.f32 %v3439, %v3457
  %3459 = vdwg.mxu0
  %3460 = vmatpush.bf16.msra.mxu0 %v3046
  %3461 = vmatpush.bf16.msra.mxu0 %v3042
  %3462 = vmatpush.bf16.msra.mxu0 %v3038
  %3463 = vmatpush.bf16.msra.mxu0 %v3034
  %3464 = vmatpush.bf16.msra.mxu0 %v3030
  %3465 = vmatpush.bf16.msra.mxu0 %v3026
  %3466 = vmatpush.bf16.msra.mxu0 %v3022
  %3467 = vmatpush.bf16.msra.mxu0 %v3018
  %3468 = vmatmul.bf16.gmra.mxu0 %v491
  %v3469 = vpop.f32.mrf.mxu0
  %v3470 = vadd.f32 %v3451, %v3469
  %v3471 = vpop.f32.mrf.mxu0
  %v3472 = vadd.f32 %v3453, %v3471
  %3473 = vmatmul.bf16.gmra.mxu0 %v495
  %v3474 = vpop.f32.mrf.mxu0
  %v3475 = vadd.f32 %v3456, %v3474
  %v3476 = vpop.f32.mrf.mxu0
  %v3477 = vadd.f32 %v3458, %v3476
  %3478 = vdwg.mxu0
  %v3479 = vld [vmem:[%s1102] sm:$0xff]
  %v3480 = vld [vmem:[%s1102 + $0x8] sm:$0xff]
  %v3481 = vld [vmem:[%s1102 + $0x10] sm:$0xff]
  %v3482 = vld [vmem:[%s1102 + $0x18] sm:$0xff]
  %v3483 = vld [vmem:[%s1102 + $0x20] sm:$0xff]
  %v3484 = vld [vmem:[%s1102 + $0x28] sm:$0xff]
  %v3485 = vld [vmem:[%s1102 + $0x30] sm:$0xff]
  %v3486 = vld [vmem:[%s1102 + $0x38] sm:$0xff]
  %v3487 = vld [vmem:[%s1102 + $0x40] sm:$0xff]
  %v3488 = vld [vmem:[%s1102 + $0x48] sm:$0xff]
  %v3489 = vld [vmem:[%s1102 + $0x50] sm:$0xff]
  %v3490 = vld [vmem:[%s1102 + $0x58] sm:$0xff]
  %v3491 = vld [vmem:[%s1102 + $0x60] sm:$0xff]
  %v3492 = vld [vmem:[%s1102 + $0x68] sm:$0xff]
  %v3493 = vld [vmem:[%s1102 + $0x70] sm:$0xff]
  %v3494 = vld [vmem:[%s1102 + $0x78] sm:$0xff]
  %v3495 = vld [vmem:[%s1102 + $0x80] sm:$0xff]
  %v3496 = vld [vmem:[%s1102 + $0x88] sm:$0xff]
  %v3497 = vld [vmem:[%s1102 + $0x90] sm:$0xff]
  %v3498 = vld [vmem:[%s1102 + $0x98] sm:$0xff]
  %v3499 = vld [vmem:[%s1102 + $0xa0] sm:$0xff]
  %v3500 = vld [vmem:[%s1102 + $0xa8] sm:$0xff]
  %v3501 = vld [vmem:[%s1102 + $0xb0] sm:$0xff]
  %v3502 = vld [vmem:[%s1102 + $0xb8] sm:$0xff]
  %v3503 = vld [vmem:[%s1102 + $0xc0] sm:$0xff]
  %v3504 = vld [vmem:[%s1102 + $0xc8] sm:$0xff]
  %v3505 = vld [vmem:[%s1102 + $0xd0] sm:$0xff]
  %v3506 = vld [vmem:[%s1102 + $0xd8] sm:$0xff]
  %v3507 = vld [vmem:[%s1102 + $0xe0] sm:$0xff]
  %v3508 = vld [vmem:[%s1102 + $0xe8] sm:$0xff]
  %v3509 = vld [vmem:[%s1102 + $0xf0] sm:$0xff]
  %v3510 = vld [vmem:[%s1102 + $0xf8] sm:$0xff]
  %v3511 = vld [vmem:[%s1102 + $0x100] sm:$0xff]
  %v3512 = vld [vmem:[%s1102 + $0x108] sm:$0xff]
  %v3513 = vld [vmem:[%s1102 + $0x110] sm:$0xff]
  %v3514 = vld [vmem:[%s1102 + $0x118] sm:$0xff]
  %v3515 = vld [vmem:[%s1102 + $0x120] sm:$0xff]
  %v3516 = vld [vmem:[%s1102 + $0x128] sm:$0xff]
  %v3517 = vld [vmem:[%s1102 + $0x130] sm:$0xff]
  %v3518 = vld [vmem:[%s1102 + $0x138] sm:$0xff]
  %v3519 = vld [vmem:[%s1102 + $0x140] sm:$0xff]
  %v3520 = vld [vmem:[%s1102 + $0x148] sm:$0xff]
  %v3521 = vld [vmem:[%s1102 + $0x150] sm:$0xff]
  %v3522 = vld [vmem:[%s1102 + $0x158] sm:$0xff]
  %v3523 = vld [vmem:[%s1102 + $0x160] sm:$0xff]
  %v3524 = vld [vmem:[%s1102 + $0x168] sm:$0xff]
  %v3525 = vld [vmem:[%s1102 + $0x170] sm:$0xff]
  %v3526 = vld [vmem:[%s1102 + $0x178] sm:$0xff]
  %v3527 = vld [vmem:[%s1102 + $0x180] sm:$0xff]
  %v3528 = vld [vmem:[%s1102 + $0x188] sm:$0xff]
  %v3529 = vld [vmem:[%s1102 + $0x190] sm:$0xff]
  %v3530 = vld [vmem:[%s1102 + $0x198] sm:$0xff]
  %v3531 = vld [vmem:[%s1102 + $0x1a0] sm:$0xff]
  %v3532 = vld [vmem:[%s1102 + $0x1a8] sm:$0xff]
  %v3533 = vld [vmem:[%s1102 + $0x1b0] sm:$0xff]
  %v3534 = vld [vmem:[%s1102 + $0x1b8] sm:$0xff]
  %v3535 = vld [vmem:[%s1102 + $0x1c0] sm:$0xff]
  %v3536 = vld [vmem:[%s1102 + $0x1c8] sm:$0xff]
  %v3537 = vld [vmem:[%s1102 + $0x1d0] sm:$0xff]
  %v3538 = vld [vmem:[%s1102 + $0x1d8] sm:$0xff]
  %v3539 = vld [vmem:[%s1102 + $0x1e0] sm:$0xff]
  %v3540 = vld [vmem:[%s1102 + $0x1e8] sm:$0xff]
  %v3541 = vld [vmem:[%s1102 + $0x1f0] sm:$0xff]
  %v3542 = vld [vmem:[%s1102 + $0x1f8] sm:$0xff]
  %v3543 = vld [vmem:[%s1102 + $0x200] sm:$0xff]
  %v3544 = vld [vmem:[%s1102 + $0x208] sm:$0xff]
  %v3545 = vld [vmem:[%s1102 + $0x210] sm:$0xff]
  %v3546 = vld [vmem:[%s1102 + $0x218] sm:$0xff]
  %v3547 = vld [vmem:[%s1102 + $0x220] sm:$0xff]
  %v3548 = vld [vmem:[%s1102 + $0x228] sm:$0xff]
  %v3549 = vld [vmem:[%s1102 + $0x230] sm:$0xff]
  %v3550 = vld [vmem:[%s1102 + $0x238] sm:$0xff]
  %v3551 = vld [vmem:[%s1102 + $0x240] sm:$0xff]
  %v3552 = vld [vmem:[%s1102 + $0x248] sm:$0xff]
  %v3553 = vld [vmem:[%s1102 + $0x250] sm:$0xff]
  %v3554 = vld [vmem:[%s1102 + $0x258] sm:$0xff]
  %v3555 = vld [vmem:[%s1102 + $0x260] sm:$0xff]
  %v3556 = vld [vmem:[%s1102 + $0x268] sm:$0xff]
  %v3557 = vld [vmem:[%s1102 + $0x270] sm:$0xff]
  %v3558 = vld [vmem:[%s1102 + $0x278] sm:$0xff]
  %v3559 = vld [vmem:[%s1102 + $0x280] sm:$0xff]
  %v3560 = vld [vmem:[%s1102 + $0x288] sm:$0xff]
  %v3561 = vld [vmem:[%s1102 + $0x290] sm:$0xff]
  %v3562 = vld [vmem:[%s1102 + $0x298] sm:$0xff]
  %v3563 = vld [vmem:[%s1102 + $0x2a0] sm:$0xff]
  %v3564 = vld [vmem:[%s1102 + $0x2a8] sm:$0xff]
  %v3565 = vld [vmem:[%s1102 + $0x2b0] sm:$0xff]
  %v3566 = vld [vmem:[%s1102 + $0x2b8] sm:$0xff]
  %v3567 = vld [vmem:[%s1102 + $0x2c0] sm:$0xff]
  %v3568 = vld [vmem:[%s1102 + $0x2c8] sm:$0xff]
  %v3569 = vld [vmem:[%s1102 + $0x2d0] sm:$0xff]
  %v3570 = vld [vmem:[%s1102 + $0x2d8] sm:$0xff]
  %v3571 = vld [vmem:[%s1102 + $0x2e0] sm:$0xff]
  %v3572 = vld [vmem:[%s1102 + $0x2e8] sm:$0xff]
  %v3573 = vld [vmem:[%s1102 + $0x2f0] sm:$0xff]
  %v3574 = vld [vmem:[%s1102 + $0x2f8] sm:$0xff]
  %v3575 = vld [vmem:[%s1102 + $0x300] sm:$0xff]
  %v3576 = vld [vmem:[%s1102 + $0x308] sm:$0xff]
  %v3577 = vld [vmem:[%s1102 + $0x310] sm:$0xff]
  %v3578 = vld [vmem:[%s1102 + $0x318] sm:$0xff]
  %v3579 = vld [vmem:[%s1102 + $0x320] sm:$0xff]
  %v3580 = vld [vmem:[%s1102 + $0x328] sm:$0xff]
  %v3581 = vld [vmem:[%s1102 + $0x330] sm:$0xff]
  %v3582 = vld [vmem:[%s1102 + $0x338] sm:$0xff]
  %v3583 = vld [vmem:[%s1102 + $0x340] sm:$0xff]
  %v3584 = vld [vmem:[%s1102 + $0x348] sm:$0xff]
  %v3585 = vld [vmem:[%s1102 + $0x350] sm:$0xff]
  %v3586 = vld [vmem:[%s1102 + $0x358] sm:$0xff]
  %v3587 = vld [vmem:[%s1102 + $0x360] sm:$0xff]
  %v3588 = vld [vmem:[%s1102 + $0x368] sm:$0xff]
  %v3589 = vld [vmem:[%s1102 + $0x370] sm:$0xff]
  %v3590 = vld [vmem:[%s1102 + $0x378] sm:$0xff]
  %v3591 = vld [vmem:[%s1102 + $0x380] sm:$0xff]
  %v3592 = vld [vmem:[%s1102 + $0x388] sm:$0xff]
  %v3593 = vld [vmem:[%s1102 + $0x390] sm:$0xff]
  %v3594 = vld [vmem:[%s1102 + $0x398] sm:$0xff]
  %v3595 = vld [vmem:[%s1102 + $0x3a0] sm:$0xff]
  %v3596 = vld [vmem:[%s1102 + $0x3a8] sm:$0xff]
  %v3597 = vld [vmem:[%s1102 + $0x3b0] sm:$0xff]
  %v3598 = vld [vmem:[%s1102 + $0x3b8] sm:$0xff]
  %v3599 = vld [vmem:[%s1102 + $0x3c0] sm:$0xff]
  %v3600 = vld [vmem:[%s1102 + $0x3c8] sm:$0xff]
  %v3601 = vld [vmem:[%s1102 + $0x3d0] sm:$0xff]
  %v3602 = vld [vmem:[%s1102 + $0x3d8] sm:$0xff]
  %v3603 = vld [vmem:[%s1102 + $0x3e0] sm:$0xff]
  %v3604 = vld [vmem:[%s1102 + $0x3e8] sm:$0xff]
  %v3605 = vld [vmem:[%s1102 + $0x3f0] sm:$0xff]
  %v3606 = vld [vmem:[%s1102 + $0x3f8] sm:$0xff]
  %v3735 = vunpack.c.l.b16 %v3479
  %v3736 = vunpack.c.h.b16 %v3479
  %v3737 = vunpack.c.l.b16 %v3480
  %v3738 = vunpack.c.h.b16 %v3480
  %v3739 = vunpack.c.l.b16 %v3481
  %v3740 = vunpack.c.h.b16 %v3481
  %v3741 = vunpack.c.l.b16 %v3482
  %v3742 = vunpack.c.h.b16 %v3482
  %v3743 = vunpack.c.l.b16 %v3483
  %v3744 = vunpack.c.h.b16 %v3483
  %v3745 = vunpack.c.l.b16 %v3484
  %v3746 = vunpack.c.h.b16 %v3484
  %v3747 = vunpack.c.l.b16 %v3485
  %v3748 = vunpack.c.h.b16 %v3485
  %v3749 = vunpack.c.l.b16 %v3486
  %v3750 = vunpack.c.h.b16 %v3486
  %v3751 = vunpack.c.l.b16 %v3487
  %v3752 = vunpack.c.h.b16 %v3487
  %v3753 = vunpack.c.l.b16 %v3488
  %v3754 = vunpack.c.h.b16 %v3488
  %v3755 = vunpack.c.l.b16 %v3489
  %v3756 = vunpack.c.h.b16 %v3489
  %v3757 = vunpack.c.l.b16 %v3490
  %v3758 = vunpack.c.h.b16 %v3490
  %v3759 = vunpack.c.l.b16 %v3491
  %v3760 = vunpack.c.h.b16 %v3491
  %v3761 = vunpack.c.l.b16 %v3492
  %v3762 = vunpack.c.h.b16 %v3492
  %v3763 = vunpack.c.l.b16 %v3493
  %v3764 = vunpack.c.h.b16 %v3493
  %v3765 = vunpack.c.l.b16 %v3494
  %v3766 = vunpack.c.h.b16 %v3494
  %v3767 = vunpack.c.l.b16 %v3495
  %v3768 = vunpack.c.h.b16 %v3495
  %v3769 = vunpack.c.l.b16 %v3496
  %v3770 = vunpack.c.h.b16 %v3496
  %v3771 = vunpack.c.l.b16 %v3497
  %v3772 = vunpack.c.h.b16 %v3497
  %v3773 = vunpack.c.l.b16 %v3498
  %v3774 = vunpack.c.h.b16 %v3498
  %v3775 = vunpack.c.l.b16 %v3499
  %v3776 = vunpack.c.h.b16 %v3499
  %v3777 = vunpack.c.l.b16 %v3500
  %v3778 = vunpack.c.h.b16 %v3500
  %v3779 = vunpack.c.l.b16 %v3501
  %v3780 = vunpack.c.h.b16 %v3501
  %v3781 = vunpack.c.l.b16 %v3502
  %v3782 = vunpack.c.h.b16 %v3502
  %v3783 = vunpack.c.l.b16 %v3503
  %v3784 = vunpack.c.h.b16 %v3503
  %v3785 = vunpack.c.l.b16 %v3504
  %v3786 = vunpack.c.h.b16 %v3504
  %v3787 = vunpack.c.l.b16 %v3505
  %v3788 = vunpack.c.h.b16 %v3505
  %v3789 = vunpack.c.l.b16 %v3506
  %v3790 = vunpack.c.h.b16 %v3506
  %v3791 = vunpack.c.l.b16 %v3507
  %v3792 = vunpack.c.h.b16 %v3507
  %v3793 = vunpack.c.l.b16 %v3508
  %v3794 = vunpack.c.h.b16 %v3508
  %v3795 = vunpack.c.l.b16 %v3509
  %v3796 = vunpack.c.h.b16 %v3509
  %v3797 = vunpack.c.l.b16 %v3510
  %v3798 = vunpack.c.h.b16 %v3510
  %v3799 = vunpack.c.l.b16 %v3511
  %v3800 = vunpack.c.h.b16 %v3511
  %v3801 = vunpack.c.l.b16 %v3512
  %v3802 = vunpack.c.h.b16 %v3512
  %v3803 = vunpack.c.l.b16 %v3513
  %v3804 = vunpack.c.h.b16 %v3513
  %v3805 = vunpack.c.l.b16 %v3514
  %v3806 = vunpack.c.h.b16 %v3514
  %v3807 = vunpack.c.l.b16 %v3515
  %v3808 = vunpack.c.h.b16 %v3515
  %v3809 = vunpack.c.l.b16 %v3516
  %v3810 = vunpack.c.h.b16 %v3516
  %v3811 = vunpack.c.l.b16 %v3517
  %v3812 = vunpack.c.h.b16 %v3517
  %v3813 = vunpack.c.l.b16 %v3518
  %v3814 = vunpack.c.h.b16 %v3518
  %v3815 = vunpack.c.l.b16 %v3519
  %v3816 = vunpack.c.h.b16 %v3519
  %v3817 = vunpack.c.l.b16 %v3520
  %v3818 = vunpack.c.h.b16 %v3520
  %v3819 = vunpack.c.l.b16 %v3521
  %v3820 = vunpack.c.h.b16 %v3521
  %v3821 = vunpack.c.l.b16 %v3522
  %v3822 = vunpack.c.h.b16 %v3522
  %v3823 = vunpack.c.l.b16 %v3523
  %v3824 = vunpack.c.h.b16 %v3523
  %v3825 = vunpack.c.l.b16 %v3524
  %v3826 = vunpack.c.h.b16 %v3524
  %v3827 = vunpack.c.l.b16 %v3525
  %v3828 = vunpack.c.h.b16 %v3525
  %v3829 = vunpack.c.l.b16 %v3526
  %v3830 = vunpack.c.h.b16 %v3526
  %v3831 = vunpack.c.l.b16 %v3527
  %v3832 = vunpack.c.h.b16 %v3527
  %v3833 = vunpack.c.l.b16 %v3528
  %v3834 = vunpack.c.h.b16 %v3528
  %v3835 = vunpack.c.l.b16 %v3529
  %v3836 = vunpack.c.h.b16 %v3529
  %v3837 = vunpack.c.l.b16 %v3530
  %v3838 = vunpack.c.h.b16 %v3530
  %v3839 = vunpack.c.l.b16 %v3531
  %v3840 = vunpack.c.h.b16 %v3531
  %v3841 = vunpack.c.l.b16 %v3532
  %v3842 = vunpack.c.h.b16 %v3532
  %v3843 = vunpack.c.l.b16 %v3533
  %v3844 = vunpack.c.h.b16 %v3533
  %v3845 = vunpack.c.l.b16 %v3534
  %v3846 = vunpack.c.h.b16 %v3534
  %v3847 = vunpack.c.l.b16 %v3535
  %v3848 = vunpack.c.h.b16 %v3535
  %v3849 = vunpack.c.l.b16 %v3536
  %v3850 = vunpack.c.h.b16 %v3536
  %v3851 = vunpack.c.l.b16 %v3537
  %v3852 = vunpack.c.h.b16 %v3537
  %v3853 = vunpack.c.l.b16 %v3538
  %v3854 = vunpack.c.h.b16 %v3538
  %v3855 = vunpack.c.l.b16 %v3539
  %v3856 = vunpack.c.h.b16 %v3539
  %v3857 = vunpack.c.l.b16 %v3540
  %v3858 = vunpack.c.h.b16 %v3540
  %v3859 = vunpack.c.l.b16 %v3541
  %v3860 = vunpack.c.h.b16 %v3541
  %v3861 = vunpack.c.l.b16 %v3542
  %v3862 = vunpack.c.h.b16 %v3542
  %v3863 = vunpack.c.l.b16 %v3543
  %v3864 = vunpack.c.h.b16 %v3543
  %v3865 = vunpack.c.l.b16 %v3544
  %v3866 = vunpack.c.h.b16 %v3544
  %v3867 = vunpack.c.l.b16 %v3545
  %v3868 = vunpack.c.h.b16 %v3545
  %v3869 = vunpack.c.l.b16 %v3546
  %v3870 = vunpack.c.h.b16 %v3546
  %v3871 = vunpack.c.l.b16 %v3547
  %v3872 = vunpack.c.h.b16 %v3547
  %v3873 = vunpack.c.l.b16 %v3548
  %v3874 = vunpack.c.h.b16 %v3548
  %v3875 = vunpack.c.l.b16 %v3549
  %v3876 = vunpack.c.h.b16 %v3549
  %v3877 = vunpack.c.l.b16 %v3550
  %v3878 = vunpack.c.h.b16 %v3550
  %v3879 = vunpack.c.l.b16 %v3551
  %v3880 = vunpack.c.h.b16 %v3551
  %v3881 = vunpack.c.l.b16 %v3552
  %v3882 = vunpack.c.h.b16 %v3552
  %v3883 = vunpack.c.l.b16 %v3553
  %v3884 = vunpack.c.h.b16 %v3553
  %v3885 = vunpack.c.l.b16 %v3554
  %v3886 = vunpack.c.h.b16 %v3554
  %v3887 = vunpack.c.l.b16 %v3555
  %v3888 = vunpack.c.h.b16 %v3555
  %v3889 = vunpack.c.l.b16 %v3556
  %v3890 = vunpack.c.h.b16 %v3556
  %v3891 = vunpack.c.l.b16 %v3557
  %v3892 = vunpack.c.h.b16 %v3557
  %v3893 = vunpack.c.l.b16 %v3558
  %v3894 = vunpack.c.h.b16 %v3558
  %v3895 = vunpack.c.l.b16 %v3559
  %v3896 = vunpack.c.h.b16 %v3559
  %v3897 = vunpack.c.l.b16 %v3560
  %v3898 = vunpack.c.h.b16 %v3560
  %v3899 = vunpack.c.l.b16 %v3561
  %v3900 = vunpack.c.h.b16 %v3561
  %v3901 = vunpack.c.l.b16 %v3562
  %v3902 = vunpack.c.h.b16 %v3562
  %v3903 = vunpack.c.l.b16 %v3563
  %v3904 = vunpack.c.h.b16 %v3563
  %v3905 = vunpack.c.l.b16 %v3564
  %v3906 = vunpack.c.h.b16 %v3564
  %v3907 = vunpack.c.l.b16 %v3565
  %v3908 = vunpack.c.h.b16 %v3565
  %v3909 = vunpack.c.l.b16 %v3566
  %v3910 = vunpack.c.h.b16 %v3566
  %v3911 = vunpack.c.l.b16 %v3567
  %v3912 = vunpack.c.h.b16 %v3567
  %v3913 = vunpack.c.l.b16 %v3568
  %v3914 = vunpack.c.h.b16 %v3568
  %v3915 = vunpack.c.l.b16 %v3569
  %v3916 = vunpack.c.h.b16 %v3569
  %v3917 = vunpack.c.l.b16 %v3570
  %v3918 = vunpack.c.h.b16 %v3570
  %v3919 = vunpack.c.l.b16 %v3571
  %v3920 = vunpack.c.h.b16 %v3571
  %v3921 = vunpack.c.l.b16 %v3572
  %v3922 = vunpack.c.h.b16 %v3572
  %v3923 = vunpack.c.l.b16 %v3573
  %v3924 = vunpack.c.h.b16 %v3573
  %v3925 = vunpack.c.l.b16 %v3574
  %v3926 = vunpack.c.h.b16 %v3574
  %v3927 = vunpack.c.l.b16 %v3575
  %v3928 = vunpack.c.h.b16 %v3575
  %v3929 = vunpack.c.l.b16 %v3576
  %v3930 = vunpack.c.h.b16 %v3576
  %v3931 = vunpack.c.l.b16 %v3577
  %v3932 = vunpack.c.h.b16 %v3577
  %v3933 = vunpack.c.l.b16 %v3578
  %v3934 = vunpack.c.h.b16 %v3578
  %v3935 = vunpack.c.l.b16 %v3579
  %v3936 = vunpack.c.h.b16 %v3579
  %v3937 = vunpack.c.l.b16 %v3580
  %v3938 = vunpack.c.h.b16 %v3580
  %v3939 = vunpack.c.l.b16 %v3581
  %v3940 = vunpack.c.h.b16 %v3581
  %v3941 = vunpack.c.l.b16 %v3582
  %v3942 = vunpack.c.h.b16 %v3582
  %v3943 = vunpack.c.l.b16 %v3583
  %v3944 = vunpack.c.h.b16 %v3583
  %v3945 = vunpack.c.l.b16 %v3584
  %v3946 = vunpack.c.h.b16 %v3584
  %v3947 = vunpack.c.l.b16 %v3585
  %v3948 = vunpack.c.h.b16 %v3585
  %v3949 = vunpack.c.l.b16 %v3586
  %v3950 = vunpack.c.h.b16 %v3586
  %v3951 = vunpack.c.l.b16 %v3587
  %v3952 = vunpack.c.h.b16 %v3587
  %v3953 = vunpack.c.l.b16 %v3588
  %v3954 = vunpack.c.h.b16 %v3588
  %v3955 = vunpack.c.l.b16 %v3589
  %v3956 = vunpack.c.h.b16 %v3589
  %v3957 = vunpack.c.l.b16 %v3590
  %v3958 = vunpack.c.h.b16 %v3590
  %v3959 = vunpack.c.l.b16 %v3591
  %v3960 = vunpack.c.h.b16 %v3591
  %v3961 = vunpack.c.l.b16 %v3592
  %v3962 = vunpack.c.h.b16 %v3592
  %v3963 = vunpack.c.l.b16 %v3593
  %v3964 = vunpack.c.h.b16 %v3593
  %v3965 = vunpack.c.l.b16 %v3594
  %v3966 = vunpack.c.h.b16 %v3594
  %v3967 = vunpack.c.l.b16 %v3595
  %v3968 = vunpack.c.h.b16 %v3595
  %v3969 = vunpack.c.l.b16 %v3596
  %v3970 = vunpack.c.h.b16 %v3596
  %v3971 = vunpack.c.l.b16 %v3597
  %v3972 = vunpack.c.h.b16 %v3597
  %v3973 = vunpack.c.l.b16 %v3598
  %v3974 = vunpack.c.h.b16 %v3598
  %v3975 = vunpack.c.l.b16 %v3599
  %v3976 = vunpack.c.h.b16 %v3599
  %v3977 = vunpack.c.l.b16 %v3600
  %v3978 = vunpack.c.h.b16 %v3600
  %v3979 = vunpack.c.l.b16 %v3601
  %v3980 = vunpack.c.h.b16 %v3601
  %v3981 = vunpack.c.l.b16 %v3602
  %v3982 = vunpack.c.h.b16 %v3602
  %v3983 = vunpack.c.l.b16 %v3603
  %v3984 = vunpack.c.h.b16 %v3603
  %v3985 = vunpack.c.l.b16 %v3604
  %v3986 = vunpack.c.h.b16 %v3604
  %v3987 = vunpack.c.l.b16 %v3605
  %v3988 = vunpack.c.h.b16 %v3605
  %v3989 = vunpack.c.l.b16 %v3606
  %v3990 = vunpack.c.h.b16 %v3606
  %v3991 = vpack.c.b16 %v3739, %v3735
  %v3992 = vpack.c.b16 %v3740, %v3736
  %v3993 = vpack.c.b16 %v3741, %v3737
  %v3994 = vpack.c.b16 %v3742, %v3738
  %v3995 = vpack.c.b16 %v3747, %v3743
  %v3996 = vpack.c.b16 %v3748, %v3744
  %v3997 = vpack.c.b16 %v3749, %v3745
  %v3998 = vpack.c.b16 %v3750, %v3746
  %v3999 = vpack.c.b16 %v3755, %v3751
  %v4000 = vpack.c.b16 %v3756, %v3752
  %v4001 = vpack.c.b16 %v3757, %v3753
  %v4002 = vpack.c.b16 %v3758, %v3754
  %v4003 = vpack.c.b16 %v3763, %v3759
  %v4004 = vpack.c.b16 %v3764, %v3760
  %v4005 = vpack.c.b16 %v3765, %v3761
  %v4006 = vpack.c.b16 %v3766, %v3762
  %v4007 = vpack.c.b16 %v3771, %v3767
  %v4008 = vpack.c.b16 %v3772, %v3768
  %v4009 = vpack.c.b16 %v3773, %v3769
  %v4010 = vpack.c.b16 %v3774, %v3770
  %v4011 = vpack.c.b16 %v3779, %v3775
  %v4012 = vpack.c.b16 %v3780, %v3776
  %v4013 = vpack.c.b16 %v3781, %v3777
  %v4014 = vpack.c.b16 %v3782, %v3778
  %v4015 = vpack.c.b16 %v3787, %v3783
  %v4016 = vpack.c.b16 %v3788, %v3784
  %v4017 = vpack.c.b16 %v3789, %v3785
  %v4018 = vpack.c.b16 %v3790, %v3786
  %v4019 = vpack.c.b16 %v3795, %v3791
  %v4020 = vpack.c.b16 %v3796, %v3792
  %v4021 = vpack.c.b16 %v3797, %v3793
  %v4022 = vpack.c.b16 %v3798, %v3794
  %v4023 = vpack.c.b16 %v3803, %v3799
  %v4024 = vpack.c.b16 %v3804, %v3800
  %v4025 = vpack.c.b16 %v3805, %v3801
  %v4026 = vpack.c.b16 %v3806, %v3802
  %v4027 = vpack.c.b16 %v3811, %v3807
  %v4028 = vpack.c.b16 %v3812, %v3808
  %v4029 = vpack.c.b16 %v3813, %v3809
  %v4030 = vpack.c.b16 %v3814, %v3810
  %v4031 = vpack.c.b16 %v3819, %v3815
  %v4032 = vpack.c.b16 %v3820, %v3816
  %v4033 = vpack.c.b16 %v3821, %v3817
  %v4034 = vpack.c.b16 %v3822, %v3818
  %v4035 = vpack.c.b16 %v3827, %v3823
  %v4036 = vpack.c.b16 %v3828, %v3824
  %v4037 = vpack.c.b16 %v3829, %v3825
  %v4038 = vpack.c.b16 %v3830, %v3826
  %v4039 = vpack.c.b16 %v3835, %v3831
  %v4040 = vpack.c.b16 %v3836, %v3832
  %v4041 = vpack.c.b16 %v3837, %v3833
  %v4042 = vpack.c.b16 %v3838, %v3834
  %v4043 = vpack.c.b16 %v3843, %v3839
  %v4044 = vpack.c.b16 %v3844, %v3840
  %v4045 = vpack.c.b16 %v3845, %v3841
  %v4046 = vpack.c.b16 %v3846, %v3842
  %v4047 = vpack.c.b16 %v3851, %v3847
  %v4048 = vpack.c.b16 %v3852, %v3848
  %v4049 = vpack.c.b16 %v3853, %v3849
  %v4050 = vpack.c.b16 %v3854, %v3850
  %v4051 = vpack.c.b16 %v3859, %v3855
  %v4052 = vpack.c.b16 %v3860, %v3856
  %v4053 = vpack.c.b16 %v3861, %v3857
  %v4054 = vpack.c.b16 %v3862, %v3858
  %v4055 = vpack.c.b16 %v3867, %v3863
  %v4056 = vpack.c.b16 %v3868, %v3864
  %v4057 = vpack.c.b16 %v3869, %v3865
  %v4058 = vpack.c.b16 %v3870, %v3866
  %v4059 = vpack.c.b16 %v3875, %v3871
  %v4060 = vpack.c.b16 %v3876, %v3872
  %v4061 = vpack.c.b16 %v3877, %v3873
  %v4062 = vpack.c.b16 %v3878, %v3874
  %v4063 = vpack.c.b16 %v3883, %v3879
  %v4064 = vpack.c.b16 %v3884, %v3880
  %v4065 = vpack.c.b16 %v3885, %v3881
  %v4066 = vpack.c.b16 %v3886, %v3882
  %v4067 = vpack.c.b16 %v3891, %v3887
  %v4068 = vpack.c.b16 %v3892, %v3888
  %v4069 = vpack.c.b16 %v3893, %v3889
  %v4070 = vpack.c.b16 %v3894, %v3890
  %v4071 = vpack.c.b16 %v3899, %v3895
  %v4072 = vpack.c.b16 %v3900, %v3896
  %v4073 = vpack.c.b16 %v3901, %v3897
  %v4074 = vpack.c.b16 %v3902, %v3898
  %v4075 = vpack.c.b16 %v3907, %v3903
  %v4076 = vpack.c.b16 %v3908, %v3904
  %v4077 = vpack.c.b16 %v3909, %v3905
  %v4078 = vpack.c.b16 %v3910, %v3906
  %v4079 = vpack.c.b16 %v3915, %v3911
  %v4080 = vpack.c.b16 %v3916, %v3912
  %v4081 = vpack.c.b16 %v3917, %v3913
  %v4082 = vpack.c.b16 %v3918, %v3914
  %v4083 = vpack.c.b16 %v3923, %v3919
  %v4084 = vpack.c.b16 %v3924, %v3920
  %v4085 = vpack.c.b16 %v3925, %v3921
  %v4086 = vpack.c.b16 %v3926, %v3922
  %v4087 = vpack.c.b16 %v3931, %v3927
  %v4088 = vpack.c.b16 %v3932, %v3928
  %v4089 = vpack.c.b16 %v3933, %v3929
  %v4090 = vpack.c.b16 %v3934, %v3930
  %v4091 = vpack.c.b16 %v3939, %v3935
  %v4092 = vpack.c.b16 %v3940, %v3936
  %v4093 = vpack.c.b16 %v3941, %v3937
  %v4094 = vpack.c.b16 %v3942, %v3938
  %v4095 = vpack.c.b16 %v3947, %v3943
  %v4096 = vpack.c.b16 %v3948, %v3944
  %v4097 = vpack.c.b16 %v3949, %v3945
  %v4098 = vpack.c.b16 %v3950, %v3946
  %v4099 = vpack.c.b16 %v3955, %v3951
  %v4100 = vpack.c.b16 %v3956, %v3952
  %v4101 = vpack.c.b16 %v3957, %v3953
  %v4102 = vpack.c.b16 %v3958, %v3954
  %v4103 = vpack.c.b16 %v3963, %v3959
  %v4104 = vpack.c.b16 %v3964, %v3960
  %v4105 = vpack.c.b16 %v3965, %v3961
  %v4106 = vpack.c.b16 %v3966, %v3962
  %v4107 = vpack.c.b16 %v3971, %v3967
  %v4108 = vpack.c.b16 %v3972, %v3968
  %v4109 = vpack.c.b16 %v3973, %v3969
  %v4110 = vpack.c.b16 %v3974, %v3970
  %v4111 = vpack.c.b16 %v3979, %v3975
  %v4112 = vpack.c.b16 %v3980, %v3976
  %v4113 = vpack.c.b16 %v3981, %v3977
  %v4114 = vpack.c.b16 %v3982, %v3978
  %v4115 = vpack.c.b16 %v3987, %v3983
  %v4116 = vpack.c.b16 %v3988, %v3984
  %v4117 = vpack.c.b16 %v3989, %v3985
  %v4118 = vpack.c.b16 %v3990, %v3986
  %4247 = vmatpush.bf16.msra.mxu0 %v4019
  %4248 = vmatpush.bf16.msra.mxu0 %v4015
  %4249 = vmatpush.bf16.msra.mxu0 %v4011
  %4250 = vmatpush.bf16.msra.mxu0 %v4007
  %4251 = vmatpush.bf16.msra.mxu0 %v4003
  %4252 = vmatpush.bf16.msra.mxu0 %v3999
  %4253 = vmatpush.bf16.msra.mxu0 %v3995
  %4254 = vmatpush.bf16.msra.mxu0 %v3991
  %4255 = vmatmul.bf16.gmra.mxu0 %v488
  %v4256 = vpop.f32.mrf.mxu0
  %v4257 = vadd.f32 0.0, %v4256
  %v4258 = vpop.f32.mrf.mxu0
  %v4259 = vadd.f32 0.0, %v4258
  %4260 = vmatmul.bf16.gmra.mxu0 %v492
  %v4261 = vpop.f32.mrf.mxu0
  %v4262 = vadd.f32 0.0, %v4261
  %v4263 = vpop.f32.mrf.mxu0
  %v4264 = vadd.f32 0.0, %v4263
  %4265 = vdwg.mxu0
  %4266 = vmatpush.bf16.msra.mxu0 %v4051
  %4267 = vmatpush.bf16.msra.mxu0 %v4047
  %4268 = vmatpush.bf16.msra.mxu0 %v4043
  %4269 = vmatpush.bf16.msra.mxu0 %v4039
  %4270 = vmatpush.bf16.msra.mxu0 %v4035
  %4271 = vmatpush.bf16.msra.mxu0 %v4031
  %4272 = vmatpush.bf16.msra.mxu0 %v4027
  %4273 = vmatpush.bf16.msra.mxu0 %v4023
  %4274 = vmatmul.bf16.gmra.mxu0 %v489
  %v4275 = vpop.f32.mrf.mxu0
  %v4276 = vadd.f32 %v4257, %v4275
  %v4277 = vpop.f32.mrf.mxu0
  %v4278 = vadd.f32 %v4259, %v4277
  %4279 = vmatmul.bf16.gmra.mxu0 %v493
  %v4280 = vpop.f32.mrf.mxu0
  %v4281 = vadd.f32 %v4262, %v4280
  %v4282 = vpop.f32.mrf.mxu0
  %v4283 = vadd.f32 %v4264, %v4282
  %4284 = vdwg.mxu0
  %4285 = vmatpush.bf16.msra.mxu0 %v4083
  %4286 = vmatpush.bf16.msra.mxu0 %v4079
  %4287 = vmatpush.bf16.msra.mxu0 %v4075
  %4288 = vmatpush.bf16.msra.mxu0 %v4071
  %4289 = vmatpush.bf16.msra.mxu0 %v4067
  %4290 = vmatpush.bf16.msra.mxu0 %v4063
  %4291 = vmatpush.bf16.msra.mxu0 %v4059
  %4292 = vmatpush.bf16.msra.mxu0 %v4055
  %4293 = vmatmul.bf16.gmra.mxu0 %v490
  %v4294 = vpop.f32.mrf.mxu0
  %v4295 = vadd.f32 %v4276, %v4294
  %v4296 = vpop.f32.mrf.mxu0
  %v4297 = vadd.f32 %v4278, %v4296
  %4298 = vmatmul.bf16.gmra.mxu0 %v494
  %v4299 = vpop.f32.mrf.mxu0
  %v4300 = vadd.f32 %v4281, %v4299
  %v4301 = vpop.f32.mrf.mxu0
  %v4302 = vadd.f32 %v4283, %v4301
  %4303 = vdwg.mxu0
  %4304 = vmatpush.bf16.msra.mxu0 %v4115
  %4305 = vmatpush.bf16.msra.mxu0 %v4111
  %4306 = vmatpush.bf16.msra.mxu0 %v4107
  %4307 = vmatpush.bf16.msra.mxu0 %v4103
  %4308 = vmatpush.bf16.msra.mxu0 %v4099
  %4309 = vmatpush.bf16.msra.mxu0 %v4095
  %4310 = vmatpush.bf16.msra.mxu0 %v4091
  %4311 = vmatpush.bf16.msra.mxu0 %v4087
  %4312 = vmatmul.bf16.gmra.mxu0 %v491
  %v4313 = vpop.f32.mrf.mxu0
  %v4314 = vadd.f32 %v4295, %v4313
  %v4315 = vpop.f32.mrf.mxu0
  %v4316 = vadd.f32 %v4297, %v4315
  %4317 = vmatmul.bf16.gmra.mxu0 %v495
  %v4318 = vpop.f32.mrf.mxu0
  %v4319 = vadd.f32 %v4300, %v4318
  %v4320 = vpop.f32.mrf.mxu0
  %v4321 = vadd.f32 %v4302, %v4320
  %4322 = vdwg.mxu0
  %4323 = vmatpush.bf16.msra.mxu0 %v4020
  %4324 = vmatpush.bf16.msra.mxu0 %v4016
  %4325 = vmatpush.bf16.msra.mxu0 %v4012
  %4326 = vmatpush.bf16.msra.mxu0 %v4008
  %4327 = vmatpush.bf16.msra.mxu0 %v4004
  %4328 = vmatpush.bf16.msra.mxu0 %v4000
  %4329 = vmatpush.bf16.msra.mxu0 %v3996
  %4330 = vmatpush.bf16.msra.mxu0 %v3992
  %4331 = vmatmul.bf16.gmra.mxu0 %v488
  %v4332 = vpop.f32.mrf.mxu0
  %v4333 = vadd.f32 0.0, %v4332
  %v4334 = vpop.f32.mrf.mxu0
  %v4335 = vadd.f32 0.0, %v4334
  %4336 = vmatmul.bf16.gmra.mxu0 %v492
  %v4337 = vpop.f32.mrf.mxu0
  %v4338 = vadd.f32 0.0, %v4337
  %v4339 = vpop.f32.mrf.mxu0
  %v4340 = vadd.f32 0.0, %v4339
  %4341 = vdwg.mxu0
  %4342 = vmatpush.bf16.msra.mxu0 %v4052
  %4343 = vmatpush.bf16.msra.mxu0 %v4048
  %4344 = vmatpush.bf16.msra.mxu0 %v4044
  %4345 = vmatpush.bf16.msra.mxu0 %v4040
  %4346 = vmatpush.bf16.msra.mxu0 %v4036
  %4347 = vmatpush.bf16.msra.mxu0 %v4032
  %4348 = vmatpush.bf16.msra.mxu0 %v4028
  %4349 = vmatpush.bf16.msra.mxu0 %v4024
  %4350 = vmatmul.bf16.gmra.mxu0 %v489
  %v4351 = vpop.f32.mrf.mxu0
  %v4352 = vadd.f32 %v4333, %v4351
  %v4353 = vpop.f32.mrf.mxu0
  %v4354 = vadd.f32 %v4335, %v4353
  %4355 = vmatmul.bf16.gmra.mxu0 %v493
  %v4356 = vpop.f32.mrf.mxu0
  %v4357 = vadd.f32 %v4338, %v4356
  %v4358 = vpop.f32.mrf.mxu0
  %v4359 = vadd.f32 %v4340, %v4358
  %4360 = vdwg.mxu0
  %4361 = vmatpush.bf16.msra.mxu0 %v4084
  %4362 = vmatpush.bf16.msra.mxu0 %v4080
  %4363 = vmatpush.bf16.msra.mxu0 %v4076
  %4364 = vmatpush.bf16.msra.mxu0 %v4072
  %4365 = vmatpush.bf16.msra.mxu0 %v4068
  %4366 = vmatpush.bf16.msra.mxu0 %v4064
  %4367 = vmatpush.bf16.msra.mxu0 %v4060
  %4368 = vmatpush.bf16.msra.mxu0 %v4056
  %4369 = vmatmul.bf16.gmra.mxu0 %v490
  %v4370 = vpop.f32.mrf.mxu0
  %v4371 = vadd.f32 %v4352, %v4370
  %v4372 = vpop.f32.mrf.mxu0
  %v4373 = vadd.f32 %v4354, %v4372
  %4374 = vmatmul.bf16.gmra.mxu0 %v494
  %v4375 = vpop.f32.mrf.mxu0
  %v4376 = vadd.f32 %v4357, %v4375
  %v4377 = vpop.f32.mrf.mxu0
  %v4378 = vadd.f32 %v4359, %v4377
  %4379 = vdwg.mxu0
  %4380 = vmatpush.bf16.msra.mxu0 %v4116
  %4381 = vmatpush.bf16.msra.mxu0 %v4112
  %4382 = vmatpush.bf16.msra.mxu0 %v4108
  %4383 = vmatpush.bf16.msra.mxu0 %v4104
  %4384 = vmatpush.bf16.msra.mxu0 %v4100
  %4385 = vmatpush.bf16.msra.mxu0 %v4096
  %4386 = vmatpush.bf16.msra.mxu0 %v4092
  %4387 = vmatpush.bf16.msra.mxu0 %v4088
  %4388 = vmatmul.bf16.gmra.mxu0 %v491
  %v4389 = vpop.f32.mrf.mxu0
  %v4390 = vadd.f32 %v4371, %v4389
  %v4391 = vpop.f32.mrf.mxu0
  %v4392 = vadd.f32 %v4373, %v4391
  %4393 = vmatmul.bf16.gmra.mxu0 %v495
  %v4394 = vpop.f32.mrf.mxu0
  %v4395 = vadd.f32 %v4376, %v4394
  %v4396 = vpop.f32.mrf.mxu0
  %v4397 = vadd.f32 %v4378, %v4396
  %4398 = vdwg.mxu0
  %4399 = vmatpush.bf16.msra.mxu0 %v4021
  %4400 = vmatpush.bf16.msra.mxu0 %v4017
  %4401 = vmatpush.bf16.msra.mxu0 %v4013
  %4402 = vmatpush.bf16.msra.mxu0 %v4009
  %4403 = vmatpush.bf16.msra.mxu0 %v4005
  %4404 = vmatpush.bf16.msra.mxu0 %v4001
  %4405 = vmatpush.bf16.msra.mxu0 %v3997
  %4406 = vmatpush.bf16.msra.mxu0 %v3993
  %4407 = vmatmul.bf16.gmra.mxu0 %v488
  %v4408 = vpop.f32.mrf.mxu0
  %v4409 = vadd.f32 0.0, %v4408
  %v4410 = vpop.f32.mrf.mxu0
  %v4411 = vadd.f32 0.0, %v4410
  %4412 = vmatmul.bf16.gmra.mxu0 %v492
  %v4413 = vpop.f32.mrf.mxu0
  %v4414 = vadd.f32 0.0, %v4413
  %v4415 = vpop.f32.mrf.mxu0
  %v4416 = vadd.f32 0.0, %v4415
  %4417 = vdwg.mxu0
  %4418 = vmatpush.bf16.msra.mxu0 %v4053
  %4419 = vmatpush.bf16.msra.mxu0 %v4049
  %4420 = vmatpush.bf16.msra.mxu0 %v4045
  %4421 = vmatpush.bf16.msra.mxu0 %v4041
  %4422 = vmatpush.bf16.msra.mxu0 %v4037
  %4423 = vmatpush.bf16.msra.mxu0 %v4033
  %4424 = vmatpush.bf16.msra.mxu0 %v4029
  %4425 = vmatpush.bf16.msra.mxu0 %v4025
  %4426 = vmatmul.bf16.gmra.mxu0 %v489
  %v4427 = vpop.f32.mrf.mxu0
  %v4428 = vadd.f32 %v4409, %v4427
  %v4429 = vpop.f32.mrf.mxu0
  %v4430 = vadd.f32 %v4411, %v4429
  %4431 = vmatmul.bf16.gmra.mxu0 %v493
  %v4432 = vpop.f32.mrf.mxu0
  %v4433 = vadd.f32 %v4414, %v4432
  %v4434 = vpop.f32.mrf.mxu0
  %v4435 = vadd.f32 %v4416, %v4434
  %4436 = vdwg.mxu0
  %4437 = vmatpush.bf16.msra.mxu0 %v4085
  %4438 = vmatpush.bf16.msra.mxu0 %v4081
  %4439 = vmatpush.bf16.msra.mxu0 %v4077
  %4440 = vmatpush.bf16.msra.mxu0 %v4073
  %4441 = vmatpush.bf16.msra.mxu0 %v4069
  %4442 = vmatpush.bf16.msra.mxu0 %v4065
  %4443 = vmatpush.bf16.msra.mxu0 %v4061
  %4444 = vmatpush.bf16.msra.mxu0 %v4057
  %4445 = vmatmul.bf16.gmra.mxu0 %v490
  %v4446 = vpop.f32.mrf.mxu0
  %v4447 = vadd.f32 %v4428, %v4446
  %v4448 = vpop.f32.mrf.mxu0
  %v4449 = vadd.f32 %v4430, %v4448
  %4450 = vmatmul.bf16.gmra.mxu0 %v494
  %v4451 = vpop.f32.mrf.mxu0
  %v4452 = vadd.f32 %v4433, %v4451
  %v4453 = vpop.f32.mrf.mxu0
  %v4454 = vadd.f32 %v4435, %v4453
  %4455 = vdwg.mxu0
  %4456 = vmatpush.bf16.msra.mxu0 %v4117
  %4457 = vmatpush.bf16.msra.mxu0 %v4113
  %4458 = vmatpush.bf16.msra.mxu0 %v4109
  %4459 = vmatpush.bf16.msra.mxu0 %v4105
  %4460 = vmatpush.bf16.msra.mxu0 %v4101
  %4461 = vmatpush.bf16.msra.mxu0 %v4097
  %4462 = vmatpush.bf16.msra.mxu0 %v4093
  %4463 = vmatpush.bf16.msra.mxu0 %v4089
  %4464 = vmatmul.bf16.gmra.mxu0 %v491
  %v4465 = vpop.f32.mrf.mxu0
  %v4466 = vadd.f32 %v4447, %v4465
  %v4467 = vpop.f32.mrf.mxu0
  %v4468 = vadd.f32 %v4449, %v4467
  %4469 = vmatmul.bf16.gmra.mxu0 %v495
  %v4470 = vpop.f32.mrf.mxu0
  %v4471 = vadd.f32 %v4452, %v4470
  %v4472 = vpop.f32.mrf.mxu0
  %v4473 = vadd.f32 %v4454, %v4472
  %4474 = vdwg.mxu0
  %4475 = vmatpush.bf16.msra.mxu0 %v4022
  %4476 = vmatpush.bf16.msra.mxu0 %v4018
  %4477 = vmatpush.bf16.msra.mxu0 %v4014
  %4478 = vmatpush.bf16.msra.mxu0 %v4010
  %4479 = vmatpush.bf16.msra.mxu0 %v4006
  %4480 = vmatpush.bf16.msra.mxu0 %v4002
  %4481 = vmatpush.bf16.msra.mxu0 %v3998
  %4482 = vmatpush.bf16.msra.mxu0 %v3994
  %4483 = vmatmul.bf16.gmra.mxu0 %v488
  %v4484 = vpop.f32.mrf.mxu0
  %v4485 = vadd.f32 0.0, %v4484
  %v4486 = vpop.f32.mrf.mxu0
  %v4487 = vadd.f32 0.0, %v4486
  %4488 = vmatmul.bf16.gmra.mxu0 %v492
  %v4489 = vpop.f32.mrf.mxu0
  %v4490 = vadd.f32 0.0, %v4489
  %v4491 = vpop.f32.mrf.mxu0
  %v4492 = vadd.f32 0.0, %v4491
  %4493 = vdwg.mxu0
  %4494 = vmatpush.bf16.msra.mxu0 %v4054
  %4495 = vmatpush.bf16.msra.mxu0 %v4050
  %4496 = vmatpush.bf16.msra.mxu0 %v4046
  %4497 = vmatpush.bf16.msra.mxu0 %v4042
  %4498 = vmatpush.bf16.msra.mxu0 %v4038
  %4499 = vmatpush.bf16.msra.mxu0 %v4034
  %4500 = vmatpush.bf16.msra.mxu0 %v4030
  %4501 = vmatpush.bf16.msra.mxu0 %v4026
  %4502 = vmatmul.bf16.gmra.mxu0 %v489
  %v4503 = vpop.f32.mrf.mxu0
  %v4504 = vadd.f32 %v4485, %v4503
  %v4505 = vpop.f32.mrf.mxu0
  %v4506 = vadd.f32 %v4487, %v4505
  %4507 = vmatmul.bf16.gmra.mxu0 %v493
  %v4508 = vpop.f32.mrf.mxu0
  %v4509 = vadd.f32 %v4490, %v4508
  %v4510 = vpop.f32.mrf.mxu0
  %v4511 = vadd.f32 %v4492, %v4510
  %4512 = vdwg.mxu0
  %4513 = vmatpush.bf16.msra.mxu0 %v4086
  %4514 = vmatpush.bf16.msra.mxu0 %v4082
  %4515 = vmatpush.bf16.msra.mxu0 %v4078
  %4516 = vmatpush.bf16.msra.mxu0 %v4074
  %4517 = vmatpush.bf16.msra.mxu0 %v4070
  %4518 = vmatpush.bf16.msra.mxu0 %v4066
  %4519 = vmatpush.bf16.msra.mxu0 %v4062
  %4520 = vmatpush.bf16.msra.mxu0 %v4058
  %4521 = vmatmul.bf16.gmra.mxu0 %v490
  %v4522 = vpop.f32.mrf.mxu0
  %v4523 = vadd.f32 %v4504, %v4522
  %v4524 = vpop.f32.mrf.mxu0
  %v4525 = vadd.f32 %v4506, %v4524
  %4526 = vmatmul.bf16.gmra.mxu0 %v494
  %v4527 = vpop.f32.mrf.mxu0
  %v4528 = vadd.f32 %v4509, %v4527
  %v4529 = vpop.f32.mrf.mxu0
  %v4530 = vadd.f32 %v4511, %v4529
  %4531 = vdwg.mxu0
  %4532 = vmatpush.bf16.msra.mxu0 %v4118
  %4533 = vmatpush.bf16.msra.mxu0 %v4114
  %4534 = vmatpush.bf16.msra.mxu0 %v4110
  %4535 = vmatpush.bf16.msra.mxu0 %v4106
  %4536 = vmatpush.bf16.msra.mxu0 %v4102
  %4537 = vmatpush.bf16.msra.mxu0 %v4098
  %4538 = vmatpush.bf16.msra.mxu0 %v4094
  %4539 = vmatpush.bf16.msra.mxu0 %v4090
  %4540 = vmatmul.bf16.gmra.mxu0 %v491
  %v4541 = vpop.f32.mrf.mxu0
  %v4542 = vadd.f32 %v4523, %v4541
  %v4543 = vpop.f32.mrf.mxu0
  %v4544 = vadd.f32 %v4525, %v4543
  %4545 = vmatmul.bf16.gmra.mxu0 %v495
  %v4546 = vpop.f32.mrf.mxu0
  %v4547 = vadd.f32 %v4528, %v4546
  %v4548 = vpop.f32.mrf.mxu0
  %v4549 = vadd.f32 %v4530, %v4548
  %4550 = vdwg.mxu0
  %vm4567 = vcmask 1046528
  %v4568 = vrot.slane %v2170, 1
  %v4569 = vrot.slane %v2172, 1
  %v4570 = vsel %vm4567, %v4568, %v4569
  %v4571 = vrot.slane %v2246, 1
  %v4572 = vrot.slane %v2248, 1
  %v4573 = vsel %vm4567, %v4571, %v4572
  %v4574 = vrot.slane %v2322, 1
  %v4575 = vrot.slane %v2324, 1
  %v4576 = vsel %vm4567, %v4574, %v4575
  %v4577 = vrot.slane %v2398, 1
  %v4578 = vrot.slane %v2400, 1
  %v4579 = vsel %vm4567, %v4577, %v4578
  %v4580 = vrot.slane %v2175, 1
  %v4581 = vsel %vm4567, %v4569, %v4580
  %v4582 = vrot.slane %v2251, 1
  %v4583 = vsel %vm4567, %v4572, %v4582
  %v4584 = vrot.slane %v2327, 1
  %v4585 = vsel %vm4567, %v4575, %v4584
  %v4586 = vrot.slane %v2403, 1
  %v4587 = vsel %vm4567, %v4578, %v4586
  %v4588 = vrot.slane %v2177, 1
  %v4589 = vsel %vm4567, %v4580, %v4588
  %v4590 = vrot.slane %v2253, 1
  %v4591 = vsel %vm4567, %v4582, %v4590
  %v4592 = vrot.slane %v2329, 1
  %v4593 = vsel %vm4567, %v4584, %v4592
  %v4594 = vrot.slane %v2405, 1
  %v4595 = vsel %vm4567, %v4586, %v4594
  %v4616 = vsel %vm4567, %v4588, %v4568
  %v4617 = vsel %vm4567, %v4590, %v4571
  %v4618 = vsel %vm4567, %v4592, %v4574
  %v4619 = vsel %vm4567, %v4594, %v4577
  %v4620 = vrot.slane %v2177, 7
  %v4621 = vrot.slane %v2253, 7
  %v4622 = vrot.slane %v2329, 7
  %v4623 = vrot.slane %v2405, 7
  %vm4628 = vcmask 1040384
  %v4629 = vrot.slane %v2170, 7
  %v4630 = vrot.slane %v2246, 7
  %v4631 = vrot.slane %v2322, 7
  %v4632 = vrot.slane %v2398, 7
  %v4633 = vrot.slane %v2172, 7
  %v4634 = vsel %vm4628, %v4629, %v4633
  %v4635 = vrot.slane %v2248, 7
  %v4636 = vsel %vm4628, %v4630, %v4635
  %v4637 = vrot.slane %v2324, 7
  %v4638 = vsel %vm4628, %v4631, %v4637
  %v4639 = vrot.slane %v2400, 7
  %v4640 = vsel %vm4628, %v4632, %v4639
  %v4641 = vrot.slane %v2175, 7
  %v4642 = vsel %vm4628, %v4633, %v4641
  %v4643 = vrot.slane %v2251, 7
  %v4644 = vsel %vm4628, %v4635, %v4643
  %v4645 = vrot.slane %v2327, 7
  %v4646 = vsel %vm4628, %v4637, %v4645
  %v4647 = vrot.slane %v2403, 7
  %v4648 = vsel %vm4628, %v4639, %v4647
  %v4649 = vsel %vm4628, %v4641, %v4620
  %v4650 = vsel %vm4628, %v4643, %v4621
  %v4651 = vsel %vm4628, %v4645, %v4622
  %v4652 = vsel %vm4628, %v4647, %v4623
  %v4669 = vsel %vm4628, %v4620, %v4629
  %v4670 = vsel %vm4628, %v4621, %v4630
  %v4671 = vsel %vm4628, %v4622, %v4631
  %v4672 = vsel %vm4628, %v4623, %v4632
  %v4673 = vsel %vm80, %v4570, %v4669
  %v4674 = vsel %vm80, %v4573, %v4670
  %v4675 = vsel %vm80, %v4576, %v4671
  %v4676 = vsel %vm80, %v4579, %v4672
  %v4677 = vsel %vm81, %v4581, %v4634
  %v4678 = vsel %vm81, %v4583, %v4636
  %v4679 = vsel %vm81, %v4585, %v4638
  %v4680 = vsel %vm81, %v4587, %v4640
  %v4681 = vsel %vm82, %v4589, %v4642
  %v4682 = vsel %vm82, %v4591, %v4644
  %v4683 = vsel %vm82, %v4593, %v4646
  %v4684 = vsel %vm82, %v4595, %v4648
  %v4685 = vsel %vm83, %v4616, %v4649
  %v4686 = vsel %vm83, %v4617, %v4650
  %v4687 = vsel %vm83, %v4618, %v4651
  %v4688 = vsel %vm83, %v4619, %v4652
  %v4693 = vrot.slane %v4321, 7
  %v4694 = vrot.slane %v4397, 7
  %v4695 = vrot.slane %v4473, 7
  %v4696 = vrot.slane %v4549, 7
  %v4713 = vrot.slane %v4314, 7
  %v4714 = vrot.slane %v4390, 7
  %v4715 = vrot.slane %v4466, 7
  %v4716 = vrot.slane %v4542, 7
  %v4717 = vrot.slane %v4316, 7
  %v4718 = vsel %vm4628, %v4713, %v4717
  %v4719 = vrot.slane %v4392, 7
  %v4720 = vsel %vm4628, %v4714, %v4719
  %v4721 = vrot.slane %v4468, 7
  %v4722 = vsel %vm4628, %v4715, %v4721
  %v4723 = vrot.slane %v4544, 7
  %v4724 = vsel %vm4628, %v4716, %v4723
  %v4725 = vrot.slane %v4319, 7
  %v4726 = vsel %vm4628, %v4717, %v4725
  %v4727 = vrot.slane %v4395, 7
  %v4728 = vsel %vm4628, %v4719, %v4727
  %v4729 = vrot.slane %v4471, 7
  %v4730 = vsel %vm4628, %v4721, %v4729
  %v4731 = vrot.slane %v4547, 7
  %v4732 = vsel %vm4628, %v4723, %v4731
  %v4733 = vsel %vm4628, %v4725, %v4693
  %v4734 = vsel %vm4628, %v4727, %v4694
  %v4735 = vsel %vm4628, %v4729, %v4695
  %v4736 = vsel %vm4628, %v4731, %v4696
  %v4753 = vsel %vm4628, %v4693, %v4713
  %v4754 = vsel %vm4628, %v4694, %v4714
  %v4755 = vsel %vm4628, %v4695, %v4715
  %v4756 = vsel %vm4628, %v4696, %v4716
  %v4757 = vrot.slane %v4314, 1
  %v4758 = vrot.slane %v4316, 1
  %v4759 = vsel %vm4567, %v4757, %v4758
  %v4760 = vrot.slane %v4390, 1
  %v4761 = vrot.slane %v4392, 1
  %v4762 = vsel %vm4567, %v4760, %v4761
  %v4763 = vrot.slane %v4466, 1
  %v4764 = vrot.slane %v4468, 1
  %v4765 = vsel %vm4567, %v4763, %v4764
  %v4766 = vrot.slane %v4542, 1
  %v4767 = vrot.slane %v4544, 1
  %v4768 = vsel %vm4567, %v4766, %v4767
  %v4769 = vrot.slane %v4319, 1
  %v4770 = vsel %vm4567, %v4758, %v4769
  %v4771 = vrot.slane %v4395, 1
  %v4772 = vsel %vm4567, %v4761, %v4771
  %v4773 = vrot.slane %v4471, 1
  %v4774 = vsel %vm4567, %v4764, %v4773
  %v4775 = vrot.slane %v4547, 1
  %v4776 = vsel %vm4567, %v4767, %v4775
  %v4777 = vrot.slane %v4321, 1
  %v4778 = vsel %vm4567, %v4769, %v4777
  %v4779 = vrot.slane %v4397, 1
  %v4780 = vsel %vm4567, %v4771, %v4779
  %v4781 = vrot.slane %v4473, 1
  %v4782 = vsel %vm4567, %v4773, %v4781
  %v4783 = vrot.slane %v4549, 1
  %v4784 = vsel %vm4567, %v4775, %v4783
  %v4805 = vsel %vm4567, %v4777, %v4757
  %v4806 = vsel %vm4567, %v4779, %v4760
  %v4807 = vsel %vm4567, %v4781, %v4763
  %v4808 = vsel %vm4567, %v4783, %v4766
  %v4809 = vsel %vm84, %v4753, %v4759
  %v4810 = vsel %vm84, %v4754, %v4762
  %v4811 = vsel %vm84, %v4755, %v4765
  %v4812 = vsel %vm84, %v4756, %v4768
  %v4813 = vsel %vm85, %v4718, %v4770
  %v4814 = vsel %vm85, %v4720, %v4772
  %v4815 = vsel %vm85, %v4722, %v4774
  %v4816 = vsel %vm85, %v4724, %v4776
  %v4817 = vsel %vm86, %v4726, %v4778
  %v4818 = vsel %vm86, %v4728, %v4780
  %v4819 = vsel %vm86, %v4730, %v4782
  %v4820 = vsel %vm86, %v4732, %v4784
  %v4821 = vsel %vm87, %v4733, %v4805
  %v4822 = vsel %vm87, %v4734, %v4806
  %v4823 = vsel %vm87, %v4735, %v4807
  %v4824 = vsel %vm87, %v4736, %v4808
  %v4825 = vadd.f32 %v4673, %v3242
  %v4826 = vadd.f32 %v4674, %v3318
  %v4827 = vadd.f32 %v4675, %v3394
  %v4828 = vadd.f32 %v4676, %v3470
  %v4829 = vadd.f32 %v4677, %v3244
  %v4830 = vadd.f32 %v4678, %v3320
  %v4831 = vadd.f32 %v4679, %v3396
  %v4832 = vadd.f32 %v4680, %v3472
  %v4833 = vadd.f32 %v4681, %v3247
  %v4834 = vadd.f32 %v4682, %v3323
  %v4835 = vadd.f32 %v4683, %v3399
  %v4836 = vadd.f32 %v4684, %v3475
  %v4837 = vadd.f32 %v4685, %v3249
  %v4838 = vadd.f32 %v4686, %v3325
  %v4839 = vadd.f32 %v4687, %v3401
  %v4840 = vadd.f32 %v4688, %v3477
  %v4841 = vadd.f32 %v4825, %v4809
  %v4842 = vadd.f32 %v4826, %v4810
  %v4843 = vadd.f32 %v4827, %v4811
  %v4844 = vadd.f32 %v4828, %v4812
  %v4845 = vadd.f32 %v4829, %v4813
  %v4846 = vadd.f32 %v4830, %v4814
  %v4847 = vadd.f32 %v4831, %v4815
  %v4848 = vadd.f32 %v4832, %v4816
  %v4849 = vadd.f32 %v4833, %v4817
  %v4850 = vadd.f32 %v4834, %v4818
  %v4851 = vadd.f32 %v4835, %v4819
  %v4852 = vadd.f32 %v4836, %v4820
  %v4853 = vadd.f32 %v4837, %v4821
  %v4854 = vadd.f32 %v4838, %v4822
  %v4855 = vadd.f32 %v4839, %v4823
  %v4856 = vadd.f32 %v4840, %v4824
  %v4857 = vadd.f32 %v4841, %v4845
  %v4858 = vadd.f32 %v4857, %v4849
  %v4859 = vadd.f32 %v4858, %v4853
  %v4860 = vrot.slane %v4859, 4
  %v4861 = vadd.f32 %v4859, %v4860
  %v4862 = vrot.slane %v4861, 2
  %v4863 = vadd.f32 %v4861, %v4862
  %v4864 = vrot.slane %v4863, 1
  %v4865 = vadd.f32 %v4863, %v4864
  %v4866 = vadd.f32 %v4842, %v4846
  %v4867 = vadd.f32 %v4866, %v4850
  %v4868 = vadd.f32 %v4867, %v4854
  %v4869 = vrot.slane %v4868, 4
  %v4870 = vadd.f32 %v4868, %v4869
  %v4871 = vrot.slane %v4870, 2
  %v4872 = vadd.f32 %v4870, %v4871
  %v4873 = vrot.slane %v4872, 1
  %v4874 = vadd.f32 %v4872, %v4873
  %v4875 = vadd.f32 %v4843, %v4847
  %v4876 = vadd.f32 %v4875, %v4851
  %v4877 = vadd.f32 %v4876, %v4855
  %v4878 = vrot.slane %v4877, 4
  %v4879 = vadd.f32 %v4877, %v4878
  %v4880 = vrot.slane %v4879, 2
  %v4881 = vadd.f32 %v4879, %v4880
  %v4882 = vrot.slane %v4881, 1
  %v4883 = vadd.f32 %v4881, %v4882
  %v4884 = vadd.f32 %v4844, %v4848
  %v4885 = vadd.f32 %v4884, %v4852
  %v4886 = vadd.f32 %v4885, %v4856
  %v4887 = vrot.slane %v4886, 4
  %v4888 = vadd.f32 %v4886, %v4887
  %v4889 = vrot.slane %v4888, 2
  %v4890 = vadd.f32 %v4888, %v4889
  %v4891 = vrot.slane %v4890, 1
  %v4892 = vadd.f32 %v4890, %v4891
  %v4893 = vadd.f32 %v4865, %v4883
  %v4894 = vadd.f32 %v4874, %v4892
  %v4895 = vadd.f32 %v4893, %v4894
  %4896 = vrot.lane.b32.xlu0 %v4895, 64
  %v4897 = vpop.permute.xlu0 %4896
  %v4898 = vlaneseq
  %v4899 = vand.u32 %v4898, 127
  %v4900 = vadd.f32 %v4895, %v4897
  %4901 = vrot.lane.b32.xlu0 %v4900, 32
  %v4902 = vpop.permute.xlu0 %4901
  %v4903 = vadd.f32 %v4900, %v4902
  %v4904 = vmul.f32 %v4903, 0.001953125
  %v4905 = vperm.slane %v4904, 0
  %v4906 = vsub.f32 %v4841, %v4905
  %v4907 = vsub.f32 %v4842, %v4905
  %v4908 = vsub.f32 %v4843, %v4905
  %v4909 = vsub.f32 %v4844, %v4905
  %v4910 = vsub.f32 %v4845, %v4905
  %v4911 = vsub.f32 %v4846, %v4905
  %v4912 = vsub.f32 %v4847, %v4905
  %v4913 = vsub.f32 %v4848, %v4905
  %v4914 = vsub.f32 %v4849, %v4905
  %v4915 = vsub.f32 %v4850, %v4905
  %v4916 = vsub.f32 %v4851, %v4905
  %v4917 = vsub.f32 %v4852, %v4905
  %v4918 = vsub.f32 %v4853, %v4905
  %v4919 = vsub.f32 %v4854, %v4905
  %v4920 = vsub.f32 %v4855, %v4905
  %v4921 = vsub.f32 %v4856, %v4905
  %v4922 = vmul.f32 %v4906, %v4906
  %v4923 = vmul.f32 %v4907, %v4907
  %v4924 = vmul.f32 %v4908, %v4908
  %v4925 = vmul.f32 %v4909, %v4909
  %v4926 = vmul.f32 %v4910, %v4910
  %v4927 = vmul.f32 %v4911, %v4911
  %v4928 = vmul.f32 %v4912, %v4912
  %v4929 = vmul.f32 %v4913, %v4913
  %v4930 = vmul.f32 %v4914, %v4914
  %v4931 = vmul.f32 %v4915, %v4915
  %v4932 = vmul.f32 %v4916, %v4916
  %v4933 = vmul.f32 %v4917, %v4917
  %v4934 = vmul.f32 %v4918, %v4918
  %v4935 = vmul.f32 %v4919, %v4919
  %v4936 = vmul.f32 %v4920, %v4920
  %v4937 = vmul.f32 %v4921, %v4921
  %v4938 = vadd.f32 %v4922, %v4926
  %v4939 = vadd.f32 %v4938, %v4930
  %v4940 = vadd.f32 %v4939, %v4934
  %v4941 = vrot.slane %v4940, 4
  %v4942 = vadd.f32 %v4940, %v4941
  %v4943 = vrot.slane %v4942, 2
  %v4944 = vadd.f32 %v4942, %v4943
  %v4945 = vrot.slane %v4944, 1
  %v4946 = vadd.f32 %v4944, %v4945
  %v4947 = vadd.f32 %v4923, %v4927
  %v4948 = vadd.f32 %v4947, %v4931
  %v4949 = vadd.f32 %v4948, %v4935
  %v4950 = vrot.slane %v4949, 4
  %v4951 = vadd.f32 %v4949, %v4950
  %v4952 = vrot.slane %v4951, 2
  %v4953 = vadd.f32 %v4951, %v4952
  %v4954 = vrot.slane %v4953, 1
  %v4955 = vadd.f32 %v4953, %v4954
  %v4956 = vadd.f32 %v4924, %v4928
  %v4957 = vadd.f32 %v4956, %v4932
  %v4958 = vadd.f32 %v4957, %v4936
  %v4959 = vrot.slane %v4958, 4
  %v4960 = vadd.f32 %v4958, %v4959
  %v4961 = vrot.slane %v4960, 2
  %v4962 = vadd.f32 %v4960, %v4961
  %v4963 = vrot.slane %v4962, 1
  %v4964 = vadd.f32 %v4962, %v4963
  %v4965 = vadd.f32 %v4925, %v4929
  %v4966 = vadd.f32 %v4965, %v4933
  %v4967 = vadd.f32 %v4966, %v4937
  %v4968 = vrot.slane %v4967, 4
  %v4969 = vadd.f32 %v4967, %v4968
  %v4970 = vrot.slane %v4969, 2
  %v4971 = vadd.f32 %v4969, %v4970
  %v4972 = vrot.slane %v4971, 1
  %v4973 = vadd.f32 %v4971, %v4972
  %v4974 = vadd.f32 %v4946, %v4964
  %v4975 = vadd.f32 %v4955, %v4973
  %v4976 = vadd.f32 %v4974, %v4975
  %4977 = vrot.lane.b32.xlu0 %v4976, 64
  %v4978 = vpop.permute.xlu0 %4977
  %v4979 = vadd.f32 %v4976, %v4978
  %4980 = vrot.lane.b32.xlu0 %v4979, 32
  %v4981 = vpop.permute.xlu0 %4980
  %v4982 = vadd.f32 %v4979, %v4981
  %v4983 = vmul.f32 %v4982, 0.001953125
  %v4984 = vld [vmem:[%s2] sm:$0xf]
  %v4985 = vadd.f32 %v4983, 1e-05
  %v4986 = vrsqrt.pop %v4985
  %v4987 = vmul.f32 %v4986, %v4985
  %v4988 = vmul.f32 %v4987, %v4986
  %v4989 = vmul.f32 0.5, %v4988
  %v4990 = vsub.f32 1.5, %v4989
  %v4991 = vmul.f32 %v4986, %v4990
  %vm4992 = vweird.f32 %v4985
  %vm4993 = vweird.f32 %v4986
  %vm4994 = vmor %vm4992, %vm4993
  %v4995 = vsel %vm4994, %v4986, %v4991
  %v4997 = vrot.slane %v4995, 7
  %v4998 = vrot.slane %v4995, 6
  %v4999 = vrot.slane %v4995, 5
  %v5000 = vsel %vm4628, %v4995, %v4997
  %vm5001 = vcmask 1042434
  %v5002 = vsel %vm5001, %v4998, %v4999
  %vm5003 = vcmask 1041408
  %v5004 = vsel %vm5003, %v5000, %v5002
  %v5006 = vmul.f32 %v4984, %v5004
  %v5008 = vperm.slane %v5006, 0
  %v5009 = vperm.slane %v5006, 1
  %v5010 = vperm.slane %v5006, 2
  %v5011 = vperm.slane %v5006, 3
  %v5016 = vmul.f32 %v4906, %v5008
  %v5017 = vmul.f32 %v4907, %v5009
  %v5018 = vmul.f32 %v4908, %v5010
  %v5019 = vmul.f32 %v4909, %v5011
  %v5020 = vmul.f32 %v4910, %v5008
  %v5021 = vmul.f32 %v4911, %v5009
  %v5022 = vmul.f32 %v4912, %v5010
  %v5023 = vmul.f32 %v4913, %v5011
  %v5024 = vmul.f32 %v4914, %v5008
  %v5025 = vmul.f32 %v4915, %v5009
  %v5026 = vmul.f32 %v4916, %v5010
  %v5027 = vmul.f32 %v4917, %v5011
  %v5028 = vmul.f32 %v4918, %v5008
  %v5029 = vmul.f32 %v4919, %v5009
  %v5030 = vmul.f32 %v4920, %v5010
  %v5031 = vmul.f32 %v4921, %v5011
  %v5032 = vld [vmem:[%s3] sm:$0xf]
  %v5034 = vperm.slane %v5032, 0
  %v5035 = vperm.slane %v5032, 1
  %v5036 = vperm.slane %v5032, 2
  %v5037 = vperm.slane %v5032, 3
  %v5042 = vadd.f32 %v5016, %v5034
  %v5043 = vadd.f32 %v5017, %v5035
  %v5044 = vadd.f32 %v5018, %v5036
  %v5045 = vadd.f32 %v5019, %v5037
  %v5046 = vadd.f32 %v5020, %v5034
  %v5047 = vadd.f32 %v5021, %v5035
  %v5048 = vadd.f32 %v5022, %v5036
  %v5049 = vadd.f32 %v5023, %v5037
  %v5050 = vadd.f32 %v5024, %v5034
  %v5051 = vadd.f32 %v5025, %v5035
  %v5052 = vadd.f32 %v5026, %v5036
  %v5053 = vadd.f32 %v5027, %v5037
  %v5054 = vadd.f32 %v5028, %v5034
  %v5055 = vadd.f32 %v5029, %v5035
  %v5056 = vadd.f32 %v5030, %v5036
  %v5057 = vadd.f32 %v5031, %v5037
  %v5058 = vmax.f32 %v5042, 0.0
  %v5059 = vmax.f32 %v5043, 0.0
  %v5060 = vmax.f32 %v5044, 0.0
  %v5061 = vmax.f32 %v5045, 0.0
  %v5062 = vmax.f32 %v5046, 0.0
  %v5063 = vmax.f32 %v5047, 0.0
  %v5064 = vmax.f32 %v5048, 0.0
  %v5065 = vmax.f32 %v5049, 0.0
  %v5066 = vmax.f32 %v5050, 0.0
  %v5067 = vmax.f32 %v5051, 0.0
  %v5068 = vmax.f32 %v5052, 0.0
  %v5069 = vmax.f32 %v5053, 0.0
  %v5070 = vmax.f32 %v5054, 0.0
  %v5071 = vmax.f32 %v5055, 0.0
  %v5072 = vmax.f32 %v5056, 0.0
  %v5073 = vmax.f32 %v5057, 0.0
  %v5074 = vld [vmem:[%s4] sm:$0xff]
  %v5075 = vld [vmem:[%s4 + $0x8] sm:$0xff]
  %v5076 = vld [vmem:[%s4 + $0x10] sm:$0xff]
  %v5077 = vld [vmem:[%s4 + $0x18] sm:$0xff]
  %s5078 = scalar_lea.vmem %s4, 32
  %v5079 = vld [vmem:[%s5078] sm:$0xff]
  %v5080 = vld [vmem:[%s5078 + $0x8] sm:$0xff]
  %v5081 = vld [vmem:[%s5078 + $0x10] sm:$0xff]
  %v5082 = vld [vmem:[%s5078 + $0x18] sm:$0xff]
  %s5083 = scalar_lea.vmem %s4, 64
  %v5084 = vld [vmem:[%s5083] sm:$0xff]
  %v5085 = vld [vmem:[%s5083 + $0x8] sm:$0xff]
  %v5086 = vld [vmem:[%s5083 + $0x10] sm:$0xff]
  %v5087 = vld [vmem:[%s5083 + $0x18] sm:$0xff]
  %v5088 = vadd.f32 %v5074, %v5084
  %v5089 = vadd.f32 %v5075, %v5085
  %v5090 = vadd.f32 %v5076, %v5086
  %v5091 = vadd.f32 %v5077, %v5087
  %5096 = vrot.lane.b32.xlu0 %v5074, 32
  %v5097 = vpop.permute.xlu0 %5096
  %5098 = vrot.lane.b32.xlu0 %v5075, 32
  %v5099 = vpop.permute.xlu0 %5098
  %5100 = vrot.lane.b32.xlu0 %v5076, 32
  %v5101 = vpop.permute.xlu0 %5100
  %5102 = vrot.lane.b32.xlu0 %v5077, 32
  %v5103 = vpop.permute.xlu0 %5102
  %v5108 = vsel %vm530, %v5079, %v5097
  %v5109 = vsel %vm530, %v5080, %v5099
  %v5110 = vsel %vm530, %v5081, %v5101
  %v5111 = vsel %vm530, %v5082, %v5103
  %v5112 = vpack.c.bf16 %v5108, %v5108
  %v5113 = vpack.c.bf16 %v5109, %v5109
  %v5114 = vpack.c.bf16 %v5110, %v5110
  %v5115 = vpack.c.bf16 %v5111, %v5111
  %5116 = vst.msk [vmem:[#allocation2] sm:$0xf] %vm539, %v5112
  %5117 = vst.msk [vmem:[#allocation2 + $0x10] sm:$0xf] %vm539, %v5113
  %5118 = vst.msk [vmem:[#allocation2 + $0x20] sm:$0xf] %vm539, %v5114
  %5119 = vst.msk [vmem:[#allocation2 + $0x30] sm:$0xf] %vm539, %v5115
  %5124 = vrot.lane.b32.xlu0 %v5079, 32
  %v5125 = vpop.permute.xlu0 %5124
  %5126 = vrot.lane.b32.xlu0 %v5080, 32
  %v5127 = vpop.permute.xlu0 %5126
  %5128 = vrot.lane.b32.xlu0 %v5081, 32
  %v5129 = vpop.permute.xlu0 %5128
  %5130 = vrot.lane.b32.xlu0 %v5082, 32
  %v5131 = vpop.permute.xlu0 %5130
  %5136 = vrot.lane.b32.xlu0 %v5074, 64
  %v5137 = vpop.permute.xlu0 %5136
  %5138 = vrot.lane.b32.xlu0 %v5075, 64
  %v5139 = vpop.permute.xlu0 %5138
  %5140 = vrot.lane.b32.xlu0 %v5076, 64
  %v5141 = vpop.permute.xlu0 %5140
  %5142 = vrot.lane.b32.xlu0 %v5077, 64
  %v5143 = vpop.permute.xlu0 %5142
  %v5148 = vsel %vm530, %v5088, %v5125
  %v5149 = vsel %vm530, %v5089, %v5127
  %v5150 = vsel %vm530, %v5090, %v5129
  %v5151 = vsel %vm530, %v5091, %v5131
  %v5152 = vsel %vm576, %v5148, %v5137
  %v5153 = vsel %vm576, %v5149, %v5139
  %v5154 = vsel %vm576, %v5150, %v5141
  %v5155 = vsel %vm576, %v5151, %v5143
  %v5156 = vpack.c.bf16 %v5152, %v5152
  %v5157 = vpack.c.bf16 %v5153, %v5153
  %v5158 = vpack.c.bf16 %v5154, %v5154
  %v5159 = vpack.c.bf16 %v5155, %v5155
  %5160 = vst.msk [vmem:[#allocation2 + $0x40] sm:$0xf] %vm585, %v5156
  %5161 = vst.msk [vmem:[#allocation2 + $0x50] sm:$0xf] %vm585, %v5157
  %5162 = vst.msk [vmem:[#allocation2 + $0x60] sm:$0xf] %vm585, %v5158
  %5163 = vst.msk [vmem:[#allocation2 + $0x70] sm:$0xf] %vm585, %v5159
  %v5164 = vsel %vm530, %v5084, %v5125
  %v5165 = vsel %vm530, %v5085, %v5127
  %v5166 = vsel %vm530, %v5086, %v5129
  %v5167 = vsel %vm530, %v5087, %v5131
  %v5168 = vsel %vm576, %v5164, %v5137
  %v5169 = vsel %vm576, %v5165, %v5139
  %v5170 = vsel %vm576, %v5166, %v5141
  %v5171 = vsel %vm576, %v5167, %v5143
  %v5172 = vpack.c.bf16 %v5168, %v5168
  %v5173 = vpack.c.bf16 %v5169, %v5169
  %v5174 = vpack.c.bf16 %v5170, %v5170
  %v5175 = vpack.c.bf16 %v5171, %v5171
  %5180 = vrot.lane.b32.xlu0 %v5172, 32
  %v5181 = vpop.permute.xlu0 %5180
  %5182 = vrot.lane.b32.xlu0 %v5173, 32
  %v5183 = vpop.permute.xlu0 %5182
  %5184 = vrot.lane.b32.xlu0 %v5174, 32
  %v5185 = vpop.permute.xlu0 %5184
  %5186 = vrot.lane.b32.xlu0 %v5175, 32
  %v5187 = vpop.permute.xlu0 %5186
  %5192 = vst.msk [vmem:[#allocation2 + $0x80] sm:$0xf] %vm618, %v5181
  %5193 = vst.msk [vmem:[#allocation2 + $0x90] sm:$0xf] %vm618, %v5183
  %5194 = vst.msk [vmem:[#allocation2 + $0xa0] sm:$0xf] %vm618, %v5185
  %5195 = vst.msk [vmem:[#allocation2 + $0xb0] sm:$0xf] %vm618, %v5187
  %5196 = vrot.lane.b32.xlu0 %v5172, 64
  %v5197 = vpop.permute.xlu0 %5196
  %5198 = vrot.lane.b32.xlu0 %v5173, 64
  %v5199 = vpop.permute.xlu0 %5198
  %5200 = vrot.lane.b32.xlu0 %v5174, 64
  %v5201 = vpop.permute.xlu0 %5200
  %5202 = vrot.lane.b32.xlu0 %v5175, 64
  %v5203 = vpop.permute.xlu0 %5202
  %v5204 = vrot.slane %v5197, 4
  %v5205 = vrot.slane %v5199, 4
  %v5206 = vrot.slane %v5201, 4
  %v5207 = vrot.slane %v5203, 4
  %v5208 = vsel %vm635, %v5204, %v5197
  %v5209 = vsel %vm635, %v5205, %v5199
  %v5210 = vsel %vm635, %v5206, %v5201
  %v5211 = vsel %vm635, %v5207, %v5203
  %5216 = vst.msk [vmem:[#allocation2 + $0xc0] sm:$0xff] %vm646, %v5208
  %5217 = vst.msk [vmem:[#allocation2 + $0xd0] sm:$0xff] %vm646, %v5209
  %5218 = vst.msk [vmem:[#allocation2 + $0xe0] sm:$0xff] %vm646, %v5210
  %5219 = vst.msk [vmem:[#allocation2 + $0xf0] sm:$0xff] %vm646, %v5211
  %5220 = vrot.lane.b32.xlu0 %v5172, 96
  %v5221 = vpop.permute.xlu0 %5220
  %5222 = vrot.lane.b32.xlu0 %v5173, 96
  %v5223 = vpop.permute.xlu0 %5222
  %5224 = vrot.lane.b32.xlu0 %v5174, 96
  %v5225 = vpop.permute.xlu0 %5224
  %5226 = vrot.lane.b32.xlu0 %v5175, 96
  %v5227 = vpop.permute.xlu0 %5226
  %v5228 = vrot.slane %v5221, 4
  %v5229 = vrot.slane %v5223, 4
  %v5230 = vrot.slane %v5225, 4
  %v5231 = vrot.slane %v5227, 4
  %v5232 = vsel %vm663, %v5228, %v5221
  %v5233 = vsel %vm663, %v5229, %v5223
  %v5234 = vsel %vm663, %v5230, %v5225
  %v5235 = vsel %vm663, %v5231, %v5227
  %5240 = vst.msk [vmem:[#allocation2 + $0x100] sm:$0xff] %vm674, %v5232
  %5241 = vst.msk [vmem:[#allocation2 + $0x110] sm:$0xff] %vm674, %v5233
  %5242 = vst.msk [vmem:[#allocation2 + $0x120] sm:$0xff] %vm674, %v5234
  %5243 = vst.msk [vmem:[#allocation2 + $0x130] sm:$0xff] %vm674, %v5235
  %5244 = vst.msk [vmem:[#allocation2 + $0x144] sm:$0xf] %vm585, %v5172
  %5245 = vst.msk [vmem:[#allocation2 + $0x154] sm:$0xf] %vm585, %v5173
  %5246 = vst.msk [vmem:[#allocation2 + $0x164] sm:$0xf] %vm585, %v5174
  %5247 = vst.msk [vmem:[#allocation2 + $0x174] sm:$0xf] %vm585, %v5175
  %5248 = vst.msk [vmem:[#allocation2 + $0x184] sm:$0xf] %vm618, %v5181
  %5249 = vst.msk [vmem:[#allocation2 + $0x194] sm:$0xf] %vm618, %v5183
  %5250 = vst.msk [vmem:[#allocation2 + $0x1a4] sm:$0xf] %vm618, %v5185
  %5251 = vst.msk [vmem:[#allocation2 + $0x1b4] sm:$0xf] %vm618, %v5187
  %5252 = vst.msk [vmem:[#allocation2 + $0x1c4] sm:$0xff] %vm646, %v5208
  %5253 = vst.msk [vmem:[#allocation2 + $0x1d4] sm:$0xff] %vm646, %v5209
  %5254 = vst.msk [vmem:[#allocation2 + $0x1e4] sm:$0xff] %vm646, %v5210
  %5255 = vst.msk [vmem:[#allocation2 + $0x1f4] sm:$0xff] %vm646, %v5211
  %5256 = vst.msk [vmem:[#allocation2 + $0x204] sm:$0xff] %vm674, %v5232
  %5257 = vst.msk [vmem:[#allocation2 + $0x214] sm:$0xff] %vm674, %v5233
  %5258 = vst.msk [vmem:[#allocation2 + $0x224] sm:$0xff] %vm674, %v5234
  %5259 = vst.msk [vmem:[#allocation2 + $0x234] sm:$0xff] %vm674, %v5235
  %5260 = vst.msk [vmem:[#allocation2 + $0x248] sm:$0xf] %vm585, %v5172
  %5261 = vst.msk [vmem:[#allocation2 + $0x258] sm:$0xf] %vm585, %v5173
  %5262 = vst.msk [vmem:[#allocation2 + $0x268] sm:$0xf] %vm585, %v5174
  %5263 = vst.msk [vmem:[#allocation2 + $0x278] sm:$0xf] %vm585, %v5175
  %5264 = vst.msk [vmem:[#allocation2 + $0x288] sm:$0xf] %vm618, %v5181
  %5265 = vst.msk [vmem:[#allocation2 + $0x298] sm:$0xf] %vm618, %v5183
  %5266 = vst.msk [vmem:[#allocation2 + $0x2a8] sm:$0xf] %vm618, %v5185
  %5267 = vst.msk [vmem:[#allocation2 + $0x2b8] sm:$0xf] %vm618, %v5187
  %5268 = vst.msk [vmem:[#allocation2 + $0x2c8] sm:$0xff] %vm646, %v5208
  %5269 = vst.msk [vmem:[#allocation2 + $0x2d8] sm:$0xff] %vm646, %v5209
  %5270 = vst.msk [vmem:[#allocation2 + $0x2e8] sm:$0xff] %vm646, %v5210
  %5271 = vst.msk [vmem:[#allocation2 + $0x2f8] sm:$0xff] %vm646, %v5211
  %5272 = vst.msk [vmem:[#allocation2 + $0x308] sm:$0xff] %vm674, %v5232
  %5273 = vst.msk [vmem:[#allocation2 + $0x318] sm:$0xff] %vm674, %v5233
  %5274 = vst.msk [vmem:[#allocation2 + $0x328] sm:$0xff] %vm674, %v5234
  %5275 = vst.msk [vmem:[#allocation2 + $0x338] sm:$0xff] %vm674, %v5235
  %5276 = vst.msk [vmem:[#allocation2 + $0x34c] sm:$0xf] %vm585, %v5172
  %5277 = vst.msk [vmem:[#allocation2 + $0x35c] sm:$0xf] %vm585, %v5173
  %5278 = vst.msk [vmem:[#allocation2 + $0x36c] sm:$0xf] %vm585, %v5174
  %5279 = vst.msk [vmem:[#allocation2 + $0x37c] sm:$0xf] %vm585, %v5175
  %5284 = vrot.lane.b32.xlu0 %v5088, 64
  %v5285 = vpop.permute.xlu0 %5284
  %5286 = vrot.lane.b32.xlu0 %v5089, 64
  %v5287 = vpop.permute.xlu0 %5286
  %5288 = vrot.lane.b32.xlu0 %v5090, 64
  %v5289 = vpop.permute.xlu0 %5288
  %5290 = vrot.lane.b32.xlu0 %v5091, 64
  %v5291 = vpop.permute.xlu0 %5290
  %v5296 = vsel %vm576, %v5164, %v5285
  %v5297 = vsel %vm576, %v5165, %v5287
  %v5298 = vsel %vm576, %v5166, %v5289
  %v5299 = vsel %vm576, %v5167, %v5291
  %v5300 = vpack.c.bf16 %v5296, %v5296
  %v5301 = vpack.c.bf16 %v5297, %v5297
  %v5302 = vpack.c.bf16 %v5298, %v5298
  %v5303 = vpack.c.bf16 %v5299, %v5299
  %5308 = vrot.lane.b32.xlu0 %v5300, 32
  %v5309 = vpop.permute.xlu0 %5308
  %5310 = vrot.lane.b32.xlu0 %v5301, 32
  %v5311 = vpop.permute.xlu0 %5310
  %5312 = vrot.lane.b32.xlu0 %v5302, 32
  %v5313 = vpop.permute.xlu0 %5312
  %5314 = vrot.lane.b32.xlu0 %v5303, 32
  %v5315 = vpop.permute.xlu0 %5314
  %5320 = vst.msk [vmem:[#allocation2 + $0x38c] sm:$0xf] %vm618, %v5309
  %5321 = vst.msk [vmem:[#allocation2 + $0x39c] sm:$0xf] %vm618, %v5311
  %5322 = vst.msk [vmem:[#allocation2 + $0x3ac] sm:$0xf] %vm618, %v5313
  %5323 = vst.msk [vmem:[#allocation2 + $0x3bc] sm:$0xf] %vm618, %v5315
  %v5324 = vpack.c.bf16 %v5164, %v5164
  %v5325 = vpack.c.bf16 %v5165, %v5165
  %v5326 = vpack.c.bf16 %v5166, %v5166
  %v5327 = vpack.c.bf16 %v5167, %v5167
  %5332 = vrot.lane.b32.xlu0 %v5324, 64
  %v5333 = vpop.permute.xlu0 %5332
  %5334 = vrot.lane.b32.xlu0 %v5325, 64
  %v5335 = vpop.permute.xlu0 %5334
  %5336 = vrot.lane.b32.xlu0 %v5326, 64
  %v5337 = vpop.permute.xlu0 %5336
  %5338 = vrot.lane.b32.xlu0 %v5327, 64
  %v5339 = vpop.permute.xlu0 %5338
  %5344 = vst.msk [vmem:[#allocation2 + $0x3cc] sm:$0xf] %vm644, %v5333
  %5345 = vst.msk [vmem:[#allocation2 + $0x3dc] sm:$0xf] %vm644, %v5335
  %5346 = vst.msk [vmem:[#allocation2 + $0x3ec] sm:$0xf] %vm644, %v5337
  %5347 = vst.msk [vmem:[#allocation2 + $0x3fc] sm:$0xf] %vm644, %v5339
  %s5348 = scalar_lea.vmem %s4, 96
  %v5349 = vld [vmem:[%s5348] sm:$0xff]
  %v5350 = vld [vmem:[%s5348 + $0x8] sm:$0xff]
  %v5351 = vld [vmem:[%s5348 + $0x10] sm:$0xff]
  %v5352 = vld [vmem:[%s5348 + $0x18] sm:$0xff]
  %s5353 = scalar_lea.vmem %s4, 128
  %v5354 = vld [vmem:[%s5353] sm:$0xff]
  %v5355 = vld [vmem:[%s5353 + $0x8] sm:$0xff]
  %v5356 = vld [vmem:[%s5353 + $0x10] sm:$0xff]
  %v5357 = vld [vmem:[%s5353 + $0x18] sm:$0xff]
  %s5358 = scalar_lea.vmem %s4, 160
  %v5359 = vld [vmem:[%s5358] sm:$0xff]
  %v5360 = vld [vmem:[%s5358 + $0x8] sm:$0xff]
  %v5361 = vld [vmem:[%s5358 + $0x10] sm:$0xff]
  %v5362 = vld [vmem:[%s5358 + $0x18] sm:$0xff]
  %v5363 = vadd.f32 %v5349, %v5359
  %v5364 = vadd.f32 %v5350, %v5360
  %v5365 = vadd.f32 %v5351, %v5361
  %v5366 = vadd.f32 %v5352, %v5362
  %5371 = vrot.lane.b32.xlu0 %v5349, 32
  %v5372 = vpop.permute.xlu0 %5371
  %5373 = vrot.lane.b32.xlu0 %v5350, 32
  %v5374 = vpop.permute.xlu0 %5373
  %5375 = vrot.lane.b32.xlu0 %v5351, 32
  %v5376 = vpop.permute.xlu0 %5375
  %5377 = vrot.lane.b32.xlu0 %v5352, 32
  %v5378 = vpop.permute.xlu0 %5377
  %v5383 = vsel %vm530, %v5354, %v5372
  %v5384 = vsel %vm530, %v5355, %v5374
  %v5385 = vsel %vm530, %v5356, %v5376
  %v5386 = vsel %vm530, %v5357, %v5378
  %v5387 = vpack.c.bf16 %v5383, %v5383
  %v5388 = vpack.c.bf16 %v5384, %v5384
  %v5389 = vpack.c.bf16 %v5385, %v5385
  %v5390 = vpack.c.bf16 %v5386, %v5386
  %5391 = vst.msk [vmem:[%s826] sm:$0xf] %vm539, %v5387
  %5392 = vst.msk [vmem:[%s826 + $0x10] sm:$0xf] %vm539, %v5388
  %5393 = vst.msk [vmem:[%s826 + $0x20] sm:$0xf] %vm539, %v5389
  %5394 = vst.msk [vmem:[%s826 + $0x30] sm:$0xf] %vm539, %v5390
  %5399 = vrot.lane.b32.xlu0 %v5354, 32
  %v5400 = vpop.permute.xlu0 %5399
  %5401 = vrot.lane.b32.xlu0 %v5355, 32
  %v5402 = vpop.permute.xlu0 %5401
  %5403 = vrot.lane.b32.xlu0 %v5356, 32
  %v5404 = vpop.permute.xlu0 %5403
  %5405 = vrot.lane.b32.xlu0 %v5357, 32
  %v5406 = vpop.permute.xlu0 %5405
  %5411 = vrot.lane.b32.xlu0 %v5349, 64
  %v5412 = vpop.permute.xlu0 %5411
  %5413 = vrot.lane.b32.xlu0 %v5350, 64
  %v5414 = vpop.permute.xlu0 %5413
  %5415 = vrot.lane.b32.xlu0 %v5351, 64
  %v5416 = vpop.permute.xlu0 %5415
  %5417 = vrot.lane.b32.xlu0 %v5352, 64
  %v5418 = vpop.permute.xlu0 %5417
  %v5423 = vsel %vm530, %v5363, %v5400
  %v5424 = vsel %vm530, %v5364, %v5402
  %v5425 = vsel %vm530, %v5365, %v5404
  %v5426 = vsel %vm530, %v5366, %v5406
  %v5427 = vsel %vm576, %v5423, %v5412
  %v5428 = vsel %vm576, %v5424, %v5414
  %v5429 = vsel %vm576, %v5425, %v5416
  %v5430 = vsel %vm576, %v5426, %v5418
  %v5431 = vpack.c.bf16 %v5427, %v5427
  %v5432 = vpack.c.bf16 %v5428, %v5428
  %v5433 = vpack.c.bf16 %v5429, %v5429
  %v5434 = vpack.c.bf16 %v5430, %v5430
  %5435 = vst.msk [vmem:[%s826 + $0x40] sm:$0xf] %vm585, %v5431
  %5436 = vst.msk [vmem:[%s826 + $0x50] sm:$0xf] %vm585, %v5432
  %5437 = vst.msk [vmem:[%s826 + $0x60] sm:$0xf] %vm585, %v5433
  %5438 = vst.msk [vmem:[%s826 + $0x70] sm:$0xf] %vm585, %v5434
  %v5439 = vsel %vm530, %v5359, %v5400
  %v5440 = vsel %vm530, %v5360, %v5402
  %v5441 = vsel %vm530, %v5361, %v5404
  %v5442 = vsel %vm530, %v5362, %v5406
  %v5443 = vsel %vm576, %v5439, %v5412
  %v5444 = vsel %vm576, %v5440, %v5414
  %v5445 = vsel %vm576, %v5441, %v5416
  %v5446 = vsel %vm576, %v5442, %v5418
  %v5447 = vpack.c.bf16 %v5443, %v5443
  %v5448 = vpack.c.bf16 %v5444, %v5444
  %v5449 = vpack.c.bf16 %v5445, %v5445
  %v5450 = vpack.c.bf16 %v5446, %v5446
  %5455 = vrot.lane.b32.xlu0 %v5447, 32
  %v5456 = vpop.permute.xlu0 %5455
  %5457 = vrot.lane.b32.xlu0 %v5448, 32
  %v5458 = vpop.permute.xlu0 %5457
  %5459 = vrot.lane.b32.xlu0 %v5449, 32
  %v5460 = vpop.permute.xlu0 %5459
  %5461 = vrot.lane.b32.xlu0 %v5450, 32
  %v5462 = vpop.permute.xlu0 %5461
  %5467 = vst.msk [vmem:[%s826 + $0x80] sm:$0xf] %vm618, %v5456
  %5468 = vst.msk [vmem:[%s826 + $0x90] sm:$0xf] %vm618, %v5458
  %5469 = vst.msk [vmem:[%s826 + $0xa0] sm:$0xf] %vm618, %v5460
  %5470 = vst.msk [vmem:[%s826 + $0xb0] sm:$0xf] %vm618, %v5462
  %5471 = vrot.lane.b32.xlu0 %v5447, 64
  %v5472 = vpop.permute.xlu0 %5471
  %5473 = vrot.lane.b32.xlu0 %v5448, 64
  %v5474 = vpop.permute.xlu0 %5473
  %5475 = vrot.lane.b32.xlu0 %v5449, 64
  %v5476 = vpop.permute.xlu0 %5475
  %5477 = vrot.lane.b32.xlu0 %v5450, 64
  %v5478 = vpop.permute.xlu0 %5477
  %v5479 = vrot.slane %v5472, 4
  %v5480 = vrot.slane %v5474, 4
  %v5481 = vrot.slane %v5476, 4
  %v5482 = vrot.slane %v5478, 4
  %v5483 = vsel %vm635, %v5479, %v5472
  %v5484 = vsel %vm635, %v5480, %v5474
  %v5485 = vsel %vm635, %v5481, %v5476
  %v5486 = vsel %vm635, %v5482, %v5478
  %5491 = vst.msk [vmem:[%s826 + $0xc0] sm:$0xff] %vm646, %v5483
  %5492 = vst.msk [vmem:[%s826 + $0xd0] sm:$0xff] %vm646, %v5484
  %5493 = vst.msk [vmem:[%s826 + $0xe0] sm:$0xff] %vm646, %v5485
  %5494 = vst.msk [vmem:[%s826 + $0xf0] sm:$0xff] %vm646, %v5486
  %5495 = vrot.lane.b32.xlu0 %v5447, 96
  %v5496 = vpop.permute.xlu0 %5495
  %5497 = vrot.lane.b32.xlu0 %v5448, 96
  %v5498 = vpop.permute.xlu0 %5497
  %5499 = vrot.lane.b32.xlu0 %v5449, 96
  %v5500 = vpop.permute.xlu0 %5499
  %5501 = vrot.lane.b32.xlu0 %v5450, 96
  %v5502 = vpop.permute.xlu0 %5501
  %v5503 = vrot.slane %v5496, 4
  %v5504 = vrot.slane %v5498, 4
  %v5505 = vrot.slane %v5500, 4
  %v5506 = vrot.slane %v5502, 4
  %v5507 = vsel %vm663, %v5503, %v5496
  %v5508 = vsel %vm663, %v5504, %v5498
  %v5509 = vsel %vm663, %v5505, %v5500
  %v5510 = vsel %vm663, %v5506, %v5502
  %5515 = vst.msk [vmem:[%s826 + $0x100] sm:$0xff] %vm674, %v5507
  %5516 = vst.msk [vmem:[%s826 + $0x110] sm:$0xff] %vm674, %v5508
  %5517 = vst.msk [vmem:[%s826 + $0x120] sm:$0xff] %vm674, %v5509
  %5518 = vst.msk [vmem:[%s826 + $0x130] sm:$0xff] %vm674, %v5510
  %5519 = vst.msk [vmem:[%s826 + $0x144] sm:$0xf] %vm585, %v5447
  %5520 = vst.msk [vmem:[%s826 + $0x154] sm:$0xf] %vm585, %v5448
  %5521 = vst.msk [vmem:[%s826 + $0x164] sm:$0xf] %vm585, %v5449
  %5522 = vst.msk [vmem:[%s826 + $0x174] sm:$0xf] %vm585, %v5450
  %5523 = vst.msk [vmem:[%s826 + $0x184] sm:$0xf] %vm618, %v5456
  %5524 = vst.msk [vmem:[%s826 + $0x194] sm:$0xf] %vm618, %v5458
  %5525 = vst.msk [vmem:[%s826 + $0x1a4] sm:$0xf] %vm618, %v5460
  %5526 = vst.msk [vmem:[%s826 + $0x1b4] sm:$0xf] %vm618, %v5462
  %5527 = vst.msk [vmem:[%s826 + $0x1c4] sm:$0xff] %vm646, %v5483
  %5528 = vst.msk [vmem:[%s826 + $0x1d4] sm:$0xff] %vm646, %v5484
  %5529 = vst.msk [vmem:[%s826 + $0x1e4] sm:$0xff] %vm646, %v5485
  %5530 = vst.msk [vmem:[%s826 + $0x1f4] sm:$0xff] %vm646, %v5486
  %5531 = vst.msk [vmem:[%s826 + $0x204] sm:$0xff] %vm674, %v5507
  %5532 = vst.msk [vmem:[%s826 + $0x214] sm:$0xff] %vm674, %v5508
  %5533 = vst.msk [vmem:[%s826 + $0x224] sm:$0xff] %vm674, %v5509
  %5534 = vst.msk [vmem:[%s826 + $0x234] sm:$0xff] %vm674, %v5510
  %5535 = vst.msk [vmem:[%s826 + $0x248] sm:$0xf] %vm585, %v5447
  %5536 = vst.msk [vmem:[%s826 + $0x258] sm:$0xf] %vm585, %v5448
  %5537 = vst.msk [vmem:[%s826 + $0x268] sm:$0xf] %vm585, %v5449
  %5538 = vst.msk [vmem:[%s826 + $0x278] sm:$0xf] %vm585, %v5450
  %5539 = vst.msk [vmem:[%s826 + $0x288] sm:$0xf] %vm618, %v5456
  %5540 = vst.msk [vmem:[%s826 + $0x298] sm:$0xf] %vm618, %v5458
  %5541 = vst.msk [vmem:[%s826 + $0x2a8] sm:$0xf] %vm618, %v5460
  %5542 = vst.msk [vmem:[%s826 + $0x2b8] sm:$0xf] %vm618, %v5462
  %5543 = vst.msk [vmem:[%s826 + $0x2c8] sm:$0xff] %vm646, %v5483
  %5544 = vst.msk [vmem:[%s826 + $0x2d8] sm:$0xff] %vm646, %v5484
  %5545 = vst.msk [vmem:[%s826 + $0x2e8] sm:$0xff] %vm646, %v5485
  %5546 = vst.msk [vmem:[%s826 + $0x2f8] sm:$0xff] %vm646, %v5486
  %5547 = vst.msk [vmem:[%s826 + $0x308] sm:$0xff] %vm674, %v5507
  %5548 = vst.msk [vmem:[%s826 + $0x318] sm:$0xff] %vm674, %v5508
  %5549 = vst.msk [vmem:[%s826 + $0x328] sm:$0xff] %vm674, %v5509
  %5550 = vst.msk [vmem:[%s826 + $0x338] sm:$0xff] %vm674, %v5510
  %5551 = vst.msk [vmem:[%s826 + $0x34c] sm:$0xf] %vm585, %v5447
  %5552 = vst.msk [vmem:[%s826 + $0x35c] sm:$0xf] %vm585, %v5448
  %5553 = vst.msk [vmem:[%s826 + $0x36c] sm:$0xf] %vm585, %v5449
  %5554 = vst.msk [vmem:[%s826 + $0x37c] sm:$0xf] %vm585, %v5450
  %5559 = vrot.lane.b32.xlu0 %v5363, 64
  %v5560 = vpop.permute.xlu0 %5559
  %5561 = vrot.lane.b32.xlu0 %v5364, 64
  %v5562 = vpop.permute.xlu0 %5561
  %5563 = vrot.lane.b32.xlu0 %v5365, 64
  %v5564 = vpop.permute.xlu0 %5563
  %5565 = vrot.lane.b32.xlu0 %v5366, 64
  %v5566 = vpop.permute.xlu0 %5565
  %v5571 = vsel %vm576, %v5439, %v5560
  %v5572 = vsel %vm576, %v5440, %v5562
  %v5573 = vsel %vm576, %v5441, %v5564
  %v5574 = vsel %vm576, %v5442, %v5566
  %v5575 = vpack.c.bf16 %v5571, %v5571
  %v5576 = vpack.c.bf16 %v5572, %v5572
  %v5577 = vpack.c.bf16 %v5573, %v5573
  %v5578 = vpack.c.bf16 %v5574, %v5574
  %5583 = vrot.lane.b32.xlu0 %v5575, 32
  %v5584 = vpop.permute.xlu0 %5583
  %5585 = vrot.lane.b32.xlu0 %v5576, 32
  %v5586 = vpop.permute.xlu0 %5585
  %5587 = vrot.lane.b32.xlu0 %v5577, 32
  %v5588 = vpop.permute.xlu0 %5587
  %5589 = vrot.lane.b32.xlu0 %v5578, 32
  %v5590 = vpop.permute.xlu0 %5589
  %5595 = vst.msk [vmem:[%s826 + $0x38c] sm:$0xf] %vm618, %v5584
  %5596 = vst.msk [vmem:[%s826 + $0x39c] sm:$0xf] %vm618, %v5586
  %5597 = vst.msk [vmem:[%s826 + $0x3ac] sm:$0xf] %vm618, %v5588
  %5598 = vst.msk [vmem:[%s826 + $0x3bc] sm:$0xf] %vm618, %v5590
  %v5599 = vpack.c.bf16 %v5439, %v5439
  %v5600 = vpack.c.bf16 %v5440, %v5440
  %v5601 = vpack.c.bf16 %v5441, %v5441
  %v5602 = vpack.c.bf16 %v5442, %v5442
  %5607 = vrot.lane.b32.xlu0 %v5599, 64
  %v5608 = vpop.permute.xlu0 %5607
  %5609 = vrot.lane.b32.xlu0 %v5600, 64
  %v5610 = vpop.permute.xlu0 %5609
  %5611 = vrot.lane.b32.xlu0 %v5601, 64
  %v5612 = vpop.permute.xlu0 %5611
  %5613 = vrot.lane.b32.xlu0 %v5602, 64
  %v5614 = vpop.permute.xlu0 %5613
  %5619 = vst.msk [vmem:[%s826 + $0x3cc] sm:$0xf] %vm644, %v5608
  %5620 = vst.msk [vmem:[%s826 + $0x3dc] sm:$0xf] %vm644, %v5610
  %5621 = vst.msk [vmem:[%s826 + $0x3ec] sm:$0xf] %vm644, %v5612
  %5622 = vst.msk [vmem:[%s826 + $0x3fc] sm:$0xf] %vm644, %v5614
  %s5623 = scalar_lea.vmem %s4, 192
  %v5624 = vld [vmem:[%s5623] sm:$0xff]
  %v5625 = vld [vmem:[%s5623 + $0x8] sm:$0xff]
  %v5626 = vld [vmem:[%s5623 + $0x10] sm:$0xff]
  %v5627 = vld [vmem:[%s5623 + $0x18] sm:$0xff]
  %s5628 = scalar_lea.vmem %s4, 224
  %v5629 = vld [vmem:[%s5628] sm:$0xff]
  %v5630 = vld [vmem:[%s5628 + $0x8] sm:$0xff]
  %v5631 = vld [vmem:[%s5628 + $0x10] sm:$0xff]
  %v5632 = vld [vmem:[%s5628 + $0x18] sm:$0xff]
  %s5633 = scalar_lea.vmem %s4, 256
  %v5634 = vld [vmem:[%s5633] sm:$0xff]
  %v5635 = vld [vmem:[%s5633 + $0x8] sm:$0xff]
  %v5636 = vld [vmem:[%s5633 + $0x10] sm:$0xff]
  %v5637 = vld [vmem:[%s5633 + $0x18] sm:$0xff]
  %v5638 = vadd.f32 %v5624, %v5634
  %v5639 = vadd.f32 %v5625, %v5635
  %v5640 = vadd.f32 %v5626, %v5636
  %v5641 = vadd.f32 %v5627, %v5637
  %5646 = vrot.lane.b32.xlu0 %v5624, 32
  %v5647 = vpop.permute.xlu0 %5646
  %5648 = vrot.lane.b32.xlu0 %v5625, 32
  %v5649 = vpop.permute.xlu0 %5648
  %5650 = vrot.lane.b32.xlu0 %v5626, 32
  %v5651 = vpop.permute.xlu0 %5650
  %5652 = vrot.lane.b32.xlu0 %v5627, 32
  %v5653 = vpop.permute.xlu0 %5652
  %v5658 = vsel %vm530, %v5629, %v5647
  %v5659 = vsel %vm530, %v5630, %v5649
  %v5660 = vsel %vm530, %v5631, %v5651
  %v5661 = vsel %vm530, %v5632, %v5653
  %v5662 = vpack.c.bf16 %v5658, %v5658
  %v5663 = vpack.c.bf16 %v5659, %v5659
  %v5664 = vpack.c.bf16 %v5660, %v5660
  %v5665 = vpack.c.bf16 %v5661, %v5661
  %5666 = vst.msk [vmem:[%s1102] sm:$0xf] %vm539, %v5662
  %5667 = vst.msk [vmem:[%s1102 + $0x10] sm:$0xf] %vm539, %v5663
  %5668 = vst.msk [vmem:[%s1102 + $0x20] sm:$0xf] %vm539, %v5664
  %5669 = vst.msk [vmem:[%s1102 + $0x30] sm:$0xf] %vm539, %v5665
  %5674 = vrot.lane.b32.xlu0 %v5629, 32
  %v5675 = vpop.permute.xlu0 %5674
  %5676 = vrot.lane.b32.xlu0 %v5630, 32
  %v5677 = vpop.permute.xlu0 %5676
  %5678 = vrot.lane.b32.xlu0 %v5631, 32
  %v5679 = vpop.permute.xlu0 %5678
  %5680 = vrot.lane.b32.xlu0 %v5632, 32
  %v5681 = vpop.permute.xlu0 %5680
  %5686 = vrot.lane.b32.xlu0 %v5624, 64
  %v5687 = vpop.permute.xlu0 %5686
  %5688 = vrot.lane.b32.xlu0 %v5625, 64
  %v5689 = vpop.permute.xlu0 %5688
  %5690 = vrot.lane.b32.xlu0 %v5626, 64
  %v5691 = vpop.permute.xlu0 %5690
  %5692 = vrot.lane.b32.xlu0 %v5627, 64
  %v5693 = vpop.permute.xlu0 %5692
  %v5698 = vsel %vm530, %v5638, %v5675
  %v5699 = vsel %vm530, %v5639, %v5677
  %v5700 = vsel %vm530, %v5640, %v5679
  %v5701 = vsel %vm530, %v5641, %v5681
  %v5702 = vsel %vm576, %v5698, %v5687
  %v5703 = vsel %vm576, %v5699, %v5689
  %v5704 = vsel %vm576, %v5700, %v5691
  %v5705 = vsel %vm576, %v5701, %v5693
  %v5706 = vpack.c.bf16 %v5702, %v5702
  %v5707 = vpack.c.bf16 %v5703, %v5703
  %v5708 = vpack.c.bf16 %v5704, %v5704
  %v5709 = vpack.c.bf16 %v5705, %v5705
  %5710 = vst.msk [vmem:[%s1102 + $0x40] sm:$0xf] %vm585, %v5706
  %5711 = vst.msk [vmem:[%s1102 + $0x50] sm:$0xf] %vm585, %v5707
  %5712 = vst.msk [vmem:[%s1102 + $0x60] sm:$0xf] %vm585, %v5708
  %5713 = vst.msk [vmem:[%s1102 + $0x70] sm:$0xf] %vm585, %v5709
  %v5714 = vsel %vm530, %v5634, %v5675
  %v5715 = vsel %vm530, %v5635, %v5677
  %v5716 = vsel %vm530, %v5636, %v5679
  %v5717 = vsel %vm530, %v5637, %v5681
  %v5718 = vsel %vm576, %v5714, %v5687
  %v5719 = vsel %vm576, %v5715, %v5689
  %v5720 = vsel %vm576, %v5716, %v5691
  %v5721 = vsel %vm576, %v5717, %v5693
  %v5722 = vpack.c.bf16 %v5718, %v5718
  %v5723 = vpack.c.bf16 %v5719, %v5719
  %v5724 = vpack.c.bf16 %v5720, %v5720
  %v5725 = vpack.c.bf16 %v5721, %v5721
  %5730 = vrot.lane.b32.xlu0 %v5722, 32
  %v5731 = vpop.permute.xlu0 %5730
  %5732 = vrot.lane.b32.xlu0 %v5723, 32
  %v5733 = vpop.permute.xlu0 %5732
  %5734 = vrot.lane.b32.xlu0 %v5724, 32
  %v5735 = vpop.permute.xlu0 %5734
  %5736 = vrot.lane.b32.xlu0 %v5725, 32
  %v5737 = vpop.permute.xlu0 %5736
  %5742 = vst.msk [vmem:[%s1102 + $0x80] sm:$0xf] %vm618, %v5731
  %5743 = vst.msk [vmem:[%s1102 + $0x90] sm:$0xf] %vm618, %v5733
  %5744 = vst.msk [vmem:[%s1102 + $0xa0] sm:$0xf] %vm618, %v5735
  %5745 = vst.msk [vmem:[%s1102 + $0xb0] sm:$0xf] %vm618, %v5737
  %5746 = vrot.lane.b32.xlu0 %v5722, 64
  %v5747 = vpop.permute.xlu0 %5746
  %5748 = vrot.lane.b32.xlu0 %v5723, 64
  %v5749 = vpop.permute.xlu0 %5748
  %5750 = vrot.lane.b32.xlu0 %v5724, 64
  %v5751 = vpop.permute.xlu0 %5750
  %5752 = vrot.lane.b32.xlu0 %v5725, 64
  %v5753 = vpop.permute.xlu0 %5752
  %v5754 = vrot.slane %v5747, 4
  %v5755 = vrot.slane %v5749, 4
  %v5756 = vrot.slane %v5751, 4
  %v5757 = vrot.slane %v5753, 4
  %v5758 = vsel %vm635, %v5754, %v5747
  %v5759 = vsel %vm635, %v5755, %v5749
  %v5760 = vsel %vm635, %v5756, %v5751
  %v5761 = vsel %vm635, %v5757, %v5753
  %5766 = vst.msk [vmem:[%s1102 + $0xc0] sm:$0xff] %vm646, %v5758
  %5767 = vst.msk [vmem:[%s1102 + $0xd0] sm:$0xff] %vm646, %v5759
  %5768 = vst.msk [vmem:[%s1102 + $0xe0] sm:$0xff] %vm646, %v5760
  %5769 = vst.msk [vmem:[%s1102 + $0xf0] sm:$0xff] %vm646, %v5761
  %5770 = vrot.lane.b32.xlu0 %v5722, 96
  %v5771 = vpop.permute.xlu0 %5770
  %5772 = vrot.lane.b32.xlu0 %v5723, 96
  %v5773 = vpop.permute.xlu0 %5772
  %5774 = vrot.lane.b32.xlu0 %v5724, 96
  %v5775 = vpop.permute.xlu0 %5774
  %5776 = vrot.lane.b32.xlu0 %v5725, 96
  %v5777 = vpop.permute.xlu0 %5776
  %v5778 = vrot.slane %v5771, 4
  %v5779 = vrot.slane %v5773, 4
  %v5780 = vrot.slane %v5775, 4
  %v5781 = vrot.slane %v5777, 4
  %v5782 = vsel %vm663, %v5778, %v5771
  %v5783 = vsel %vm663, %v5779, %v5773
  %v5784 = vsel %vm663, %v5780, %v5775
  %v5785 = vsel %vm663, %v5781, %v5777
  %5790 = vst.msk [vmem:[%s1102 + $0x100] sm:$0xff] %vm674, %v5782
  %5791 = vst.msk [vmem:[%s1102 + $0x110] sm:$0xff] %vm674, %v5783
  %5792 = vst.msk [vmem:[%s1102 + $0x120] sm:$0xff] %vm674, %v5784
  %5793 = vst.msk [vmem:[%s1102 + $0x130] sm:$0xff] %vm674, %v5785
  %5794 = vst.msk [vmem:[%s1102 + $0x144] sm:$0xf] %vm585, %v5722
  %5795 = vst.msk [vmem:[%s1102 + $0x154] sm:$0xf] %vm585, %v5723
  %5796 = vst.msk [vmem:[%s1102 + $0x164] sm:$0xf] %vm585, %v5724
  %5797 = vst.msk [vmem:[%s1102 + $0x174] sm:$0xf] %vm585, %v5725
  %5798 = vst.msk [vmem:[%s1102 + $0x184] sm:$0xf] %vm618, %v5731
  %5799 = vst.msk [vmem:[%s1102 + $0x194] sm:$0xf] %vm618, %v5733
  %5800 = vst.msk [vmem:[%s1102 + $0x1a4] sm:$0xf] %vm618, %v5735
  %5801 = vst.msk [vmem:[%s1102 + $0x1b4] sm:$0xf] %vm618, %v5737
  %5802 = vst.msk [vmem:[%s1102 + $0x1c4] sm:$0xff] %vm646, %v5758
  %5803 = vst.msk [vmem:[%s1102 + $0x1d4] sm:$0xff] %vm646, %v5759
  %5804 = vst.msk [vmem:[%s1102 + $0x1e4] sm:$0xff] %vm646, %v5760
  %5805 = vst.msk [vmem:[%s1102 + $0x1f4] sm:$0xff] %vm646, %v5761
  %5806 = vst.msk [vmem:[%s1102 + $0x204] sm:$0xff] %vm674, %v5782
  %5807 = vst.msk [vmem:[%s1102 + $0x214] sm:$0xff] %vm674, %v5783
  %5808 = vst.msk [vmem:[%s1102 + $0x224] sm:$0xff] %vm674, %v5784
  %5809 = vst.msk [vmem:[%s1102 + $0x234] sm:$0xff] %vm674, %v5785
  %5810 = vst.msk [vmem:[%s1102 + $0x248] sm:$0xf] %vm585, %v5722
  %5811 = vst.msk [vmem:[%s1102 + $0x258] sm:$0xf] %vm585, %v5723
  %5812 = vst.msk [vmem:[%s1102 + $0x268] sm:$0xf] %vm585, %v5724
  %5813 = vst.msk [vmem:[%s1102 + $0x278] sm:$0xf] %vm585, %v5725
  %5814 = vst.msk [vmem:[%s1102 + $0x288] sm:$0xf] %vm618, %v5731
  %5815 = vst.msk [vmem:[%s1102 + $0x298] sm:$0xf] %vm618, %v5733
  %5816 = vst.msk [vmem:[%s1102 + $0x2a8] sm:$0xf] %vm618, %v5735
  %5817 = vst.msk [vmem:[%s1102 + $0x2b8] sm:$0xf] %vm618, %v5737
  %5818 = vst.msk [vmem:[%s1102 + $0x2c8] sm:$0xff] %vm646, %v5758
  %5819 = vst.msk [vmem:[%s1102 + $0x2d8] sm:$0xff] %vm646, %v5759
  %5820 = vst.msk [vmem:[%s1102 + $0x2e8] sm:$0xff] %vm646, %v5760
  %5821 = vst.msk [vmem:[%s1102 + $0x2f8] sm:$0xff] %vm646, %v5761
  %5822 = vst.msk [vmem:[%s1102 + $0x308] sm:$0xff] %vm674, %v5782
  %5823 = vst.msk [vmem:[%s1102 + $0x318] sm:$0xff] %vm674, %v5783
  %5824 = vst.msk [vmem:[%s1102 + $0x328] sm:$0xff] %vm674, %v5784
  %5825 = vst.msk [vmem:[%s1102 + $0x338] sm:$0xff] %vm674, %v5785
  %5826 = vst.msk [vmem:[%s1102 + $0x34c] sm:$0xf] %vm585, %v5722
  %5827 = vst.msk [vmem:[%s1102 + $0x35c] sm:$0xf] %vm585, %v5723
  %5828 = vst.msk [vmem:[%s1102 + $0x36c] sm:$0xf] %vm585, %v5724
  %5829 = vst.msk [vmem:[%s1102 + $0x37c] sm:$0xf] %vm585, %v5725
  %5834 = vrot.lane.b32.xlu0 %v5638, 64
  %v5835 = vpop.permute.xlu0 %5834
  %5836 = vrot.lane.b32.xlu0 %v5639, 64
  %v5837 = vpop.permute.xlu0 %5836
  %5838 = vrot.lane.b32.xlu0 %v5640, 64
  %v5839 = vpop.permute.xlu0 %5838
  %5840 = vrot.lane.b32.xlu0 %v5641, 64
  %v5841 = vpop.permute.xlu0 %5840
  %v5846 = vsel %vm576, %v5714, %v5835
  %v5847 = vsel %vm576, %v5715, %v5837
  %v5848 = vsel %vm576, %v5716, %v5839
  %v5849 = vsel %vm576, %v5717, %v5841
  %v5850 = vpack.c.bf16 %v5846, %v5846
  %v5851 = vpack.c.bf16 %v5847, %v5847
  %v5852 = vpack.c.bf16 %v5848, %v5848
  %v5853 = vpack.c.bf16 %v5849, %v5849
  %5858 = vrot.lane.b32.xlu0 %v5850, 32
  %v5859 = vpop.permute.xlu0 %5858
  %5860 = vrot.lane.b32.xlu0 %v5851, 32
  %v5861 = vpop.permute.xlu0 %5860
  %5862 = vrot.lane.b32.xlu0 %v5852, 32
  %v5863 = vpop.permute.xlu0 %5862
  %5864 = vrot.lane.b32.xlu0 %v5853, 32
  %v5865 = vpop.permute.xlu0 %5864
  %5870 = vst.msk [vmem:[%s1102 + $0x38c] sm:$0xf] %vm618, %v5859
  %5871 = vst.msk [vmem:[%s1102 + $0x39c] sm:$0xf] %vm618, %v5861
  %5872 = vst.msk [vmem:[%s1102 + $0x3ac] sm:$0xf] %vm618, %v5863
  %5873 = vst.msk [vmem:[%s1102 + $0x3bc] sm:$0xf] %vm618, %v5865
  %v5874 = vpack.c.bf16 %v5714, %v5714
  %v5875 = vpack.c.bf16 %v5715, %v5715
  %v5876 = vpack.c.bf16 %v5716, %v5716
  %v5877 = vpack.c.bf16 %v5717, %v5717
  %5882 = vrot.lane.b32.xlu0 %v5874, 64
  %v5883 = vpop.permute.xlu0 %5882
  %5884 = vrot.lane.b32.xlu0 %v5875, 64
  %v5885 = vpop.permute.xlu0 %5884
  %5886 = vrot.lane.b32.xlu0 %v5876, 64
  %v5887 = vpop.permute.xlu0 %5886
  %5888 = vrot.lane.b32.xlu0 %v5877, 64
  %v5889 = vpop.permute.xlu0 %5888
  %5894 = vst.msk [vmem:[%s1102 + $0x3cc] sm:$0xf] %vm644, %v5883
  %5895 = vst.msk [vmem:[%s1102 + $0x3dc] sm:$0xf] %vm644, %v5885
  %5896 = vst.msk [vmem:[%s1102 + $0x3ec] sm:$0xf] %vm644, %v5887
  %5897 = vst.msk [vmem:[%s1102 + $0x3fc] sm:$0xf] %vm644, %v5889
  %v5898 = vpack.c.bf16 %v5062, %v5058
  %v5899 = vpack.c.bf16 %v5063, %v5059
  %v5900 = vpack.c.bf16 %v5064, %v5060
  %v5901 = vpack.c.bf16 %v5065, %v5061
  %v5902 = vpack.c.bf16 %v5070, %v5066
  %v5903 = vpack.c.bf16 %v5071, %v5067
  %v5904 = vpack.c.bf16 %v5072, %v5068
  %v5905 = vpack.c.bf16 %v5073, %v5069
  %v5906 = vld [vmem:[#allocation2] sm:$0xff]
  %v5907 = vld [vmem:[#allocation2 + $0x8] sm:$0xff]
  %v5908 = vld [vmem:[#allocation2 + $0x10] sm:$0xff]
  %v5909 = vld [vmem:[#allocation2 + $0x18] sm:$0xff]
  %v5910 = vld [vmem:[#allocation2 + $0x20] sm:$0xff]
  %v5911 = vld [vmem:[#allocation2 + $0x28] sm:$0xff]
  %v5912 = vld [vmem:[#allocation2 + $0x30] sm:$0xff]
  %v5913 = vld [vmem:[#allocation2 + $0x38] sm:$0xff]
  %v5914 = vld [vmem:[#allocation2 + $0x40] sm:$0xff]
  %v5915 = vld [vmem:[#allocation2 + $0x48] sm:$0xff]
  %v5916 = vld [vmem:[#allocation2 + $0x50] sm:$0xff]
  %v5917 = vld [vmem:[#allocation2 + $0x58] sm:$0xff]
  %v5918 = vld [vmem:[#allocation2 + $0x60] sm:$0xff]
  %v5919 = vld [vmem:[#allocation2 + $0x68] sm:$0xff]
  %v5920 = vld [vmem:[#allocation2 + $0x70] sm:$0xff]
  %v5921 = vld [vmem:[#allocation2 + $0x78] sm:$0xff]
  %v5922 = vld [vmem:[#allocation2 + $0x80] sm:$0xff]
  %v5923 = vld [vmem:[#allocation2 + $0x88] sm:$0xff]
  %v5924 = vld [vmem:[#allocation2 + $0x90] sm:$0xff]
  %v5925 = vld [vmem:[#allocation2 + $0x98] sm:$0xff]
  %v5926 = vld [vmem:[#allocation2 + $0xa0] sm:$0xff]
  %v5927 = vld [vmem:[#allocation2 + $0xa8] sm:$0xff]
  %v5928 = vld [vmem:[#allocation2 + $0xb0] sm:$0xff]
  %v5929 = vld [vmem:[#allocation2 + $0xb8] sm:$0xff]
  %v5930 = vld [vmem:[#allocation2 + $0xc0] sm:$0xff]
  %v5931 = vld [vmem:[#allocation2 + $0xc8] sm:$0xff]
  %v5932 = vld [vmem:[#allocation2 + $0xd0] sm:$0xff]
  %v5933 = vld [vmem:[#allocation2 + $0xd8] sm:$0xff]
  %v5934 = vld [vmem:[#allocation2 + $0xe0] sm:$0xff]
  %v5935 = vld [vmem:[#allocation2 + $0xe8] sm:$0xff]
  %v5936 = vld [vmem:[#allocation2 + $0xf0] sm:$0xff]
  %v5937 = vld [vmem:[#allocation2 + $0xf8] sm:$0xff]
  %v5938 = vld [vmem:[#allocation2 + $0x100] sm:$0xff]
  %v5939 = vld [vmem:[#allocation2 + $0x108] sm:$0xff]
  %v5940 = vld [vmem:[#allocation2 + $0x110] sm:$0xff]
  %v5941 = vld [vmem:[#allocation2 + $0x118] sm:$0xff]
  %v5942 = vld [vmem:[#allocation2 + $0x120] sm:$0xff]
  %v5943 = vld [vmem:[#allocation2 + $0x128] sm:$0xff]
  %v5944 = vld [vmem:[#allocation2 + $0x130] sm:$0xff]
  %v5945 = vld [vmem:[#allocation2 + $0x138] sm:$0xff]
  %v5946 = vld [vmem:[#allocation2 + $0x140] sm:$0xff]
  %v5947 = vld [vmem:[#allocation2 + $0x148] sm:$0xff]
  %v5948 = vld [vmem:[#allocation2 + $0x150] sm:$0xff]
  %v5949 = vld [vmem:[#allocation2 + $0x158] sm:$0xff]
  %v5950 = vld [vmem:[#allocation2 + $0x160] sm:$0xff]
  %v5951 = vld [vmem:[#allocation2 + $0x168] sm:$0xff]
  %v5952 = vld [vmem:[#allocation2 + $0x170] sm:$0xff]
  %v5953 = vld [vmem:[#allocation2 + $0x178] sm:$0xff]
  %v5954 = vld [vmem:[#allocation2 + $0x180] sm:$0xff]
  %v5955 = vld [vmem:[#allocation2 + $0x188] sm:$0xff]
  %v5956 = vld [vmem:[#allocation2 + $0x190] sm:$0xff]
  %v5957 = vld [vmem:[#allocation2 + $0x198] sm:$0xff]
  %v5958 = vld [vmem:[#allocation2 + $0x1a0] sm:$0xff]
  %v5959 = vld [vmem:[#allocation2 + $0x1a8] sm:$0xff]
  %v5960 = vld [vmem:[#allocation2 + $0x1b0] sm:$0xff]
  %v5961 = vld [vmem:[#allocation2 + $0x1b8] sm:$0xff]
  %v5962 = vld [vmem:[#allocation2 + $0x1c0] sm:$0xff]
  %v5963 = vld [vmem:[#allocation2 + $0x1c8] sm:$0xff]
  %v5964 = vld [vmem:[#allocation2 + $0x1d0] sm:$0xff]
  %v5965 = vld [vmem:[#allocation2 + $0x1d8] sm:$0xff]
  %v5966 = vld [vmem:[#allocation2 + $0x1e0] sm:$0xff]
  %v5967 = vld [vmem:[#allocation2 + $0x1e8] sm:$0xff]
  %v5968 = vld [vmem:[#allocation2 + $0x1f0] sm:$0xff]
  %v5969 = vld [vmem:[#allocation2 + $0x1f8] sm:$0xff]
  %v5970 = vld [vmem:[#allocation2 + $0x200] sm:$0xff]
  %v5971 = vld [vmem:[#allocation2 + $0x208] sm:$0xff]
  %v5972 = vld [vmem:[#allocation2 + $0x210] sm:$0xff]
  %v5973 = vld [vmem:[#allocation2 + $0x218] sm:$0xff]
  %v5974 = vld [vmem:[#allocation2 + $0x220] sm:$0xff]
  %v5975 = vld [vmem:[#allocation2 + $0x228] sm:$0xff]
  %v5976 = vld [vmem:[#allocation2 + $0x230] sm:$0xff]
  %v5977 = vld [vmem:[#allocation2 + $0x238] sm:$0xff]
  %v5978 = vld [vmem:[#allocation2 + $0x240] sm:$0xff]
  %v5979 = vld [vmem:[#allocation2 + $0x248] sm:$0xff]
  %v5980 = vld [vmem:[#allocation2 + $0x250] sm:$0xff]
  %v5981 = vld [vmem:[#allocation2 + $0x258] sm:$0xff]
  %v5982 = vld [vmem:[#allocation2 + $0x260] sm:$0xff]
  %v5983 = vld [vmem:[#allocation2 + $0x268] sm:$0xff]
  %v5984 = vld [vmem:[#allocation2 + $0x270] sm:$0xff]
  %v5985 = vld [vmem:[#allocation2 + $0x278] sm:$0xff]
  %v5986 = vld [vmem:[#allocation2 + $0x280] sm:$0xff]
  %v5987 = vld [vmem:[#allocation2 + $0x288] sm:$0xff]
  %v5988 = vld [vmem:[#allocation2 + $0x290] sm:$0xff]
  %v5989 = vld [vmem:[#allocation2 + $0x298] sm:$0xff]
  %v5990 = vld [vmem:[#allocation2 + $0x2a0] sm:$0xff]
  %v5991 = vld [vmem:[#allocation2 + $0x2a8] sm:$0xff]
  %v5992 = vld [vmem:[#allocation2 + $0x2b0] sm:$0xff]
  %v5993 = vld [vmem:[#allocation2 + $0x2b8] sm:$0xff]
  %v5994 = vld [vmem:[#allocation2 + $0x2c0] sm:$0xff]
  %v5995 = vld [vmem:[#allocation2 + $0x2c8] sm:$0xff]
  %v5996 = vld [vmem:[#allocation2 + $0x2d0] sm:$0xff]
  %v5997 = vld [vmem:[#allocation2 + $0x2d8] sm:$0xff]
  %v5998 = vld [vmem:[#allocation2 + $0x2e0] sm:$0xff]
  %v5999 = vld [vmem:[#allocation2 + $0x2e8] sm:$0xff]
  %v6000 = vld [vmem:[#allocation2 + $0x2f0] sm:$0xff]
  %v6001 = vld [vmem:[#allocation2 + $0x2f8] sm:$0xff]
  %v6002 = vld [vmem:[#allocation2 + $0x300] sm:$0xff]
  %v6003 = vld [vmem:[#allocation2 + $0x308] sm:$0xff]
  %v6004 = vld [vmem:[#allocation2 + $0x310] sm:$0xff]
  %v6005 = vld [vmem:[#allocation2 + $0x318] sm:$0xff]
  %v6006 = vld [vmem:[#allocation2 + $0x320] sm:$0xff]
  %v6007 = vld [vmem:[#allocation2 + $0x328] sm:$0xff]
  %v6008 = vld [vmem:[#allocation2 + $0x330] sm:$0xff]
  %v6009 = vld [vmem:[#allocation2 + $0x338] sm:$0xff]
  %v6010 = vld [vmem:[#allocation2 + $0x340] sm:$0xff]
  %v6011 = vld [vmem:[#allocation2 + $0x348] sm:$0xff]
  %v6012 = vld [vmem:[#allocation2 + $0x350] sm:$0xff]
  %v6013 = vld [vmem:[#allocation2 + $0x358] sm:$0xff]
  %v6014 = vld [vmem:[#allocation2 + $0x360] sm:$0xff]
  %v6015 = vld [vmem:[#allocation2 + $0x368] sm:$0xff]
  %v6016 = vld [vmem:[#allocation2 + $0x370] sm:$0xff]
  %v6017 = vld [vmem:[#allocation2 + $0x378] sm:$0xff]
  %v6018 = vld [vmem:[#allocation2 + $0x380] sm:$0xff]
  %v6019 = vld [vmem:[#allocation2 + $0x388] sm:$0xff]
  %v6020 = vld [vmem:[#allocation2 + $0x390] sm:$0xff]
  %v6021 = vld [vmem:[#allocation2 + $0x398] sm:$0xff]
  %v6022 = vld [vmem:[#allocation2 + $0x3a0] sm:$0xff]
  %v6023 = vld [vmem:[#allocation2 + $0x3a8] sm:$0xff]
  %v6024 = vld [vmem:[#allocation2 + $0x3b0] sm:$0xff]
  %v6025 = vld [vmem:[#allocation2 + $0x3b8] sm:$0xff]
  %v6026 = vld [vmem:[#allocation2 + $0x3c0] sm:$0xff]
  %v6027 = vld [vmem:[#allocation2 + $0x3c8] sm:$0xff]
  %v6028 = vld [vmem:[#allocation2 + $0x3d0] sm:$0xff]
  %v6029 = vld [vmem:[#allocation2 + $0x3d8] sm:$0xff]
  %v6030 = vld [vmem:[#allocation2 + $0x3e0] sm:$0xff]
  %v6031 = vld [vmem:[#allocation2 + $0x3e8] sm:$0xff]
  %v6032 = vld [vmem:[#allocation2 + $0x3f0] sm:$0xff]
  %v6033 = vld [vmem:[#allocation2 + $0x3f8] sm:$0xff]
  %v6162 = vunpack.c.l.b16 %v5906
  %v6163 = vunpack.c.h.b16 %v5906
  %v6164 = vunpack.c.l.b16 %v5907
  %v6165 = vunpack.c.h.b16 %v5907
  %v6166 = vunpack.c.l.b16 %v5908
  %v6167 = vunpack.c.h.b16 %v5908
  %v6168 = vunpack.c.l.b16 %v5909
  %v6169 = vunpack.c.h.b16 %v5909
  %v6170 = vunpack.c.l.b16 %v5910
  %v6171 = vunpack.c.h.b16 %v5910
  %v6172 = vunpack.c.l.b16 %v5911
  %v6173 = vunpack.c.h.b16 %v5911
  %v6174 = vunpack.c.l.b16 %v5912
  %v6175 = vunpack.c.h.b16 %v5912
  %v6176 = vunpack.c.l.b16 %v5913
  %v6177 = vunpack.c.h.b16 %v5913
  %v6178 = vunpack.c.l.b16 %v5914
  %v6179 = vunpack.c.h.b16 %v5914
  %v6180 = vunpack.c.l.b16 %v5915
  %v6181 = vunpack.c.h.b16 %v5915
  %v6182 = vunpack.c.l.b16 %v5916
  %v6183 = vunpack.c.h.b16 %v5916
  %v6184 = vunpack.c.l.b16 %v5917
  %v6185 = vunpack.c.h.b16 %v5917
  %v6186 = vunpack.c.l.b16 %v5918
  %v6187 = vunpack.c.h.b16 %v5918
  %v6188 = vunpack.c.l.b16 %v5919
  %v6189 = vunpack.c.h.b16 %v5919
  %v6190 = vunpack.c.l.b16 %v5920
  %v6191 = vunpack.c.h.b16 %v5920
  %v6192 = vunpack.c.l.b16 %v5921
  %v6193 = vunpack.c.h.b16 %v5921
  %v6194 = vunpack.c.l.b16 %v5922
  %v6195 = vunpack.c.h.b16 %v5922
  %v6196 = vunpack.c.l.b16 %v5923
  %v6197 = vunpack.c.h.b16 %v5923
  %v6198 = vunpack.c.l.b16 %v5924
  %v6199 = vunpack.c.h.b16 %v5924
  %v6200 = vunpack.c.l.b16 %v5925
  %v6201 = vunpack.c.h.b16 %v5925
  %v6202 = vunpack.c.l.b16 %v5926
  %v6203 = vunpack.c.h.b16 %v5926
  %v6204 = vunpack.c.l.b16 %v5927
  %v6205 = vunpack.c.h.b16 %v5927
  %v6206 = vunpack.c.l.b16 %v5928
  %v6207 = vunpack.c.h.b16 %v5928
  %v6208 = vunpack.c.l.b16 %v5929
  %v6209 = vunpack.c.h.b16 %v5929
  %v6210 = vunpack.c.l.b16 %v5930
  %v6211 = vunpack.c.h.b16 %v5930
  %v6212 = vunpack.c.l.b16 %v5931
  %v6213 = vunpack.c.h.b16 %v5931
  %v6214 = vunpack.c.l.b16 %v5932
  %v6215 = vunpack.c.h.b16 %v5932
  %v6216 = vunpack.c.l.b16 %v5933
  %v6217 = vunpack.c.h.b16 %v5933
  %v6218 = vunpack.c.l.b16 %v5934
  %v6219 = vunpack.c.h.b16 %v5934
  %v6220 = vunpack.c.l.b16 %v5935
  %v6221 = vunpack.c.h.b16 %v5935
  %v6222 = vunpack.c.l.b16 %v5936
  %v6223 = vunpack.c.h.b16 %v5936
  %v6224 = vunpack.c.l.b16 %v5937
  %v6225 = vunpack.c.h.b16 %v5937
  %v6226 = vunpack.c.l.b16 %v5938
  %v6227 = vunpack.c.h.b16 %v5938
  %v6228 = vunpack.c.l.b16 %v5939
  %v6229 = vunpack.c.h.b16 %v5939
  %v6230 = vunpack.c.l.b16 %v5940
  %v6231 = vunpack.c.h.b16 %v5940
  %v6232 = vunpack.c.l.b16 %v5941
  %v6233 = vunpack.c.h.b16 %v5941
  %v6234 = vunpack.c.l.b16 %v5942
  %v6235 = vunpack.c.h.b16 %v5942
  %v6236 = vunpack.c.l.b16 %v5943
  %v6237 = vunpack.c.h.b16 %v5943
  %v6238 = vunpack.c.l.b16 %v5944
  %v6239 = vunpack.c.h.b16 %v5944
  %v6240 = vunpack.c.l.b16 %v5945
  %v6241 = vunpack.c.h.b16 %v5945
  %v6242 = vunpack.c.l.b16 %v5946
  %v6243 = vunpack.c.h.b16 %v5946
  %v6244 = vunpack.c.l.b16 %v5947
  %v6245 = vunpack.c.h.b16 %v5947
  %v6246 = vunpack.c.l.b16 %v5948
  %v6247 = vunpack.c.h.b16 %v5948
  %v6248 = vunpack.c.l.b16 %v5949
  %v6249 = vunpack.c.h.b16 %v5949
  %v6250 = vunpack.c.l.b16 %v5950
  %v6251 = vunpack.c.h.b16 %v5950
  %v6252 = vunpack.c.l.b16 %v5951
  %v6253 = vunpack.c.h.b16 %v5951
  %v6254 = vunpack.c.l.b16 %v5952
  %v6255 = vunpack.c.h.b16 %v5952
  %v6256 = vunpack.c.l.b16 %v5953
  %v6257 = vunpack.c.h.b16 %v5953
  %v6258 = vunpack.c.l.b16 %v5954
  %v6259 = vunpack.c.h.b16 %v5954
  %v6260 = vunpack.c.l.b16 %v5955
  %v6261 = vunpack.c.h.b16 %v5955
  %v6262 = vunpack.c.l.b16 %v5956
  %v6263 = vunpack.c.h.b16 %v5956
  %v6264 = vunpack.c.l.b16 %v5957
  %v6265 = vunpack.c.h.b16 %v5957
  %v6266 = vunpack.c.l.b16 %v5958
  %v6267 = vunpack.c.h.b16 %v5958
  %v6268 = vunpack.c.l.b16 %v5959
  %v6269 = vunpack.c.h.b16 %v5959
  %v6270 = vunpack.c.l.b16 %v5960
  %v6271 = vunpack.c.h.b16 %v5960
  %v6272 = vunpack.c.l.b16 %v5961
  %v6273 = vunpack.c.h.b16 %v5961
  %v6274 = vunpack.c.l.b16 %v5962
  %v6275 = vunpack.c.h.b16 %v5962
  %v6276 = vunpack.c.l.b16 %v5963
  %v6277 = vunpack.c.h.b16 %v5963
  %v6278 = vunpack.c.l.b16 %v5964
  %v6279 = vunpack.c.h.b16 %v5964
  %v6280 = vunpack.c.l.b16 %v5965
  %v6281 = vunpack.c.h.b16 %v5965
  %v6282 = vunpack.c.l.b16 %v5966
  %v6283 = vunpack.c.h.b16 %v5966
  %v6284 = vunpack.c.l.b16 %v5967
  %v6285 = vunpack.c.h.b16 %v5967
  %v6286 = vunpack.c.l.b16 %v5968
  %v6287 = vunpack.c.h.b16 %v5968
  %v6288 = vunpack.c.l.b16 %v5969
  %v6289 = vunpack.c.h.b16 %v5969
  %v6290 = vunpack.c.l.b16 %v5970
  %v6291 = vunpack.c.h.b16 %v5970
  %v6292 = vunpack.c.l.b16 %v5971
  %v6293 = vunpack.c.h.b16 %v5971
  %v6294 = vunpack.c.l.b16 %v5972
  %v6295 = vunpack.c.h.b16 %v5972
  %v6296 = vunpack.c.l.b16 %v5973
  %v6297 = vunpack.c.h.b16 %v5973
  %v6298 = vunpack.c.l.b16 %v5974
  %v6299 = vunpack.c.h.b16 %v5974
  %v6300 = vunpack.c.l.b16 %v5975
  %v6301 = vunpack.c.h.b16 %v5975
  %v6302 = vunpack.c.l.b16 %v5976
  %v6303 = vunpack.c.h.b16 %v5976
  %v6304 = vunpack.c.l.b16 %v5977
  %v6305 = vunpack.c.h.b16 %v5977
  %v6306 = vunpack.c.l.b16 %v5978
  %v6307 = vunpack.c.h.b16 %v5978
  %v6308 = vunpack.c.l.b16 %v5979
  %v6309 = vunpack.c.h.b16 %v5979
  %v6310 = vunpack.c.l.b16 %v5980
  %v6311 = vunpack.c.h.b16 %v5980
  %v6312 = vunpack.c.l.b16 %v5981
  %v6313 = vunpack.c.h.b16 %v5981
  %v6314 = vunpack.c.l.b16 %v5982
  %v6315 = vunpack.c.h.b16 %v5982
  %v6316 = vunpack.c.l.b16 %v5983
  %v6317 = vunpack.c.h.b16 %v5983
  %v6318 = vunpack.c.l.b16 %v5984
  %v6319 = vunpack.c.h.b16 %v5984
  %v6320 = vunpack.c.l.b16 %v5985
  %v6321 = vunpack.c.h.b16 %v5985
  %v6322 = vunpack.c.l.b16 %v5986
  %v6323 = vunpack.c.h.b16 %v5986
  %v6324 = vunpack.c.l.b16 %v5987
  %v6325 = vunpack.c.h.b16 %v5987
  %v6326 = vunpack.c.l.b16 %v5988
  %v6327 = vunpack.c.h.b16 %v5988
  %v6328 = vunpack.c.l.b16 %v5989
  %v6329 = vunpack.c.h.b16 %v5989
  %v6330 = vunpack.c.l.b16 %v5990
  %v6331 = vunpack.c.h.b16 %v5990
  %v6332 = vunpack.c.l.b16 %v5991
  %v6333 = vunpack.c.h.b16 %v5991
  %v6334 = vunpack.c.l.b16 %v5992
  %v6335 = vunpack.c.h.b16 %v5992
  %v6336 = vunpack.c.l.b16 %v5993
  %v6337 = vunpack.c.h.b16 %v5993
  %v6338 = vunpack.c.l.b16 %v5994
  %v6339 = vunpack.c.h.b16 %v5994
  %v6340 = vunpack.c.l.b16 %v5995
  %v6341 = vunpack.c.h.b16 %v5995
  %v6342 = vunpack.c.l.b16 %v5996
  %v6343 = vunpack.c.h.b16 %v5996
  %v6344 = vunpack.c.l.b16 %v5997
  %v6345 = vunpack.c.h.b16 %v5997
  %v6346 = vunpack.c.l.b16 %v5998
  %v6347 = vunpack.c.h.b16 %v5998
  %v6348 = vunpack.c.l.b16 %v5999
  %v6349 = vunpack.c.h.b16 %v5999
  %v6350 = vunpack.c.l.b16 %v6000
  %v6351 = vunpack.c.h.b16 %v6000
  %v6352 = vunpack.c.l.b16 %v6001
  %v6353 = vunpack.c.h.b16 %v6001
  %v6354 = vunpack.c.l.b16 %v6002
  %v6355 = vunpack.c.h.b16 %v6002
  %v6356 = vunpack.c.l.b16 %v6003
  %v6357 = vunpack.c.h.b16 %v6003
  %v6358 = vunpack.c.l.b16 %v6004
  %v6359 = vunpack.c.h.b16 %v6004
  %v6360 = vunpack.c.l.b16 %v6005
  %v6361 = vunpack.c.h.b16 %v6005
  %v6362 = vunpack.c.l.b16 %v6006
  %v6363 = vunpack.c.h.b16 %v6006
  %v6364 = vunpack.c.l.b16 %v6007
  %v6365 = vunpack.c.h.b16 %v6007
  %v6366 = vunpack.c.l.b16 %v6008
  %v6367 = vunpack.c.h.b16 %v6008
  %v6368 = vunpack.c.l.b16 %v6009
  %v6369 = vunpack.c.h.b16 %v6009
  %v6370 = vunpack.c.l.b16 %v6010
  %v6371 = vunpack.c.h.b16 %v6010
  %v6372 = vunpack.c.l.b16 %v6011
  %v6373 = vunpack.c.h.b16 %v6011
  %v6374 = vunpack.c.l.b16 %v6012
  %v6375 = vunpack.c.h.b16 %v6012
  %v6376 = vunpack.c.l.b16 %v6013
  %v6377 = vunpack.c.h.b16 %v6013
  %v6378 = vunpack.c.l.b16 %v6014
  %v6379 = vunpack.c.h.b16 %v6014
  %v6380 = vunpack.c.l.b16 %v6015
  %v6381 = vunpack.c.h.b16 %v6015
  %v6382 = vunpack.c.l.b16 %v6016
  %v6383 = vunpack.c.h.b16 %v6016
  %v6384 = vunpack.c.l.b16 %v6017
  %v6385 = vunpack.c.h.b16 %v6017
  %v6386 = vunpack.c.l.b16 %v6018
  %v6387 = vunpack.c.h.b16 %v6018
  %v6388 = vunpack.c.l.b16 %v6019
  %v6389 = vunpack.c.h.b16 %v6019
  %v6390 = vunpack.c.l.b16 %v6020
  %v6391 = vunpack.c.h.b16 %v6020
  %v6392 = vunpack.c.l.b16 %v6021
  %v6393 = vunpack.c.h.b16 %v6021
  %v6394 = vunpack.c.l.b16 %v6022
  %v6395 = vunpack.c.h.b16 %v6022
  %v6396 = vunpack.c.l.b16 %v6023
  %v6397 = vunpack.c.h.b16 %v6023
  %v6398 = vunpack.c.l.b16 %v6024
  %v6399 = vunpack.c.h.b16 %v6024
  %v6400 = vunpack.c.l.b16 %v6025
  %v6401 = vunpack.c.h.b16 %v6025
  %v6402 = vunpack.c.l.b16 %v6026
  %v6403 = vunpack.c.h.b16 %v6026
  %v6404 = vunpack.c.l.b16 %v6027
  %v6405 = vunpack.c.h.b16 %v6027
  %v6406 = vunpack.c.l.b16 %v6028
  %v6407 = vunpack.c.h.b16 %v6028
  %v6408 = vunpack.c.l.b16 %v6029
  %v6409 = vunpack.c.h.b16 %v6029
  %v6410 = vunpack.c.l.b16 %v6030
  %v6411 = vunpack.c.h.b16 %v6030
  %v6412 = vunpack.c.l.b16 %v6031
  %v6413 = vunpack.c.h.b16 %v6031
  %v6414 = vunpack.c.l.b16 %v6032
  %v6415 = vunpack.c.h.b16 %v6032
  %v6416 = vunpack.c.l.b16 %v6033
  %v6417 = vunpack.c.h.b16 %v6033
  %v6418 = vpack.c.b16 %v6166, %v6162
  %v6419 = vpack.c.b16 %v6167, %v6163
  %v6420 = vpack.c.b16 %v6168, %v6164
  %v6421 = vpack.c.b16 %v6169, %v6165
  %v6422 = vpack.c.b16 %v6174, %v6170
  %v6423 = vpack.c.b16 %v6175, %v6171
  %v6424 = vpack.c.b16 %v6176, %v6172
  %v6425 = vpack.c.b16 %v6177, %v6173
  %v6426 = vpack.c.b16 %v6182, %v6178
  %v6427 = vpack.c.b16 %v6183, %v6179
  %v6428 = vpack.c.b16 %v6184, %v6180
  %v6429 = vpack.c.b16 %v6185, %v6181
  %v6430 = vpack.c.b16 %v6190, %v6186
  %v6431 = vpack.c.b16 %v6191, %v6187
  %v6432 = vpack.c.b16 %v6192, %v6188
  %v6433 = vpack.c.b16 %v6193, %v6189
  %v6434 = vpack.c.b16 %v6198, %v6194
  %v6435 = vpack.c.b16 %v6199, %v6195
  %v6436 = vpack.c.b16 %v6200, %v6196
  %v6437 = vpack.c.b16 %v6201, %v6197
  %v6438 = vpack.c.b16 %v6206, %v6202
  %v6439 = vpack.c.b16 %v6207, %v6203
  %v6440 = vpack.c.b16 %v6208, %v6204
  %v6441 = vpack.c.b16 %v6209, %v6205
  %v6442 = vpack.c.b16 %v6214, %v6210
  %v6443 = vpack.c.b16 %v6215, %v6211
  %v6444 = vpack.c.b16 %v6216, %v6212
  %v6445 = vpack.c.b16 %v6217, %v6213
  %v6446 = vpack.c.b16 %v6222, %v6218
  %v6447 = vpack.c.b16 %v6223, %v6219
  %v6448 = vpack.c.b16 %v6224, %v6220
  %v6449 = vpack.c.b16 %v6225, %v6221
  %v6450 = vpack.c.b16 %v6230, %v6226
  %v6451 = vpack.c.b16 %v6231, %v6227
  %v6452 = vpack.c.b16 %v6232, %v6228
  %v6453 = vpack.c.b16 %v6233, %v6229
  %v6454 = vpack.c.b16 %v6238, %v6234
  %v6455 = vpack.c.b16 %v6239, %v6235
  %v6456 = vpack.c.b16 %v6240, %v6236
  %v6457 = vpack.c.b16 %v6241, %v6237
  %v6458 = vpack.c.b16 %v6246, %v6242
  %v6459 = vpack.c.b16 %v6247, %v6243
  %v6460 = vpack.c.b16 %v6248, %v6244
  %v6461 = vpack.c.b16 %v6249, %v6245
  %v6462 = vpack.c.b16 %v6254, %v6250
  %v6463 = vpack.c.b16 %v6255, %v6251
  %v6464 = vpack.c.b16 %v6256, %v6252
  %v6465 = vpack.c.b16 %v6257, %v6253
  %v6466 = vpack.c.b16 %v6262, %v6258
  %v6467 = vpack.c.b16 %v6263, %v6259
  %v6468 = vpack.c.b16 %v6264, %v6260
  %v6469 = vpack.c.b16 %v6265, %v6261
  %v6470 = vpack.c.b16 %v6270, %v6266
  %v6471 = vpack.c.b16 %v6271, %v6267
  %v6472 = vpack.c.b16 %v6272, %v6268
  %v6473 = vpack.c.b16 %v6273, %v6269
  %v6474 = vpack.c.b16 %v6278, %v6274
  %v6475 = vpack.c.b16 %v6279, %v6275
  %v6476 = vpack.c.b16 %v6280, %v6276
  %v6477 = vpack.c.b16 %v6281, %v6277
  %v6478 = vpack.c.b16 %v6286, %v6282
  %v6479 = vpack.c.b16 %v6287, %v6283
  %v6480 = vpack.c.b16 %v6288, %v6284
  %v6481 = vpack.c.b16 %v6289, %v6285
  %v6482 = vpack.c.b16 %v6294, %v6290
  %v6483 = vpack.c.b16 %v6295, %v6291
  %v6484 = vpack.c.b16 %v6296, %v6292
  %v6485 = vpack.c.b16 %v6297, %v6293
  %v6486 = vpack.c.b16 %v6302, %v6298
  %v6487 = vpack.c.b16 %v6303, %v6299
  %v6488 = vpack.c.b16 %v6304, %v6300
  %v6489 = vpack.c.b16 %v6305, %v6301
  %v6490 = vpack.c.b16 %v6310, %v6306
  %v6491 = vpack.c.b16 %v6311, %v6307
  %v6492 = vpack.c.b16 %v6312, %v6308
  %v6493 = vpack.c.b16 %v6313, %v6309
  %v6494 = vpack.c.b16 %v6318, %v6314
  %v6495 = vpack.c.b16 %v6319, %v6315
  %v6496 = vpack.c.b16 %v6320, %v6316
  %v6497 = vpack.c.b16 %v6321, %v6317
  %v6498 = vpack.c.b16 %v6326, %v6322
  %v6499 = vpack.c.b16 %v6327, %v6323
  %v6500 = vpack.c.b16 %v6328, %v6324
  %v6501 = vpack.c.b16 %v6329, %v6325
  %v6502 = vpack.c.b16 %v6334, %v6330
  %v6503 = vpack.c.b16 %v6335, %v6331
  %v6504 = vpack.c.b16 %v6336, %v6332
  %v6505 = vpack.c.b16 %v6337, %v6333
  %v6506 = vpack.c.b16 %v6342, %v6338
  %v6507 = vpack.c.b16 %v6343, %v6339
  %v6508 = vpack.c.b16 %v6344, %v6340
  %v6509 = vpack.c.b16 %v6345, %v6341
  %v6510 = vpack.c.b16 %v6350, %v6346
  %v6511 = vpack.c.b16 %v6351, %v6347
  %v6512 = vpack.c.b16 %v6352, %v6348
  %v6513 = vpack.c.b16 %v6353, %v6349
  %v6514 = vpack.c.b16 %v6358, %v6354
  %v6515 = vpack.c.b16 %v6359, %v6355
  %v6516 = vpack.c.b16 %v6360, %v6356
  %v6517 = vpack.c.b16 %v6361, %v6357
  %v6518 = vpack.c.b16 %v6366, %v6362
  %v6519 = vpack.c.b16 %v6367, %v6363
  %v6520 = vpack.c.b16 %v6368, %v6364
  %v6521 = vpack.c.b16 %v6369, %v6365
  %v6522 = vpack.c.b16 %v6374, %v6370
  %v6523 = vpack.c.b16 %v6375, %v6371
  %v6524 = vpack.c.b16 %v6376, %v6372
  %v6525 = vpack.c.b16 %v6377, %v6373
  %v6526 = vpack.c.b16 %v6382, %v6378
  %v6527 = vpack.c.b16 %v6383, %v6379
  %v6528 = vpack.c.b16 %v6384, %v6380
  %v6529 = vpack.c.b16 %v6385, %v6381
  %v6530 = vpack.c.b16 %v6390, %v6386
  %v6531 = vpack.c.b16 %v6391, %v6387
  %v6532 = vpack.c.b16 %v6392, %v6388
  %v6533 = vpack.c.b16 %v6393, %v6389
  %v6534 = vpack.c.b16 %v6398, %v6394
  %v6535 = vpack.c.b16 %v6399, %v6395
  %v6536 = vpack.c.b16 %v6400, %v6396
  %v6537 = vpack.c.b16 %v6401, %v6397
  %v6538 = vpack.c.b16 %v6406, %v6402
  %v6539 = vpack.c.b16 %v6407, %v6403
  %v6540 = vpack.c.b16 %v6408, %v6404
  %v6541 = vpack.c.b16 %v6409, %v6405
  %v6542 = vpack.c.b16 %v6414, %v6410
  %v6543 = vpack.c.b16 %v6415, %v6411
  %v6544 = vpack.c.b16 %v6416, %v6412
  %v6545 = vpack.c.b16 %v6417, %v6413
  %6674 = vmatpush.bf16.msra.mxu0 %v6446
  %6675 = vmatpush.bf16.msra.mxu0 %v6442
  %6676 = vmatpush.bf16.msra.mxu0 %v6438
  %6677 = vmatpush.bf16.msra.mxu0 %v6434
  %6678 = vmatpush.bf16.msra.mxu0 %v6430
  %6679 = vmatpush.bf16.msra.mxu0 %v6426
  %6680 = vmatpush.bf16.msra.mxu0 %v6422
  %6681 = vmatpush.bf16.msra.mxu0 %v6418
  %6682 = vmatmul.bf16.gmra.mxu0 %v5898
  %v6683 = vpop.f32.mrf.mxu0
  %v6684 = vadd.f32 0.0, %v6683
  %v6685 = vpop.f32.mrf.mxu0
  %v6686 = vadd.f32 0.0, %v6685
  %6687 = vmatmul.bf16.gmra.mxu0 %v5902
  %v6688 = vpop.f32.mrf.mxu0
  %v6689 = vadd.f32 0.0, %v6688
  %v6690 = vpop.f32.mrf.mxu0
  %v6691 = vadd.f32 0.0, %v6690
  %6692 = vdwg.mxu0
  %6693 = vmatpush.bf16.msra.mxu0 %v6478
  %6694 = vmatpush.bf16.msra.mxu0 %v6474
  %6695 = vmatpush.bf16.msra.mxu0 %v6470
  %6696 = vmatpush.bf16.msra.mxu0 %v6466
  %6697 = vmatpush.bf16.msra.mxu0 %v6462
  %6698 = vmatpush.bf16.msra.mxu0 %v6458
  %6699 = vmatpush.bf16.msra.mxu0 %v6454
  %6700 = vmatpush.bf16.msra.mxu0 %v6450
  %6701 = vmatmul.bf16.gmra.mxu0 %v5899
  %v6702 = vpop.f32.mrf.mxu0
  %v6703 = vadd.f32 %v6684, %v6702
  %v6704 = vpop.f32.mrf.mxu0
  %v6705 = vadd.f32 %v6686, %v6704
  %6706 = vmatmul.bf16.gmra.mxu0 %v5903
  %v6707 = vpop.f32.mrf.mxu0
  %v6708 = vadd.f32 %v6689, %v6707
  %v6709 = vpop.f32.mrf.mxu0
  %v6710 = vadd.f32 %v6691, %v6709
  %6711 = vdwg.mxu0
  %6712 = vmatpush.bf16.msra.mxu0 %v6510
  %6713 = vmatpush.bf16.msra.mxu0 %v6506
  %6714 = vmatpush.bf16.msra.mxu0 %v6502
  %6715 = vmatpush.bf16.msra.mxu0 %v6498
  %6716 = vmatpush.bf16.msra.mxu0 %v6494
  %6717 = vmatpush.bf16.msra.mxu0 %v6490
  %6718 = vmatpush.bf16.msra.mxu0 %v6486
  %6719 = vmatpush.bf16.msra.mxu0 %v6482
  %6720 = vmatmul.bf16.gmra.mxu0 %v5900
  %v6721 = vpop.f32.mrf.mxu0
  %v6722 = vadd.f32 %v6703, %v6721
  %v6723 = vpop.f32.mrf.mxu0
  %v6724 = vadd.f32 %v6705, %v6723
  %6725 = vmatmul.bf16.gmra.mxu0 %v5904
  %v6726 = vpop.f32.mrf.mxu0
  %v6727 = vadd.f32 %v6708, %v6726
  %v6728 = vpop.f32.mrf.mxu0
  %v6729 = vadd.f32 %v6710, %v6728
  %6730 = vdwg.mxu0
  %6731 = vmatpush.bf16.msra.mxu0 %v6542
  %6732 = vmatpush.bf16.msra.mxu0 %v6538
  %6733 = vmatpush.bf16.msra.mxu0 %v6534
  %6734 = vmatpush.bf16.msra.mxu0 %v6530
  %6735 = vmatpush.bf16.msra.mxu0 %v6526
  %6736 = vmatpush.bf16.msra.mxu0 %v6522
  %6737 = vmatpush.bf16.msra.mxu0 %v6518
  %6738 = vmatpush.bf16.msra.mxu0 %v6514
  %6739 = vmatmul.bf16.gmra.mxu0 %v5901
  %v6740 = vpop.f32.mrf.mxu0
  %v6741 = vadd.f32 %v6722, %v6740
  %v6742 = vpop.f32.mrf.mxu0
  %v6743 = vadd.f32 %v6724, %v6742
  %6744 = vmatmul.bf16.gmra.mxu0 %v5905
  %v6745 = vpop.f32.mrf.mxu0
  %v6746 = vadd.f32 %v6727, %v6745
  %v6747 = vpop.f32.mrf.mxu0
  %v6748 = vadd.f32 %v6729, %v6747
  %6749 = vdwg.mxu0
  %6750 = vmatpush.bf16.msra.mxu0 %v6447
  %6751 = vmatpush.bf16.msra.mxu0 %v6443
  %6752 = vmatpush.bf16.msra.mxu0 %v6439
  %6753 = vmatpush.bf16.msra.mxu0 %v6435
  %6754 = vmatpush.bf16.msra.mxu0 %v6431
  %6755 = vmatpush.bf16.msra.mxu0 %v6427
  %6756 = vmatpush.bf16.msra.mxu0 %v6423
  %6757 = vmatpush.bf16.msra.mxu0 %v6419
  %6758 = vmatmul.bf16.gmra.mxu0 %v5898
  %v6759 = vpop.f32.mrf.mxu0
  %v6760 = vadd.f32 0.0, %v6759
  %v6761 = vpop.f32.mrf.mxu0
  %v6762 = vadd.f32 0.0, %v6761
  %6763 = vmatmul.bf16.gmra.mxu0 %v5902
  %v6764 = vpop.f32.mrf.mxu0
  %v6765 = vadd.f32 0.0, %v6764
  %v6766 = vpop.f32.mrf.mxu0
  %v6767 = vadd.f32 0.0, %v6766
  %6768 = vdwg.mxu0
  %6769 = vmatpush.bf16.msra.mxu0 %v6479
  %6770 = vmatpush.bf16.msra.mxu0 %v6475
  %6771 = vmatpush.bf16.msra.mxu0 %v6471
  %6772 = vmatpush.bf16.msra.mxu0 %v6467
  %6773 = vmatpush.bf16.msra.mxu0 %v6463
  %6774 = vmatpush.bf16.msra.mxu0 %v6459
  %6775 = vmatpush.bf16.msra.mxu0 %v6455
  %6776 = vmatpush.bf16.msra.mxu0 %v6451
  %6777 = vmatmul.bf16.gmra.mxu0 %v5899
  %v6778 = vpop.f32.mrf.mxu0
  %v6779 = vadd.f32 %v6760, %v6778
  %v6780 = vpop.f32.mrf.mxu0
  %v6781 = vadd.f32 %v6762, %v6780
  %6782 = vmatmul.bf16.gmra.mxu0 %v5903
  %v6783 = vpop.f32.mrf.mxu0
  %v6784 = vadd.f32 %v6765, %v6783
  %v6785 = vpop.f32.mrf.mxu0
  %v6786 = vadd.f32 %v6767, %v6785
  %6787 = vdwg.mxu0
  %6788 = vmatpush.bf16.msra.mxu0 %v6511
  %6789 = vmatpush.bf16.msra.mxu0 %v6507
  %6790 = vmatpush.bf16.msra.mxu0 %v6503
  %6791 = vmatpush.bf16.msra.mxu0 %v6499
  %6792 = vmatpush.bf16.msra.mxu0 %v6495
  %6793 = vmatpush.bf16.msra.mxu0 %v6491
  %6794 = vmatpush.bf16.msra.mxu0 %v6487
  %6795 = vmatpush.bf16.msra.mxu0 %v6483
  %6796 = vmatmul.bf16.gmra.mxu0 %v5900
  %v6797 = vpop.f32.mrf.mxu0
  %v6798 = vadd.f32 %v6779, %v6797
  %v6799 = vpop.f32.mrf.mxu0
  %v6800 = vadd.f32 %v6781, %v6799
  %6801 = vmatmul.bf16.gmra.mxu0 %v5904
  %v6802 = vpop.f32.mrf.mxu0
  %v6803 = vadd.f32 %v6784, %v6802
  %v6804 = vpop.f32.mrf.mxu0
  %v6805 = vadd.f32 %v6786, %v6804
  %6806 = vdwg.mxu0
  %6807 = vmatpush.bf16.msra.mxu0 %v6543
  %6808 = vmatpush.bf16.msra.mxu0 %v6539
  %6809 = vmatpush.bf16.msra.mxu0 %v6535
  %6810 = vmatpush.bf16.msra.mxu0 %v6531
  %6811 = vmatpush.bf16.msra.mxu0 %v6527
  %6812 = vmatpush.bf16.msra.mxu0 %v6523
  %6813 = vmatpush.bf16.msra.mxu0 %v6519
  %6814 = vmatpush.bf16.msra.mxu0 %v6515
  %6815 = vmatmul.bf16.gmra.mxu0 %v5901
  %v6816 = vpop.f32.mrf.mxu0
  %v6817 = vadd.f32 %v6798, %v6816
  %v6818 = vpop.f32.mrf.mxu0
  %v6819 = vadd.f32 %v6800, %v6818
  %6820 = vmatmul.bf16.gmra.mxu0 %v5905
  %v6821 = vpop.f32.mrf.mxu0
  %v6822 = vadd.f32 %v6803, %v6821
  %v6823 = vpop.f32.mrf.mxu0
  %v6824 = vadd.f32 %v6805, %v6823
  %6825 = vdwg.mxu0
  %6826 = vmatpush.bf16.msra.mxu0 %v6448
  %6827 = vmatpush.bf16.msra.mxu0 %v6444
  %6828 = vmatpush.bf16.msra.mxu0 %v6440
  %6829 = vmatpush.bf16.msra.mxu0 %v6436
  %6830 = vmatpush.bf16.msra.mxu0 %v6432
  %6831 = vmatpush.bf16.msra.mxu0 %v6428
  %6832 = vmatpush.bf16.msra.mxu0 %v6424
  %6833 = vmatpush.bf16.msra.mxu0 %v6420
  %6834 = vmatmul.bf16.gmra.mxu0 %v5898
  %v6835 = vpop.f32.mrf.mxu0
  %v6836 = vadd.f32 0.0, %v6835
  %v6837 = vpop.f32.mrf.mxu0
  %v6838 = vadd.f32 0.0, %v6837
  %6839 = vmatmul.bf16.gmra.mxu0 %v5902
  %v6840 = vpop.f32.mrf.mxu0
  %v6841 = vadd.f32 0.0, %v6840
  %v6842 = vpop.f32.mrf.mxu0
  %v6843 = vadd.f32 0.0, %v6842
  %6844 = vdwg.mxu0
  %6845 = vmatpush.bf16.msra.mxu0 %v6480
  %6846 = vmatpush.bf16.msra.mxu0 %v6476
  %6847 = vmatpush.bf16.msra.mxu0 %v6472
  %6848 = vmatpush.bf16.msra.mxu0 %v6468
  %6849 = vmatpush.bf16.msra.mxu0 %v6464
  %6850 = vmatpush.bf16.msra.mxu0 %v6460
  %6851 = vmatpush.bf16.msra.mxu0 %v6456
  %6852 = vmatpush.bf16.msra.mxu0 %v6452
  %6853 = vmatmul.bf16.gmra.mxu0 %v5899
  %v6854 = vpop.f32.mrf.mxu0
  %v6855 = vadd.f32 %v6836, %v6854
  %v6856 = vpop.f32.mrf.mxu0
  %v6857 = vadd.f32 %v6838, %v6856
  %6858 = vmatmul.bf16.gmra.mxu0 %v5903
  %v6859 = vpop.f32.mrf.mxu0
  %v6860 = vadd.f32 %v6841, %v6859
  %v6861 = vpop.f32.mrf.mxu0
  %v6862 = vadd.f32 %v6843, %v6861
  %6863 = vdwg.mxu0
  %6864 = vmatpush.bf16.msra.mxu0 %v6512
  %6865 = vmatpush.bf16.msra.mxu0 %v6508
  %6866 = vmatpush.bf16.msra.mxu0 %v6504
  %6867 = vmatpush.bf16.msra.mxu0 %v6500
  %6868 = vmatpush.bf16.msra.mxu0 %v6496
  %6869 = vmatpush.bf16.msra.mxu0 %v6492
  %6870 = vmatpush.bf16.msra.mxu0 %v6488
  %6871 = vmatpush.bf16.msra.mxu0 %v6484
  %6872 = vmatmul.bf16.gmra.mxu0 %v5900
  %v6873 = vpop.f32.mrf.mxu0
  %v6874 = vadd.f32 %v6855, %v6873
  %v6875 = vpop.f32.mrf.mxu0
  %v6876 = vadd.f32 %v6857, %v6875
  %6877 = vmatmul.bf16.gmra.mxu0 %v5904
  %v6878 = vpop.f32.mrf.mxu0
  %v6879 = vadd.f32 %v6860, %v6878
  %v6880 = vpop.f32.mrf.mxu0
  %v6881 = vadd.f32 %v6862, %v6880
  %6882 = vdwg.mxu0
  %6883 = vmatpush.bf16.msra.mxu0 %v6544
  %6884 = vmatpush.bf16.msra.mxu0 %v6540
  %6885 = vmatpush.bf16.msra.mxu0 %v6536
  %6886 = vmatpush.bf16.msra.mxu0 %v6532
  %6887 = vmatpush.bf16.msra.mxu0 %v6528
  %6888 = vmatpush.bf16.msra.mxu0 %v6524
  %6889 = vmatpush.bf16.msra.mxu0 %v6520
  %6890 = vmatpush.bf16.msra.mxu0 %v6516
  %6891 = vmatmul.bf16.gmra.mxu0 %v5901
  %v6892 = vpop.f32.mrf.mxu0
  %v6893 = vadd.f32 %v6874, %v6892
  %v6894 = vpop.f32.mrf.mxu0
  %v6895 = vadd.f32 %v6876, %v6894
  %6896 = vmatmul.bf16.gmra.mxu0 %v5905
  %v6897 = vpop.f32.mrf.mxu0
  %v6898 = vadd.f32 %v6879, %v6897
  %v6899 = vpop.f32.mrf.mxu0
  %v6900 = vadd.f32 %v6881, %v6899
  %6901 = vdwg.mxu0
  %6902 = vmatpush.bf16.msra.mxu0 %v6449
  %6903 = vmatpush.bf16.msra.mxu0 %v6445
  %6904 = vmatpush.bf16.msra.mxu0 %v6441
  %6905 = vmatpush.bf16.msra.mxu0 %v6437
  %6906 = vmatpush.bf16.msra.mxu0 %v6433
  %6907 = vmatpush.bf16.msra.mxu0 %v6429
  %6908 = vmatpush.bf16.msra.mxu0 %v6425
  %6909 = vmatpush.bf16.msra.mxu0 %v6421
  %6910 = vmatmul.bf16.gmra.mxu0 %v5898
  %v6911 = vpop.f32.mrf.mxu0
  %v6912 = vadd.f32 0.0, %v6911
  %v6913 = vpop.f32.mrf.mxu0
  %v6914 = vadd.f32 0.0, %v6913
  %6915 = vmatmul.bf16.gmra.mxu0 %v5902
  %v6916 = vpop.f32.mrf.mxu0
  %v6917 = vadd.f32 0.0, %v6916
  %v6918 = vpop.f32.mrf.mxu0
  %v6919 = vadd.f32 0.0, %v6918
  %6920 = vdwg.mxu0
  %6921 = vmatpush.bf16.msra.mxu0 %v6481
  %6922 = vmatpush.bf16.msra.mxu0 %v6477
  %6923 = vmatpush.bf16.msra.mxu0 %v6473
  %6924 = vmatpush.bf16.msra.mxu0 %v6469
  %6925 = vmatpush.bf16.msra.mxu0 %v6465
  %6926 = vmatpush.bf16.msra.mxu0 %v6461
  %6927 = vmatpush.bf16.msra.mxu0 %v6457
  %6928 = vmatpush.bf16.msra.mxu0 %v6453
  %6929 = vmatmul.bf16.gmra.mxu0 %v5899
  %v6930 = vpop.f32.mrf.mxu0
  %v6931 = vadd.f32 %v6912, %v6930
  %v6932 = vpop.f32.mrf.mxu0
  %v6933 = vadd.f32 %v6914, %v6932
  %6934 = vmatmul.bf16.gmra.mxu0 %v5903
  %v6935 = vpop.f32.mrf.mxu0
  %v6936 = vadd.f32 %v6917, %v6935
  %v6937 = vpop.f32.mrf.mxu0
  %v6938 = vadd.f32 %v6919, %v6937
  %6939 = vdwg.mxu0
  %6940 = vmatpush.bf16.msra.mxu0 %v6513
  %6941 = vmatpush.bf16.msra.mxu0 %v6509
  %6942 = vmatpush.bf16.msra.mxu0 %v6505
  %6943 = vmatpush.bf16.msra.mxu0 %v6501
  %6944 = vmatpush.bf16.msra.mxu0 %v6497
  %6945 = vmatpush.bf16.msra.mxu0 %v6493
  %6946 = vmatpush.bf16.msra.mxu0 %v6489
  %6947 = vmatpush.bf16.msra.mxu0 %v6485
  %6948 = vmatmul.bf16.gmra.mxu0 %v5900
  %v6949 = vpop.f32.mrf.mxu0
  %v6950 = vadd.f32 %v6931, %v6949
  %v6951 = vpop.f32.mrf.mxu0
  %v6952 = vadd.f32 %v6933, %v6951
  %6953 = vmatmul.bf16.gmra.mxu0 %v5904
  %v6954 = vpop.f32.mrf.mxu0
  %v6955 = vadd.f32 %v6936, %v6954
  %v6956 = vpop.f32.mrf.mxu0
  %v6957 = vadd.f32 %v6938, %v6956
  %6958 = vdwg.mxu0
  %6959 = vmatpush.bf16.msra.mxu0 %v6545
  %6960 = vmatpush.bf16.msra.mxu0 %v6541
  %6961 = vmatpush.bf16.msra.mxu0 %v6537
  %6962 = vmatpush.bf16.msra.mxu0 %v6533
  %6963 = vmatpush.bf16.msra.mxu0 %v6529
  %6964 = vmatpush.bf16.msra.mxu0 %v6525
  %6965 = vmatpush.bf16.msra.mxu0 %v6521
  %6966 = vmatpush.bf16.msra.mxu0 %v6517
  %6967 = vmatmul.bf16.gmra.mxu0 %v5901
  %v6968 = vpop.f32.mrf.mxu0
  %v6969 = vadd.f32 %v6950, %v6968
  %v6970 = vpop.f32.mrf.mxu0
  %v6971 = vadd.f32 %v6952, %v6970
  %6972 = vmatmul.bf16.gmra.mxu0 %v5905
  %v6973 = vpop.f32.mrf.mxu0
  %v6974 = vadd.f32 %v6955, %v6973
  %v6975 = vpop.f32.mrf.mxu0
  %v6976 = vadd.f32 %v6957, %v6975
  %6977 = vdwg.mxu0
  %v6978 = vld [vmem:[%s826] sm:$0xff]
  %v6979 = vld [vmem:[%s826 + $0x8] sm:$0xff]
  %v6980 = vld [vmem:[%s826 + $0x10] sm:$0xff]
  %v6981 = vld [vmem:[%s826 + $0x18] sm:$0xff]
  %v6982 = vld [vmem:[%s826 + $0x20] sm:$0xff]
  %v6983 = vld [vmem:[%s826 + $0x28] sm:$0xff]
  %v6984 = vld [vmem:[%s826 + $0x30] sm:$0xff]
  %v6985 = vld [vmem:[%s826 + $0x38] sm:$0xff]
  %v6986 = vld [vmem:[%s826 + $0x40] sm:$0xff]
  %v6987 = vld [vmem:[%s826 + $0x48] sm:$0xff]
  %v6988 = vld [vmem:[%s826 + $0x50] sm:$0xff]
  %v6989 = vld [vmem:[%s826 + $0x58] sm:$0xff]
  %v6990 = vld [vmem:[%s826 + $0x60] sm:$0xff]
  %v6991 = vld [vmem:[%s826 + $0x68] sm:$0xff]
  %v6992 = vld [vmem:[%s826 + $0x70] sm:$0xff]
  %v6993 = vld [vmem:[%s826 + $0x78] sm:$0xff]
  %v6994 = vld [vmem:[%s826 + $0x80] sm:$0xff]
  %v6995 = vld [vmem:[%s826 + $0x88] sm:$0xff]
  %v6996 = vld [vmem:[%s826 + $0x90] sm:$0xff]
  %v6997 = vld [vmem:[%s826 + $0x98] sm:$0xff]
  %v6998 = vld [vmem:[%s826 + $0xa0] sm:$0xff]
  %v6999 = vld [vmem:[%s826 + $0xa8] sm:$0xff]
  %v7000 = vld [vmem:[%s826 + $0xb0] sm:$0xff]
  %v7001 = vld [vmem:[%s826 + $0xb8] sm:$0xff]
  %v7002 = vld [vmem:[%s826 + $0xc0] sm:$0xff]
  %v7003 = vld [vmem:[%s826 + $0xc8] sm:$0xff]
  %v7004 = vld [vmem:[%s826 + $0xd0] sm:$0xff]
  %v7005 = vld [vmem:[%s826 + $0xd8] sm:$0xff]
  %v7006 = vld [vmem:[%s826 + $0xe0] sm:$0xff]
  %v7007 = vld [vmem:[%s826 + $0xe8] sm:$0xff]
  %v7008 = vld [vmem:[%s826 + $0xf0] sm:$0xff]
  %v7009 = vld [vmem:[%s826 + $0xf8] sm:$0xff]
  %v7010 = vld [vmem:[%s826 + $0x100] sm:$0xff]
  %v7011 = vld [vmem:[%s826 + $0x108] sm:$0xff]
  %v7012 = vld [vmem:[%s826 + $0x110] sm:$0xff]
  %v7013 = vld [vmem:[%s826 + $0x118] sm:$0xff]
  %v7014 = vld [vmem:[%s826 + $0x120] sm:$0xff]
  %v7015 = vld [vmem:[%s826 + $0x128] sm:$0xff]
  %v7016 = vld [vmem:[%s826 + $0x130] sm:$0xff]
  %v7017 = vld [vmem:[%s826 + $0x138] sm:$0xff]
  %v7018 = vld [vmem:[%s826 + $0x140] sm:$0xff]
  %v7019 = vld [vmem:[%s826 + $0x148] sm:$0xff]
  %v7020 = vld [vmem:[%s826 + $0x150] sm:$0xff]
  %v7021 = vld [vmem:[%s826 + $0x158] sm:$0xff]
  %v7022 = vld [vmem:[%s826 + $0x160] sm:$0xff]
  %v7023 = vld [vmem:[%s826 + $0x168] sm:$0xff]
  %v7024 = vld [vmem:[%s826 + $0x170] sm:$0xff]
  %v7025 = vld [vmem:[%s826 + $0x178] sm:$0xff]
  %v7026 = vld [vmem:[%s826 + $0x180] sm:$0xff]
  %v7027 = vld [vmem:[%s826 + $0x188] sm:$0xff]
  %v7028 = vld [vmem:[%s826 + $0x190] sm:$0xff]
  %v7029 = vld [vmem:[%s826 + $0x198] sm:$0xff]
  %v7030 = vld [vmem:[%s826 + $0x1a0] sm:$0xff]
  %v7031 = vld [vmem:[%s826 + $0x1a8] sm:$0xff]
  %v7032 = vld [vmem:[%s826 + $0x1b0] sm:$0xff]
  %v7033 = vld [vmem:[%s826 + $0x1b8] sm:$0xff]
  %v7034 = vld [vmem:[%s826 + $0x1c0] sm:$0xff]
  %v7035 = vld [vmem:[%s826 + $0x1c8] sm:$0xff]
  %v7036 = vld [vmem:[%s826 + $0x1d0] sm:$0xff]
  %v7037 = vld [vmem:[%s826 + $0x1d8] sm:$0xff]
  %v7038 = vld [vmem:[%s826 + $0x1e0] sm:$0xff]
  %v7039 = vld [vmem:[%s826 + $0x1e8] sm:$0xff]
  %v7040 = vld [vmem:[%s826 + $0x1f0] sm:$0xff]
  %v7041 = vld [vmem:[%s826 + $0x1f8] sm:$0xff]
  %v7042 = vld [vmem:[%s826 + $0x200] sm:$0xff]
  %v7043 = vld [vmem:[%s826 + $0x208] sm:$0xff]
  %v7044 = vld [vmem:[%s826 + $0x210] sm:$0xff]
  %v7045 = vld [vmem:[%s826 + $0x218] sm:$0xff]
  %v7046 = vld [vmem:[%s826 + $0x220] sm:$0xff]
  %v7047 = vld [vmem:[%s826 + $0x228] sm:$0xff]
  %v7048 = vld [vmem:[%s826 + $0x230] sm:$0xff]
  %v7049 = vld [vmem:[%s826 + $0x238] sm:$0xff]
  %v7050 = vld [vmem:[%s826 + $0x240] sm:$0xff]
  %v7051 = vld [vmem:[%s826 + $0x248] sm:$0xff]
  %v7052 = vld [vmem:[%s826 + $0x250] sm:$0xff]
  %v7053 = vld [vmem:[%s826 + $0x258] sm:$0xff]
  %v7054 = vld [vmem:[%s826 + $0x260] sm:$0xff]
  %v7055 = vld [vmem:[%s826 + $0x268] sm:$0xff]
  %v7056 = vld [vmem:[%s826 + $0x270] sm:$0xff]
  %v7057 = vld [vmem:[%s826 + $0x278] sm:$0xff]
  %v7058 = vld [vmem:[%s826 + $0x280] sm:$0xff]
  %v7059 = vld [vmem:[%s826 + $0x288] sm:$0xff]
  %v7060 = vld [vmem:[%s826 + $0x290] sm:$0xff]
  %v7061 = vld [vmem:[%s826 + $0x298] sm:$0xff]
  %v7062 = vld [vmem:[%s826 + $0x2a0] sm:$0xff]
  %v7063 = vld [vmem:[%s826 + $0x2a8] sm:$0xff]
  %v7064 = vld [vmem:[%s826 + $0x2b0] sm:$0xff]
  %v7065 = vld [vmem:[%s826 + $0x2b8] sm:$0xff]
  %v7066 = vld [vmem:[%s826 + $0x2c0] sm:$0xff]
  %v7067 = vld [vmem:[%s826 + $0x2c8] sm:$0xff]
  %v7068 = vld [vmem:[%s826 + $0x2d0] sm:$0xff]
  %v7069 = vld [vmem:[%s826 + $0x2d8] sm:$0xff]
  %v7070 = vld [vmem:[%s826 + $0x2e0] sm:$0xff]
  %v7071 = vld [vmem:[%s826 + $0x2e8] sm:$0xff]
  %v7072 = vld [vmem:[%s826 + $0x2f0] sm:$0xff]
  %v7073 = vld [vmem:[%s826 + $0x2f8] sm:$0xff]
  %v7074 = vld [vmem:[%s826 + $0x300] sm:$0xff]
  %v7075 = vld [vmem:[%s826 + $0x308] sm:$0xff]
  %v7076 = vld [vmem:[%s826 + $0x310] sm:$0xff]
  %v7077 = vld [vmem:[%s826 + $0x318] sm:$0xff]
  %v7078 = vld [vmem:[%s826 + $0x320] sm:$0xff]
  %v7079 = vld [vmem:[%s826 + $0x328] sm:$0xff]
  %v7080 = vld [vmem:[%s826 + $0x330] sm:$0xff]
  %v7081 = vld [vmem:[%s826 + $0x338] sm:$0xff]
  %v7082 = vld [vmem:[%s826 + $0x340] sm:$0xff]
  %v7083 = vld [vmem:[%s826 + $0x348] sm:$0xff]
  %v7084 = vld [vmem:[%s826 + $0x350] sm:$0xff]
  %v7085 = vld [vmem:[%s826 + $0x358] sm:$0xff]
  %v7086 = vld [vmem:[%s826 + $0x360] sm:$0xff]
  %v7087 = vld [vmem:[%s826 + $0x368] sm:$0xff]
  %v7088 = vld [vmem:[%s826 + $0x370] sm:$0xff]
  %v7089 = vld [vmem:[%s826 + $0x378] sm:$0xff]
  %v7090 = vld [vmem:[%s826 + $0x380] sm:$0xff]
  %v7091 = vld [vmem:[%s826 + $0x388] sm:$0xff]
  %v7092 = vld [vmem:[%s826 + $0x390] sm:$0xff]
  %v7093 = vld [vmem:[%s826 + $0x398] sm:$0xff]
  %v7094 = vld [vmem:[%s826 + $0x3a0] sm:$0xff]
  %v7095 = vld [vmem:[%s826 + $0x3a8] sm:$0xff]
  %v7096 = vld [vmem:[%s826 + $0x3b0] sm:$0xff]
  %v7097 = vld [vmem:[%s826 + $0x3b8] sm:$0xff]
  %v7098 = vld [vmem:[%s826 + $0x3c0] sm:$0xff]
  %v7099 = vld [vmem:[%s826 + $0x3c8] sm:$0xff]
  %v7100 = vld [vmem:[%s826 + $0x3d0] sm:$0xff]
  %v7101 = vld [vmem:[%s826 + $0x3d8] sm:$0xff]
  %v7102 = vld [vmem:[%s826 + $0x3e0] sm:$0xff]
  %v7103 = vld [vmem:[%s826 + $0x3e8] sm:$0xff]
  %v7104 = vld [vmem:[%s826 + $0x3f0] sm:$0xff]
  %v7105 = vld [vmem:[%s826 + $0x3f8] sm:$0xff]
  %v7234 = vunpack.c.l.b16 %v6978
  %v7235 = vunpack.c.h.b16 %v6978
  %v7236 = vunpack.c.l.b16 %v6979
  %v7237 = vunpack.c.h.b16 %v6979
  %v7238 = vunpack.c.l.b16 %v6980
  %v7239 = vunpack.c.h.b16 %v6980
  %v7240 = vunpack.c.l.b16 %v6981
  %v7241 = vunpack.c.h.b16 %v6981
  %v7242 = vunpack.c.l.b16 %v6982
  %v7243 = vunpack.c.h.b16 %v6982
  %v7244 = vunpack.c.l.b16 %v6983
  %v7245 = vunpack.c.h.b16 %v6983
  %v7246 = vunpack.c.l.b16 %v6984
  %v7247 = vunpack.c.h.b16 %v6984
  %v7248 = vunpack.c.l.b16 %v6985
  %v7249 = vunpack.c.h.b16 %v6985
  %v7250 = vunpack.c.l.b16 %v6986
  %v7251 = vunpack.c.h.b16 %v6986
  %v7252 = vunpack.c.l.b16 %v6987
  %v7253 = vunpack.c.h.b16 %v6987
  %v7254 = vunpack.c.l.b16 %v6988
  %v7255 = vunpack.c.h.b16 %v6988
  %v7256 = vunpack.c.l.b16 %v6989
  %v7257 = vunpack.c.h.b16 %v6989
  %v7258 = vunpack.c.l.b16 %v6990
  %v7259 = vunpack.c.h.b16 %v6990
  %v7260 = vunpack.c.l.b16 %v6991
  %v7261 = vunpack.c.h.b16 %v6991
  %v7262 = vunpack.c.l.b16 %v6992
  %v7263 = vunpack.c.h.b16 %v6992
  %v7264 = vunpack.c.l.b16 %v6993
  %v7265 = vunpack.c.h.b16 %v6993
  %v7266 = vunpack.c.l.b16 %v6994
  %v7267 = vunpack.c.h.b16 %v6994
  %v7268 = vunpack.c.l.b16 %v6995
  %v7269 = vunpack.c.h.b16 %v6995
  %v7270 = vunpack.c.l.b16 %v6996
  %v7271 = vunpack.c.h.b16 %v6996
  %v7272 = vunpack.c.l.b16 %v6997
  %v7273 = vunpack.c.h.b16 %v6997
  %v7274 = vunpack.c.l.b16 %v6998
  %v7275 = vunpack.c.h.b16 %v6998
  %v7276 = vunpack.c.l.b16 %v6999
  %v7277 = vunpack.c.h.b16 %v6999
  %v7278 = vunpack.c.l.b16 %v7000
  %v7279 = vunpack.c.h.b16 %v7000
  %v7280 = vunpack.c.l.b16 %v7001
  %v7281 = vunpack.c.h.b16 %v7001
  %v7282 = vunpack.c.l.b16 %v7002
  %v7283 = vunpack.c.h.b16 %v7002
  %v7284 = vunpack.c.l.b16 %v7003
  %v7285 = vunpack.c.h.b16 %v7003
  %v7286 = vunpack.c.l.b16 %v7004
  %v7287 = vunpack.c.h.b16 %v7004
  %v7288 = vunpack.c.l.b16 %v7005
  %v7289 = vunpack.c.h.b16 %v7005
  %v7290 = vunpack.c.l.b16 %v7006
  %v7291 = vunpack.c.h.b16 %v7006
  %v7292 = vunpack.c.l.b16 %v7007
  %v7293 = vunpack.c.h.b16 %v7007
  %v7294 = vunpack.c.l.b16 %v7008
  %v7295 = vunpack.c.h.b16 %v7008
  %v7296 = vunpack.c.l.b16 %v7009
  %v7297 = vunpack.c.h.b16 %v7009
  %v7298 = vunpack.c.l.b16 %v7010
  %v7299 = vunpack.c.h.b16 %v7010
  %v7300 = vunpack.c.l.b16 %v7011
  %v7301 = vunpack.c.h.b16 %v7011
  %v7302 = vunpack.c.l.b16 %v7012
  %v7303 = vunpack.c.h.b16 %v7012
  %v7304 = vunpack.c.l.b16 %v7013
  %v7305 = vunpack.c.h.b16 %v7013
  %v7306 = vunpack.c.l.b16 %v7014
  %v7307 = vunpack.c.h.b16 %v7014
  %v7308 = vunpack.c.l.b16 %v7015
  %v7309 = vunpack.c.h.b16 %v7015
  %v7310 = vunpack.c.l.b16 %v7016
  %v7311 = vunpack.c.h.b16 %v7016
  %v7312 = vunpack.c.l.b16 %v7017
  %v7313 = vunpack.c.h.b16 %v7017
  %v7314 = vunpack.c.l.b16 %v7018
  %v7315 = vunpack.c.h.b16 %v7018
  %v7316 = vunpack.c.l.b16 %v7019
  %v7317 = vunpack.c.h.b16 %v7019
  %v7318 = vunpack.c.l.b16 %v7020
  %v7319 = vunpack.c.h.b16 %v7020
  %v7320 = vunpack.c.l.b16 %v7021
  %v7321 = vunpack.c.h.b16 %v7021
  %v7322 = vunpack.c.l.b16 %v7022
  %v7323 = vunpack.c.h.b16 %v7022
  %v7324 = vunpack.c.l.b16 %v7023
  %v7325 = vunpack.c.h.b16 %v7023
  %v7326 = vunpack.c.l.b16 %v7024
  %v7327 = vunpack.c.h.b16 %v7024
  %v7328 = vunpack.c.l.b16 %v7025
  %v7329 = vunpack.c.h.b16 %v7025
  %v7330 = vunpack.c.l.b16 %v7026
  %v7331 = vunpack.c.h.b16 %v7026
  %v7332 = vunpack.c.l.b16 %v7027
  %v7333 = vunpack.c.h.b16 %v7027
  %v7334 = vunpack.c.l.b16 %v7028
  %v7335 = vunpack.c.h.b16 %v7028
  %v7336 = vunpack.c.l.b16 %v7029
  %v7337 = vunpack.c.h.b16 %v7029
  %v7338 = vunpack.c.l.b16 %v7030
  %v7339 = vunpack.c.h.b16 %v7030
  %v7340 = vunpack.c.l.b16 %v7031
  %v7341 = vunpack.c.h.b16 %v7031
  %v7342 = vunpack.c.l.b16 %v7032
  %v7343 = vunpack.c.h.b16 %v7032
  %v7344 = vunpack.c.l.b16 %v7033
  %v7345 = vunpack.c.h.b16 %v7033
  %v7346 = vunpack.c.l.b16 %v7034
  %v7347 = vunpack.c.h.b16 %v7034
  %v7348 = vunpack.c.l.b16 %v7035
  %v7349 = vunpack.c.h.b16 %v7035
  %v7350 = vunpack.c.l.b16 %v7036
  %v7351 = vunpack.c.h.b16 %v7036
  %v7352 = vunpack.c.l.b16 %v7037
  %v7353 = vunpack.c.h.b16 %v7037
  %v7354 = vunpack.c.l.b16 %v7038
  %v7355 = vunpack.c.h.b16 %v7038
  %v7356 = vunpack.c.l.b16 %v7039
  %v7357 = vunpack.c.h.b16 %v7039
  %v7358 = vunpack.c.l.b16 %v7040
  %v7359 = vunpack.c.h.b16 %v7040
  %v7360 = vunpack.c.l.b16 %v7041
  %v7361 = vunpack.c.h.b16 %v7041
  %v7362 = vunpack.c.l.b16 %v7042
  %v7363 = vunpack.c.h.b16 %v7042
  %v7364 = vunpack.c.l.b16 %v7043
  %v7365 = vunpack.c.h.b16 %v7043
  %v7366 = vunpack.c.l.b16 %v7044
  %v7367 = vunpack.c.h.b16 %v7044
  %v7368 = vunpack.c.l.b16 %v7045
  %v7369 = vunpack.c.h.b16 %v7045
  %v7370 = vunpack.c.l.b16 %v7046
  %v7371 = vunpack.c.h.b16 %v7046
  %v7372 = vunpack.c.l.b16 %v7047
  %v7373 = vunpack.c.h.b16 %v7047
  %v7374 = vunpack.c.l.b16 %v7048
  %v7375 = vunpack.c.h.b16 %v7048
  %v7376 = vunpack.c.l.b16 %v7049
  %v7377 = vunpack.c.h.b16 %v7049
  %v7378 = vunpack.c.l.b16 %v7050
  %v7379 = vunpack.c.h.b16 %v7050
  %v7380 = vunpack.c.l.b16 %v7051
  %v7381 = vunpack.c.h.b16 %v7051
  %v7382 = vunpack.c.l.b16 %v7052
  %v7383 = vunpack.c.h.b16 %v7052
  %v7384 = vunpack.c.l.b16 %v7053
  %v7385 = vunpack.c.h.b16 %v7053
  %v7386 = vunpack.c.l.b16 %v7054
  %v7387 = vunpack.c.h.b16 %v7054
  %v7388 = vunpack.c.l.b16 %v7055
  %v7389 = vunpack.c.h.b16 %v7055
  %v7390 = vunpack.c.l.b16 %v7056
  %v7391 = vunpack.c.h.b16 %v7056
  %v7392 = vunpack.c.l.b16 %v7057
  %v7393 = vunpack.c.h.b16 %v7057
  %v7394 = vunpack.c.l.b16 %v7058
  %v7395 = vunpack.c.h.b16 %v7058
  %v7396 = vunpack.c.l.b16 %v7059
  %v7397 = vunpack.c.h.b16 %v7059
  %v7398 = vunpack.c.l.b16 %v7060
  %v7399 = vunpack.c.h.b16 %v7060
  %v7400 = vunpack.c.l.b16 %v7061
  %v7401 = vunpack.c.h.b16 %v7061
  %v7402 = vunpack.c.l.b16 %v7062
  %v7403 = vunpack.c.h.b16 %v7062
  %v7404 = vunpack.c.l.b16 %v7063
  %v7405 = vunpack.c.h.b16 %v7063
  %v7406 = vunpack.c.l.b16 %v7064
  %v7407 = vunpack.c.h.b16 %v7064
  %v7408 = vunpack.c.l.b16 %v7065
  %v7409 = vunpack.c.h.b16 %v7065
  %v7410 = vunpack.c.l.b16 %v7066
  %v7411 = vunpack.c.h.b16 %v7066
  %v7412 = vunpack.c.l.b16 %v7067
  %v7413 = vunpack.c.h.b16 %v7067
  %v7414 = vunpack.c.l.b16 %v7068
  %v7415 = vunpack.c.h.b16 %v7068
  %v7416 = vunpack.c.l.b16 %v7069
  %v7417 = vunpack.c.h.b16 %v7069
  %v7418 = vunpack.c.l.b16 %v7070
  %v7419 = vunpack.c.h.b16 %v7070
  %v7420 = vunpack.c.l.b16 %v7071
  %v7421 = vunpack.c.h.b16 %v7071
  %v7422 = vunpack.c.l.b16 %v7072
  %v7423 = vunpack.c.h.b16 %v7072
  %v7424 = vunpack.c.l.b16 %v7073
  %v7425 = vunpack.c.h.b16 %v7073
  %v7426 = vunpack.c.l.b16 %v7074
  %v7427 = vunpack.c.h.b16 %v7074
  %v7428 = vunpack.c.l.b16 %v7075
  %v7429 = vunpack.c.h.b16 %v7075
  %v7430 = vunpack.c.l.b16 %v7076
  %v7431 = vunpack.c.h.b16 %v7076
  %v7432 = vunpack.c.l.b16 %v7077
  %v7433 = vunpack.c.h.b16 %v7077
  %v7434 = vunpack.c.l.b16 %v7078
  %v7435 = vunpack.c.h.b16 %v7078
  %v7436 = vunpack.c.l.b16 %v7079
  %v7437 = vunpack.c.h.b16 %v7079
  %v7438 = vunpack.c.l.b16 %v7080
  %v7439 = vunpack.c.h.b16 %v7080
  %v7440 = vunpack.c.l.b16 %v7081
  %v7441 = vunpack.c.h.b16 %v7081
  %v7442 = vunpack.c.l.b16 %v7082
  %v7443 = vunpack.c.h.b16 %v7082
  %v7444 = vunpack.c.l.b16 %v7083
  %v7445 = vunpack.c.h.b16 %v7083
  %v7446 = vunpack.c.l.b16 %v7084
  %v7447 = vunpack.c.h.b16 %v7084
  %v7448 = vunpack.c.l.b16 %v7085
  %v7449 = vunpack.c.h.b16 %v7085
  %v7450 = vunpack.c.l.b16 %v7086
  %v7451 = vunpack.c.h.b16 %v7086
  %v7452 = vunpack.c.l.b16 %v7087
  %v7453 = vunpack.c.h.b16 %v7087
  %v7454 = vunpack.c.l.b16 %v7088
  %v7455 = vunpack.c.h.b16 %v7088
  %v7456 = vunpack.c.l.b16 %v7089
  %v7457 = vunpack.c.h.b16 %v7089
  %v7458 = vunpack.c.l.b16 %v7090
  %v7459 = vunpack.c.h.b16 %v7090
  %v7460 = vunpack.c.l.b16 %v7091
  %v7461 = vunpack.c.h.b16 %v7091
  %v7462 = vunpack.c.l.b16 %v7092
  %v7463 = vunpack.c.h.b16 %v7092
  %v7464 = vunpack.c.l.b16 %v7093
  %v7465 = vunpack.c.h.b16 %v7093
  %v7466 = vunpack.c.l.b16 %v7094
  %v7467 = vunpack.c.h.b16 %v7094
  %v7468 = vunpack.c.l.b16 %v7095
  %v7469 = vunpack.c.h.b16 %v7095
  %v7470 = vunpack.c.l.b16 %v7096
  %v7471 = vunpack.c.h.b16 %v7096
  %v7472 = vunpack.c.l.b16 %v7097
  %v7473 = vunpack.c.h.b16 %v7097
  %v7474 = vunpack.c.l.b16 %v7098
  %v7475 = vunpack.c.h.b16 %v7098
  %v7476 = vunpack.c.l.b16 %v7099
  %v7477 = vunpack.c.h.b16 %v7099
  %v7478 = vunpack.c.l.b16 %v7100
  %v7479 = vunpack.c.h.b16 %v7100
  %v7480 = vunpack.c.l.b16 %v7101
  %v7481 = vunpack.c.h.b16 %v7101
  %v7482 = vunpack.c.l.b16 %v7102
  %v7483 = vunpack.c.h.b16 %v7102
  %v7484 = vunpack.c.l.b16 %v7103
  %v7485 = vunpack.c.h.b16 %v7103
  %v7486 = vunpack.c.l.b16 %v7104
  %v7487 = vunpack.c.h.b16 %v7104
  %v7488 = vunpack.c.l.b16 %v7105
  %v7489 = vunpack.c.h.b16 %v7105
  %v7490 = vpack.c.b16 %v7238, %v7234
  %v7491 = vpack.c.b16 %v7239, %v7235
  %v7492 = vpack.c.b16 %v7240, %v7236
  %v7493 = vpack.c.b16 %v7241, %v7237
  %v7494 = vpack.c.b16 %v7246, %v7242
  %v7495 = vpack.c.b16 %v7247, %v7243
  %v7496 = vpack.c.b16 %v7248, %v7244
  %v7497 = vpack.c.b16 %v7249, %v7245
  %v7498 = vpack.c.b16 %v7254, %v7250
  %v7499 = vpack.c.b16 %v7255, %v7251
  %v7500 = vpack.c.b16 %v7256, %v7252
  %v7501 = vpack.c.b16 %v7257, %v7253
  %v7502 = vpack.c.b16 %v7262, %v7258
  %v7503 = vpack.c.b16 %v7263, %v7259
  %v7504 = vpack.c.b16 %v7264, %v7260
  %v7505 = vpack.c.b16 %v7265, %v7261
  %v7506 = vpack.c.b16 %v7270, %v7266
  %v7507 = vpack.c.b16 %v7271, %v7267
  %v7508 = vpack.c.b16 %v7272, %v7268
  %v7509 = vpack.c.b16 %v7273, %v7269
  %v7510 = vpack.c.b16 %v7278, %v7274
  %v7511 = vpack.c.b16 %v7279, %v7275
  %v7512 = vpack.c.b16 %v7280, %v7276
  %v7513 = vpack.c.b16 %v7281, %v7277
  %v7514 = vpack.c.b16 %v7286, %v7282
  %v7515 = vpack.c.b16 %v7287, %v7283
  %v7516 = vpack.c.b16 %v7288, %v7284
  %v7517 = vpack.c.b16 %v7289, %v7285
  %v7518 = vpack.c.b16 %v7294, %v7290
  %v7519 = vpack.c.b16 %v7295, %v7291
  %v7520 = vpack.c.b16 %v7296, %v7292
  %v7521 = vpack.c.b16 %v7297, %v7293
  %v7522 = vpack.c.b16 %v7302, %v7298
  %v7523 = vpack.c.b16 %v7303, %v7299
  %v7524 = vpack.c.b16 %v7304, %v7300
  %v7525 = vpack.c.b16 %v7305, %v7301
  %v7526 = vpack.c.b16 %v7310, %v7306
  %v7527 = vpack.c.b16 %v7311, %v7307
  %v7528 = vpack.c.b16 %v7312, %v7308
  %v7529 = vpack.c.b16 %v7313, %v7309
  %v7530 = vpack.c.b16 %v7318, %v7314
  %v7531 = vpack.c.b16 %v7319, %v7315
  %v7532 = vpack.c.b16 %v7320, %v7316
  %v7533 = vpack.c.b16 %v7321, %v7317
  %v7534 = vpack.c.b16 %v7326, %v7322
  %v7535 = vpack.c.b16 %v7327, %v7323
  %v7536 = vpack.c.b16 %v7328, %v7324
  %v7537 = vpack.c.b16 %v7329, %v7325
  %v7538 = vpack.c.b16 %v7334, %v7330
  %v7539 = vpack.c.b16 %v7335, %v7331
  %v7540 = vpack.c.b16 %v7336, %v7332
  %v7541 = vpack.c.b16 %v7337, %v7333
  %v7542 = vpack.c.b16 %v7342, %v7338
  %v7543 = vpack.c.b16 %v7343, %v7339
  %v7544 = vpack.c.b16 %v7344, %v7340
  %v7545 = vpack.c.b16 %v7345, %v7341
  %v7546 = vpack.c.b16 %v7350, %v7346
  %v7547 = vpack.c.b16 %v7351, %v7347
  %v7548 = vpack.c.b16 %v7352, %v7348
  %v7549 = vpack.c.b16 %v7353, %v7349
  %v7550 = vpack.c.b16 %v7358, %v7354
  %v7551 = vpack.c.b16 %v7359, %v7355
  %v7552 = vpack.c.b16 %v7360, %v7356
  %v7553 = vpack.c.b16 %v7361, %v7357
  %v7554 = vpack.c.b16 %v7366, %v7362
  %v7555 = vpack.c.b16 %v7367, %v7363
  %v7556 = vpack.c.b16 %v7368, %v7364
  %v7557 = vpack.c.b16 %v7369, %v7365
  %v7558 = vpack.c.b16 %v7374, %v7370
  %v7559 = vpack.c.b16 %v7375, %v7371
  %v7560 = vpack.c.b16 %v7376, %v7372
  %v7561 = vpack.c.b16 %v7377, %v7373
  %v7562 = vpack.c.b16 %v7382, %v7378
  %v7563 = vpack.c.b16 %v7383, %v7379
  %v7564 = vpack.c.b16 %v7384, %v7380
  %v7565 = vpack.c.b16 %v7385, %v7381
  %v7566 = vpack.c.b16 %v7390, %v7386
  %v7567 = vpack.c.b16 %v7391, %v7387
  %v7568 = vpack.c.b16 %v7392, %v7388
  %v7569 = vpack.c.b16 %v7393, %v7389
  %v7570 = vpack.c.b16 %v7398, %v7394
  %v7571 = vpack.c.b16 %v7399, %v7395
  %v7572 = vpack.c.b16 %v7400, %v7396
  %v7573 = vpack.c.b16 %v7401, %v7397
  %v7574 = vpack.c.b16 %v7406, %v7402
  %v7575 = vpack.c.b16 %v7407, %v7403
  %v7576 = vpack.c.b16 %v7408, %v7404
  %v7577 = vpack.c.b16 %v7409, %v7405
  %v7578 = vpack.c.b16 %v7414, %v7410
  %v7579 = vpack.c.b16 %v7415, %v7411
  %v7580 = vpack.c.b16 %v7416, %v7412
  %v7581 = vpack.c.b16 %v7417, %v7413
  %v7582 = vpack.c.b16 %v7422, %v7418
  %v7583 = vpack.c.b16 %v7423, %v7419
  %v7584 = vpack.c.b16 %v7424, %v7420
  %v7585 = vpack.c.b16 %v7425, %v7421
  %v7586 = vpack.c.b16 %v7430, %v7426
  %v7587 = vpack.c.b16 %v7431, %v7427
  %v7588 = vpack.c.b16 %v7432, %v7428
  %v7589 = vpack.c.b16 %v7433, %v7429
  %v7590 = vpack.c.b16 %v7438, %v7434
  %v7591 = vpack.c.b16 %v7439, %v7435
  %v7592 = vpack.c.b16 %v7440, %v7436
  %v7593 = vpack.c.b16 %v7441, %v7437
  %v7594 = vpack.c.b16 %v7446, %v7442
  %v7595 = vpack.c.b16 %v7447, %v7443
  %v7596 = vpack.c.b16 %v7448, %v7444
  %v7597 = vpack.c.b16 %v7449, %v7445
  %v7598 = vpack.c.b16 %v7454, %v7450
  %v7599 = vpack.c.b16 %v7455, %v7451
  %v7600 = vpack.c.b16 %v7456, %v7452
  %v7601 = vpack.c.b16 %v7457, %v7453
  %v7602 = vpack.c.b16 %v7462, %v7458
  %v7603 = vpack.c.b16 %v7463, %v7459
  %v7604 = vpack.c.b16 %v7464, %v7460
  %v7605 = vpack.c.b16 %v7465, %v7461
  %v7606 = vpack.c.b16 %v7470, %v7466
  %v7607 = vpack.c.b16 %v7471, %v7467
  %v7608 = vpack.c.b16 %v7472, %v7468
  %v7609 = vpack.c.b16 %v7473, %v7469
  %v7610 = vpack.c.b16 %v7478, %v7474
  %v7611 = vpack.c.b16 %v7479, %v7475
  %v7612 = vpack.c.b16 %v7480, %v7476
  %v7613 = vpack.c.b16 %v7481, %v7477
  %v7614 = vpack.c.b16 %v7486, %v7482
  %v7615 = vpack.c.b16 %v7487, %v7483
  %v7616 = vpack.c.b16 %v7488, %v7484
  %v7617 = vpack.c.b16 %v7489, %v7485
  %7746 = vmatpush.bf16.msra.mxu0 %v7518
  %7747 = vmatpush.bf16.msra.mxu0 %v7514
  %7748 = vmatpush.bf16.msra.mxu0 %v7510
  %7749 = vmatpush.bf16.msra.mxu0 %v7506
  %7750 = vmatpush.bf16.msra.mxu0 %v7502
  %7751 = vmatpush.bf16.msra.mxu0 %v7498
  %7752 = vmatpush.bf16.msra.mxu0 %v7494
  %7753 = vmatpush.bf16.msra.mxu0 %v7490
  %7754 = vmatmul.bf16.gmra.mxu0 %v5898
  %v7755 = vpop.f32.mrf.mxu0
  %v7756 = vadd.f32 0.0, %v7755
  %v7757 = vpop.f32.mrf.mxu0
  %v7758 = vadd.f32 0.0, %v7757
  %7759 = vmatmul.bf16.gmra.mxu0 %v5902
  %v7760 = vpop.f32.mrf.mxu0
  %v7761 = vadd.f32 0.0, %v7760
  %v7762 = vpop.f32.mrf.mxu0
  %v7763 = vadd.f32 0.0, %v7762
  %7764 = vdwg.mxu0
  %7765 = vmatpush.bf16.msra.mxu0 %v7550
  %7766 = vmatpush.bf16.msra.mxu0 %v7546
  %7767 = vmatpush.bf16.msra.mxu0 %v7542
  %7768 = vmatpush.bf16.msra.mxu0 %v7538
  %7769 = vmatpush.bf16.msra.mxu0 %v7534
  %7770 = vmatpush.bf16.msra.mxu0 %v7530
  %7771 = vmatpush.bf16.msra.mxu0 %v7526
  %7772 = vmatpush.bf16.msra.mxu0 %v7522
  %7773 = vmatmul.bf16.gmra.mxu0 %v5899
  %v7774 = vpop.f32.mrf.mxu0
  %v7775 = vadd.f32 %v7756, %v7774
  %v7776 = vpop.f32.mrf.mxu0
  %v7777 = vadd.f32 %v7758, %v7776
  %7778 = vmatmul.bf16.gmra.mxu0 %v5903
  %v7779 = vpop.f32.mrf.mxu0
  %v7780 = vadd.f32 %v7761, %v7779
  %v7781 = vpop.f32.mrf.mxu0
  %v7782 = vadd.f32 %v7763, %v7781
  %7783 = vdwg.mxu0
  %7784 = vmatpush.bf16.msra.mxu0 %v7582
  %7785 = vmatpush.bf16.msra.mxu0 %v7578
  %7786 = vmatpush.bf16.msra.mxu0 %v7574
  %7787 = vmatpush.bf16.msra.mxu0 %v7570
  %7788 = vmatpush.bf16.msra.mxu0 %v7566
  %7789 = vmatpush.bf16.msra.mxu0 %v7562
  %7790 = vmatpush.bf16.msra.mxu0 %v7558
  %7791 = vmatpush.bf16.msra.mxu0 %v7554
  %7792 = vmatmul.bf16.gmra.mxu0 %v5900
  %v7793 = vpop.f32.mrf.mxu0
  %v7794 = vadd.f32 %v7775, %v7793
  %v7795 = vpop.f32.mrf.mxu0
  %v7796 = vadd.f32 %v7777, %v7795
  %7797 = vmatmul.bf16.gmra.mxu0 %v5904
  %v7798 = vpop.f32.mrf.mxu0
  %v7799 = vadd.f32 %v7780, %v7798
  %v7800 = vpop.f32.mrf.mxu0
  %v7801 = vadd.f32 %v7782, %v7800
  %7802 = vdwg.mxu0
  %7803 = vmatpush.bf16.msra.mxu0 %v7614
  %7804 = vmatpush.bf16.msra.mxu0 %v7610
  %7805 = vmatpush.bf16.msra.mxu0 %v7606
  %7806 = vmatpush.bf16.msra.mxu0 %v7602
  %7807 = vmatpush.bf16.msra.mxu0 %v7598
  %7808 = vmatpush.bf16.msra.mxu0 %v7594
  %7809 = vmatpush.bf16.msra.mxu0 %v7590
  %7810 = vmatpush.bf16.msra.mxu0 %v7586
  %7811 = vmatmul.bf16.gmra.mxu0 %v5901
  %v7812 = vpop.f32.mrf.mxu0
  %v7813 = vadd.f32 %v7794, %v7812
  %v7814 = vpop.f32.mrf.mxu0
  %v7815 = vadd.f32 %v7796, %v7814
  %7816 = vmatmul.bf16.gmra.mxu0 %v5905
  %v7817 = vpop.f32.mrf.mxu0
  %v7818 = vadd.f32 %v7799, %v7817
  %v7819 = vpop.f32.mrf.mxu0
  %v7820 = vadd.f32 %v7801, %v7819
  %7821 = vdwg.mxu0
  %7822 = vmatpush.bf16.msra.mxu0 %v7519
  %7823 = vmatpush.bf16.msra.mxu0 %v7515
  %7824 = vmatpush.bf16.msra.mxu0 %v7511
  %7825 = vmatpush.bf16.msra.mxu0 %v7507
  %7826 = vmatpush.bf16.msra.mxu0 %v7503
  %7827 = vmatpush.bf16.msra.mxu0 %v7499
  %7828 = vmatpush.bf16.msra.mxu0 %v7495
  %7829 = vmatpush.bf16.msra.mxu0 %v7491
  %7830 = vmatmul.bf16.gmra.mxu0 %v5898
  %v7831 = vpop.f32.mrf.mxu0
  %v7832 = vadd.f32 0.0, %v7831
  %v7833 = vpop.f32.mrf.mxu0
  %v7834 = vadd.f32 0.0, %v7833
  %7835 = vmatmul.bf16.gmra.mxu0 %v5902
  %v7836 = vpop.f32.mrf.mxu0
  %v7837 = vadd.f32 0.0, %v7836
  %v7838 = vpop.f32.mrf.mxu0
  %v7839 = vadd.f32 0.0, %v7838
  %7840 = vdwg.mxu0
  %7841 = vmatpush.bf16.msra.mxu0 %v7551
  %7842 = vmatpush.bf16.msra.mxu0 %v7547
  %7843 = vmatpush.bf16.msra.mxu0 %v7543
  %7844 = vmatpush.bf16.msra.mxu0 %v7539
  %7845 = vmatpush.bf16.msra.mxu0 %v7535
  %7846 = vmatpush.bf16.msra.mxu0 %v7531
  %7847 = vmatpush.bf16.msra.mxu0 %v7527
  %7848 = vmatpush.bf16.msra.mxu0 %v7523
  %7849 = vmatmul.bf16.gmra.mxu0 %v5899
  %v7850 = vpop.f32.mrf.mxu0
  %v7851 = vadd.f32 %v7832, %v7850
  %v7852 = vpop.f32.mrf.mxu0
  %v7853 = vadd.f32 %v7834, %v7852
  %7854 = vmatmul.bf16.gmra.mxu0 %v5903
  %v7855 = vpop.f32.mrf.mxu0
  %v7856 = vadd.f32 %v7837, %v7855
  %v7857 = vpop.f32.mrf.mxu0
  %v7858 = vadd.f32 %v7839, %v7857
  %7859 = vdwg.mxu0
  %7860 = vmatpush.bf16.msra.mxu0 %v7583
  %7861 = vmatpush.bf16.msra.mxu0 %v7579
  %7862 = vmatpush.bf16.msra.mxu0 %v7575
  %7863 = vmatpush.bf16.msra.mxu0 %v7571
  %7864 = vmatpush.bf16.msra.mxu0 %v7567
  %7865 = vmatpush.bf16.msra.mxu0 %v7563
  %7866 = vmatpush.bf16.msra.mxu0 %v7559
  %7867 = vmatpush.bf16.msra.mxu0 %v7555
  %7868 = vmatmul.bf16.gmra.mxu0 %v5900
  %v7869 = vpop.f32.mrf.mxu0
  %v7870 = vadd.f32 %v7851, %v7869
  %v7871 = vpop.f32.mrf.mxu0
  %v7872 = vadd.f32 %v7853, %v7871
  %7873 = vmatmul.bf16.gmra.mxu0 %v5904
  %v7874 = vpop.f32.mrf.mxu0
  %v7875 = vadd.f32 %v7856, %v7874
  %v7876 = vpop.f32.mrf.mxu0
  %v7877 = vadd.f32 %v7858, %v7876
  %7878 = vdwg.mxu0
  %7879 = vmatpush.bf16.msra.mxu0 %v7615
  %7880 = vmatpush.bf16.msra.mxu0 %v7611
  %7881 = vmatpush.bf16.msra.mxu0 %v7607
  %7882 = vmatpush.bf16.msra.mxu0 %v7603
  %7883 = vmatpush.bf16.msra.mxu0 %v7599
  %7884 = vmatpush.bf16.msra.mxu0 %v7595
  %7885 = vmatpush.bf16.msra.mxu0 %v7591
  %7886 = vmatpush.bf16.msra.mxu0 %v7587
  %7887 = vmatmul.bf16.gmra.mxu0 %v5901
  %v7888 = vpop.f32.mrf.mxu0
  %v7889 = vadd.f32 %v7870, %v7888
  %v7890 = vpop.f32.mrf.mxu0
  %v7891 = vadd.f32 %v7872, %v7890
  %7892 = vmatmul.bf16.gmra.mxu0 %v5905
  %v7893 = vpop.f32.mrf.mxu0
  %v7894 = vadd.f32 %v7875, %v7893
  %v7895 = vpop.f32.mrf.mxu0
  %v7896 = vadd.f32 %v7877, %v7895
  %7897 = vdwg.mxu0
  %7898 = vmatpush.bf16.msra.mxu0 %v7520
  %7899 = vmatpush.bf16.msra.mxu0 %v7516
  %7900 = vmatpush.bf16.msra.mxu0 %v7512
  %7901 = vmatpush.bf16.msra.mxu0 %v7508
  %7902 = vmatpush.bf16.msra.mxu0 %v7504
  %7903 = vmatpush.bf16.msra.mxu0 %v7500
  %7904 = vmatpush.bf16.msra.mxu0 %v7496
  %7905 = vmatpush.bf16.msra.mxu0 %v7492
  %7906 = vmatmul.bf16.gmra.mxu0 %v5898
  %v7907 = vpop.f32.mrf.mxu0
  %v7908 = vadd.f32 0.0, %v7907
  %v7909 = vpop.f32.mrf.mxu0
  %v7910 = vadd.f32 0.0, %v7909
  %7911 = vmatmul.bf16.gmra.mxu0 %v5902
  %v7912 = vpop.f32.mrf.mxu0
  %v7913 = vadd.f32 0.0, %v7912
  %v7914 = vpop.f32.mrf.mxu0
  %v7915 = vadd.f32 0.0, %v7914
  %7916 = vdwg.mxu0
  %7917 = vmatpush.bf16.msra.mxu0 %v7552
  %7918 = vmatpush.bf16.msra.mxu0 %v7548
  %7919 = vmatpush.bf16.msra.mxu0 %v7544
  %7920 = vmatpush.bf16.msra.mxu0 %v7540
  %7921 = vmatpush.bf16.msra.mxu0 %v7536
  %7922 = vmatpush.bf16.msra.mxu0 %v7532
  %7923 = vmatpush.bf16.msra.mxu0 %v7528
  %7924 = vmatpush.bf16.msra.mxu0 %v7524
  %7925 = vmatmul.bf16.gmra.mxu0 %v5899
  %v7926 = vpop.f32.mrf.mxu0
  %v7927 = vadd.f32 %v7908, %v7926
  %v7928 = vpop.f32.mrf.mxu0
  %v7929 = vadd.f32 %v7910, %v7928
  %7930 = vmatmul.bf16.gmra.mxu0 %v5903
  %v7931 = vpop.f32.mrf.mxu0
  %v7932 = vadd.f32 %v7913, %v7931
  %v7933 = vpop.f32.mrf.mxu0
  %v7934 = vadd.f32 %v7915, %v7933
  %7935 = vdwg.mxu0
  %7936 = vmatpush.bf16.msra.mxu0 %v7584
  %7937 = vmatpush.bf16.msra.mxu0 %v7580
  %7938 = vmatpush.bf16.msra.mxu0 %v7576
  %7939 = vmatpush.bf16.msra.mxu0 %v7572
  %7940 = vmatpush.bf16.msra.mxu0 %v7568
  %7941 = vmatpush.bf16.msra.mxu0 %v7564
  %7942 = vmatpush.bf16.msra.mxu0 %v7560
  %7943 = vmatpush.bf16.msra.mxu0 %v7556
  %7944 = vmatmul.bf16.gmra.mxu0 %v5900
  %v7945 = vpop.f32.mrf.mxu0
  %v7946 = vadd.f32 %v7927, %v7945
  %v7947 = vpop.f32.mrf.mxu0
  %v7948 = vadd.f32 %v7929, %v7947
  %7949 = vmatmul.bf16.gmra.mxu0 %v5904
  %v7950 = vpop.f32.mrf.mxu0
  %v7951 = vadd.f32 %v7932, %v7950
  %v7952 = vpop.f32.mrf.mxu0
  %v7953 = vadd.f32 %v7934, %v7952
  %7954 = vdwg.mxu0
  %7955 = vmatpush.bf16.msra.mxu0 %v7616
  %7956 = vmatpush.bf16.msra.mxu0 %v7612
  %7957 = vmatpush.bf16.msra.mxu0 %v7608
  %7958 = vmatpush.bf16.msra.mxu0 %v7604
  %7959 = vmatpush.bf16.msra.mxu0 %v7600
  %7960 = vmatpush.bf16.msra.mxu0 %v7596
  %7961 = vmatpush.bf16.msra.mxu0 %v7592
  %7962 = vmatpush.bf16.msra.mxu0 %v7588
  %7963 = vmatmul.bf16.gmra.mxu0 %v5901
  %v7964 = vpop.f32.mrf.mxu0
  %v7965 = vadd.f32 %v7946, %v7964
  %v7966 = vpop.f32.mrf.mxu0
  %v7967 = vadd.f32 %v7948, %v7966
  %7968 = vmatmul.bf16.gmra.mxu0 %v5905
  %v7969 = vpop.f32.mrf.mxu0
  %v7970 = vadd.f32 %v7951, %v7969
  %v7971 = vpop.f32.mrf.mxu0
  %v7972 = vadd.f32 %v7953, %v7971
  %7973 = vdwg.mxu0
  %7974 = vmatpush.bf16.msra.mxu0 %v7521
  %7975 = vmatpush.bf16.msra.mxu0 %v7517
  %7976 = vmatpush.bf16.msra.mxu0 %v7513
  %7977 = vmatpush.bf16.msra.mxu0 %v7509
  %7978 = vmatpush.bf16.msra.mxu0 %v7505
  %7979 = vmatpush.bf16.msra.mxu0 %v7501
  %7980 = vmatpush.bf16.msra.mxu0 %v7497
  %7981 = vmatpush.bf16.msra.mxu0 %v7493
  %7982 = vmatmul.bf16.gmra.mxu0 %v5898
  %v7983 = vpop.f32.mrf.mxu0
  %v7984 = vadd.f32 0.0, %v7983
  %v7985 = vpop.f32.mrf.mxu0
  %v7986 = vadd.f32 0.0, %v7985
  %7987 = vmatmul.bf16.gmra.mxu0 %v5902
  %v7988 = vpop.f32.mrf.mxu0
  %v7989 = vadd.f32 0.0, %v7988
  %v7990 = vpop.f32.mrf.mxu0
  %v7991 = vadd.f32 0.0, %v7990
  %7992 = vdwg.mxu0
  %7993 = vmatpush.bf16.msra.mxu0 %v7553
  %7994 = vmatpush.bf16.msra.mxu0 %v7549
  %7995 = vmatpush.bf16.msra.mxu0 %v7545
  %7996 = vmatpush.bf16.msra.mxu0 %v7541
  %7997 = vmatpush.bf16.msra.mxu0 %v7537
  %7998 = vmatpush.bf16.msra.mxu0 %v7533
  %7999 = vmatpush.bf16.msra.mxu0 %v7529
  %8000 = vmatpush.bf16.msra.mxu0 %v7525
  %8001 = vmatmul.bf16.gmra.mxu0 %v5899
  %v8002 = vpop.f32.mrf.mxu0
  %v8003 = vadd.f32 %v7984, %v8002
  %v8004 = vpop.f32.mrf.mxu0
  %v8005 = vadd.f32 %v7986, %v8004
  %8006 = vmatmul.bf16.gmra.mxu0 %v5903
  %v8007 = vpop.f32.mrf.mxu0
  %v8008 = vadd.f32 %v7989, %v8007
  %v8009 = vpop.f32.mrf.mxu0
  %v8010 = vadd.f32 %v7991, %v8009
  %8011 = vdwg.mxu0
  %8012 = vmatpush.bf16.msra.mxu0 %v7585
  %8013 = vmatpush.bf16.msra.mxu0 %v7581
  %8014 = vmatpush.bf16.msra.mxu0 %v7577
  %8015 = vmatpush.bf16.msra.mxu0 %v7573
  %8016 = vmatpush.bf16.msra.mxu0 %v7569
  %8017 = vmatpush.bf16.msra.mxu0 %v7565
  %8018 = vmatpush.bf16.msra.mxu0 %v7561
  %8019 = vmatpush.bf16.msra.mxu0 %v7557
  %8020 = vmatmul.bf16.gmra.mxu0 %v5900
  %v8021 = vpop.f32.mrf.mxu0
  %v8022 = vadd.f32 %v8003, %v8021
  %v8023 = vpop.f32.mrf.mxu0
  %v8024 = vadd.f32 %v8005, %v8023
  %8025 = vmatmul.bf16.gmra.mxu0 %v5904
  %v8026 = vpop.f32.mrf.mxu0
  %v8027 = vadd.f32 %v8008, %v8026
  %v8028 = vpop.f32.mrf.mxu0
  %v8029 = vadd.f32 %v8010, %v8028
  %8030 = vdwg.mxu0
  %8031 = vmatpush.bf16.msra.mxu0 %v7617
  %8032 = vmatpush.bf16.msra.mxu0 %v7613
  %8033 = vmatpush.bf16.msra.mxu0 %v7609
  %8034 = vmatpush.bf16.msra.mxu0 %v7605
  %8035 = vmatpush.bf16.msra.mxu0 %v7601
  %8036 = vmatpush.bf16.msra.mxu0 %v7597
  %8037 = vmatpush.bf16.msra.mxu0 %v7593
  %8038 = vmatpush.bf16.msra.mxu0 %v7589
  %8039 = vmatmul.bf16.gmra.mxu0 %v5901
  %v8040 = vpop.f32.mrf.mxu0
  %v8041 = vadd.f32 %v8022, %v8040
  %v8042 = vpop.f32.mrf.mxu0
  %v8043 = vadd.f32 %v8024, %v8042
  %8044 = vmatmul.bf16.gmra.mxu0 %v5905
  %v8045 = vpop.f32.mrf.mxu0
  %v8046 = vadd.f32 %v8027, %v8045
  %v8047 = vpop.f32.mrf.mxu0
  %v8048 = vadd.f32 %v8029, %v8047
  %8049 = vdwg.mxu0
  %v8050 = vld [vmem:[%s1102] sm:$0xff]
  %v8051 = vld [vmem:[%s1102 + $0x8] sm:$0xff]
  %v8052 = vld [vmem:[%s1102 + $0x10] sm:$0xff]
  %v8053 = vld [vmem:[%s1102 + $0x18] sm:$0xff]
  %v8054 = vld [vmem:[%s1102 + $0x20] sm:$0xff]
  %v8055 = vld [vmem:[%s1102 + $0x28] sm:$0xff]
  %v8056 = vld [vmem:[%s1102 + $0x30] sm:$0xff]
  %v8057 = vld [vmem:[%s1102 + $0x38] sm:$0xff]
  %v8058 = vld [vmem:[%s1102 + $0x40] sm:$0xff]
  %v8059 = vld [vmem:[%s1102 + $0x48] sm:$0xff]
  %v8060 = vld [vmem:[%s1102 + $0x50] sm:$0xff]
  %v8061 = vld [vmem:[%s1102 + $0x58] sm:$0xff]
  %v8062 = vld [vmem:[%s1102 + $0x60] sm:$0xff]
  %v8063 = vld [vmem:[%s1102 + $0x68] sm:$0xff]
  %v8064 = vld [vmem:[%s1102 + $0x70] sm:$0xff]
  %v8065 = vld [vmem:[%s1102 + $0x78] sm:$0xff]
  %v8066 = vld [vmem:[%s1102 + $0x80] sm:$0xff]
  %v8067 = vld [vmem:[%s1102 + $0x88] sm:$0xff]
  %v8068 = vld [vmem:[%s1102 + $0x90] sm:$0xff]
  %v8069 = vld [vmem:[%s1102 + $0x98] sm:$0xff]
  %v8070 = vld [vmem:[%s1102 + $0xa0] sm:$0xff]
  %v8071 = vld [vmem:[%s1102 + $0xa8] sm:$0xff]
  %v8072 = vld [vmem:[%s1102 + $0xb0] sm:$0xff]
  %v8073 = vld [vmem:[%s1102 + $0xb8] sm:$0xff]
  %v8074 = vld [vmem:[%s1102 + $0xc0] sm:$0xff]
  %v8075 = vld [vmem:[%s1102 + $0xc8] sm:$0xff]
  %v8076 = vld [vmem:[%s1102 + $0xd0] sm:$0xff]
  %v8077 = vld [vmem:[%s1102 + $0xd8] sm:$0xff]
  %v8078 = vld [vmem:[%s1102 + $0xe0] sm:$0xff]
  %v8079 = vld [vmem:[%s1102 + $0xe8] sm:$0xff]
  %v8080 = vld [vmem:[%s1102 + $0xf0] sm:$0xff]
  %v8081 = vld [vmem:[%s1102 + $0xf8] sm:$0xff]
  %v8082 = vld [vmem:[%s1102 + $0x100] sm:$0xff]
  %v8083 = vld [vmem:[%s1102 + $0x108] sm:$0xff]
  %v8084 = vld [vmem:[%s1102 + $0x110] sm:$0xff]
  %v8085 = vld [vmem:[%s1102 + $0x118] sm:$0xff]
  %v8086 = vld [vmem:[%s1102 + $0x120] sm:$0xff]
  %v8087 = vld [vmem:[%s1102 + $0x128] sm:$0xff]
  %v8088 = vld [vmem:[%s1102 + $0x130] sm:$0xff]
  %v8089 = vld [vmem:[%s1102 + $0x138] sm:$0xff]
  %v8090 = vld [vmem:[%s1102 + $0x140] sm:$0xff]
  %v8091 = vld [vmem:[%s1102 + $0x148] sm:$0xff]
  %v8092 = vld [vmem:[%s1102 + $0x150] sm:$0xff]
  %v8093 = vld [vmem:[%s1102 + $0x158] sm:$0xff]
  %v8094 = vld [vmem:[%s1102 + $0x160] sm:$0xff]
  %v8095 = vld [vmem:[%s1102 + $0x168] sm:$0xff]
  %v8096 = vld [vmem:[%s1102 + $0x170] sm:$0xff]
  %v8097 = vld [vmem:[%s1102 + $0x178] sm:$0xff]
  %v8098 = vld [vmem:[%s1102 + $0x180] sm:$0xff]
  %v8099 = vld [vmem:[%s1102 + $0x188] sm:$0xff]
  %v8100 = vld [vmem:[%s1102 + $0x190] sm:$0xff]
  %v8101 = vld [vmem:[%s1102 + $0x198] sm:$0xff]
  %v8102 = vld [vmem:[%s1102 + $0x1a0] sm:$0xff]
  %v8103 = vld [vmem:[%s1102 + $0x1a8] sm:$0xff]
  %v8104 = vld [vmem:[%s1102 + $0x1b0] sm:$0xff]
  %v8105 = vld [vmem:[%s1102 + $0x1b8] sm:$0xff]
  %v8106 = vld [vmem:[%s1102 + $0x1c0] sm:$0xff]
  %v8107 = vld [vmem:[%s1102 + $0x1c8] sm:$0xff]
  %v8108 = vld [vmem:[%s1102 + $0x1d0] sm:$0xff]
  %v8109 = vld [vmem:[%s1102 + $0x1d8] sm:$0xff]
  %v8110 = vld [vmem:[%s1102 + $0x1e0] sm:$0xff]
  %v8111 = vld [vmem:[%s1102 + $0x1e8] sm:$0xff]
  %v8112 = vld [vmem:[%s1102 + $0x1f0] sm:$0xff]
  %v8113 = vld [vmem:[%s1102 + $0x1f8] sm:$0xff]
  %v8114 = vld [vmem:[%s1102 + $0x200] sm:$0xff]
  %v8115 = vld [vmem:[%s1102 + $0x208] sm:$0xff]
  %v8116 = vld [vmem:[%s1102 + $0x210] sm:$0xff]
  %v8117 = vld [vmem:[%s1102 + $0x218] sm:$0xff]
  %v8118 = vld [vmem:[%s1102 + $0x220] sm:$0xff]
  %v8119 = vld [vmem:[%s1102 + $0x228] sm:$0xff]
  %v8120 = vld [vmem:[%s1102 + $0x230] sm:$0xff]
  %v8121 = vld [vmem:[%s1102 + $0x238] sm:$0xff]
  %v8122 = vld [vmem:[%s1102 + $0x240] sm:$0xff]
  %v8123 = vld [vmem:[%s1102 + $0x248] sm:$0xff]
  %v8124 = vld [vmem:[%s1102 + $0x250] sm:$0xff]
  %v8125 = vld [vmem:[%s1102 + $0x258] sm:$0xff]
  %v8126 = vld [vmem:[%s1102 + $0x260] sm:$0xff]
  %v8127 = vld [vmem:[%s1102 + $0x268] sm:$0xff]
  %v8128 = vld [vmem:[%s1102 + $0x270] sm:$0xff]
  %v8129 = vld [vmem:[%s1102 + $0x278] sm:$0xff]
  %v8130 = vld [vmem:[%s1102 + $0x280] sm:$0xff]
  %v8131 = vld [vmem:[%s1102 + $0x288] sm:$0xff]
  %v8132 = vld [vmem:[%s1102 + $0x290] sm:$0xff]
  %v8133 = vld [vmem:[%s1102 + $0x298] sm:$0xff]
  %v8134 = vld [vmem:[%s1102 + $0x2a0] sm:$0xff]
  %v8135 = vld [vmem:[%s1102 + $0x2a8] sm:$0xff]
  %v8136 = vld [vmem:[%s1102 + $0x2b0] sm:$0xff]
  %v8137 = vld [vmem:[%s1102 + $0x2b8] sm:$0xff]
  %v8138 = vld [vmem:[%s1102 + $0x2c0] sm:$0xff]
  %v8139 = vld [vmem:[%s1102 + $0x2c8] sm:$0xff]
  %v8140 = vld [vmem:[%s1102 + $0x2d0] sm:$0xff]
  %v8141 = vld [vmem:[%s1102 + $0x2d8] sm:$0xff]
  %v8142 = vld [vmem:[%s1102 + $0x2e0] sm:$0xff]
  %v8143 = vld [vmem:[%s1102 + $0x2e8] sm:$0xff]
  %v8144 = vld [vmem:[%s1102 + $0x2f0] sm:$0xff]
  %v8145 = vld [vmem:[%s1102 + $0x2f8] sm:$0xff]
  %v8146 = vld [vmem:[%s1102 + $0x300] sm:$0xff]
  %v8147 = vld [vmem:[%s1102 + $0x308] sm:$0xff]
  %v8148 = vld [vmem:[%s1102 + $0x310] sm:$0xff]
  %v8149 = vld [vmem:[%s1102 + $0x318] sm:$0xff]
  %v8150 = vld [vmem:[%s1102 + $0x320] sm:$0xff]
  %v8151 = vld [vmem:[%s1102 + $0x328] sm:$0xff]
  %v8152 = vld [vmem:[%s1102 + $0x330] sm:$0xff]
  %v8153 = vld [vmem:[%s1102 + $0x338] sm:$0xff]
  %v8154 = vld [vmem:[%s1102 + $0x340] sm:$0xff]
  %v8155 = vld [vmem:[%s1102 + $0x348] sm:$0xff]
  %v8156 = vld [vmem:[%s1102 + $0x350] sm:$0xff]
  %v8157 = vld [vmem:[%s1102 + $0x358] sm:$0xff]
  %v8158 = vld [vmem:[%s1102 + $0x360] sm:$0xff]
  %v8159 = vld [vmem:[%s1102 + $0x368] sm:$0xff]
  %v8160 = vld [vmem:[%s1102 + $0x370] sm:$0xff]
  %v8161 = vld [vmem:[%s1102 + $0x378] sm:$0xff]
  %v8162 = vld [vmem:[%s1102 + $0x380] sm:$0xff]
  %v8163 = vld [vmem:[%s1102 + $0x388] sm:$0xff]
  %v8164 = vld [vmem:[%s1102 + $0x390] sm:$0xff]
  %v8165 = vld [vmem:[%s1102 + $0x398] sm:$0xff]
  %v8166 = vld [vmem:[%s1102 + $0x3a0] sm:$0xff]
  %v8167 = vld [vmem:[%s1102 + $0x3a8] sm:$0xff]
  %v8168 = vld [vmem:[%s1102 + $0x3b0] sm:$0xff]
  %v8169 = vld [vmem:[%s1102 + $0x3b8] sm:$0xff]
  %v8170 = vld [vmem:[%s1102 + $0x3c0] sm:$0xff]
  %v8171 = vld [vmem:[%s1102 + $0x3c8] sm:$0xff]
  %v8172 = vld [vmem:[%s1102 + $0x3d0] sm:$0xff]
  %v8173 = vld [vmem:[%s1102 + $0x3d8] sm:$0xff]
  %v8174 = vld [vmem:[%s1102 + $0x3e0] sm:$0xff]
  %v8175 = vld [vmem:[%s1102 + $0x3e8] sm:$0xff]
  %v8176 = vld [vmem:[%s1102 + $0x3f0] sm:$0xff]
  %v8177 = vld [vmem:[%s1102 + $0x3f8] sm:$0xff]
  %v8306 = vunpack.c.l.b16 %v8050
  %v8307 = vunpack.c.h.b16 %v8050
  %v8308 = vunpack.c.l.b16 %v8051
  %v8309 = vunpack.c.h.b16 %v8051
  %v8310 = vunpack.c.l.b16 %v8052
  %v8311 = vunpack.c.h.b16 %v8052
  %v8312 = vunpack.c.l.b16 %v8053
  %v8313 = vunpack.c.h.b16 %v8053
  %v8314 = vunpack.c.l.b16 %v8054
  %v8315 = vunpack.c.h.b16 %v8054
  %v8316 = vunpack.c.l.b16 %v8055
  %v8317 = vunpack.c.h.b16 %v8055
  %v8318 = vunpack.c.l.b16 %v8056
  %v8319 = vunpack.c.h.b16 %v8056
  %v8320 = vunpack.c.l.b16 %v8057
  %v8321 = vunpack.c.h.b16 %v8057
  %v8322 = vunpack.c.l.b16 %v8058
  %v8323 = vunpack.c.h.b16 %v8058
  %v8324 = vunpack.c.l.b16 %v8059
  %v8325 = vunpack.c.h.b16 %v8059
  %v8326 = vunpack.c.l.b16 %v8060
  %v8327 = vunpack.c.h.b16 %v8060
  %v8328 = vunpack.c.l.b16 %v8061
  %v8329 = vunpack.c.h.b16 %v8061
  %v8330 = vunpack.c.l.b16 %v8062
  %v8331 = vunpack.c.h.b16 %v8062
  %v8332 = vunpack.c.l.b16 %v8063
  %v8333 = vunpack.c.h.b16 %v8063
  %v8334 = vunpack.c.l.b16 %v8064
  %v8335 = vunpack.c.h.b16 %v8064
  %v8336 = vunpack.c.l.b16 %v8065
  %v8337 = vunpack.c.h.b16 %v8065
  %v8338 = vunpack.c.l.b16 %v8066
  %v8339 = vunpack.c.h.b16 %v8066
  %v8340 = vunpack.c.l.b16 %v8067
  %v8341 = vunpack.c.h.b16 %v8067
  %v8342 = vunpack.c.l.b16 %v8068
  %v8343 = vunpack.c.h.b16 %v8068
  %v8344 = vunpack.c.l.b16 %v8069
  %v8345 = vunpack.c.h.b16 %v8069
  %v8346 = vunpack.c.l.b16 %v8070
  %v8347 = vunpack.c.h.b16 %v8070
  %v8348 = vunpack.c.l.b16 %v8071
  %v8349 = vunpack.c.h.b16 %v8071
  %v8350 = vunpack.c.l.b16 %v8072
  %v8351 = vunpack.c.h.b16 %v8072
  %v8352 = vunpack.c.l.b16 %v8073
  %v8353 = vunpack.c.h.b16 %v8073
  %v8354 = vunpack.c.l.b16 %v8074
  %v8355 = vunpack.c.h.b16 %v8074
  %v8356 = vunpack.c.l.b16 %v8075
  %v8357 = vunpack.c.h.b16 %v8075
  %v8358 = vunpack.c.l.b16 %v8076
  %v8359 = vunpack.c.h.b16 %v8076
  %v8360 = vunpack.c.l.b16 %v8077
  %v8361 = vunpack.c.h.b16 %v8077
  %v8362 = vunpack.c.l.b16 %v8078
  %v8363 = vunpack.c.h.b16 %v8078
  %v8364 = vunpack.c.l.b16 %v8079
  %v8365 = vunpack.c.h.b16 %v8079
  %v8366 = vunpack.c.l.b16 %v8080
  %v8367 = vunpack.c.h.b16 %v8080
  %v8368 = vunpack.c.l.b16 %v8081
  %v8369 = vunpack.c.h.b16 %v8081
  %v8370 = vunpack.c.l.b16 %v8082
  %v8371 = vunpack.c.h.b16 %v8082
  %v8372 = vunpack.c.l.b16 %v8083
  %v8373 = vunpack.c.h.b16 %v8083
  %v8374 = vunpack.c.l.b16 %v8084
  %v8375 = vunpack.c.h.b16 %v8084
  %v8376 = vunpack.c.l.b16 %v8085
  %v8377 = vunpack.c.h.b16 %v8085
  %v8378 = vunpack.c.l.b16 %v8086
  %v8379 = vunpack.c.h.b16 %v8086
  %v8380 = vunpack.c.l.b16 %v8087
  %v8381 = vunpack.c.h.b16 %v8087
  %v8382 = vunpack.c.l.b16 %v8088
  %v8383 = vunpack.c.h.b16 %v8088
  %v8384 = vunpack.c.l.b16 %v8089
  %v8385 = vunpack.c.h.b16 %v8089
  %v8386 = vunpack.c.l.b16 %v8090
  %v8387 = vunpack.c.h.b16 %v8090
  %v8388 = vunpack.c.l.b16 %v8091
  %v8389 = vunpack.c.h.b16 %v8091
  %v8390 = vunpack.c.l.b16 %v8092
  %v8391 = vunpack.c.h.b16 %v8092
  %v8392 = vunpack.c.l.b16 %v8093
  %v8393 = vunpack.c.h.b16 %v8093
  %v8394 = vunpack.c.l.b16 %v8094
  %v8395 = vunpack.c.h.b16 %v8094
  %v8396 = vunpack.c.l.b16 %v8095
  %v8397 = vunpack.c.h.b16 %v8095
  %v8398 = vunpack.c.l.b16 %v8096
  %v8399 = vunpack.c.h.b16 %v8096
  %v8400 = vunpack.c.l.b16 %v8097
  %v8401 = vunpack.c.h.b16 %v8097
  %v8402 = vunpack.c.l.b16 %v8098
  %v8403 = vunpack.c.h.b16 %v8098
  %v8404 = vunpack.c.l.b16 %v8099
  %v8405 = vunpack.c.h.b16 %v8099
  %v8406 = vunpack.c.l.b16 %v8100
  %v8407 = vunpack.c.h.b16 %v8100
  %v8408 = vunpack.c.l.b16 %v8101
  %v8409 = vunpack.c.h.b16 %v8101
  %v8410 = vunpack.c.l.b16 %v8102
  %v8411 = vunpack.c.h.b16 %v8102
  %v8412 = vunpack.c.l.b16 %v8103
  %v8413 = vunpack.c.h.b16 %v8103
  %v8414 = vunpack.c.l.b16 %v8104
  %v8415 = vunpack.c.h.b16 %v8104
  %v8416 = vunpack.c.l.b16 %v8105
  %v8417 = vunpack.c.h.b16 %v8105
  %v8418 = vunpack.c.l.b16 %v8106
  %v8419 = vunpack.c.h.b16 %v8106
  %v8420 = vunpack.c.l.b16 %v8107
  %v8421 = vunpack.c.h.b16 %v8107
  %v8422 = vunpack.c.l.b16 %v8108
  %v8423 = vunpack.c.h.b16 %v8108
  %v8424 = vunpack.c.l.b16 %v8109
  %v8425 = vunpack.c.h.b16 %v8109
  %v8426 = vunpack.c.l.b16 %v8110
  %v8427 = vunpack.c.h.b16 %v8110
  %v8428 = vunpack.c.l.b16 %v8111
  %v8429 = vunpack.c.h.b16 %v8111
  %v8430 = vunpack.c.l.b16 %v8112
  %v8431 = vunpack.c.h.b16 %v8112
  %v8432 = vunpack.c.l.b16 %v8113
  %v8433 = vunpack.c.h.b16 %v8113
  %v8434 = vunpack.c.l.b16 %v8114
  %v8435 = vunpack.c.h.b16 %v8114
  %v8436 = vunpack.c.l.b16 %v8115
  %v8437 = vunpack.c.h.b16 %v8115
  %v8438 = vunpack.c.l.b16 %v8116
  %v8439 = vunpack.c.h.b16 %v8116
  %v8440 = vunpack.c.l.b16 %v8117
  %v8441 = vunpack.c.h.b16 %v8117
  %v8442 = vunpack.c.l.b16 %v8118
  %v8443 = vunpack.c.h.b16 %v8118
  %v8444 = vunpack.c.l.b16 %v8119
  %v8445 = vunpack.c.h.b16 %v8119
  %v8446 = vunpack.c.l.b16 %v8120
  %v8447 = vunpack.c.h.b16 %v8120
  %v8448 = vunpack.c.l.b16 %v8121
  %v8449 = vunpack.c.h.b16 %v8121
  %v8450 = vunpack.c.l.b16 %v8122
  %v8451 = vunpack.c.h.b16 %v8122
  %v8452 = vunpack.c.l.b16 %v8123
  %v8453 = vunpack.c.h.b16 %v8123
  %v8454 = vunpack.c.l.b16 %v8124
  %v8455 = vunpack.c.h.b16 %v8124
  %v8456 = vunpack.c.l.b16 %v8125
  %v8457 = vunpack.c.h.b16 %v8125
  %v8458 = vunpack.c.l.b16 %v8126
  %v8459 = vunpack.c.h.b16 %v8126
  %v8460 = vunpack.c.l.b16 %v8127
  %v8461 = vunpack.c.h.b16 %v8127
  %v8462 = vunpack.c.l.b16 %v8128
  %v8463 = vunpack.c.h.b16 %v8128
  %v8464 = vunpack.c.l.b16 %v8129
  %v8465 = vunpack.c.h.b16 %v8129
  %v8466 = vunpack.c.l.b16 %v8130
  %v8467 = vunpack.c.h.b16 %v8130
  %v8468 = vunpack.c.l.b16 %v8131
  %v8469 = vunpack.c.h.b16 %v8131
  %v8470 = vunpack.c.l.b16 %v8132
  %v8471 = vunpack.c.h.b16 %v8132
  %v8472 = vunpack.c.l.b16 %v8133
  %v8473 = vunpack.c.h.b16 %v8133
  %v8474 = vunpack.c.l.b16 %v8134
  %v8475 = vunpack.c.h.b16 %v8134
  %v8476 = vunpack.c.l.b16 %v8135
  %v8477 = vunpack.c.h.b16 %v8135
  %v8478 = vunpack.c.l.b16 %v8136
  %v8479 = vunpack.c.h.b16 %v8136
  %v8480 = vunpack.c.l.b16 %v8137
  %v8481 = vunpack.c.h.b16 %v8137
  %v8482 = vunpack.c.l.b16 %v8138
  %v8483 = vunpack.c.h.b16 %v8138
  %v8484 = vunpack.c.l.b16 %v8139
  %v8485 = vunpack.c.h.b16 %v8139
  %v8486 = vunpack.c.l.b16 %v8140
  %v8487 = vunpack.c.h.b16 %v8140
  %v8488 = vunpack.c.l.b16 %v8141
  %v8489 = vunpack.c.h.b16 %v8141
  %v8490 = vunpack.c.l.b16 %v8142
  %v8491 = vunpack.c.h.b16 %v8142
  %v8492 = vunpack.c.l.b16 %v8143
  %v8493 = vunpack.c.h.b16 %v8143
  %v8494 = vunpack.c.l.b16 %v8144
  %v8495 = vunpack.c.h.b16 %v8144
  %v8496 = vunpack.c.l.b16 %v8145
  %v8497 = vunpack.c.h.b16 %v8145
  %v8498 = vunpack.c.l.b16 %v8146
  %v8499 = vunpack.c.h.b16 %v8146
  %v8500 = vunpack.c.l.b16 %v8147
  %v8501 = vunpack.c.h.b16 %v8147
  %v8502 = vunpack.c.l.b16 %v8148
  %v8503 = vunpack.c.h.b16 %v8148
  %v8504 = vunpack.c.l.b16 %v8149
  %v8505 = vunpack.c.h.b16 %v8149
  %v8506 = vunpack.c.l.b16 %v8150
  %v8507 = vunpack.c.h.b16 %v8150
  %v8508 = vunpack.c.l.b16 %v8151
  %v8509 = vunpack.c.h.b16 %v8151
  %v8510 = vunpack.c.l.b16 %v8152
  %v8511 = vunpack.c.h.b16 %v8152
  %v8512 = vunpack.c.l.b16 %v8153
  %v8513 = vunpack.c.h.b16 %v8153
  %v8514 = vunpack.c.l.b16 %v8154
  %v8515 = vunpack.c.h.b16 %v8154
  %v8516 = vunpack.c.l.b16 %v8155
  %v8517 = vunpack.c.h.b16 %v8155
  %v8518 = vunpack.c.l.b16 %v8156
  %v8519 = vunpack.c.h.b16 %v8156
  %v8520 = vunpack.c.l.b16 %v8157
  %v8521 = vunpack.c.h.b16 %v8157
  %v8522 = vunpack.c.l.b16 %v8158
  %v8523 = vunpack.c.h.b16 %v8158
  %v8524 = vunpack.c.l.b16 %v8159
  %v8525 = vunpack.c.h.b16 %v8159
  %v8526 = vunpack.c.l.b16 %v8160
  %v8527 = vunpack.c.h.b16 %v8160
  %v8528 = vunpack.c.l.b16 %v8161
  %v8529 = vunpack.c.h.b16 %v8161
  %v8530 = vunpack.c.l.b16 %v8162
  %v8531 = vunpack.c.h.b16 %v8162
  %v8532 = vunpack.c.l.b16 %v8163
  %v8533 = vunpack.c.h.b16 %v8163
  %v8534 = vunpack.c.l.b16 %v8164
  %v8535 = vunpack.c.h.b16 %v8164
  %v8536 = vunpack.c.l.b16 %v8165
  %v8537 = vunpack.c.h.b16 %v8165
  %v8538 = vunpack.c.l.b16 %v8166
  %v8539 = vunpack.c.h.b16 %v8166
  %v8540 = vunpack.c.l.b16 %v8167
  %v8541 = vunpack.c.h.b16 %v8167
  %v8542 = vunpack.c.l.b16 %v8168
  %v8543 = vunpack.c.h.b16 %v8168
  %v8544 = vunpack.c.l.b16 %v8169
  %v8545 = vunpack.c.h.b16 %v8169
  %v8546 = vunpack.c.l.b16 %v8170
  %v8547 = vunpack.c.h.b16 %v8170
  %v8548 = vunpack.c.l.b16 %v8171
  %v8549 = vunpack.c.h.b16 %v8171
  %v8550 = vunpack.c.l.b16 %v8172
  %v8551 = vunpack.c.h.b16 %v8172
  %v8552 = vunpack.c.l.b16 %v8173
  %v8553 = vunpack.c.h.b16 %v8173
  %v8554 = vunpack.c.l.b16 %v8174
  %v8555 = vunpack.c.h.b16 %v8174
  %v8556 = vunpack.c.l.b16 %v8175
  %v8557 = vunpack.c.h.b16 %v8175
  %v8558 = vunpack.c.l.b16 %v8176
  %v8559 = vunpack.c.h.b16 %v8176
  %v8560 = vunpack.c.l.b16 %v8177
  %v8561 = vunpack.c.h.b16 %v8177
  %v8562 = vpack.c.b16 %v8310, %v8306
  %v8563 = vpack.c.b16 %v8311, %v8307
  %v8564 = vpack.c.b16 %v8312, %v8308
  %v8565 = vpack.c.b16 %v8313, %v8309
  %v8566 = vpack.c.b16 %v8318, %v8314
  %v8567 = vpack.c.b16 %v8319, %v8315
  %v8568 = vpack.c.b16 %v8320, %v8316
  %v8569 = vpack.c.b16 %v8321, %v8317
  %v8570 = vpack.c.b16 %v8326, %v8322
  %v8571 = vpack.c.b16 %v8327, %v8323
  %v8572 = vpack.c.b16 %v8328, %v8324
  %v8573 = vpack.c.b16 %v8329, %v8325
  %v8574 = vpack.c.b16 %v8334, %v8330
  %v8575 = vpack.c.b16 %v8335, %v8331
  %v8576 = vpack.c.b16 %v8336, %v8332
  %v8577 = vpack.c.b16 %v8337, %v8333
  %v8578 = vpack.c.b16 %v8342, %v8338
  %v8579 = vpack.c.b16 %v8343, %v8339
  %v8580 = vpack.c.b16 %v8344, %v8340
  %v8581 = vpack.c.b16 %v8345, %v8341
  %v8582 = vpack.c.b16 %v8350, %v8346
  %v8583 = vpack.c.b16 %v8351, %v8347
  %v8584 = vpack.c.b16 %v8352, %v8348
  %v8585 = vpack.c.b16 %v8353, %v8349
  %v8586 = vpack.c.b16 %v8358, %v8354
  %v8587 = vpack.c.b16 %v8359, %v8355
  %v8588 = vpack.c.b16 %v8360, %v8356
  %v8589 = vpack.c.b16 %v8361, %v8357
  %v8590 = vpack.c.b16 %v8366, %v8362
  %v8591 = vpack.c.b16 %v8367, %v8363
  %v8592 = vpack.c.b16 %v8368, %v8364
  %v8593 = vpack.c.b16 %v8369, %v8365
  %v8594 = vpack.c.b16 %v8374, %v8370
  %v8595 = vpack.c.b16 %v8375, %v8371
  %v8596 = vpack.c.b16 %v8376, %v8372
  %v8597 = vpack.c.b16 %v8377, %v8373
  %v8598 = vpack.c.b16 %v8382, %v8378
  %v8599 = vpack.c.b16 %v8383, %v8379
  %v8600 = vpack.c.b16 %v8384, %v8380
  %v8601 = vpack.c.b16 %v8385, %v8381
  %v8602 = vpack.c.b16 %v8390, %v8386
  %v8603 = vpack.c.b16 %v8391, %v8387
  %v8604 = vpack.c.b16 %v8392, %v8388
  %v8605 = vpack.c.b16 %v8393, %v8389
  %v8606 = vpack.c.b16 %v8398, %v8394
  %v8607 = vpack.c.b16 %v8399, %v8395
  %v8608 = vpack.c.b16 %v8400, %v8396
  %v8609 = vpack.c.b16 %v8401, %v8397
  %v8610 = vpack.c.b16 %v8406, %v8402
  %v8611 = vpack.c.b16 %v8407, %v8403
  %v8612 = vpack.c.b16 %v8408, %v8404
  %v8613 = vpack.c.b16 %v8409, %v8405
  %v8614 = vpack.c.b16 %v8414, %v8410
  %v8615 = vpack.c.b16 %v8415, %v8411
  %v8616 = vpack.c.b16 %v8416, %v8412
  %v8617 = vpack.c.b16 %v8417, %v8413
  %v8618 = vpack.c.b16 %v8422, %v8418
  %v8619 = vpack.c.b16 %v8423, %v8419
  %v8620 = vpack.c.b16 %v8424, %v8420
  %v8621 = vpack.c.b16 %v8425, %v8421
  %v8622 = vpack.c.b16 %v8430, %v8426
  %v8623 = vpack.c.b16 %v8431, %v8427
  %v8624 = vpack.c.b16 %v8432, %v8428
  %v8625 = vpack.c.b16 %v8433, %v8429
  %v8626 = vpack.c.b16 %v8438, %v8434
  %v8627 = vpack.c.b16 %v8439, %v8435
  %v8628 = vpack.c.b16 %v8440, %v8436
  %v8629 = vpack.c.b16 %v8441, %v8437
  %v8630 = vpack.c.b16 %v8446, %v8442
  %v8631 = vpack.c.b16 %v8447, %v8443
  %v8632 = vpack.c.b16 %v8448, %v8444
  %v8633 = vpack.c.b16 %v8449, %v8445
  %v8634 = vpack.c.b16 %v8454, %v8450
  %v8635 = vpack.c.b16 %v8455, %v8451
  %v8636 = vpack.c.b16 %v8456, %v8452
  %v8637 = vpack.c.b16 %v8457, %v8453
  %v8638 = vpack.c.b16 %v8462, %v8458
  %v8639 = vpack.c.b16 %v8463, %v8459
  %v8640 = vpack.c.b16 %v8464, %v8460
  %v8641 = vpack.c.b16 %v8465, %v8461
  %v8642 = vpack.c.b16 %v8470, %v8466
  %v8643 = vpack.c.b16 %v8471, %v8467
  %v8644 = vpack.c.b16 %v8472, %v8468
  %v8645 = vpack.c.b16 %v8473, %v8469
  %v8646 = vpack.c.b16 %v8478, %v8474
  %v8647 = vpack.c.b16 %v8479, %v8475
  %v8648 = vpack.c.b16 %v8480, %v8476
  %v8649 = vpack.c.b16 %v8481, %v8477
  %v8650 = vpack.c.b16 %v8486, %v8482
  %v8651 = vpack.c.b16 %v8487, %v8483
  %v8652 = vpack.c.b16 %v8488, %v8484
  %v8653 = vpack.c.b16 %v8489, %v8485
  %v8654 = vpack.c.b16 %v8494, %v8490
  %v8655 = vpack.c.b16 %v8495, %v8491
  %v8656 = vpack.c.b16 %v8496, %v8492
  %v8657 = vpack.c.b16 %v8497, %v8493
  %v8658 = vpack.c.b16 %v8502, %v8498
  %v8659 = vpack.c.b16 %v8503, %v8499
  %v8660 = vpack.c.b16 %v8504, %v8500
  %v8661 = vpack.c.b16 %v8505, %v8501
  %v8662 = vpack.c.b16 %v8510, %v8506
  %v8663 = vpack.c.b16 %v8511, %v8507
  %v8664 = vpack.c.b16 %v8512, %v8508
  %v8665 = vpack.c.b16 %v8513, %v8509
  %v8666 = vpack.c.b16 %v8518, %v8514
  %v8667 = vpack.c.b16 %v8519, %v8515
  %v8668 = vpack.c.b16 %v8520, %v8516
  %v8669 = vpack.c.b16 %v8521, %v8517
  %v8670 = vpack.c.b16 %v8526, %v8522
  %v8671 = vpack.c.b16 %v8527, %v8523
  %v8672 = vpack.c.b16 %v8528, %v8524
  %v8673 = vpack.c.b16 %v8529, %v8525
  %v8674 = vpack.c.b16 %v8534, %v8530
  %v8675 = vpack.c.b16 %v8535, %v8531
  %v8676 = vpack.c.b16 %v8536, %v8532
  %v8677 = vpack.c.b16 %v8537, %v8533
  %v8678 = vpack.c.b16 %v8542, %v8538
  %v8679 = vpack.c.b16 %v8543, %v8539
  %v8680 = vpack.c.b16 %v8544, %v8540
  %v8681 = vpack.c.b16 %v8545, %v8541
  %v8682 = vpack.c.b16 %v8550, %v8546
  %v8683 = vpack.c.b16 %v8551, %v8547
  %v8684 = vpack.c.b16 %v8552, %v8548
  %v8685 = vpack.c.b16 %v8553, %v8549
  %v8686 = vpack.c.b16 %v8558, %v8554
  %v8687 = vpack.c.b16 %v8559, %v8555
  %v8688 = vpack.c.b16 %v8560, %v8556
  %v8689 = vpack.c.b16 %v8561, %v8557
  %8818 = vmatpush.bf16.msra.mxu0 %v8590
  %8819 = vmatpush.bf16.msra.mxu0 %v8586
  %8820 = vmatpush.bf16.msra.mxu0 %v8582
  %8821 = vmatpush.bf16.msra.mxu0 %v8578
  %8822 = vmatpush.bf16.msra.mxu0 %v8574
  %8823 = vmatpush.bf16.msra.mxu0 %v8570
  %8824 = vmatpush.bf16.msra.mxu0 %v8566
  %8825 = vmatpush.bf16.msra.mxu0 %v8562
  %8826 = vmatmul.bf16.gmra.mxu0 %v5898
  %v8827 = vpop.f32.mrf.mxu0
  %v8828 = vadd.f32 0.0, %v8827
  %v8829 = vpop.f32.mrf.mxu0
  %v8830 = vadd.f32 0.0, %v8829
  %8831 = vmatmul.bf16.gmra.mxu0 %v5902
  %v8832 = vpop.f32.mrf.mxu0
  %v8833 = vadd.f32 0.0, %v8832
  %v8834 = vpop.f32.mrf.mxu0
  %v8835 = vadd.f32 0.0, %v8834
  %8836 = vdwg.mxu0
  %8837 = vmatpush.bf16.msra.mxu0 %v8622
  %8838 = vmatpush.bf16.msra.mxu0 %v8618
  %8839 = vmatpush.bf16.msra.mxu0 %v8614
  %8840 = vmatpush.bf16.msra.mxu0 %v8610
  %8841 = vmatpush.bf16.msra.mxu0 %v8606
  %8842 = vmatpush.bf16.msra.mxu0 %v8602
  %8843 = vmatpush.bf16.msra.mxu0 %v8598
  %8844 = vmatpush.bf16.msra.mxu0 %v8594
  %8845 = vmatmul.bf16.gmra.mxu0 %v5899
  %v8846 = vpop.f32.mrf.mxu0
  %v8847 = vadd.f32 %v8828, %v8846
  %v8848 = vpop.f32.mrf.mxu0
  %v8849 = vadd.f32 %v8830, %v8848
  %8850 = vmatmul.bf16.gmra.mxu0 %v5903
  %v8851 = vpop.f32.mrf.mxu0
  %v8852 = vadd.f32 %v8833, %v8851
  %v8853 = vpop.f32.mrf.mxu0
  %v8854 = vadd.f32 %v8835, %v8853
  %8855 = vdwg.mxu0
  %8856 = vmatpush.bf16.msra.mxu0 %v8654
  %8857 = vmatpush.bf16.msra.mxu0 %v8650
  %8858 = vmatpush.bf16.msra.mxu0 %v8646
  %8859 = vmatpush.bf16.msra.mxu0 %v8642
  %8860 = vmatpush.bf16.msra.mxu0 %v8638
  %8861 = vmatpush.bf16.msra.mxu0 %v8634
  %8862 = vmatpush.bf16.msra.mxu0 %v8630
  %8863 = vmatpush.bf16.msra.mxu0 %v8626
  %8864 = vmatmul.bf16.gmra.mxu0 %v5900
  %v8865 = vpop.f32.mrf.mxu0
  %v8866 = vadd.f32 %v8847, %v8865
  %v8867 = vpop.f32.mrf.mxu0
  %v8868 = vadd.f32 %v8849, %v8867
  %8869 = vmatmul.bf16.gmra.mxu0 %v5904
  %v8870 = vpop.f32.mrf.mxu0
  %v8871 = vadd.f32 %v8852, %v8870
  %v8872 = vpop.f32.mrf.mxu0
  %v8873 = vadd.f32 %v8854, %v8872
  %8874 = vdwg.mxu0
  %8875 = vmatpush.bf16.msra.mxu0 %v8686
  %8876 = vmatpush.bf16.msra.mxu0 %v8682
  %8877 = vmatpush.bf16.msra.mxu0 %v8678
  %8878 = vmatpush.bf16.msra.mxu0 %v8674
  %8879 = vmatpush.bf16.msra.mxu0 %v8670
  %8880 = vmatpush.bf16.msra.mxu0 %v8666
  %8881 = vmatpush.bf16.msra.mxu0 %v8662
  %8882 = vmatpush.bf16.msra.mxu0 %v8658
  %8883 = vmatmul.bf16.gmra.mxu0 %v5901
  %v8884 = vpop.f32.mrf.mxu0
  %v8885 = vadd.f32 %v8866, %v8884
  %v8886 = vpop.f32.mrf.mxu0
  %v8887 = vadd.f32 %v8868, %v8886
  %8888 = vmatmul.bf16.gmra.mxu0 %v5905
  %v8889 = vpop.f32.mrf.mxu0
  %v8890 = vadd.f32 %v8871, %v8889
  %v8891 = vpop.f32.mrf.mxu0
  %v8892 = vadd.f32 %v8873, %v8891
  %8893 = vdwg.mxu0
  %8894 = vmatpush.bf16.msra.mxu0 %v8591
  %8895 = vmatpush.bf16.msra.mxu0 %v8587
  %8896 = vmatpush.bf16.msra.mxu0 %v8583
  %8897 = vmatpush.bf16.msra.mxu0 %v8579
  %8898 = vmatpush.bf16.msra.mxu0 %v8575
  %8899 = vmatpush.bf16.msra.mxu0 %v8571
  %8900 = vmatpush.bf16.msra.mxu0 %v8567
  %8901 = vmatpush.bf16.msra.mxu0 %v8563
  %8902 = vmatmul.bf16.gmra.mxu0 %v5898
  %v8903 = vpop.f32.mrf.mxu0
  %v8904 = vadd.f32 0.0, %v8903
  %v8905 = vpop.f32.mrf.mxu0
  %v8906 = vadd.f32 0.0, %v8905
  %8907 = vmatmul.bf16.gmra.mxu0 %v5902
  %v8908 = vpop.f32.mrf.mxu0
  %v8909 = vadd.f32 0.0, %v8908
  %v8910 = vpop.f32.mrf.mxu0
  %v8911 = vadd.f32 0.0, %v8910
  %8912 = vdwg.mxu0
  %8913 = vmatpush.bf16.msra.mxu0 %v8623
  %8914 = vmatpush.bf16.msra.mxu0 %v8619
  %8915 = vmatpush.bf16.msra.mxu0 %v8615
  %8916 = vmatpush.bf16.msra.mxu0 %v8611
  %8917 = vmatpush.bf16.msra.mxu0 %v8607
  %8918 = vmatpush.bf16.msra.mxu0 %v8603
  %8919 = vmatpush.bf16.msra.mxu0 %v8599
  %8920 = vmatpush.bf16.msra.mxu0 %v8595
  %8921 = vmatmul.bf16.gmra.mxu0 %v5899
  %v8922 = vpop.f32.mrf.mxu0
  %v8923 = vadd.f32 %v8904, %v8922
  %v8924 = vpop.f32.mrf.mxu0
  %v8925 = vadd.f32 %v8906, %v8924
  %8926 = vmatmul.bf16.gmra.mxu0 %v5903
  %v8927 = vpop.f32.mrf.mxu0
  %v8928 = vadd.f32 %v8909, %v8927
  %v8929 = vpop.f32.mrf.mxu0
  %v8930 = vadd.f32 %v8911, %v8929
  %8931 = vdwg.mxu0
  %8932 = vmatpush.bf16.msra.mxu0 %v8655
  %8933 = vmatpush.bf16.msra.mxu0 %v8651
  %8934 = vmatpush.bf16.msra.mxu0 %v8647
  %8935 = vmatpush.bf16.msra.mxu0 %v8643
  %8936 = vmatpush.bf16.msra.mxu0 %v8639
  %8937 = vmatpush.bf16.msra.mxu0 %v8635
  %8938 = vmatpush.bf16.msra.mxu0 %v8631
  %8939 = vmatpush.bf16.msra.mxu0 %v8627
  %8940 = vmatmul.bf16.gmra.mxu0 %v5900
  %v8941 = vpop.f32.mrf.mxu0
  %v8942 = vadd.f32 %v8923, %v8941
  %v8943 = vpop.f32.mrf.mxu0
  %v8944 = vadd.f32 %v8925, %v8943
  %8945 = vmatmul.bf16.gmra.mxu0 %v5904
  %v8946 = vpop.f32.mrf.mxu0
  %v8947 = vadd.f32 %v8928, %v8946
  %v8948 = vpop.f32.mrf.mxu0
  %v8949 = vadd.f32 %v8930, %v8948
  %8950 = vdwg.mxu0
  %8951 = vmatpush.bf16.msra.mxu0 %v8687
  %8952 = vmatpush.bf16.msra.mxu0 %v8683
  %8953 = vmatpush.bf16.msra.mxu0 %v8679
  %8954 = vmatpush.bf16.msra.mxu0 %v8675
  %8955 = vmatpush.bf16.msra.mxu0 %v8671
  %8956 = vmatpush.bf16.msra.mxu0 %v8667
  %8957 = vmatpush.bf16.msra.mxu0 %v8663
  %8958 = vmatpush.bf16.msra.mxu0 %v8659
  %8959 = vmatmul.bf16.gmra.mxu0 %v5901
  %v8960 = vpop.f32.mrf.mxu0
  %v8961 = vadd.f32 %v8942, %v8960
  %v8962 = vpop.f32.mrf.mxu0
  %v8963 = vadd.f32 %v8944, %v8962
  %8964 = vmatmul.bf16.gmra.mxu0 %v5905
  %v8965 = vpop.f32.mrf.mxu0
  %v8966 = vadd.f32 %v8947, %v8965
  %v8967 = vpop.f32.mrf.mxu0
  %v8968 = vadd.f32 %v8949, %v8967
  %8969 = vdwg.mxu0
  %8970 = vmatpush.bf16.msra.mxu0 %v8592
  %8971 = vmatpush.bf16.msra.mxu0 %v8588
  %8972 = vmatpush.bf16.msra.mxu0 %v8584
  %8973 = vmatpush.bf16.msra.mxu0 %v8580
  %8974 = vmatpush.bf16.msra.mxu0 %v8576
  %8975 = vmatpush.bf16.msra.mxu0 %v8572
  %8976 = vmatpush.bf16.msra.mxu0 %v8568
  %8977 = vmatpush.bf16.msra.mxu0 %v8564
  %8978 = vmatmul.bf16.gmra.mxu0 %v5898
  %v8979 = vpop.f32.mrf.mxu0
  %v8980 = vadd.f32 0.0, %v8979
  %v8981 = vpop.f32.mrf.mxu0
  %v8982 = vadd.f32 0.0, %v8981
  %8983 = vmatmul.bf16.gmra.mxu0 %v5902
  %v8984 = vpop.f32.mrf.mxu0
  %v8985 = vadd.f32 0.0, %v8984
  %v8986 = vpop.f32.mrf.mxu0
  %v8987 = vadd.f32 0.0, %v8986
  %8988 = vdwg.mxu0
  %8989 = vmatpush.bf16.msra.mxu0 %v8624
  %8990 = vmatpush.bf16.msra.mxu0 %v8620
  %8991 = vmatpush.bf16.msra.mxu0 %v8616
  %8992 = vmatpush.bf16.msra.mxu0 %v8612
  %8993 = vmatpush.bf16.msra.mxu0 %v8608
  %8994 = vmatpush.bf16.msra.mxu0 %v8604
  %8995 = vmatpush.bf16.msra.mxu0 %v8600
  %8996 = vmatpush.bf16.msra.mxu0 %v8596
  %8997 = vmatmul.bf16.gmra.mxu0 %v5899
  %v8998 = vpop.f32.mrf.mxu0
  %v8999 = vadd.f32 %v8980, %v8998
  %v9000 = vpop.f32.mrf.mxu0
  %v9001 = vadd.f32 %v8982, %v9000
  %9002 = vmatmul.bf16.gmra.mxu0 %v5903
  %v9003 = vpop.f32.mrf.mxu0
  %v9004 = vadd.f32 %v8985, %v9003
  %v9005 = vpop.f32.mrf.mxu0
  %v9006 = vadd.f32 %v8987, %v9005
  %9007 = vdwg.mxu0
  %9008 = vmatpush.bf16.msra.mxu0 %v8656
  %9009 = vmatpush.bf16.msra.mxu0 %v8652
  %9010 = vmatpush.bf16.msra.mxu0 %v8648
  %9011 = vmatpush.bf16.msra.mxu0 %v8644
  %9012 = vmatpush.bf16.msra.mxu0 %v8640
  %9013 = vmatpush.bf16.msra.mxu0 %v8636
  %9014 = vmatpush.bf16.msra.mxu0 %v8632
  %9015 = vmatpush.bf16.msra.mxu0 %v8628
  %9016 = vmatmul.bf16.gmra.mxu0 %v5900
  %v9017 = vpop.f32.mrf.mxu0
  %v9018 = vadd.f32 %v8999, %v9017
  %v9019 = vpop.f32.mrf.mxu0
  %v9020 = vadd.f32 %v9001, %v9019
  %9021 = vmatmul.bf16.gmra.mxu0 %v5904
  %v9022 = vpop.f32.mrf.mxu0
  %v9023 = vadd.f32 %v9004, %v9022
  %v9024 = vpop.f32.mrf.mxu0
  %v9025 = vadd.f32 %v9006, %v9024
  %9026 = vdwg.mxu0
  %9027 = vmatpush.bf16.msra.mxu0 %v8688
  %9028 = vmatpush.bf16.msra.mxu0 %v8684
  %9029 = vmatpush.bf16.msra.mxu0 %v8680
  %9030 = vmatpush.bf16.msra.mxu0 %v8676
  %9031 = vmatpush.bf16.msra.mxu0 %v8672
  %9032 = vmatpush.bf16.msra.mxu0 %v8668
  %9033 = vmatpush.bf16.msra.mxu0 %v8664
  %9034 = vmatpush.bf16.msra.mxu0 %v8660
  %9035 = vmatmul.bf16.gmra.mxu0 %v5901
  %v9036 = vpop.f32.mrf.mxu0
  %v9037 = vadd.f32 %v9018, %v9036
  %v9038 = vpop.f32.mrf.mxu0
  %v9039 = vadd.f32 %v9020, %v9038
  %9040 = vmatmul.bf16.gmra.mxu0 %v5905
  %v9041 = vpop.f32.mrf.mxu0
  %v9042 = vadd.f32 %v9023, %v9041
  %v9043 = vpop.f32.mrf.mxu0
  %v9044 = vadd.f32 %v9025, %v9043
  %9045 = vdwg.mxu0
  %9046 = vmatpush.bf16.msra.mxu0 %v8593
  %9047 = vmatpush.bf16.msra.mxu0 %v8589
  %9048 = vmatpush.bf16.msra.mxu0 %v8585
  %9049 = vmatpush.bf16.msra.mxu0 %v8581
  %9050 = vmatpush.bf16.msra.mxu0 %v8577
  %9051 = vmatpush.bf16.msra.mxu0 %v8573
  %9052 = vmatpush.bf16.msra.mxu0 %v8569
  %9053 = vmatpush.bf16.msra.mxu0 %v8565
  %9054 = vmatmul.bf16.gmra.mxu0 %v5898
  %v9055 = vpop.f32.mrf.mxu0
  %v9056 = vadd.f32 0.0, %v9055
  %v9057 = vpop.f32.mrf.mxu0
  %v9058 = vadd.f32 0.0, %v9057
  %9059 = vmatmul.bf16.gmra.mxu0 %v5902
  %v9060 = vpop.f32.mrf.mxu0
  %v9061 = vadd.f32 0.0, %v9060
  %v9062 = vpop.f32.mrf.mxu0
  %v9063 = vadd.f32 0.0, %v9062
  %9064 = vdwg.mxu0
  %9065 = vmatpush.bf16.msra.mxu0 %v8625
  %9066 = vmatpush.bf16.msra.mxu0 %v8621
  %9067 = vmatpush.bf16.msra.mxu0 %v8617
  %9068 = vmatpush.bf16.msra.mxu0 %v8613
  %9069 = vmatpush.bf16.msra.mxu0 %v8609
  %9070 = vmatpush.bf16.msra.mxu0 %v8605
  %9071 = vmatpush.bf16.msra.mxu0 %v8601
  %9072 = vmatpush.bf16.msra.mxu0 %v8597
  %9073 = vmatmul.bf16.gmra.mxu0 %v5899
  %v9074 = vpop.f32.mrf.mxu0
  %v9075 = vadd.f32 %v9056, %v9074
  %v9076 = vpop.f32.mrf.mxu0
  %v9077 = vadd.f32 %v9058, %v9076
  %9078 = vmatmul.bf16.gmra.mxu0 %v5903
  %v9079 = vpop.f32.mrf.mxu0
  %v9080 = vadd.f32 %v9061, %v9079
  %v9081 = vpop.f32.mrf.mxu0
  %v9082 = vadd.f32 %v9063, %v9081
  %9083 = vdwg.mxu0
  %9084 = vmatpush.bf16.msra.mxu0 %v8657
  %9085 = vmatpush.bf16.msra.mxu0 %v8653
  %9086 = vmatpush.bf16.msra.mxu0 %v8649
  %9087 = vmatpush.bf16.msra.mxu0 %v8645
  %9088 = vmatpush.bf16.msra.mxu0 %v8641
  %9089 = vmatpush.bf16.msra.mxu0 %v8637
  %9090 = vmatpush.bf16.msra.mxu0 %v8633
  %9091 = vmatpush.bf16.msra.mxu0 %v8629
  %9092 = vmatmul.bf16.gmra.mxu0 %v5900
  %v9093 = vpop.f32.mrf.mxu0
  %v9094 = vadd.f32 %v9075, %v9093
  %v9095 = vpop.f32.mrf.mxu0
  %v9096 = vadd.f32 %v9077, %v9095
  %9097 = vmatmul.bf16.gmra.mxu0 %v5904
  %v9098 = vpop.f32.mrf.mxu0
  %v9099 = vadd.f32 %v9080, %v9098
  %v9100 = vpop.f32.mrf.mxu0
  %v9101 = vadd.f32 %v9082, %v9100
  %9102 = vdwg.mxu0
  %9103 = vmatpush.bf16.msra.mxu0 %v8689
  %9104 = vmatpush.bf16.msra.mxu0 %v8685
  %9105 = vmatpush.bf16.msra.mxu0 %v8681
  %9106 = vmatpush.bf16.msra.mxu0 %v8677
  %9107 = vmatpush.bf16.msra.mxu0 %v8673
  %9108 = vmatpush.bf16.msra.mxu0 %v8669
  %9109 = vmatpush.bf16.msra.mxu0 %v8665
  %9110 = vmatpush.bf16.msra.mxu0 %v8661
  %9111 = vmatmul.bf16.gmra.mxu0 %v5901
  %v9112 = vpop.f32.mrf.mxu0
  %v9113 = vadd.f32 %v9094, %v9112
  %v9114 = vpop.f32.mrf.mxu0
  %v9115 = vadd.f32 %v9096, %v9114
  %9116 = vmatmul.bf16.gmra.mxu0 %v5905
  %v9117 = vpop.f32.mrf.mxu0
  %v9118 = vadd.f32 %v9099, %v9117
  %v9119 = vpop.f32.mrf.mxu0
  %v9120 = vadd.f32 %v9101, %v9119
  %9121 = vdwg.mxu0
  %v9138 = vrot.slane %v6741, 1
  %v9139 = vrot.slane %v6743, 1
  %v9140 = vsel %vm4567, %v9138, %v9139
  %v9141 = vrot.slane %v6817, 1
  %v9142 = vrot.slane %v6819, 1
  %v9143 = vsel %vm4567, %v9141, %v9142
  %v9144 = vrot.slane %v6893, 1
  %v9145 = vrot.slane %v6895, 1
  %v9146 = vsel %vm4567, %v9144, %v9145
  %v9147 = vrot.slane %v6969, 1
  %v9148 = vrot.slane %v6971, 1
  %v9149 = vsel %vm4567, %v9147, %v9148
  %v9150 = vrot.slane %v6746, 1
  %v9151 = vsel %vm4567, %v9139, %v9150
  %v9152 = vrot.slane %v6822, 1
  %v9153 = vsel %vm4567, %v9142, %v9152
  %v9154 = vrot.slane %v6898, 1
  %v9155 = vsel %vm4567, %v9145, %v9154
  %v9156 = vrot.slane %v6974, 1
  %v9157 = vsel %vm4567, %v9148, %v9156
  %v9158 = vrot.slane %v6748, 1
  %v9159 = vsel %vm4567, %v9150, %v9158
  %v9160 = vrot.slane %v6824, 1
  %v9161 = vsel %vm4567, %v9152, %v9160
  %v9162 = vrot.slane %v6900, 1
  %v9163 = vsel %vm4567, %v9154, %v9162
  %v9164 = vrot.slane %v6976, 1
  %v9165 = vsel %vm4567, %v9156, %v9164
  %v9186 = vsel %vm4567, %v9158, %v9138
  %v9187 = vsel %vm4567, %v9160, %v9141
  %v9188 = vsel %vm4567, %v9162, %v9144
  %v9189 = vsel %vm4567, %v9164, %v9147
  %v9190 = vrot.slane %v6748, 7
  %v9191 = vrot.slane %v6824, 7
  %v9192 = vrot.slane %v6900, 7
  %v9193 = vrot.slane %v6976, 7
  %v9198 = vrot.slane %v6741, 7
  %v9199 = vrot.slane %v6817, 7
  %v9200 = vrot.slane %v6893, 7
  %v9201 = vrot.slane %v6969, 7
  %v9202 = vrot.slane %v6743, 7
  %v9203 = vsel %vm4628, %v9198, %v9202
  %v9204 = vrot.slane %v6819, 7
  %v9205 = vsel %vm4628, %v9199, %v9204
  %v9206 = vrot.slane %v6895, 7
  %v9207 = vsel %vm4628, %v9200, %v9206
  %v9208 = vrot.slane %v6971, 7
  %v9209 = vsel %vm4628, %v9201, %v9208
  %v9210 = vrot.slane %v6746, 7
  %v9211 = vsel %vm4628, %v9202, %v9210
  %v9212 = vrot.slane %v6822, 7
  %v9213 = vsel %vm4628, %v9204, %v9212
  %v9214 = vrot.slane %v6898, 7
  %v9215 = vsel %vm4628, %v9206, %v9214
  %v9216 = vrot.slane %v6974, 7
  %v9217 = vsel %vm4628, %v9208, %v9216
  %v9218 = vsel %vm4628, %v9210, %v9190
  %v9219 = vsel %vm4628, %v9212, %v9191
  %v9220 = vsel %vm4628, %v9214, %v9192
  %v9221 = vsel %vm4628, %v9216, %v9193
  %v9238 = vsel %vm4628, %v9190, %v9198
  %v9239 = vsel %vm4628, %v9191, %v9199
  %v9240 = vsel %vm4628, %v9192, %v9200
  %v9241 = vsel %vm4628, %v9193, %v9201
  %v9242 = vsel %vm80, %v9140, %v9238
  %v9243 = vsel %vm80, %v9143, %v9239
  %v9244 = vsel %vm80, %v9146, %v9240
  %v9245 = vsel %vm80, %v9149, %v9241
  %v9246 = vsel %vm81, %v9151, %v9203
  %v9247 = vsel %vm81, %v9153, %v9205
  %v9248 = vsel %vm81, %v9155, %v9207
  %v9249 = vsel %vm81, %v9157, %v9209
  %v9250 = vsel %vm82, %v9159, %v9211
  %v9251 = vsel %vm82, %v9161, %v9213
  %v9252 = vsel %vm82, %v9163, %v9215
  %v9253 = vsel %vm82, %v9165, %v9217
  %v9254 = vsel %vm83, %v9186, %v9218
  %v9255 = vsel %vm83, %v9187, %v9219
  %v9256 = vsel %vm83, %v9188, %v9220
  %v9257 = vsel %vm83, %v9189, %v9221
  %v9262 = vrot.slane %v8892, 7
  %v9263 = vrot.slane %v8968, 7
  %v9264 = vrot.slane %v9044, 7
  %v9265 = vrot.slane %v9120, 7
  %v9282 = vrot.slane %v8885, 7
  %v9283 = vrot.slane %v8961, 7
  %v9284 = vrot.slane %v9037, 7
  %v9285 = vrot.slane %v9113, 7
  %v9286 = vrot.slane %v8887, 7
  %v9287 = vsel %vm4628, %v9282, %v9286
  %v9288 = vrot.slane %v8963, 7
  %v9289 = vsel %vm4628, %v9283, %v9288
  %v9290 = vrot.slane %v9039, 7
  %v9291 = vsel %vm4628, %v9284, %v9290
  %v9292 = vrot.slane %v9115, 7
  %v9293 = vsel %vm4628, %v9285, %v9292
  %v9294 = vrot.slane %v8890, 7
  %v9295 = vsel %vm4628, %v9286, %v9294
  %v9296 = vrot.slane %v8966, 7
  %v9297 = vsel %vm4628, %v9288, %v9296
  %v9298 = vrot.slane %v9042, 7
  %v9299 = vsel %vm4628, %v9290, %v9298
  %v9300 = vrot.slane %v9118, 7
  %v9301 = vsel %vm4628, %v9292, %v9300
  %v9302 = vsel %vm4628, %v9294, %v9262
  %v9303 = vsel %vm4628, %v9296, %v9263
  %v9304 = vsel %vm4628, %v9298, %v9264
  %v9305 = vsel %vm4628, %v9300, %v9265
  %v9322 = vsel %vm4628, %v9262, %v9282
  %v9323 = vsel %vm4628, %v9263, %v9283
  %v9324 = vsel %vm4628, %v9264, %v9284
  %v9325 = vsel %vm4628, %v9265, %v9285
  %v9326 = vrot.slane %v8885, 1
  %v9327 = vrot.slane %v8887, 1
  %v9328 = vsel %vm4567, %v9326, %v9327
  %v9329 = vrot.slane %v8961, 1
  %v9330 = vrot.slane %v8963, 1
  %v9331 = vsel %vm4567, %v9329, %v9330
  %v9332 = vrot.slane %v9037, 1
  %v9333 = vrot.slane %v9039, 1
  %v9334 = vsel %vm4567, %v9332, %v9333
  %v9335 = vrot.slane %v9113, 1
  %v9336 = vrot.slane %v9115, 1
  %v9337 = vsel %vm4567, %v9335, %v9336
  %v9338 = vrot.slane %v8890, 1
  %v9339 = vsel %vm4567, %v9327, %v9338
  %v9340 = vrot.slane %v8966, 1
  %v9341 = vsel %vm4567, %v9330, %v9340
  %v9342 = vrot.slane %v9042, 1
  %v9343 = vsel %vm4567, %v9333, %v9342
  %v9344 = vrot.slane %v9118, 1
  %v9345 = vsel %vm4567, %v9336, %v9344
  %v9346 = vrot.slane %v8892, 1
  %v9347 = vsel %vm4567, %v9338, %v9346
  %v9348 = vrot.slane %v8968, 1
  %v9349 = vsel %vm4567, %v9340, %v9348
  %v9350 = vrot.slane %v9044, 1
  %v9351 = vsel %vm4567, %v9342, %v9350
  %v9352 = vrot.slane %v9120, 1
  %v9353 = vsel %vm4567, %v9344, %v9352
  %v9374 = vsel %vm4567, %v9346, %v9326
  %v9375 = vsel %vm4567, %v9348, %v9329
  %v9376 = vsel %vm4567, %v9350, %v9332
  %v9377 = vsel %vm4567, %v9352, %v9335
  %v9378 = vsel %vm84, %v9322, %v9328
  %v9379 = vsel %vm84, %v9323, %v9331
  %v9380 = vsel %vm84, %v9324, %v9334
  %v9381 = vsel %vm84, %v9325, %v9337
  %v9382 = vsel %vm85, %v9287, %v9339
  %v9383 = vsel %vm85, %v9289, %v9341
  %v9384 = vsel %vm85, %v9291, %v9343
  %v9385 = vsel %vm85, %v9293, %v9345
  %v9386 = vsel %vm86, %v9295, %v9347
  %v9387 = vsel %vm86, %v9297, %v9349
  %v9388 = vsel %vm86, %v9299, %v9351
  %v9389 = vsel %vm86, %v9301, %v9353
  %v9390 = vsel %vm87, %v9302, %v9374
  %v9391 = vsel %vm87, %v9303, %v9375
  %v9392 = vsel %vm87, %v9304, %v9376
  %v9393 = vsel %vm87, %v9305, %v9377
  %v9394 = vadd.f32 %v9242, %v7813
  %v9395 = vadd.f32 %v9243, %v7889
  %v9396 = vadd.f32 %v9244, %v7965
  %v9397 = vadd.f32 %v9245, %v8041
  %v9398 = vadd.f32 %v9246, %v7815
  %v9399 = vadd.f32 %v9247, %v7891
  %v9400 = vadd.f32 %v9248, %v7967
  %v9401 = vadd.f32 %v9249, %v8043
  %v9402 = vadd.f32 %v9250, %v7818
  %v9403 = vadd.f32 %v9251, %v7894
  %v9404 = vadd.f32 %v9252, %v7970
  %v9405 = vadd.f32 %v9253, %v8046
  %v9406 = vadd.f32 %v9254, %v7820
  %v9407 = vadd.f32 %v9255, %v7896
  %v9408 = vadd.f32 %v9256, %v7972
  %v9409 = vadd.f32 %v9257, %v8048
  %v9410 = vadd.f32 %v9394, %v9378
  %v9411 = vadd.f32 %v9395, %v9379
  %v9412 = vadd.f32 %v9396, %v9380
  %v9413 = vadd.f32 %v9397, %v9381
  %v9414 = vadd.f32 %v9398, %v9382
  %v9415 = vadd.f32 %v9399, %v9383
  %v9416 = vadd.f32 %v9400, %v9384
  %v9417 = vadd.f32 %v9401, %v9385
  %v9418 = vadd.f32 %v9402, %v9386
  %v9419 = vadd.f32 %v9403, %v9387
  %v9420 = vadd.f32 %v9404, %v9388
  %v9421 = vadd.f32 %v9405, %v9389
  %v9422 = vadd.f32 %v9406, %v9390
  %v9423 = vadd.f32 %v9407, %v9391
  %v9424 = vadd.f32 %v9408, %v9392
  %v9425 = vadd.f32 %v9409, %v9393
  %v9426 = vadd.f32 %v9410, %v9414
  %v9427 = vadd.f32 %v9426, %v9418
  %v9428 = vadd.f32 %v9427, %v9422
  %v9429 = vrot.slane %v9428, 4
  %v9430 = vadd.f32 %v9428, %v9429
  %v9431 = vrot.slane %v9430, 2
  %v9432 = vadd.f32 %v9430, %v9431
  %v9433 = vrot.slane %v9432, 1
  %v9434 = vadd.f32 %v9432, %v9433
  %v9435 = vadd.f32 %v9411, %v9415
  %v9436 = vadd.f32 %v9435, %v9419
  %v9437 = vadd.f32 %v9436, %v9423
  %v9438 = vrot.slane %v9437, 4
  %v9439 = vadd.f32 %v9437, %v9438
  %v9440 = vrot.slane %v9439, 2
  %v9441 = vadd.f32 %v9439, %v9440
  %v9442 = vrot.slane %v9441, 1
  %v9443 = vadd.f32 %v9441, %v9442
  %v9444 = vadd.f32 %v9412, %v9416
  %v9445 = vadd.f32 %v9444, %v9420
  %v9446 = vadd.f32 %v9445, %v9424
  %v9447 = vrot.slane %v9446, 4
  %v9448 = vadd.f32 %v9446, %v9447
  %v9449 = vrot.slane %v9448, 2
  %v9450 = vadd.f32 %v9448, %v9449
  %v9451 = vrot.slane %v9450, 1
  %v9452 = vadd.f32 %v9450, %v9451
  %v9453 = vadd.f32 %v9413, %v9417
  %v9454 = vadd.f32 %v9453, %v9421
  %v9455 = vadd.f32 %v9454, %v9425
  %v9456 = vrot.slane %v9455, 4
  %v9457 = vadd.f32 %v9455, %v9456
  %v9458 = vrot.slane %v9457, 2
  %v9459 = vadd.f32 %v9457, %v9458
  %v9460 = vrot.slane %v9459, 1
  %v9461 = vadd.f32 %v9459, %v9460
  %v9462 = vadd.f32 %v9434, %v9452
  %v9463 = vadd.f32 %v9443, %v9461
  %v9464 = vadd.f32 %v9462, %v9463
  %9465 = vrot.lane.b32.xlu0 %v9464, 64
  %v9466 = vpop.permute.xlu0 %9465
  %v9467 = vadd.f32 %v9464, %v9466
  %9468 = vrot.lane.b32.xlu0 %v9467, 32
  %v9469 = vpop.permute.xlu0 %9468
  %v9470 = vadd.f32 %v9467, %v9469
  %v9471 = vmul.f32 %v9470, 0.001953125
  %v9472 = vperm.slane %v9471, 0
  %v9473 = vsub.f32 %v9410, %v9472
  %v9474 = vsub.f32 %v9411, %v9472
  %v9475 = vsub.f32 %v9412, %v9472
  %v9476 = vsub.f32 %v9413, %v9472
  %v9477 = vsub.f32 %v9414, %v9472
  %v9478 = vsub.f32 %v9415, %v9472
  %v9479 = vsub.f32 %v9416, %v9472
  %v9480 = vsub.f32 %v9417, %v9472
  %v9481 = vsub.f32 %v9418, %v9472
  %v9482 = vsub.f32 %v9419, %v9472
  %v9483 = vsub.f32 %v9420, %v9472
  %v9484 = vsub.f32 %v9421, %v9472
  %v9485 = vsub.f32 %v9422, %v9472
  %v9486 = vsub.f32 %v9423, %v9472
  %v9487 = vsub.f32 %v9424, %v9472
  %v9488 = vsub.f32 %v9425, %v9472
  %v9489 = vmul.f32 %v9473, %v9473
  %v9490 = vmul.f32 %v9474, %v9474
  %v9491 = vmul.f32 %v9475, %v9475
  %v9492 = vmul.f32 %v9476, %v9476
  %v9493 = vmul.f32 %v9477, %v9477
  %v9494 = vmul.f32 %v9478, %v9478
  %v9495 = vmul.f32 %v9479, %v9479
  %v9496 = vmul.f32 %v9480, %v9480
  %v9497 = vmul.f32 %v9481, %v9481
  %v9498 = vmul.f32 %v9482, %v9482
  %v9499 = vmul.f32 %v9483, %v9483
  %v9500 = vmul.f32 %v9484, %v9484
  %v9501 = vmul.f32 %v9485, %v9485
  %v9502 = vmul.f32 %v9486, %v9486
  %v9503 = vmul.f32 %v9487, %v9487
  %v9504 = vmul.f32 %v9488, %v9488
  %v9505 = vadd.f32 %v9489, %v9493
  %v9506 = vadd.f32 %v9505, %v9497
  %v9507 = vadd.f32 %v9506, %v9501
  %v9508 = vrot.slane %v9507, 4
  %v9509 = vadd.f32 %v9507, %v9508
  %v9510 = vrot.slane %v9509, 2
  %v9511 = vadd.f32 %v9509, %v9510
  %v9512 = vrot.slane %v9511, 1
  %v9513 = vadd.f32 %v9511, %v9512
  %v9514 = vadd.f32 %v9490, %v9494
  %v9515 = vadd.f32 %v9514, %v9498
  %v9516 = vadd.f32 %v9515, %v9502
  %v9517 = vrot.slane %v9516, 4
  %v9518 = vadd.f32 %v9516, %v9517
  %v9519 = vrot.slane %v9518, 2
  %v9520 = vadd.f32 %v9518, %v9519
  %v9521 = vrot.slane %v9520, 1
  %v9522 = vadd.f32 %v9520, %v9521
  %v9523 = vadd.f32 %v9491, %v9495
  %v9524 = vadd.f32 %v9523, %v9499
  %v9525 = vadd.f32 %v9524, %v9503
  %v9526 = vrot.slane %v9525, 4
  %v9527 = vadd.f32 %v9525, %v9526
  %v9528 = vrot.slane %v9527, 2
  %v9529 = vadd.f32 %v9527, %v9528
  %v9530 = vrot.slane %v9529, 1
  %v9531 = vadd.f32 %v9529, %v9530
  %v9532 = vadd.f32 %v9492, %v9496
  %v9533 = vadd.f32 %v9532, %v9500
  %v9534 = vadd.f32 %v9533, %v9504
  %v9535 = vrot.slane %v9534, 4
  %v9536 = vadd.f32 %v9534, %v9535
  %v9537 = vrot.slane %v9536, 2
  %v9538 = vadd.f32 %v9536, %v9537
  %v9539 = vrot.slane %v9538, 1
  %v9540 = vadd.f32 %v9538, %v9539
  %v9541 = vadd.f32 %v9513, %v9531
  %v9542 = vadd.f32 %v9522, %v9540
  %v9543 = vadd.f32 %v9541, %v9542
  %9544 = vrot.lane.b32.xlu0 %v9543, 64
  %v9545 = vpop.permute.xlu0 %9544
  %v9546 = vadd.f32 %v9543, %v9545
  %9547 = vrot.lane.b32.xlu0 %v9546, 32
  %v9548 = vpop.permute.xlu0 %9547
  %v9549 = vadd.f32 %v9546, %v9548
  %v9550 = vmul.f32 %v9549, 0.001953125
  %v9551 = vld [vmem:[%s5] sm:$0xf]
  %v9552 = vadd.f32 %v9550, 1e-05
  %v9553 = vrsqrt.pop %v9552
  %v9554 = vmul.f32 %v9553, %v9552
  %v9555 = vmul.f32 %v9554, %v9553
  %v9556 = vmul.f32 0.5, %v9555
  %v9557 = vsub.f32 1.5, %v9556
  %v9558 = vmul.f32 %v9553, %v9557
  %vm9559 = vweird.f32 %v9552
  %vm9560 = vweird.f32 %v9553
  %vm9561 = vmor %vm9559, %vm9560
  %v9562 = vsel %vm9561, %v9553, %v9558
  %v9564 = vrot.slane %v9562, 7
  %v9565 = vrot.slane %v9562, 6
  %v9566 = vrot.slane %v9562, 5
  %v9567 = vsel %vm4628, %v9562, %v9564
  %v9568 = vsel %vm5001, %v9565, %v9566
  %v9569 = vsel %vm5003, %v9567, %v9568
  %v9571 = vmul.f32 %v9551, %v9569
  %v9573 = vperm.slane %v9571, 0
  %v9574 = vperm.slane %v9571, 1
  %v9575 = vperm.slane %v9571, 2
  %v9576 = vperm.slane %v9571, 3
  %v9581 = vmul.f32 %v9473, %v9573
  %v9582 = vmul.f32 %v9474, %v9574
  %v9583 = vmul.f32 %v9475, %v9575
  %v9584 = vmul.f32 %v9476, %v9576
  %v9585 = vmul.f32 %v9477, %v9573
  %v9586 = vmul.f32 %v9478, %v9574
  %v9587 = vmul.f32 %v9479, %v9575
  %v9588 = vmul.f32 %v9480, %v9576
  %v9589 = vmul.f32 %v9481, %v9573
  %v9590 = vmul.f32 %v9482, %v9574
  %v9591 = vmul.f32 %v9483, %v9575
  %v9592 = vmul.f32 %v9484, %v9576
  %v9593 = vmul.f32 %v9485, %v9573
  %v9594 = vmul.f32 %v9486, %v9574
  %v9595 = vmul.f32 %v9487, %v9575
  %v9596 = vmul.f32 %v9488, %v9576
  %v9597 = vld [vmem:[%s6] sm:$0xf]
  %v9599 = vperm.slane %v9597, 0
  %v9600 = vperm.slane %v9597, 1
  %v9601 = vperm.slane %v9597, 2
  %v9602 = vperm.slane %v9597, 3
  %v9607 = vadd.f32 %v9581, %v9599
  %v9608 = vadd.f32 %v9582, %v9600
  %v9609 = vadd.f32 %v9583, %v9601
  %v9610 = vadd.f32 %v9584, %v9602
  %v9611 = vadd.f32 %v9585, %v9599
  %v9612 = vadd.f32 %v9586, %v9600
  %v9613 = vadd.f32 %v9587, %v9601
  %v9614 = vadd.f32 %v9588, %v9602
  %v9615 = vadd.f32 %v9589, %v9599
  %v9616 = vadd.f32 %v9590, %v9600
  %v9617 = vadd.f32 %v9591, %v9601
  %v9618 = vadd.f32 %v9592, %v9602
  %v9619 = vadd.f32 %v9593, %v9599
  %v9620 = vadd.f32 %v9594, %v9600
  %v9621 = vadd.f32 %v9595, %v9601
  %v9622 = vadd.f32 %v9596, %v9602
  %v9623 = vld [vmem:[%s0] sm:$0xff]
  %v9624 = vld [vmem:[%s0 + $0x8] sm:$0xff]
  %v9625 = vld [vmem:[%s0 + $0x10] sm:$0xff]
  %v9626 = vld [vmem:[%s0 + $0x18] sm:$0xff]
  %v9627 = vld [vmem:[%s0 + $0x20] sm:$0xff]
  %v9628 = vld [vmem:[%s0 + $0x28] sm:$0xff]
  %v9629 = vld [vmem:[%s0 + $0x30] sm:$0xff]
  %v9630 = vld [vmem:[%s0 + $0x38] sm:$0xff]
  %v9631 = vld [vmem:[%s0 + $0x40] sm:$0xff]
  %v9632 = vld [vmem:[%s0 + $0x48] sm:$0xff]
  %v9633 = vld [vmem:[%s0 + $0x50] sm:$0xff]
  %v9634 = vld [vmem:[%s0 + $0x58] sm:$0xff]
  %v9635 = vld [vmem:[%s0 + $0x60] sm:$0xff]
  %v9636 = vld [vmem:[%s0 + $0x68] sm:$0xff]
  %v9637 = vld [vmem:[%s0 + $0x70] sm:$0xff]
  %v9638 = vld [vmem:[%s0 + $0x78] sm:$0xff]
  %v9639 = vadd.f32 %v9607, %v9623
  %v9640 = vadd.f32 %v9608, %v9624
  %v9641 = vadd.f32 %v9609, %v9625
  %v9642 = vadd.f32 %v9610, %v9626
  %v9643 = vadd.f32 %v9611, %v9627
  %v9644 = vadd.f32 %v9612, %v9628
  %v9645 = vadd.f32 %v9613, %v9629
  %v9646 = vadd.f32 %v9614, %v9630
  %v9647 = vadd.f32 %v9615, %v9631
  %v9648 = vadd.f32 %v9616, %v9632
  %v9649 = vadd.f32 %v9617, %v9633
  %v9650 = vadd.f32 %v9618, %v9634
  %v9651 = vadd.f32 %v9619, %v9635
  %v9652 = vadd.f32 %v9620, %v9636
  %v9653 = vadd.f32 %v9621, %v9637
  %v9654 = vadd.f32 %v9622, %v9638
  %9655 = vst [vmem:[%s7] sm:$0xff] %v9639
  %9656 = vst [vmem:[%s7 + $0x8] sm:$0xff] %v9640
  %9657 = vst [vmem:[%s7 + $0x10] sm:$0xff] %v9641
  %9658 = vst [vmem:[%s7 + $0x18] sm:$0xff] %v9642
  %9659 = vst [vmem:[%s7 + $0x20] sm:$0xff] %v9643
  %9660 = vst [vmem:[%s7 + $0x28] sm:$0xff] %v9644
  %9661 = vst [vmem:[%s7 + $0x30] sm:$0xff] %v9645
  %9662 = vst [vmem:[%s7 + $0x38] sm:$0xff] %v9646
  %9663 = vst [vmem:[%s7 + $0x40] sm:$0xff] %v9647
  %9664 = vst [vmem:[%s7 + $0x48] sm:$0xff] %v9648
  %9665 = vst [vmem:[%s7 + $0x50] sm:$0xff] %v9649
  %9666 = vst [vmem:[%s7 + $0x58] sm:$0xff] %v9650
  %9667 = vst [vmem:[%s7 + $0x60] sm:$0xff] %v9651
  %9668 = vst [vmem:[%s7 + $0x68] sm:$0xff] %v9652
  %9669 = vst [vmem:[%s7 + $0x70] sm:$0xff] %v9653
  %9670 = vst [vmem:[%s7 + $0x78] sm:$0xff] %v9654
  // Predicated region
  $region30: #{resnet_block.1} parent=0 // pred_check
    _
  $region31: #{resnet_block.1} parent=0 // pred_check_branch
    %9672 = sbr.rel (0) target = $region33
  $region32: #{resnet_block.1} parent=0 // pred_region
    _
  $region33: #{resnet_block.1} parent=0 // pred_fallthru
    _
  // Predicated region
  $region34: #{resnet_block.1} parent=0 // pred_check
    _
  $region35: #{resnet_block.1} parent=0 // pred_check_branch
    %9674 = sbr.rel (0) target = $region37
  $region36: #{resnet_block.1} parent=0 // pred_region
    _
  $region37: #{resnet_block.1} parent=0 // pred_fallthru
    _

</llo_original>
